<compile_context>
chip_gen: v5e
topology: v5e:2x2
jax: 0.10.0
libtpu: 0.0.40
codegen_flags: <defaults>
</compile_context>

<pallas_src>
import functools

import jax
import jax.numpy as jnp
from jax.experimental import pallas as pl
from jax.experimental.pallas import tpu as pltpu


_STATIC_UNROLL_MAX_T = 64   # fully unroll the time loop up to this length


# ----------------------------- fused GRU kernel ------------------------------

def _encoder_kernel(*args, num_layers, hidden):
    """Fused multi-layer GRU over the full sequence for one batch tile.

    Positional refs:
      emb_ref  : (T, tb, E)   embedded input sequence (time-major)
      for each layer l = 0..L-1:
        wih_ref (in_dim, 3H), whh_ref (H, 3H), bc_ref (1, 3H), bhn_ref (1, H)
      out_ref  : (tb, T*H)    last layer's h(t) packed lane-dense at offset t*H
      state_ref: (L, tb, H)   last hidden state of every layer
      gih_ref  : (T*tb, 3H)   VMEM scratch: current layer's input projection
                              (reused in place for the next layer's projection)
    """
    L, H = num_layers, hidden

    emb_ref = args[0]
    layer_refs = args[1:1 + 4 * L]
    out_ref = args[1 + 4 * L]
    state_ref = args[2 + 4 * L]
    gih_ref = args[3 + 4 * L]

    T, tb, E = emb_ref.shape

    # ---- layer-0 input projection: ONE big MXU GEMM into VMEM ----------------
    # (tb is a multiple of 8, so the (T, tb, E)->(T*tb, E) reshape is tile-exact.)
    wih0_ref, _, bc0_ref, _ = layer_refs[0:4]
    x2d = emb_ref[...].reshape(T * tb, E)
    gih_ref[...] = (
        jnp.dot(x2d, wih0_ref[...], preferred_element_type=jnp.float32)
        + bc0_ref[...])

    # ---- per-layer recurrence; inter-layer activations never leave VMEM ------
    for l in range(L):
        whh = layer_refs[4 * l + 1][...]                               # (H, 3H)
        # Hoisted broadcasts (JAX does not CSE broadcast_in_dim inside loops).
        bhn = jnp.broadcast_to(layer_refs[4 * l + 3][...], (tb, H))
        last = (l == L - 1)
        if not last:
            wih_next = layer_refs[4 * (l + 1)][...]                    # (H, 3H)
            bcn_next = jnp.broadcast_to(
                layer_refs[4 * (l + 1) + 2][...], (tb, 3 * H))

        def step(t, h):
            if isinstance(t, int):          # static (unrolled) path
                off = t * tb
                o_off = t * H
            else:                           # dynamic fori_loop path
                off = pl.multiple_of(t * tb, tb)
                o_off = pl.multiple_of(t * H, H)

            gi_t = gih_ref[pl.ds(off, tb), :]                          # (tb, 3H)
            gh = jnp.dot(h, whh, preferred_element_type=jnp.float32)   # (tb, 3H)
            # One sigmoid for both r and z (halves EUP pushes on the chain).
            rz = jax.nn.sigmoid(gi_t[:, :2 * H] + gh[:, :2 * H])
            r = rz[:, :H]
            z = rz[:, H:]
            n = jnp.tanh(gi_t[:, 2 * H:] + r * (gh[:, 2 * H:] + bhn))
            h_new = (1.0 - z) * n + z * h

            if last:
                # Lane-dense packed output: column block [t*H, (t+1)*H).
                out_ref[:, pl.ds(o_off, H)] = h_new.astype(out_ref.dtype)
            else:
                # Off-critical-path: next layer's input projection, written back
                # in place into the slot we just consumed.
                gih_ref[pl.ds(off, tb), :] = (
                    jnp.dot(h_new, wih_next, preferred_element_type=jnp.float32)
                    + bcn_next)
            return h_new

        h0 = jnp.zeros((tb, H), jnp.float32)
        if T <= _STATIC_UNROLL_MAX_T:
            h = h0
            for t in range(T):              # full static unroll (LLO visibility)
                h = step(t, h)
        else:
            h = jax.lax.fori_loop(0, T, step, h0, unroll=4)
        state_ref[l] = h.astype(state_ref.dtype)


# ------------------------------ Encoder wrapper -------------------------------

def _num_tensorcores():
    """2 TensorCores per chip only on v7x; v5e/v6e have one."""
    try:
        kind = jax.devices()[0].device_kind.lower()
    except Exception:
        return 1
    return 2 if "v7" in kind else 1


def init_params(key, vocab_size, embed_size, hidden_size, num_layers):
    params = {}
    k_emb, key = jax.random.split(key)
    params["embedding"] = jax.random.normal(
        k_emb, (vocab_size, embed_size), jnp.float32)
    params["layers"] = []
    H = hidden_size
    bound = 1.0 / jnp.sqrt(jnp.float32(H))
    in_dim = embed_size
    for _ in range(num_layers):
        key, k1, k2, k3, k4 = jax.random.split(key, 5)
        wih_t = jax.random.uniform(k1, (in_dim, 3 * H), jnp.float32, -bound, bound)
        whh_t = jax.random.uniform(k2, (H, 3 * H), jnp.float32, -bound, bound)
        b_ih = jax.random.uniform(k3, (1, 3 * H), jnp.float32, -bound, bound)
        b_hh = jax.random.uniform(k4, (1, 3 * H), jnp.float32, -bound, bound)
        # Pre-folded biases: r/z gates absorb (b_ih + b_hh); the n gate keeps
        # b_ih in the input projection and b_hh_n separately (it sits inside r*(.)).
        b_comb = jnp.concatenate(
            [b_ih[:, :2 * H] + b_hh[:, :2 * H], b_ih[:, 2 * H:]], axis=1)
        b_hh_n = b_hh[:, 2 * H:]
        params["layers"].append(dict(
            wih_t=wih_t, whh_t=whh_t, b_ih=b_ih, b_hh=b_hh,
            b_comb=b_comb, b_hh_n=b_hh_n))
        in_dim = H
    return params


@jax.jit
def seq2seq_encoder_forward(params, tokens):
    """tokens: (batch, seq_len) int32.
    Returns: output (batch, seq_len, hidden), state (num_layers, batch, hidden)."""
    layers = params["layers"]
    L = len(layers)
    H = layers[0]["whh_t"].shape[0]
    E = layers[0]["wih_t"].shape[0]

    # Embedding gather directly time-major -> (T, B, E).  The layer-0 projection
    # now happens inside the kernel, so the kernel's dominant HBM input stays
    # E-wide instead of 3H-wide (no gi0 round trip).
    emb = jnp.take(params["embedding"], tokens.T, axis=0).astype(jnp.float32)
    T, B, _ = emb.shape

    # Core-count-aware batch tiling: split only on v7x (2 TCs) and only when each
    # tile keeps the per-step h @ W_hh matmul MXU-sized.  Never split on v5e/v6e
    # (the grid would run serially on one TC and double the latency-bound loop).
    n_cores = _num_tensorcores()
    if n_cores >= 2 and B % 2 == 0 and (B // 2) % 8 == 0 and (B // 2) >= 64:
        n_bt = 2
    else:
        n_bt = 1
    tb = B // n_bt   # B is expected to be a multiple of 8 (f32 sublane tile)

    kernel = functools.partial(_encoder_kernel, num_layers=L, hidden=H)

    in_specs = [pl.BlockSpec((T, tb, E), lambda i: (0, i, 0))]
    inputs = [emb]
    for ly in layers:
        in_dim = ly["wih_t"].shape[0]
        in_specs += [
            pl.BlockSpec((in_dim, 3 * H), lambda i: (0, 0)),
            pl.BlockSpec((H, 3 * H), lambda i: (0, 0)),
            pl.BlockSpec((1, 3 * H), lambda i: (0, 0)),
            pl.BlockSpec((1, H), lambda i: (0, 0)),
        ]
        inputs += [ly["wih_t"], ly["whh_t"], ly["b_comb"], ly["b_hh_n"]]

    # Explicit VMEM budget (f32): pipelined emb/out/state blocks + gih scratch +
    # weights, clamped to [32 MiB, 64 MiB] so it is valid on v5e/v6e/v7x.
    w_elems = sum(int(w.size) for ly in layers
                  for w in (ly["wih_t"], ly["whh_t"], ly["b_comb"], ly["b_hh_n"]))
    est = 4 * (2 * T * tb * E + T * tb * 3 * H + 2 * tb * T * H
               + 2 * L * tb * H + 2 * w_elems)
    vmem_limit = int(min(max(2 * est, 32 * 1024 * 1024), 64 * 1024 * 1024))

    out2d, state = pl.pallas_call(
        kernel,
        grid=(n_bt,),
        in_specs=in_specs,
        out_specs=[
            pl.BlockSpec((tb, T * H), lambda i: (i, 0)),
            pl.BlockSpec((L, tb, H), lambda i: (0, i, 0)),
        ],
        out_shape=[
            jax.ShapeDtypeStruct((B, T * H), jnp.float32),
            jax.ShapeDtypeStruct((L, B, H), jnp.float32),
        ],
        scratch_shapes=[
            pltpu.VMEM((T * tb, 3 * H), jnp.float32),   # per-layer input projection
        ],
        compiler_params=pltpu.CompilerParams(
            dimension_semantics=("parallel",),
            vmem_limit_bytes=vmem_limit),
    )(*inputs)

    # (B, T*H) -> (B, T, H) is a contiguous row-major reshape (no data movement),
    # replacing the previous wrapper-side HBM transpose of a time-major output.
    output = out2d.reshape(B, T, H)
    return output, state


# ------------------------------ pure-JAX reference ----------------------------

def _gru_layer_ref(x_seq, wih_t, whh_t, b_ih, b_hh):
    H = whh_t.shape[0]

    def step(h, x_t):
        gi = x_t @ wih_t + b_ih
        gh = h @ whh_t + b_hh
        r = jax.nn.sigmoid(gi[:, :H] + gh[:, :H])
        z = jax.nn.sigmoid(gi[:, H:2 * H] + gh[:, H:2 * H])
        n = jnp.tanh(gi[:, 2 * H:] + r * gh[:, 2 * H:])
        h_new = (1.0 - z) * n + z * h
        return h_new, h_new

    h0 = jnp.zeros((x_seq.shape[1], H), jnp.float32)
    h_last, outs = jax.lax.scan(step, h0, x_seq)
    return outs, h_last


def seq2seq_encoder_ref(params, tokens):
    emb = jnp.take(params["embedding"], tokens, axis=0)            # (B, T, E)
    x_seq = jnp.transpose(emb, (1, 0, 2)).astype(jnp.float32)      # (T, B, E)
    states = []
    layer_in = x_seq
    for layer in params["layers"]:
        layer_out, h_last = _gru_layer_ref(
            layer_in, layer["wih_t"], layer["whh_t"], layer["b_ih"], layer["b_hh"])
        states.append(h_last)
        layer_in = layer_out
    return jnp.transpose(layer_in, (1, 0, 2)), jnp.stack(states, axis=0)


# ----------------------------------- main --------------------------------------

if __name__ == "__main__":
    vocab_size, embed_size, hidden_size, num_layers = 50, 32, 32, 2
    batch, seq_len = 32, 15   # matches the original module's batch/seq_len

    key = jax.random.PRNGKey(0)
    k_param, k_tok = jax.random.split(key)
    params = init_params(k_param, vocab_size, embed_size, hidden_size, num_layers)
    tokens = jax.random.randint(k_tok, (batch, seq_len), 0, vocab_size, dtype=jnp.int32)

    output, state = seq2seq_encoder_forward(params, tokens)
    output, state = jax.block_until_ready((output, state))

    assert output.shape == (batch, seq_len, hidden_size)
    assert state.shape == (num_layers, batch, hidden_size)

    ref_out, ref_state = seq2seq_encoder_ref(params, tokens)
    assert jnp.allclose(output, ref_out, atol=1e-4, rtol=1e-4), \
        float(jnp.max(jnp.abs(output - ref_out)))
    assert jnp.allclose(state, ref_state, atol=1e-4, rtol=1e-4), \
        float(jnp.max(jnp.abs(state - ref_state)))

    print("KERNEL_OK")
</pallas_src>

<mosaic_0001>
module attributes {stable_mosaic.version = 11 : i64} {
  func.func @_encoder_kernel(%arg0: i32, %arg1: memref<15x32x32xf32, #tpu.memory_space<vmem>>, %arg2: memref<32x96xf32, #tpu.memory_space<vmem>>, %arg3: memref<32x96xf32, #tpu.memory_space<vmem>>, %arg4: memref<1x96xf32, #tpu.memory_space<vmem>>, %arg5: memref<1x32xf32, #tpu.memory_space<vmem>>, %arg6: memref<32x96xf32, #tpu.memory_space<vmem>>, %arg7: memref<32x96xf32, #tpu.memory_space<vmem>>, %arg8: memref<1x96xf32, #tpu.memory_space<vmem>>, %arg9: memref<1x32xf32, #tpu.memory_space<vmem>>, %arg10: memref<32x480xf32, #tpu.memory_space<vmem>>, %arg11: memref<2x32x32xf32, #tpu.memory_space<vmem>>, %arg12: memref<480x96xf32, #tpu.memory_space<vmem>>) attributes {dimension_semantics = [#tpu.dimension_semantics<parallel>], iteration_bounds = array<i64: 1>, scalar_prefetch = 0 : i64, scratch_operands = 1 : i64, tpu.core_type = #tpu.core_type<tc>, window_params = [{transform_indices = @transform_0, window_bounds = array<i64: 15, 32, 32>}, {pipeline_mode = #tpu.pipeline_mode<synchronous>, transform_indices = @transform_1, window_bounds = array<i64: 32, 96>}, {pipeline_mode = #tpu.pipeline_mode<synchronous>, transform_indices = @transform_2, window_bounds = array<i64: 32, 96>}, {pipeline_mode = #tpu.pipeline_mode<synchronous>, transform_indices = @transform_3, window_bounds = array<i64: 1, 96>}, {pipeline_mode = #tpu.pipeline_mode<synchronous>, transform_indices = @transform_4, window_bounds = array<i64: 1, 32>}, {pipeline_mode = #tpu.pipeline_mode<synchronous>, transform_indices = @transform_5, window_bounds = array<i64: 32, 96>}, {pipeline_mode = #tpu.pipeline_mode<synchronous>, transform_indices = @transform_6, window_bounds = array<i64: 32, 96>}, {pipeline_mode = #tpu.pipeline_mode<synchronous>, transform_indices = @transform_7, window_bounds = array<i64: 1, 96>}, {pipeline_mode = #tpu.pipeline_mode<synchronous>, transform_indices = @transform_8, window_bounds = array<i64: 1, 32>}, {transform_indices = @transform_9, window_bounds = array<i64: 32, 480>}, {transform_indices = @transform_10, window_bounds = array<i64: 2, 32, 32>}]} {
    %c0 = arith.constant 0 : index
    %c0_0 = arith.constant 0 : index
    %c0_1 = arith.constant 0 : index
    %0 = vector.load %arg1[%c0, %c0_0, %c0_1] : memref<15x32x32xf32, #tpu.memory_space<vmem>>, vector<15x32x32xf32>
    %1 = vector.shape_cast %0 : vector<15x32x32xf32> to vector<480x32xf32>
    %c0_2 = arith.constant 0 : index
    %c0_3 = arith.constant 0 : index
    %2 = vector.load %arg2[%c0_2, %c0_3] : memref<32x96xf32, #tpu.memory_space<vmem>>, vector<32x96xf32>
    %cst = arith.constant dense<0.000000e+00> : vector<480x96xf32>
    %3 = tpu.matmul %1, %2, %cst {dimension_numbers = #tpu.dot_dimension_numbers<[1], [0], [0], [1], [0, 0, 1, 1], [], []>} : vector<480x32xf32>, vector<32x96xf32>, vector<480x96xf32> -> vector<480x96xf32>
    %c0_4 = arith.constant 0 : index
    %c0_5 = arith.constant 0 : index
    %4 = vector.load %arg4[%c0_4, %c0_5] : memref<1x96xf32, #tpu.memory_space<vmem>>, vector<1x96xf32>
    %5 = vector.broadcast %4 : vector<1x96xf32> to vector<480x96xf32>
    %6 = arith.addf %3, %5 : vector<480x96xf32>
    %c0_6 = arith.constant 0 : index
    %c0_7 = arith.constant 0 : index
    %7 = vector.load %arg12[%c0_6, %c0_7] : memref<480x96xf32, #tpu.memory_space<vmem>>, vector<480x96xf32>
    tpu.vector_store %arg12[%c0_6, %c0_7], %6 {strides = array<i32>} : memref<480x96xf32, #tpu.memory_space<vmem>>, vector<480x96xf32>,
    %c0_8 = arith.constant 0 : index
    %c0_9 = arith.constant 0 : index
    %8 = vector.load %arg3[%c0_8, %c0_9] : memref<32x96xf32, #tpu.memory_space<vmem>>, vector<32x96xf32>
    %c0_10 = arith.constant 0 : index
    %c0_11 = arith.constant 0 : index
    %9 = vector.load %arg5[%c0_10, %c0_11] : memref<1x32xf32, #tpu.memory_space<vmem>>, vector<1x32xf32>
    %10 = vector.shape_cast %9 : vector<1x32xf32> to vector<1x32xf32>
    %11 = vector.broadcast %10 : vector<1x32xf32> to vector<32x32xf32>
    %c0_12 = arith.constant 0 : index
    %c0_13 = arith.constant 0 : index
    %12 = vector.load %arg6[%c0_12, %c0_13] : memref<32x96xf32, #tpu.memory_space<vmem>>, vector<32x96xf32>
    %c0_14 = arith.constant 0 : index
    %c0_15 = arith.constant 0 : index
    %13 = vector.load %arg8[%c0_14, %c0_15] : memref<1x96xf32, #tpu.memory_space<vmem>>, vector<1x96xf32>
    %14 = vector.shape_cast %13 : vector<1x96xf32> to vector<1x96xf32>
    %15 = vector.broadcast %14 : vector<1x96xf32> to vector<32x96xf32>
    %cst_16 = arith.constant 0.000000e+00 : f32
    %16 = vector.broadcast %cst_16 : f32 to vector<32x32xf32>
    %c0_17 = arith.constant 0 : index
    %c0_18 = arith.constant 0 : index
    %17 = vector.load %arg12[%c0_17, %c0_18] : memref<480x96xf32, #tpu.memory_space<vmem>>, vector<32x96xf32>
    %cst_19 = arith.constant dense<0.000000e+00> : vector<32x96xf32>
    %18 = tpu.matmul %16, %8, %cst_19 {dimension_numbers = #tpu.dot_dimension_numbers<[1], [0], [0], [1], [0, 0, 1, 1], [], []>} : vector<32x32xf32>, vector<32x96xf32>, vector<32x96xf32> -> vector<32x96xf32>
    %19 = vector.extract_strided_slice %17 {offsets = [0, 0], sizes = [32, 64], strides = [1, 1]} : vector<32x96xf32> to vector<32x64xf32>
    %20 = vector.extract_strided_slice %18 {offsets = [0, 0], sizes = [32, 64], strides = [1, 1]} : vector<32x96xf32> to vector<32x64xf32>
    %21 = arith.addf %19, %20 : vector<32x64xf32>
    %22 = arith.negf %21 : vector<32x64xf32>
    %23 = math.exp %22 : vector<32x64xf32>
    %cst_20 = arith.constant 1.000000e+00 : f32
    %24 = vector.broadcast %cst_20 : f32 to vector<32x64xf32>
    %25 = arith.addf %24, %23 : vector<32x64xf32>
    %26 = arith.divf %24, %25 : vector<32x64xf32>
    %27 = vector.extract_strided_slice %26 {offsets = [0, 0], sizes = [32, 32], strides = [1, 1]} : vector<32x64xf32> to vector<32x32xf32>
    %28 = vector.extract_strided_slice %26 {offsets = [0, 32], sizes = [32, 32], strides = [1, 1]} : vector<32x64xf32> to vector<32x32xf32>
    %29 = vector.extract_strided_slice %17 {offsets = [0, 64], sizes = [32, 32], strides = [1, 1]} : vector<32x96xf32> to vector<32x32xf32>
    %30 = vector.extract_strided_slice %18 {offsets = [0, 64], sizes = [32, 32], strides = [1, 1]} : vector<32x96xf32> to vector<32x32xf32>
    %31 = arith.addf %30, %11 : vector<32x32xf32>
    %32 = arith.mulf %27, %31 : vector<32x32xf32>
    %33 = arith.addf %29, %32 : vector<32x32xf32>
    %34 = math.tanh %33 : vector<32x32xf32>
    %cst_21 = arith.constant 1.000000e+00 : f32
    %35 = vector.broadcast %cst_21 : f32 to vector<32x32xf32>
    %36 = arith.subf %35, %28 : vector<32x32xf32>
    %37 = arith.mulf %36, %34 : vector<32x32xf32>
    %38 = arith.mulf %28, %16 : vector<32x32xf32>
    %39 = arith.addf %37, %38 : vector<32x32xf32>
    %cst_22 = arith.constant dense<0.000000e+00> : vector<32x96xf32>
    %40 = tpu.matmul %39, %12, %cst_22 {dimension_numbers = #tpu.dot_dimension_numbers<[1], [0], [0], [1], [0, 0, 1, 1], [], []>} : vector<32x32xf32>, vector<32x96xf32>, vector<32x96xf32> -> vector<32x96xf32>
    %41 = arith.addf %40, %15 : vector<32x96xf32>
    %c0_23 = arith.constant 0 : index
    %c0_24 = arith.constant 0 : index
    %42 = vector.load %arg12[%c0_23, %c0_24] : memref<480x96xf32, #tpu.memory_space<vmem>>, vector<32x96xf32>
    tpu.vector_store %arg12[%c0_23, %c0_24], %41 {strides = array<i32>} : memref<480x96xf32, #tpu.memory_space<vmem>>, vector<32x96xf32>,
    %c32 = arith.constant 32 : index
    %c0_25 = arith.constant 0 : index
    %43 = vector.load %arg12[%c32, %c0_25] : memref<480x96xf32, #tpu.memory_space<vmem>>, vector<32x96xf32>
    %cst_26 = arith.constant dense<0.000000e+00> : vector<32x96xf32>
    %44 = tpu.matmul %39, %8, %cst_26 {dimension_numbers = #tpu.dot_dimension_numbers<[1], [0], [0], [1], [0, 0, 1, 1], [], []>} : vector<32x32xf32>, vector<32x96xf32>, vector<32x96xf32> -> vector<32x96xf32>
    %45 = vector.extract_strided_slice %43 {offsets = [0, 0], sizes = [32, 64], strides = [1, 1]} : vector<32x96xf32> to vector<32x64xf32>
    %46 = vector.extract_strided_slice %44 {offsets = [0, 0], sizes = [32, 64], strides = [1, 1]} : vector<32x96xf32> to vector<32x64xf32>
    %47 = arith.addf %45, %46 : vector<32x64xf32>
    %48 = arith.negf %47 : vector<32x64xf32>
    %49 = math.exp %48 : vector<32x64xf32>
    %cst_27 = arith.constant 1.000000e+00 : f32
    %50 = vector.broadcast %cst_27 : f32 to vector<32x64xf32>
    %51 = arith.addf %50, %49 : vector<32x64xf32>
    %52 = arith.divf %50, %51 : vector<32x64xf32>
    %53 = vector.extract_strided_slice %52 {offsets = [0, 0], sizes = [32, 32], strides = [1, 1]} : vector<32x64xf32> to vector<32x32xf32>
    %54 = vector.extract_strided_slice %52 {offsets = [0, 32], sizes = [32, 32], strides = [1, 1]} : vector<32x64xf32> to vector<32x32xf32>
    %55 = vector.extract_strided_slice %43 {offsets = [0, 64], sizes = [32, 32], strides = [1, 1]} : vector<32x96xf32> to vector<32x32xf32>
    %56 = vector.extract_strided_slice %44 {offsets = [0, 64], sizes = [32, 32], strides = [1, 1]} : vector<32x96xf32> to vector<32x32xf32>
    %57 = arith.addf %56, %11 : vector<32x32xf32>
    %58 = arith.mulf %53, %57 : vector<32x32xf32>
    %59 = arith.addf %55, %58 : vector<32x32xf32>
    %60 = math.tanh %59 : vector<32x32xf32>
    %cst_28 = arith.constant 1.000000e+00 : f32
    %61 = vector.broadcast %cst_28 : f32 to vector<32x32xf32>
    %62 = arith.subf %61, %54 : vector<32x32xf32>
    %63 = arith.mulf %62, %60 : vector<32x32xf32>
    %64 = arith.mulf %54, %39 : vector<32x32xf32>
    %65 = arith.addf %63, %64 : vector<32x32xf32>
    %cst_29 = arith.constant dense<0.000000e+00> : vector<32x96xf32>
    %66 = tpu.matmul %65, %12, %cst_29 {dimension_numbers = #tpu.dot_dimension_numbers<[1], [0], [0], [1], [0, 0, 1, 1], [], []>} : vector<32x32xf32>, vector<32x96xf32>, vector<32x96xf32> -> vector<32x96xf32>
    %67 = arith.addf %66, %15 : vector<32x96xf32>
    %c32_30 = arith.constant 32 : index
    %c0_31 = arith.constant 0 : index
    %68 = vector.load %arg12[%c32_30, %c0_31] : memref<480x96xf32, #tpu.memory_space<vmem>>, vector<32x96xf32>
    tpu.vector_store %arg12[%c32_30, %c0_31], %67 {strides = array<i32>} : memref<480x96xf32, #tpu.memory_space<vmem>>, vector<32x96xf32>,
    %c64 = arith.constant 64 : index
    %c0_32 = arith.constant 0 : index
    %69 = vector.load %arg12[%c64, %c0_32] : memref<480x96xf32, #tpu.memory_space<vmem>>, vector<32x96xf32>
    %cst_33 = arith.constant dense<0.000000e+00> : vector<32x96xf32>
    %70 = tpu.matmul %65, %8, %cst_33 {dimension_numbers = #tpu.dot_dimension_numbers<[1], [0], [0], [1], [0, 0, 1, 1], [], []>} : vector<32x32xf32>, vector<32x96xf32>, vector<32x96xf32> -> vector<32x96xf32>
    %71 = vector.extract_strided_slice %69 {offsets = [0, 0], sizes = [32, 64], strides = [1, 1]} : vector<32x96xf32> to vector<32x64xf32>
    %72 = vector.extract_strided_slice %70 {offsets = [0, 0], sizes = [32, 64], strides = [1, 1]} : vector<32x96xf32> to vector<32x64xf32>
    %73 = arith.addf %71, %72 : vector<32x64xf32>
    %74 = arith.negf %73 : vector<32x64xf32>
    %75 = math.exp %74 : vector<32x64xf32>
    %cst_34 = arith.constant 1.000000e+00 : f32
    %76 = vector.broadcast %cst_34 : f32 to vector<32x64xf32>
    %77 = arith.addf %76, %75 : vector<32x64xf32>
    %78 = arith.divf %76, %77 : vector<32x64xf32>
    %79 = vector.extract_strided_slice %78 {offsets = [0, 0], sizes = [32, 32], strides = [1, 1]} : vector<32x64xf32> to vector<32x32xf32>
    %80 = vector.extract_strided_slice %78 {offsets = [0, 32], sizes = [32, 32], strides = [1, 1]} : vector<32x64xf32> to vector<32x32xf32>
    %81 = vector.extract_strided_slice %69 {offsets = [0, 64], sizes = [32, 32], strides = [1, 1]} : vector<32x96xf32> to vector<32x32xf32>
    %82 = vector.extract_strided_slice %70 {offsets = [0, 64], sizes = [32, 32], strides = [1, 1]} : vector<32x96xf32> to vector<32x32xf32>
    %83 = arith.addf %82, %11 : vector<32x32xf32>
    %84 = arith.mulf %79, %83 : vector<32x32xf32>
    %85 = arith.addf %81, %84 : vector<32x32xf32>
    %86 = math.tanh %85 : vector<32x32xf32>
    %cst_35 = arith.constant 1.000000e+00 : f32
    %87 = vector.broadcast %cst_35 : f32 to vector<32x32xf32>
    %88 = arith.subf %87, %80 : vector<32x32xf32>
    %89 = arith.mulf %88, %86 : vector<32x32xf32>
    %90 = arith.mulf %80, %65 : vector<32x32xf32>
    %91 = arith.addf %89, %90 : vector<32x32xf32>
    %cst_36 = arith.constant dense<0.000000e+00> : vector<32x96xf32>
    %92 = tpu.matmul %91, %12, %cst_36 {dimension_numbers = #tpu.dot_dimension_numbers<[1], [0], [0], [1], [0, 0, 1, 1], [], []>} : vector<32x32xf32>, vector<32x96xf32>, vector<32x96xf32> -> vector<32x96xf32>
    %93 = arith.addf %92, %15 : vector<32x96xf32>
    %c64_37 = arith.constant 64 : index
    %c0_38 = arith.constant 0 : index
    %94 = vector.load %arg12[%c64_37, %c0_38] : memref<480x96xf32, #tpu.memory_space<vmem>>, vector<32x96xf32>
    tpu.vector_store %arg12[%c64_37, %c0_38], %93 {strides = array<i32>} : memref<480x96xf32, #tpu.memory_space<vmem>>, vector<32x96xf32>,
    %c96 = arith.constant 96 : index
    %c0_39 = arith.constant 0 : index
    %95 = vector.load %arg12[%c96, %c0_39] : memref<480x96xf32, #tpu.memory_space<vmem>>, vector<32x96xf32>
    %cst_40 = arith.constant dense<0.000000e+00> : vector<32x96xf32>
    %96 = tpu.matmul %91, %8, %cst_40 {dimension_numbers = #tpu.dot_dimension_numbers<[1], [0], [0], [1], [0, 0, 1, 1], [], []>} : vector<32x32xf32>, vector<32x96xf32>, vector<32x96xf32> -> vector<32x96xf32>
    %97 = vector.extract_strided_slice %95 {offsets = [0, 0], sizes = [32, 64], strides = [1, 1]} : vector<32x96xf32> to vector<32x64xf32>
    %98 = vector.extract_strided_slice %96 {offsets = [0, 0], sizes = [32, 64], strides = [1, 1]} : vector<32x96xf32> to vector<32x64xf32>
    %99 = arith.addf %97, %98 : vector<32x64xf32>
    %100 = arith.negf %99 : vector<32x64xf32>
    %101 = math.exp %100 : vector<32x64xf32>
    %cst_41 = arith.constant 1.000000e+00 : f32
    %102 = vector.broadcast %cst_41 : f32 to vector<32x64xf32>
    %103 = arith.addf %102, %101 : vector<32x64xf32>
    %104 = arith.divf %102, %103 : vector<32x64xf32>
    %105 = vector.extract_strided_slice %104 {offsets = [0, 0], sizes = [32, 32], strides = [1, 1]} : vector<32x64xf32> to vector<32x32xf32>
    %106 = vector.extract_strided_slice %104 {offsets = [0, 32], sizes = [32, 32], strides = [1, 1]} : vector<32x64xf32> to vector<32x32xf32>
    %107 = vector.extract_strided_slice %95 {offsets = [0, 64], sizes = [32, 32], strides = [1, 1]} : vector<32x96xf32> to vector<32x32xf32>
    %108 = vector.extract_strided_slice %96 {offsets = [0, 64], sizes = [32, 32], strides = [1, 1]} : vector<32x96xf32> to vector<32x32xf32>
    %109 = arith.addf %108, %11 : vector<32x32xf32>
    %110 = arith.mulf %105, %109 : vector<32x32xf32>
    %111 = arith.addf %107, %110 : vector<32x32xf32>
    %112 = math.tanh %111 : vector<32x32xf32>
    %cst_42 = arith.constant 1.000000e+00 : f32
    %113 = vector.broadcast %cst_42 : f32 to vector<32x32xf32>
    %114 = arith.subf %113, %106 : vector<32x32xf32>
    %115 = arith.mulf %114, %112 : vector<32x32xf32>
    %116 = arith.mulf %106, %91 : vector<32x32xf32>
    %117 = arith.addf %115, %116 : vector<32x32xf32>
    %cst_43 = arith.constant dense<0.000000e+00> : vector<32x96xf32>
    %118 = tpu.matmul %117, %12, %cst_43 {dimension_numbers = #tpu.dot_dimension_numbers<[1], [0], [0], [1], [0, 0, 1, 1], [], []>} : vector<32x32xf32>, vector<32x96xf32>, vector<32x96xf32> -> vector<32x96xf32>
    %119 = arith.addf %118, %15 : vector<32x96xf32>
    %c96_44 = arith.constant 96 : index
    %c0_45 = arith.constant 0 : index
    %120 = vector.load %arg12[%c96_44, %c0_45] : memref<480x96xf32, #tpu.memory_space<vmem>>, vector<32x96xf32>
    tpu.vector_store %arg12[%c96_44, %c0_45], %119 {strides = array<i32>} : memref<480x96xf32, #tpu.memory_space<vmem>>, vector<32x96xf32>,
    %c128 = arith.constant 128 : index
    %c0_46 = arith.constant 0 : index
    %121 = vector.load %arg12[%c128, %c0_46] : memref<480x96xf32, #tpu.memory_space<vmem>>, vector<32x96xf32>
    %cst_47 = arith.constant dense<0.000000e+00> : vector<32x96xf32>
    %122 = tpu.matmul %117, %8, %cst_47 {dimension_numbers = #tpu.dot_dimension_numbers<[1], [0], [0], [1], [0, 0, 1, 1], [], []>} : vector<32x32xf32>, vector<32x96xf32>, vector<32x96xf32> -> vector<32x96xf32>
    %123 = vector.extract_strided_slice %121 {offsets = [0, 0], sizes = [32, 64], strides = [1, 1]} : vector<32x96xf32> to vector<32x64xf32>
    %124 = vector.extract_strided_slice %122 {offsets = [0, 0], sizes = [32, 64], strides = [1, 1]} : vector<32x96xf32> to vector<32x64xf32>
    %125 = arith.addf %123, %124 : vector<32x64xf32>
    %126 = arith.negf %125 : vector<32x64xf32>
    %127 = math.exp %126 : vector<32x64xf32>
    %cst_48 = arith.constant 1.000000e+00 : f32
    %128 = vector.broadcast %cst_48 : f32 to vector<32x64xf32>
    %129 = arith.addf %128, %127 : vector<32x64xf32>
    %130 = arith.divf %128, %129 : vector<32x64xf32>
    %131 = vector.extract_strided_slice %130 {offsets = [0, 0], sizes = [32, 32], strides = [1, 1]} : vector<32x64xf32> to vector<32x32xf32>
    %132 = vector.extract_strided_slice %130 {offsets = [0, 32], sizes = [32, 32], strides = [1, 1]} : vector<32x64xf32> to vector<32x32xf32>
    %133 = vector.extract_strided_slice %121 {offsets = [0, 64], sizes = [32, 32], strides = [1, 1]} : vector<32x96xf32> to vector<32x32xf32>
    %134 = vector.extract_strided_slice %122 {offsets = [0, 64], sizes = [32, 32], strides = [1, 1]} : vector<32x96xf32> to vector<32x32xf32>
    %135 = arith.addf %134, %11 : vector<32x32xf32>
    %136 = arith.mulf %131, %135 : vector<32x32xf32>
    %137 = arith.addf %133, %136 : vector<32x32xf32>
    %138 = math.tanh %137 : vector<32x32xf32>
    %cst_49 = arith.constant 1.000000e+00 : f32
    %139 = vector.broadcast %cst_49 : f32 to vector<32x32xf32>
    %140 = arith.subf %139, %132 : vector<32x32xf32>
    %141 = arith.mulf %140, %138 : vector<32x32xf32>
    %142 = arith.mulf %132, %117 : vector<32x32xf32>
    %143 = arith.addf %141, %142 : vector<32x32xf32>
    %cst_50 = arith.constant dense<0.000000e+00> : vector<32x96xf32>
    %144 = tpu.matmul %143, %12, %cst_50 {dimension_numbers = #tpu.dot_dimension_numbers<[1], [0], [0], [1], [0, 0, 1, 1], [], []>} : vector<32x32xf32>, vector<32x96xf32>, vector<32x96xf32> -> vector<32x96xf32>
    %145 = arith.addf %144, %15 : vector<32x96xf32>
    %c128_51 = arith.constant 128 : index
    %c0_52 = arith.constant 0 : index
    %146 = vector.load %arg12[%c128_51, %c0_52] : memref<480x96xf32, #tpu.memory_space<vmem>>, vector<32x96xf32>
    tpu.vector_store %arg12[%c128_51, %c0_52], %145 {strides = array<i32>} : memref<480x96xf32, #tpu.memory_space<vmem>>, vector<32x96xf32>,
    %c160 = arith.constant 160 : index
    %c0_53 = arith.constant 0 : index
    %147 = vector.load %arg12[%c160, %c0_53] : memref<480x96xf32, #tpu.memory_space<vmem>>, vector<32x96xf32>
    %cst_54 = arith.constant dense<0.000000e+00> : vector<32x96xf32>
    %148 = tpu.matmul %143, %8, %cst_54 {dimension_numbers = #tpu.dot_dimension_numbers<[1], [0], [0], [1], [0, 0, 1, 1], [], []>} : vector<32x32xf32>, vector<32x96xf32>, vector<32x96xf32> -> vector<32x96xf32>
    %149 = vector.extract_strided_slice %147 {offsets = [0, 0], sizes = [32, 64], strides = [1, 1]} : vector<32x96xf32> to vector<32x64xf32>
    %150 = vector.extract_strided_slice %148 {offsets = [0, 0], sizes = [32, 64], strides = [1, 1]} : vector<32x96xf32> to vector<32x64xf32>
    %151 = arith.addf %149, %150 : vector<32x64xf32>
    %152 = arith.negf %151 : vector<32x64xf32>
    %153 = math.exp %152 : vector<32x64xf32>
    %cst_55 = arith.constant 1.000000e+00 : f32
    %154 = vector.broadcast %cst_55 : f32 to vector<32x64xf32>
    %155 = arith.addf %154, %153 : vector<32x64xf32>
    %156 = arith.divf %154, %155 : vector<32x64xf32>
    %157 = vector.extract_strided_slice %156 {offsets = [0, 0], sizes = [32, 32], strides = [1, 1]} : vector<32x64xf32> to vector<32x32xf32>
    %158 = vector.extract_strided_slice %156 {offsets = [0, 32], sizes = [32, 32], strides = [1, 1]} : vector<32x64xf32> to vector<32x32xf32>
    %159 = vector.extract_strided_slice %147 {offsets = [0, 64], sizes = [32, 32], strides = [1, 1]} : vector<32x96xf32> to vector<32x32xf32>
    %160 = vector.extract_strided_slice %148 {offsets = [0, 64], sizes = [32, 32], strides = [1, 1]} : vector<32x96xf32> to vector<32x32xf32>
    %161 = arith.addf %160, %11 : vector<32x32xf32>
    %162 = arith.mulf %157, %161 : vector<32x32xf32>
    %163 = arith.addf %159, %162 : vector<32x32xf32>
    %164 = math.tanh %163 : vector<32x32xf32>
    %cst_56 = arith.constant 1.000000e+00 : f32
    %165 = vector.broadcast %cst_56 : f32 to vector<32x32xf32>
    %166 = arith.subf %165, %158 : vector<32x32xf32>
    %167 = arith.mulf %166, %164 : vector<32x32xf32>
    %168 = arith.mulf %158, %143 : vector<32x32xf32>
    %169 = arith.addf %167, %168 : vector<32x32xf32>
    %cst_57 = arith.constant dense<0.000000e+00> : vector<32x96xf32>
    %170 = tpu.matmul %169, %12, %cst_57 {dimension_numbers = #tpu.dot_dimension_numbers<[1], [0], [0], [1], [0, 0, 1, 1], [], []>} : vector<32x32xf32>, vector<32x96xf32>, vector<32x96xf32> -> vector<32x96xf32>
    %171 = arith.addf %170, %15 : vector<32x96xf32>
    %c160_58 = arith.constant 160 : index
    %c0_59 = arith.constant 0 : index
    %172 = vector.load %arg12[%c160_58, %c0_59] : memref<480x96xf32, #tpu.memory_space<vmem>>, vector<32x96xf32>
    tpu.vector_store %arg12[%c160_58, %c0_59], %171 {strides = array<i32>} : memref<480x96xf32, #tpu.memory_space<vmem>>, vector<32x96xf32>,
    %c192 = arith.constant 192 : index
    %c0_60 = arith.constant 0 : index
    %173 = vector.load %arg12[%c192, %c0_60] : memref<480x96xf32, #tpu.memory_space<vmem>>, vector<32x96xf32>
    %cst_61 = arith.constant dense<0.000000e+00> : vector<32x96xf32>
    %174 = tpu.matmul %169, %8, %cst_61 {dimension_numbers = #tpu.dot_dimension_numbers<[1], [0], [0], [1], [0, 0, 1, 1], [], []>} : vector<32x32xf32>, vector<32x96xf32>, vector<32x96xf32> -> vector<32x96xf32>
    %175 = vector.extract_strided_slice %173 {offsets = [0, 0], sizes = [32, 64], strides = [1, 1]} : vector<32x96xf32> to vector<32x64xf32>
    %176 = vector.extract_strided_slice %174 {offsets = [0, 0], sizes = [32, 64], strides = [1, 1]} : vector<32x96xf32> to vector<32x64xf32>
    %177 = arith.addf %175, %176 : vector<32x64xf32>
    %178 = arith.negf %177 : vector<32x64xf32>
    %179 = math.exp %178 : vector<32x64xf32>
    %cst_62 = arith.constant 1.000000e+00 : f32
    %180 = vector.broadcast %cst_62 : f32 to vector<32x64xf32>
    %181 = arith.addf %180, %179 : vector<32x64xf32>
    %182 = arith.divf %180, %181 : vector<32x64xf32>
    %183 = vector.extract_strided_slice %182 {offsets = [0, 0], sizes = [32, 32], strides = [1, 1]} : vector<32x64xf32> to vector<32x32xf32>
    %184 = vector.extract_strided_slice %182 {offsets = [0, 32], sizes = [32, 32], strides = [1, 1]} : vector<32x64xf32> to vector<32x32xf32>
    %185 = vector.extract_strided_slice %173 {offsets = [0, 64], sizes = [32, 32], strides = [1, 1]} : vector<32x96xf32> to vector<32x32xf32>
    %186 = vector.extract_strided_slice %174 {offsets = [0, 64], sizes = [32, 32], strides = [1, 1]} : vector<32x96xf32> to vector<32x32xf32>
    %187 = arith.addf %186, %11 : vector<32x32xf32>
    %188 = arith.mulf %183, %187 : vector<32x32xf32>
    %189 = arith.addf %185, %188 : vector<32x32xf32>
    %190 = math.tanh %189 : vector<32x32xf32>
    %cst_63 = arith.constant 1.000000e+00 : f32
    %191 = vector.broadcast %cst_63 : f32 to vector<32x32xf32>
    %192 = arith.subf %191, %184 : vector<32x32xf32>
    %193 = arith.mulf %192, %190 : vector<32x32xf32>
    %194 = arith.mulf %184, %169 : vector<32x32xf32>
    %195 = arith.addf %193, %194 : vector<32x32xf32>
    %cst_64 = arith.constant dense<0.000000e+00> : vector<32x96xf32>
    %196 = tpu.matmul %195, %12, %cst_64 {dimension_numbers = #tpu.dot_dimension_numbers<[1], [0], [0], [1], [0, 0, 1, 1], [], []>} : vector<32x32xf32>, vector<32x96xf32>, vector<32x96xf32> -> vector<32x96xf32>
    %197 = arith.addf %196, %15 : vector<32x96xf32>
    %c192_65 = arith.constant 192 : index
    %c0_66 = arith.constant 0 : index
    %198 = vector.load %arg12[%c192_65, %c0_66] : memref<480x96xf32, #tpu.memory_space<vmem>>, vector<32x96xf32>
    tpu.vector_store %arg12[%c192_65, %c0_66], %197 {strides = array<i32>} : memref<480x96xf32, #tpu.memory_space<vmem>>, vector<32x96xf32>,
    %c224 = arith.constant 224 : index
    %c0_67 = arith.constant 0 : index
    %199 = vector.load %arg12[%c224, %c0_67] : memref<480x96xf32, #tpu.memory_space<vmem>>, vector<32x96xf32>
    %cst_68 = arith.constant dense<0.000000e+00> : vector<32x96xf32>
    %200 = tpu.matmul %195, %8, %cst_68 {dimension_numbers = #tpu.dot_dimension_numbers<[1], [0], [0], [1], [0, 0, 1, 1], [], []>} : vector<32x32xf32>, vector<32x96xf32>, vector<32x96xf32> -> vector<32x96xf32>
    %201 = vector.extract_strided_slice %199 {offsets = [0, 0], sizes = [32, 64], strides = [1, 1]} : vector<32x96xf32> to vector<32x64xf32>
    %202 = vector.extract_strided_slice %200 {offsets = [0, 0], sizes = [32, 64], strides = [1, 1]} : vector<32x96xf32> to vector<32x64xf32>
    %203 = arith.addf %201, %202 : vector<32x64xf32>
    %204 = arith.negf %203 : vector<32x64xf32>
    %205 = math.exp %204 : vector<32x64xf32>
    %cst_69 = arith.constant 1.000000e+00 : f32
    %206 = vector.broadcast %cst_69 : f32 to vector<32x64xf32>
    %207 = arith.addf %206, %205 : vector<32x64xf32>
    %208 = arith.divf %206, %207 : vector<32x64xf32>
    %209 = vector.extract_strided_slice %208 {offsets = [0, 0], sizes = [32, 32], strides = [1, 1]} : vector<32x64xf32> to vector<32x32xf32>
    %210 = vector.extract_strided_slice %208 {offsets = [0, 32], sizes = [32, 32], strides = [1, 1]} : vector<32x64xf32> to vector<32x32xf32>
    %211 = vector.extract_strided_slice %199 {offsets = [0, 64], sizes = [32, 32], strides = [1, 1]} : vector<32x96xf32> to vector<32x32xf32>
    %212 = vector.extract_strided_slice %200 {offsets = [0, 64], sizes = [32, 32], strides = [1, 1]} : vector<32x96xf32> to vector<32x32xf32>
    %213 = arith.addf %212, %11 : vector<32x32xf32>
    %214 = arith.mulf %209, %213 : vector<32x32xf32>
    %215 = arith.addf %211, %214 : vector<32x32xf32>
    %216 = math.tanh %215 : vector<32x32xf32>
    %cst_70 = arith.constant 1.000000e+00 : f32
    %217 = vector.broadcast %cst_70 : f32 to vector<32x32xf32>
    %218 = arith.subf %217, %210 : vector<32x32xf32>
    %219 = arith.mulf %218, %216 : vector<32x32xf32>
    %220 = arith.mulf %210, %195 : vector<32x32xf32>
    %221 = arith.addf %219, %220 : vector<32x32xf32>
    %cst_71 = arith.constant dense<0.000000e+00> : vector<32x96xf32>
    %222 = tpu.matmul %221, %12, %cst_71 {dimension_numbers = #tpu.dot_dimension_numbers<[1], [0], [0], [1], [0, 0, 1, 1], [], []>} : vector<32x32xf32>, vector<32x96xf32>, vector<32x96xf32> -> vector<32x96xf32>
    %223 = arith.addf %222, %15 : vector<32x96xf32>
    %c224_72 = arith.constant 224 : index
    %c0_73 = arith.constant 0 : index
    %224 = vector.load %arg12[%c224_72, %c0_73] : memref<480x96xf32, #tpu.memory_space<vmem>>, vector<32x96xf32>
    tpu.vector_store %arg12[%c224_72, %c0_73], %223 {strides = array<i32>} : memref<480x96xf32, #tpu.memory_space<vmem>>, vector<32x96xf32>,
    %c256 = arith.constant 256 : index
    %c0_74 = arith.constant 0 : index
    %225 = vector.load %arg12[%c256, %c0_74] : memref<480x96xf32, #tpu.memory_space<vmem>>, vector<32x96xf32>
    %cst_75 = arith.constant dense<0.000000e+00> : vector<32x96xf32>
    %226 = tpu.matmul %221, %8, %cst_75 {dimension_numbers = #tpu.dot_dimension_numbers<[1], [0], [0], [1], [0, 0, 1, 1], [], []>} : vector<32x32xf32>, vector<32x96xf32>, vector<32x96xf32> -> vector<32x96xf32>
    %227 = vector.extract_strided_slice %225 {offsets = [0, 0], sizes = [32, 64], strides = [1, 1]} : vector<32x96xf32> to vector<32x64xf32>
    %228 = vector.extract_strided_slice %226 {offsets = [0, 0], sizes = [32, 64], strides = [1, 1]} : vector<32x96xf32> to vector<32x64xf32>
    %229 = arith.addf %227, %228 : vector<32x64xf32>
    %230 = arith.negf %229 : vector<32x64xf32>
    %231 = math.exp %230 : vector<32x64xf32>
    %cst_76 = arith.constant 1.000000e+00 : f32
    %232 = vector.broadcast %cst_76 : f32 to vector<32x64xf32>
    %233 = arith.addf %232, %231 : vector<32x64xf32>
    %234 = arith.divf %232, %233 : vector<32x64xf32>
    %235 = vector.extract_strided_slice %234 {offsets = [0, 0], sizes = [32, 32], strides = [1, 1]} : vector<32x64xf32> to vector<32x32xf32>
    %236 = vector.extract_strided_slice %234 {offsets = [0, 32], sizes = [32, 32], strides = [1, 1]} : vector<32x64xf32> to vector<32x32xf32>
    %237 = vector.extract_strided_slice %225 {offsets = [0, 64], sizes = [32, 32], strides = [1, 1]} : vector<32x96xf32> to vector<32x32xf32>
    %238 = vector.extract_strided_slice %226 {offsets = [0, 64], sizes = [32, 32], strides = [1, 1]} : vector<32x96xf32> to vector<32x32xf32>
    %239 = arith.addf %238, %11 : vector<32x32xf32>
    %240 = arith.mulf %235, %239 : vector<32x32xf32>
    %241 = arith.addf %237, %240 : vector<32x32xf32>
    %242 = math.tanh %241 : vector<32x32xf32>
    %cst_77 = arith.constant 1.000000e+00 : f32
    %243 = vector.broadcast %cst_77 : f32 to vector<32x32xf32>
    %244 = arith.subf %243, %236 : vector<32x32xf32>
    %245 = arith.mulf %244, %242 : vector<32x32xf32>
    %246 = arith.mulf %236, %221 : vector<32x32xf32>
    %247 = arith.addf %245, %246 : vector<32x32xf32>
    %cst_78 = arith.constant dense<0.000000e+00> : vector<32x96xf32>
    %248 = tpu.matmul %247, %12, %cst_78 {dimension_numbers = #tpu.dot_dimension_numbers<[1], [0], [0], [1], [0, 0, 1, 1], [], []>} : vector<32x32xf32>, vector<32x96xf32>, vector<32x96xf32> -> vector<32x96xf32>
    %249 = arith.addf %248, %15 : vector<32x96xf32>
    %c256_79 = arith.constant 256 : index
    %c0_80 = arith.constant 0 : index
    %250 = vector.load %arg12[%c256_79, %c0_80] : memref<480x96xf32, #tpu.memory_space<vmem>>, vector<32x96xf32>
    tpu.vector_store %arg12[%c256_79, %c0_80], %249 {strides = array<i32>} : memref<480x96xf32, #tpu.memory_space<vmem>>, vector<32x96xf32>,
    %c288 = arith.constant 288 : index
    %c0_81 = arith.constant 0 : index
    %251 = vector.load %arg12[%c288, %c0_81] : memref<480x96xf32, #tpu.memory_space<vmem>>, vector<32x96xf32>
    %cst_82 = arith.constant dense<0.000000e+00> : vector<32x96xf32>
    %252 = tpu.matmul %247, %8, %cst_82 {dimension_numbers = #tpu.dot_dimension_numbers<[1], [0], [0], [1], [0, 0, 1, 1], [], []>} : vector<32x32xf32>, vector<32x96xf32>, vector<32x96xf32> -> vector<32x96xf32>
    %253 = vector.extract_strided_slice %251 {offsets = [0, 0], sizes = [32, 64], strides = [1, 1]} : vector<32x96xf32> to vector<32x64xf32>
    %254 = vector.extract_strided_slice %252 {offsets = [0, 0], sizes = [32, 64], strides = [1, 1]} : vector<32x96xf32> to vector<32x64xf32>
    %255 = arith.addf %253, %254 : vector<32x64xf32>
    %256 = arith.negf %255 : vector<32x64xf32>
    %257 = math.exp %256 : vector<32x64xf32>
    %cst_83 = arith.constant 1.000000e+00 : f32
    %258 = vector.broadcast %cst_83 : f32 to vector<32x64xf32>
    %259 = arith.addf %258, %257 : vector<32x64xf32>
    %260 = arith.divf %258, %259 : vector<32x64xf32>
    %261 = vector.extract_strided_slice %260 {offsets = [0, 0], sizes = [32, 32], strides = [1, 1]} : vector<32x64xf32> to vector<32x32xf32>
    %262 = vector.extract_strided_slice %260 {offsets = [0, 32], sizes = [32, 32], strides = [1, 1]} : vector<32x64xf32> to vector<32x32xf32>
    %263 = vector.extract_strided_slice %251 {offsets = [0, 64], sizes = [32, 32], strides = [1, 1]} : vector<32x96xf32> to vector<32x32xf32>
    %264 = vector.extract_strided_slice %252 {offsets = [0, 64], sizes = [32, 32], strides = [1, 1]} : vector<32x96xf32> to vector<32x32xf32>
    %265 = arith.addf %264, %11 : vector<32x32xf32>
    %266 = arith.mulf %261, %265 : vector<32x32xf32>
    %267 = arith.addf %263, %266 : vector<32x32xf32>
    %268 = math.tanh %267 : vector<32x32xf32>
    %cst_84 = arith.constant 1.000000e+00 : f32
    %269 = vector.broadcast %cst_84 : f32 to vector<32x32xf32>
    %270 = arith.subf %269, %262 : vector<32x32xf32>
    %271 = arith.mulf %270, %268 : vector<32x32xf32>
    %272 = arith.mulf %262, %247 : vector<32x32xf32>
    %273 = arith.addf %271, %272 : vector<32x32xf32>
    %cst_85 = arith.constant dense<0.000000e+00> : vector<32x96xf32>
    %274 = tpu.matmul %273, %12, %cst_85 {dimension_numbers = #tpu.dot_dimension_numbers<[1], [0], [0], [1], [0, 0, 1, 1], [], []>} : vector<32x32xf32>, vector<32x96xf32>, vector<32x96xf32> -> vector<32x96xf32>
    %275 = arith.addf %274, %15 : vector<32x96xf32>
    %c288_86 = arith.constant 288 : index
    %c0_87 = arith.constant 0 : index
    %276 = vector.load %arg12[%c288_86, %c0_87] : memref<480x96xf32, #tpu.memory_space<vmem>>, vector<32x96xf32>
    tpu.vector_store %arg12[%c288_86, %c0_87], %275 {strides = array<i32>} : memref<480x96xf32, #tpu.memory_space<vmem>>, vector<32x96xf32>,
    %c320 = arith.constant 320 : index
    %c0_88 = arith.constant 0 : index
    %277 = vector.load %arg12[%c320, %c0_88] : memref<480x96xf32, #tpu.memory_space<vmem>>, vector<32x96xf32>
    %cst_89 = arith.constant dense<0.000000e+00> : vector<32x96xf32>
    %278 = tpu.matmul %273, %8, %cst_89 {dimension_numbers = #tpu.dot_dimension_numbers<[1], [0], [0], [1], [0, 0, 1, 1], [], []>} : vector<32x32xf32>, vector<32x96xf32>, vector<32x96xf32> -> vector<32x96xf32>
    %279 = vector.extract_strided_slice %277 {offsets = [0, 0], sizes = [32, 64], strides = [1, 1]} : vector<32x96xf32> to vector<32x64xf32>
    %280 = vector.extract_strided_slice %278 {offsets = [0, 0], sizes = [32, 64], strides = [1, 1]} : vector<32x96xf32> to vector<32x64xf32>
    %281 = arith.addf %279, %280 : vector<32x64xf32>
    %282 = arith.negf %281 : vector<32x64xf32>
    %283 = math.exp %282 : vector<32x64xf32>
    %cst_90 = arith.constant 1.000000e+00 : f32
    %284 = vector.broadcast %cst_90 : f32 to vector<32x64xf32>
    %285 = arith.addf %284, %283 : vector<32x64xf32>
    %286 = arith.divf %284, %285 : vector<32x64xf32>
    %287 = vector.extract_strided_slice %286 {offsets = [0, 0], sizes = [32, 32], strides = [1, 1]} : vector<32x64xf32> to vector<32x32xf32>
    %288 = vector.extract_strided_slice %286 {offsets = [0, 32], sizes = [32, 32], strides = [1, 1]} : vector<32x64xf32> to vector<32x32xf32>
    %289 = vector.extract_strided_slice %277 {offsets = [0, 64], sizes = [32, 32], strides = [1, 1]} : vector<32x96xf32> to vector<32x32xf32>
    %290 = vector.extract_strided_slice %278 {offsets = [0, 64], sizes = [32, 32], strides = [1, 1]} : vector<32x96xf32> to vector<32x32xf32>
    %291 = arith.addf %290, %11 : vector<32x32xf32>
    %292 = arith.mulf %287, %291 : vector<32x32xf32>
    %293 = arith.addf %289, %292 : vector<32x32xf32>
    %294 = math.tanh %293 : vector<32x32xf32>
    %cst_91 = arith.constant 1.000000e+00 : f32
    %295 = vector.broadcast %cst_91 : f32 to vector<32x32xf32>
    %296 = arith.subf %295, %288 : vector<32x32xf32>
    %297 = arith.mulf %296, %294 : vector<32x32xf32>
    %298 = arith.mulf %288, %273 : vector<32x32xf32>
    %299 = arith.addf %297, %298 : vector<32x32xf32>
    %cst_92 = arith.constant dense<0.000000e+00> : vector<32x96xf32>
    %300 = tpu.matmul %299, %12, %cst_92 {dimension_numbers = #tpu.dot_dimension_numbers<[1], [0], [0], [1], [0, 0, 1, 1], [], []>} : vector<32x32xf32>, vector<32x96xf32>, vector<32x96xf32> -> vector<32x96xf32>
    %301 = arith.addf %300, %15 : vector<32x96xf32>
    %c320_93 = arith.constant 320 : index
    %c0_94 = arith.constant 0 : index
    %302 = vector.load %arg12[%c320_93, %c0_94] : memref<480x96xf32, #tpu.memory_space<vmem>>, vector<32x96xf32>
    tpu.vector_store %arg12[%c320_93, %c0_94], %301 {strides = array<i32>} : memref<480x96xf32, #tpu.memory_space<vmem>>, vector<32x96xf32>,
    %c352 = arith.constant 352 : index
    %c0_95 = arith.constant 0 : index
    %303 = vector.load %arg12[%c352, %c0_95] : memref<480x96xf32, #tpu.memory_space<vmem>>, vector<32x96xf32>
    %cst_96 = arith.constant dense<0.000000e+00> : vector<32x96xf32>
    %304 = tpu.matmul %299, %8, %cst_96 {dimension_numbers = #tpu.dot_dimension_numbers<[1], [0], [0], [1], [0, 0, 1, 1], [], []>} : vector<32x32xf32>, vector<32x96xf32>, vector<32x96xf32> -> vector<32x96xf32>
    %305 = vector.extract_strided_slice %303 {offsets = [0, 0], sizes = [32, 64], strides = [1, 1]} : vector<32x96xf32> to vector<32x64xf32>
    %306 = vector.extract_strided_slice %304 {offsets = [0, 0], sizes = [32, 64], strides = [1, 1]} : vector<32x96xf32> to vector<32x64xf32>
    %307 = arith.addf %305, %306 : vector<32x64xf32>
    %308 = arith.negf %307 : vector<32x64xf32>
    %309 = math.exp %308 : vector<32x64xf32>
    %cst_97 = arith.constant 1.000000e+00 : f32
    %310 = vector.broadcast %cst_97 : f32 to vector<32x64xf32>
    %311 = arith.addf %310, %309 : vector<32x64xf32>
    %312 = arith.divf %310, %311 : vector<32x64xf32>
    %313 = vector.extract_strided_slice %312 {offsets = [0, 0], sizes = [32, 32], strides = [1, 1]} : vector<32x64xf32> to vector<32x32xf32>
    %314 = vector.extract_strided_slice %312 {offsets = [0, 32], sizes = [32, 32], strides = [1, 1]} : vector<32x64xf32> to vector<32x32xf32>
    %315 = vector.extract_strided_slice %303 {offsets = [0, 64], sizes = [32, 32], strides = [1, 1]} : vector<32x96xf32> to vector<32x32xf32>
    %316 = vector.extract_strided_slice %304 {offsets = [0, 64], sizes = [32, 32], strides = [1, 1]} : vector<32x96xf32> to vector<32x32xf32>
    %317 = arith.addf %316, %11 : vector<32x32xf32>
    %318 = arith.mulf %313, %317 : vector<32x32xf32>
    %319 = arith.addf %315, %318 : vector<32x32xf32>
    %320 = math.tanh %319 : vector<32x32xf32>
    %cst_98 = arith.constant 1.000000e+00 : f32
    %321 = vector.broadcast %cst_98 : f32 to vector<32x32xf32>
    %322 = arith.subf %321, %314 : vector<32x32xf32>
    %323 = arith.mulf %322, %320 : vector<32x32xf32>
    %324 = arith.mulf %314, %299 : vector<32x32xf32>
    %325 = arith.addf %323, %324 : vector<32x32xf32>
    %cst_99 = arith.constant dense<0.000000e+00> : vector<32x96xf32>
    %326 = tpu.matmul %325, %12, %cst_99 {dimension_numbers = #tpu.dot_dimension_numbers<[1], [0], [0], [1], [0, 0, 1, 1], [], []>} : vector<32x32xf32>, vector<32x96xf32>, vector<32x96xf32> -> vector<32x96xf32>
    %327 = arith.addf %326, %15 : vector<32x96xf32>
    %c352_100 = arith.constant 352 : index
    %c0_101 = arith.constant 0 : index
    %328 = vector.load %arg12[%c352_100, %c0_101] : memref<480x96xf32, #tpu.memory_space<vmem>>, vector<32x96xf32>
    tpu.vector_store %arg12[%c352_100, %c0_101], %327 {strides = array<i32>} : memref<480x96xf32, #tpu.memory_space<vmem>>, vector<32x96xf32>,
    %c384 = arith.constant 384 : index
    %c0_102 = arith.constant 0 : index
    %329 = vector.load %arg12[%c384, %c0_102] : memref<480x96xf32, #tpu.memory_space<vmem>>, vector<32x96xf32>
    %cst_103 = arith.constant dense<0.000000e+00> : vector<32x96xf32>
    %330 = tpu.matmul %325, %8, %cst_103 {dimension_numbers = #tpu.dot_dimension_numbers<[1], [0], [0], [1], [0, 0, 1, 1], [], []>} : vector<32x32xf32>, vector<32x96xf32>, vector<32x96xf32> -> vector<32x96xf32>
    %331 = vector.extract_strided_slice %329 {offsets = [0, 0], sizes = [32, 64], strides = [1, 1]} : vector<32x96xf32> to vector<32x64xf32>
    %332 = vector.extract_strided_slice %330 {offsets = [0, 0], sizes = [32, 64], strides = [1, 1]} : vector<32x96xf32> to vector<32x64xf32>
    %333 = arith.addf %331, %332 : vector<32x64xf32>
    %334 = arith.negf %333 : vector<32x64xf32>
    %335 = math.exp %334 : vector<32x64xf32>
    %cst_104 = arith.constant 1.000000e+00 : f32
    %336 = vector.broadcast %cst_104 : f32 to vector<32x64xf32>
    %337 = arith.addf %336, %335 : vector<32x64xf32>
    %338 = arith.divf %336, %337 : vector<32x64xf32>
    %339 = vector.extract_strided_slice %338 {offsets = [0, 0], sizes = [32, 32], strides = [1, 1]} : vector<32x64xf32> to vector<32x32xf32>
    %340 = vector.extract_strided_slice %338 {offsets = [0, 32], sizes = [32, 32], strides = [1, 1]} : vector<32x64xf32> to vector<32x32xf32>
    %341 = vector.extract_strided_slice %329 {offsets = [0, 64], sizes = [32, 32], strides = [1, 1]} : vector<32x96xf32> to vector<32x32xf32>
    %342 = vector.extract_strided_slice %330 {offsets = [0, 64], sizes = [32, 32], strides = [1, 1]} : vector<32x96xf32> to vector<32x32xf32>
    %343 = arith.addf %342, %11 : vector<32x32xf32>
    %344 = arith.mulf %339, %343 : vector<32x32xf32>
    %345 = arith.addf %341, %344 : vector<32x32xf32>
    %346 = math.tanh %345 : vector<32x32xf32>
    %cst_105 = arith.constant 1.000000e+00 : f32
    %347 = vector.broadcast %cst_105 : f32 to vector<32x32xf32>
    %348 = arith.subf %347, %340 : vector<32x32xf32>
    %349 = arith.mulf %348, %346 : vector<32x32xf32>
    %350 = arith.mulf %340, %325 : vector<32x32xf32>
    %351 = arith.addf %349, %350 : vector<32x32xf32>
    %cst_106 = arith.constant dense<0.000000e+00> : vector<32x96xf32>
    %352 = tpu.matmul %351, %12, %cst_106 {dimension_numbers = #tpu.dot_dimension_numbers<[1], [0], [0], [1], [0, 0, 1, 1], [], []>} : vector<32x32xf32>, vector<32x96xf32>, vector<32x96xf32> -> vector<32x96xf32>
    %353 = arith.addf %352, %15 : vector<32x96xf32>
    %c384_107 = arith.constant 384 : index
    %c0_108 = arith.constant 0 : index
    %354 = vector.load %arg12[%c384_107, %c0_108] : memref<480x96xf32, #tpu.memory_space<vmem>>, vector<32x96xf32>
    tpu.vector_store %arg12[%c384_107, %c0_108], %353 {strides = array<i32>} : memref<480x96xf32, #tpu.memory_space<vmem>>, vector<32x96xf32>,
    %c416 = arith.constant 416 : index
    %c0_109 = arith.constant 0 : index
    %355 = vector.load %arg12[%c416, %c0_109] : memref<480x96xf32, #tpu.memory_space<vmem>>, vector<32x96xf32>
    %cst_110 = arith.constant dense<0.000000e+00> : vector<32x96xf32>
    %356 = tpu.matmul %351, %8, %cst_110 {dimension_numbers = #tpu.dot_dimension_numbers<[1], [0], [0], [1], [0, 0, 1, 1], [], []>} : vector<32x32xf32>, vector<32x96xf32>, vector<32x96xf32> -> vector<32x96xf32>
    %357 = vector.extract_strided_slice %355 {offsets = [0, 0], sizes = [32, 64], strides = [1, 1]} : vector<32x96xf32> to vector<32x64xf32>
    %358 = vector.extract_strided_slice %356 {offsets = [0, 0], sizes = [32, 64], strides = [1, 1]} : vector<32x96xf32> to vector<32x64xf32>
    %359 = arith.addf %357, %358 : vector<32x64xf32>
    %360 = arith.negf %359 : vector<32x64xf32>
    %361 = math.exp %360 : vector<32x64xf32>
    %cst_111 = arith.constant 1.000000e+00 : f32
    %362 = vector.broadcast %cst_111 : f32 to vector<32x64xf32>
    %363 = arith.addf %362, %361 : vector<32x64xf32>
    %364 = arith.divf %362, %363 : vector<32x64xf32>
    %365 = vector.extract_strided_slice %364 {offsets = [0, 0], sizes = [32, 32], strides = [1, 1]} : vector<32x64xf32> to vector<32x32xf32>
    %366 = vector.extract_strided_slice %364 {offsets = [0, 32], sizes = [32, 32], strides = [1, 1]} : vector<32x64xf32> to vector<32x32xf32>
    %367 = vector.extract_strided_slice %355 {offsets = [0, 64], sizes = [32, 32], strides = [1, 1]} : vector<32x96xf32> to vector<32x32xf32>
    %368 = vector.extract_strided_slice %356 {offsets = [0, 64], sizes = [32, 32], strides = [1, 1]} : vector<32x96xf32> to vector<32x32xf32>
    %369 = arith.addf %368, %11 : vector<32x32xf32>
    %370 = arith.mulf %365, %369 : vector<32x32xf32>
    %371 = arith.addf %367, %370 : vector<32x32xf32>
    %372 = math.tanh %371 : vector<32x32xf32>
    %cst_112 = arith.constant 1.000000e+00 : f32
    %373 = vector.broadcast %cst_112 : f32 to vector<32x32xf32>
    %374 = arith.subf %373, %366 : vector<32x32xf32>
    %375 = arith.mulf %374, %372 : vector<32x32xf32>
    %376 = arith.mulf %366, %351 : vector<32x32xf32>
    %377 = arith.addf %375, %376 : vector<32x32xf32>
    %cst_113 = arith.constant dense<0.000000e+00> : vector<32x96xf32>
    %378 = tpu.matmul %377, %12, %cst_113 {dimension_numbers = #tpu.dot_dimension_numbers<[1], [0], [0], [1], [0, 0, 1, 1], [], []>} : vector<32x32xf32>, vector<32x96xf32>, vector<32x96xf32> -> vector<32x96xf32>
    %379 = arith.addf %378, %15 : vector<32x96xf32>
    %c416_114 = arith.constant 416 : index
    %c0_115 = arith.constant 0 : index
    %380 = vector.load %arg12[%c416_114, %c0_115] : memref<480x96xf32, #tpu.memory_space<vmem>>, vector<32x96xf32>
    tpu.vector_store %arg12[%c416_114, %c0_115], %379 {strides = array<i32>} : memref<480x96xf32, #tpu.memory_space<vmem>>, vector<32x96xf32>,
    %c448 = arith.constant 448 : index
    %c0_116 = arith.constant 0 : index
    %381 = vector.load %arg12[%c448, %c0_116] : memref<480x96xf32, #tpu.memory_space<vmem>>, vector<32x96xf32>
    %cst_117 = arith.constant dense<0.000000e+00> : vector<32x96xf32>
    %382 = tpu.matmul %377, %8, %cst_117 {dimension_numbers = #tpu.dot_dimension_numbers<[1], [0], [0], [1], [0, 0, 1, 1], [], []>} : vector<32x32xf32>, vector<32x96xf32>, vector<32x96xf32> -> vector<32x96xf32>
    %383 = vector.extract_strided_slice %381 {offsets = [0, 0], sizes = [32, 64], strides = [1, 1]} : vector<32x96xf32> to vector<32x64xf32>
    %384 = vector.extract_strided_slice %382 {offsets = [0, 0], sizes = [32, 64], strides = [1, 1]} : vector<32x96xf32> to vector<32x64xf32>
    %385 = arith.addf %383, %384 : vector<32x64xf32>
    %386 = arith.negf %385 : vector<32x64xf32>
    %387 = math.exp %386 : vector<32x64xf32>
    %cst_118 = arith.constant 1.000000e+00 : f32
    %388 = vector.broadcast %cst_118 : f32 to vector<32x64xf32>
    %389 = arith.addf %388, %387 : vector<32x64xf32>
    %390 = arith.divf %388, %389 : vector<32x64xf32>
    %391 = vector.extract_strided_slice %390 {offsets = [0, 0], sizes = [32, 32], strides = [1, 1]} : vector<32x64xf32> to vector<32x32xf32>
    %392 = vector.extract_strided_slice %390 {offsets = [0, 32], sizes = [32, 32], strides = [1, 1]} : vector<32x64xf32> to vector<32x32xf32>
    %393 = vector.extract_strided_slice %381 {offsets = [0, 64], sizes = [32, 32], strides = [1, 1]} : vector<32x96xf32> to vector<32x32xf32>
    %394 = vector.extract_strided_slice %382 {offsets = [0, 64], sizes = [32, 32], strides = [1, 1]} : vector<32x96xf32> to vector<32x32xf32>
    %395 = arith.addf %394, %11 : vector<32x32xf32>
    %396 = arith.mulf %391, %395 : vector<32x32xf32>
    %397 = arith.addf %393, %396 : vector<32x32xf32>
    %398 = math.tanh %397 : vector<32x32xf32>
    %cst_119 = arith.constant 1.000000e+00 : f32
    %399 = vector.broadcast %cst_119 : f32 to vector<32x32xf32>
    %400 = arith.subf %399, %392 : vector<32x32xf32>
    %401 = arith.mulf %400, %398 : vector<32x32xf32>
    %402 = arith.mulf %392, %377 : vector<32x32xf32>
    %403 = arith.addf %401, %402 : vector<32x32xf32>
    %cst_120 = arith.constant dense<0.000000e+00> : vector<32x96xf32>
    %404 = tpu.matmul %403, %12, %cst_120 {dimension_numbers = #tpu.dot_dimension_numbers<[1], [0], [0], [1], [0, 0, 1, 1], [], []>} : vector<32x32xf32>, vector<32x96xf32>, vector<32x96xf32> -> vector<32x96xf32>
    %405 = arith.addf %404, %15 : vector<32x96xf32>
    %c448_121 = arith.constant 448 : index
    %c0_122 = arith.constant 0 : index
    %406 = vector.load %arg12[%c448_121, %c0_122] : memref<480x96xf32, #tpu.memory_space<vmem>>, vector<32x96xf32>
    tpu.vector_store %arg12[%c448_121, %c0_122], %405 {strides = array<i32>} : memref<480x96xf32, #tpu.memory_space<vmem>>, vector<32x96xf32>,
    %c0_123 = arith.constant 0 : index
    %c0_124 = arith.constant 0 : index
    %c0_125 = arith.constant 0 : index
    %407 = vector.load %arg11[%c0_123, %c0_124, %c0_125] : memref<2x32x32xf32, #tpu.memory_space<vmem>>, vector<1x32x32xf32>
    %408 = vector.shape_cast %407 : vector<1x32x32xf32> to vector<32x32xf32>
    %409 = vector.shape_cast %403 : vector<32x32xf32> to vector<1x32x32xf32>
    tpu.vector_store %arg11[%c0_123, %c0_124, %c0_125], %409 {strides = array<i32>} : memref<2x32x32xf32, #tpu.memory_space<vmem>>, vector<1x32x32xf32>,
    %c0_126 = arith.constant 0 : index
    %c0_127 = arith.constant 0 : index
    %410 = vector.load %arg7[%c0_126, %c0_127] : memref<32x96xf32, #tpu.memory_space<vmem>>, vector<32x96xf32>
    %c0_128 = arith.constant 0 : index
    %c0_129 = arith.constant 0 : index
    %411 = vector.load %arg9[%c0_128, %c0_129] : memref<1x32xf32, #tpu.memory_space<vmem>>, vector<1x32xf32>
    %412 = vector.shape_cast %411 : vector<1x32xf32> to vector<1x32xf32>
    %413 = vector.broadcast %412 : vector<1x32xf32> to vector<32x32xf32>
    %cst_130 = arith.constant 0.000000e+00 : f32
    %414 = vector.broadcast %cst_130 : f32 to vector<32x32xf32>
    %c0_131 = arith.constant 0 : index
    %c0_132 = arith.constant 0 : index
    %415 = vector.load %arg12[%c0_131, %c0_132] : memref<480x96xf32, #tpu.memory_space<vmem>>, vector<32x96xf32>
    %cst_133 = arith.constant dense<0.000000e+00> : vector<32x96xf32>
    %416 = tpu.matmul %414, %410, %cst_133 {dimension_numbers = #tpu.dot_dimension_numbers<[1], [0], [0], [1], [0, 0, 1, 1], [], []>} : vector<32x32xf32>, vector<32x96xf32>, vector<32x96xf32> -> vector<32x96xf32>
    %417 = vector.extract_strided_slice %415 {offsets = [0, 0], sizes = [32, 64], strides = [1, 1]} : vector<32x96xf32> to vector<32x64xf32>
    %418 = vector.extract_strided_slice %416 {offsets = [0, 0], sizes = [32, 64], strides = [1, 1]} : vector<32x96xf32> to vector<32x64xf32>
    %419 = arith.addf %417, %418 : vector<32x64xf32>
    %420 = arith.negf %419 : vector<32x64xf32>
    %421 = math.exp %420 : vector<32x64xf32>
    %cst_134 = arith.constant 1.000000e+00 : f32
    %422 = vector.broadcast %cst_134 : f32 to vector<32x64xf32>
    %423 = arith.addf %422, %421 : vector<32x64xf32>
    %424 = arith.divf %422, %423 : vector<32x64xf32>
    %425 = vector.extract_strided_slice %424 {offsets = [0, 0], sizes = [32, 32], strides = [1, 1]} : vector<32x64xf32> to vector<32x32xf32>
    %426 = vector.extract_strided_slice %424 {offsets = [0, 32], sizes = [32, 32], strides = [1, 1]} : vector<32x64xf32> to vector<32x32xf32>
    %427 = vector.extract_strided_slice %415 {offsets = [0, 64], sizes = [32, 32], strides = [1, 1]} : vector<32x96xf32> to vector<32x32xf32>
    %428 = vector.extract_strided_slice %416 {offsets = [0, 64], sizes = [32, 32], strides = [1, 1]} : vector<32x96xf32> to vector<32x32xf32>
    %429 = arith.addf %428, %413 : vector<32x32xf32>
    %430 = arith.mulf %425, %429 : vector<32x32xf32>
    %431 = arith.addf %427, %430 : vector<32x32xf32>
    %432 = math.tanh %431 : vector<32x32xf32>
    %cst_135 = arith.constant 1.000000e+00 : f32
    %433 = vector.broadcast %cst_135 : f32 to vector<32x32xf32>
    %434 = arith.subf %433, %426 : vector<32x32xf32>
    %435 = arith.mulf %434, %432 : vector<32x32xf32>
    %436 = arith.mulf %426, %414 : vector<32x32xf32>
    %437 = arith.addf %435, %436 : vector<32x32xf32>
    %c0_136 = arith.constant 0 : index
    %c0_137 = arith.constant 0 : index
    %438 = vector.load %arg10[%c0_136, %c0_137] : memref<32x480xf32, #tpu.memory_space<vmem>>, vector<32x32xf32>
    tpu.vector_store %arg10[%c0_136, %c0_137], %437 {strides = array<i32>} : memref<32x480xf32, #tpu.memory_space<vmem>>, vector<32x32xf32>,
    %c32_138 = arith.constant 32 : index
    %c0_139 = arith.constant 0 : index
    %439 = vector.load %arg12[%c32_138, %c0_139] : memref<480x96xf32, #tpu.memory_space<vmem>>, vector<32x96xf32>
    %cst_140 = arith.constant dense<0.000000e+00> : vector<32x96xf32>
    %440 = tpu.matmul %437, %410, %cst_140 {dimension_numbers = #tpu.dot_dimension_numbers<[1], [0], [0], [1], [0, 0, 1, 1], [], []>} : vector<32x32xf32>, vector<32x96xf32>, vector<32x96xf32> -> vector<32x96xf32>
    %441 = vector.extract_strided_slice %439 {offsets = [0, 0], sizes = [32, 64], strides = [1, 1]} : vector<32x96xf32> to vector<32x64xf32>
    %442 = vector.extract_strided_slice %440 {offsets = [0, 0], sizes = [32, 64], strides = [1, 1]} : vector<32x96xf32> to vector<32x64xf32>
    %443 = arith.addf %441, %442 : vector<32x64xf32>
    %444 = arith.negf %443 : vector<32x64xf32>
    %445 = math.exp %444 : vector<32x64xf32>
    %cst_141 = arith.constant 1.000000e+00 : f32
    %446 = vector.broadcast %cst_141 : f32 to vector<32x64xf32>
    %447 = arith.addf %446, %445 : vector<32x64xf32>
    %448 = arith.divf %446, %447 : vector<32x64xf32>
    %449 = vector.extract_strided_slice %448 {offsets = [0, 0], sizes = [32, 32], strides = [1, 1]} : vector<32x64xf32> to vector<32x32xf32>
    %450 = vector.extract_strided_slice %448 {offsets = [0, 32], sizes = [32, 32], strides = [1, 1]} : vector<32x64xf32> to vector<32x32xf32>
    %451 = vector.extract_strided_slice %439 {offsets = [0, 64], sizes = [32, 32], strides = [1, 1]} : vector<32x96xf32> to vector<32x32xf32>
    %452 = vector.extract_strided_slice %440 {offsets = [0, 64], sizes = [32, 32], strides = [1, 1]} : vector<32x96xf32> to vector<32x32xf32>
    %453 = arith.addf %452, %413 : vector<32x32xf32>
    %454 = arith.mulf %449, %453 : vector<32x32xf32>
    %455 = arith.addf %451, %454 : vector<32x32xf32>
    %456 = math.tanh %455 : vector<32x32xf32>
    %cst_142 = arith.constant 1.000000e+00 : f32
    %457 = vector.broadcast %cst_142 : f32 to vector<32x32xf32>
    %458 = arith.subf %457, %450 : vector<32x32xf32>
    %459 = arith.mulf %458, %456 : vector<32x32xf32>
    %460 = arith.mulf %450, %437 : vector<32x32xf32>
    %461 = arith.addf %459, %460 : vector<32x32xf32>
    %c0_143 = arith.constant 0 : index
    %c32_144 = arith.constant 32 : index
    %462 = vector.load %arg10[%c0_143, %c32_144] : memref<32x480xf32, #tpu.memory_space<vmem>>, vector<32x32xf32>
    tpu.vector_store %arg10[%c0_143, %c32_144], %461 {strides = array<i32>} : memref<32x480xf32, #tpu.memory_space<vmem>>, vector<32x32xf32>,
    %c64_145 = arith.constant 64 : index
    %c0_146 = arith.constant 0 : index
    %463 = vector.load %arg12[%c64_145, %c0_146] : memref<480x96xf32, #tpu.memory_space<vmem>>, vector<32x96xf32>
    %cst_147 = arith.constant dense<0.000000e+00> : vector<32x96xf32>
    %464 = tpu.matmul %461, %410, %cst_147 {dimension_numbers = #tpu.dot_dimension_numbers<[1], [0], [0], [1], [0, 0, 1, 1], [], []>} : vector<32x32xf32>, vector<32x96xf32>, vector<32x96xf32> -> vector<32x96xf32>
    %465 = vector.extract_strided_slice %463 {offsets = [0, 0], sizes = [32, 64], strides = [1, 1]} : vector<32x96xf32> to vector<32x64xf32>
    %466 = vector.extract_strided_slice %464 {offsets = [0, 0], sizes = [32, 64], strides = [1, 1]} : vector<32x96xf32> to vector<32x64xf32>
    %467 = arith.addf %465, %466 : vector<32x64xf32>
    %468 = arith.negf %467 : vector<32x64xf32>
    %469 = math.exp %468 : vector<32x64xf32>
    %cst_148 = arith.constant 1.000000e+00 : f32
    %470 = vector.broadcast %cst_148 : f32 to vector<32x64xf32>
    %471 = arith.addf %470, %469 : vector<32x64xf32>
    %472 = arith.divf %470, %471 : vector<32x64xf32>
    %473 = vector.extract_strided_slice %472 {offsets = [0, 0], sizes = [32, 32], strides = [1, 1]} : vector<32x64xf32> to vector<32x32xf32>
    %474 = vector.extract_strided_slice %472 {offsets = [0, 32], sizes = [32, 32], strides = [1, 1]} : vector<32x64xf32> to vector<32x32xf32>
    %475 = vector.extract_strided_slice %463 {offsets = [0, 64], sizes = [32, 32], strides = [1, 1]} : vector<32x96xf32> to vector<32x32xf32>
    %476 = vector.extract_strided_slice %464 {offsets = [0, 64], sizes = [32, 32], strides = [1, 1]} : vector<32x96xf32> to vector<32x32xf32>
    %477 = arith.addf %476, %413 : vector<32x32xf32>
    %478 = arith.mulf %473, %477 : vector<32x32xf32>
    %479 = arith.addf %475, %478 : vector<32x32xf32>
    %480 = math.tanh %479 : vector<32x32xf32>
    %cst_149 = arith.constant 1.000000e+00 : f32
    %481 = vector.broadcast %cst_149 : f32 to vector<32x32xf32>
    %482 = arith.subf %481, %474 : vector<32x32xf32>
    %483 = arith.mulf %482, %480 : vector<32x32xf32>
    %484 = arith.mulf %474, %461 : vector<32x32xf32>
    %485 = arith.addf %483, %484 : vector<32x32xf32>
    %c0_150 = arith.constant 0 : index
    %c64_151 = arith.constant 64 : index
    %486 = vector.load %arg10[%c0_150, %c64_151] : memref<32x480xf32, #tpu.memory_space<vmem>>, vector<32x32xf32>
    tpu.vector_store %arg10[%c0_150, %c64_151], %485 {strides = array<i32>} : memref<32x480xf32, #tpu.memory_space<vmem>>, vector<32x32xf32>,
    %c96_152 = arith.constant 96 : index
    %c0_153 = arith.constant 0 : index
    %487 = vector.load %arg12[%c96_152, %c0_153] : memref<480x96xf32, #tpu.memory_space<vmem>>, vector<32x96xf32>
    %cst_154 = arith.constant dense<0.000000e+00> : vector<32x96xf32>
    %488 = tpu.matmul %485, %410, %cst_154 {dimension_numbers = #tpu.dot_dimension_numbers<[1], [0], [0], [1], [0, 0, 1, 1], [], []>} : vector<32x32xf32>, vector<32x96xf32>, vector<32x96xf32> -> vector<32x96xf32>
    %489 = vector.extract_strided_slice %487 {offsets = [0, 0], sizes = [32, 64], strides = [1, 1]} : vector<32x96xf32> to vector<32x64xf32>
    %490 = vector.extract_strided_slice %488 {offsets = [0, 0], sizes = [32, 64], strides = [1, 1]} : vector<32x96xf32> to vector<32x64xf32>
    %491 = arith.addf %489, %490 : vector<32x64xf32>
    %492 = arith.negf %491 : vector<32x64xf32>
    %493 = math.exp %492 : vector<32x64xf32>
    %cst_155 = arith.constant 1.000000e+00 : f32
    %494 = vector.broadcast %cst_155 : f32 to vector<32x64xf32>
    %495 = arith.addf %494, %493 : vector<32x64xf32>
    %496 = arith.divf %494, %495 : vector<32x64xf32>
    %497 = vector.extract_strided_slice %496 {offsets = [0, 0], sizes = [32, 32], strides = [1, 1]} : vector<32x64xf32> to vector<32x32xf32>
    %498 = vector.extract_strided_slice %496 {offsets = [0, 32], sizes = [32, 32], strides = [1, 1]} : vector<32x64xf32> to vector<32x32xf32>
    %499 = vector.extract_strided_slice %487 {offsets = [0, 64], sizes = [32, 32], strides = [1, 1]} : vector<32x96xf32> to vector<32x32xf32>
    %500 = vector.extract_strided_slice %488 {offsets = [0, 64], sizes = [32, 32], strides = [1, 1]} : vector<32x96xf32> to vector<32x32xf32>
    %501 = arith.addf %500, %413 : vector<32x32xf32>
    %502 = arith.mulf %497, %501 : vector<32x32xf32>
    %503 = arith.addf %499, %502 : vector<32x32xf32>
    %504 = math.tanh %503 : vector<32x32xf32>
    %cst_156 = arith.constant 1.000000e+00 : f32
    %505 = vector.broadcast %cst_156 : f32 to vector<32x32xf32>
    %506 = arith.subf %505, %498 : vector<32x32xf32>
    %507 = arith.mulf %506, %504 : vector<32x32xf32>
    %508 = arith.mulf %498, %485 : vector<32x32xf32>
    %509 = arith.addf %507, %508 : vector<32x32xf32>
    %c0_157 = arith.constant 0 : index
    %c96_158 = arith.constant 96 : index
    %510 = vector.load %arg10[%c0_157, %c96_158] : memref<32x480xf32, #tpu.memory_space<vmem>>, vector<32x32xf32>
    tpu.vector_store %arg10[%c0_157, %c96_158], %509 {strides = array<i32>} : memref<32x480xf32, #tpu.memory_space<vmem>>, vector<32x32xf32>,
    %c128_159 = arith.constant 128 : index
    %c0_160 = arith.constant 0 : index
    %511 = vector.load %arg12[%c128_159, %c0_160] : memref<480x96xf32, #tpu.memory_space<vmem>>, vector<32x96xf32>
    %cst_161 = arith.constant dense<0.000000e+00> : vector<32x96xf32>
    %512 = tpu.matmul %509, %410, %cst_161 {dimension_numbers = #tpu.dot_dimension_numbers<[1], [0], [0], [1], [0, 0, 1, 1], [], []>} : vector<32x32xf32>, vector<32x96xf32>, vector<32x96xf32> -> vector<32x96xf32>
    %513 = vector.extract_strided_slice %511 {offsets = [0, 0], sizes = [32, 64], strides = [1, 1]} : vector<32x96xf32> to vector<32x64xf32>
    %514 = vector.extract_strided_slice %512 {offsets = [0, 0], sizes = [32, 64], strides = [1, 1]} : vector<32x96xf32> to vector<32x64xf32>
    %515 = arith.addf %513, %514 : vector<32x64xf32>
    %516 = arith.negf %515 : vector<32x64xf32>
    %517 = math.exp %516 : vector<32x64xf32>
    %cst_162 = arith.constant 1.000000e+00 : f32
    %518 = vector.broadcast %cst_162 : f32 to vector<32x64xf32>
    %519 = arith.addf %518, %517 : vector<32x64xf32>
    %520 = arith.divf %518, %519 : vector<32x64xf32>
    %521 = vector.extract_strided_slice %520 {offsets = [0, 0], sizes = [32, 32], strides = [1, 1]} : vector<32x64xf32> to vector<32x32xf32>
    %522 = vector.extract_strided_slice %520 {offsets = [0, 32], sizes = [32, 32], strides = [1, 1]} : vector<32x64xf32> to vector<32x32xf32>
    %523 = vector.extract_strided_slice %511 {offsets = [0, 64], sizes = [32, 32], strides = [1, 1]} : vector<32x96xf32> to vector<32x32xf32>
    %524 = vector.extract_strided_slice %512 {offsets = [0, 64], sizes = [32, 32], strides = [1, 1]} : vector<32x96xf32> to vector<32x32xf32>
    %525 = arith.addf %524, %413 : vector<32x32xf32>
    %526 = arith.mulf %521, %525 : vector<32x32xf32>
    %527 = arith.addf %523, %526 : vector<32x32xf32>
    %528 = math.tanh %527 : vector<32x32xf32>
    %cst_163 = arith.constant 1.000000e+00 : f32
    %529 = vector.broadcast %cst_163 : f32 to vector<32x32xf32>
    %530 = arith.subf %529, %522 : vector<32x32xf32>
    %531 = arith.mulf %530, %528 : vector<32x32xf32>
    %532 = arith.mulf %522, %509 : vector<32x32xf32>
    %533 = arith.addf %531, %532 : vector<32x32xf32>
    %c0_164 = arith.constant 0 : index
    %c128_165 = arith.constant 128 : index
    %534 = vector.load %arg10[%c0_164, %c128_165] : memref<32x480xf32, #tpu.memory_space<vmem>>, vector<32x32xf32>
    tpu.vector_store %arg10[%c0_164, %c128_165], %533 {strides = array<i32>} : memref<32x480xf32, #tpu.memory_space<vmem>>, vector<32x32xf32>,
    %c160_166 = arith.constant 160 : index
    %c0_167 = arith.constant 0 : index
    %535 = vector.load %arg12[%c160_166, %c0_167] : memref<480x96xf32, #tpu.memory_space<vmem>>, vector<32x96xf32>
    %cst_168 = arith.constant dense<0.000000e+00> : vector<32x96xf32>
    %536 = tpu.matmul %533, %410, %cst_168 {dimension_numbers = #tpu.dot_dimension_numbers<[1], [0], [0], [1], [0, 0, 1, 1], [], []>} : vector<32x32xf32>, vector<32x96xf32>, vector<32x96xf32> -> vector<32x96xf32>
    %537 = vector.extract_strided_slice %535 {offsets = [0, 0], sizes = [32, 64], strides = [1, 1]} : vector<32x96xf32> to vector<32x64xf32>
    %538 = vector.extract_strided_slice %536 {offsets = [0, 0], sizes = [32, 64], strides = [1, 1]} : vector<32x96xf32> to vector<32x64xf32>
    %539 = arith.addf %537, %538 : vector<32x64xf32>
    %540 = arith.negf %539 : vector<32x64xf32>
    %541 = math.exp %540 : vector<32x64xf32>
    %cst_169 = arith.constant 1.000000e+00 : f32
    %542 = vector.broadcast %cst_169 : f32 to vector<32x64xf32>
    %543 = arith.addf %542, %541 : vector<32x64xf32>
    %544 = arith.divf %542, %543 : vector<32x64xf32>
    %545 = vector.extract_strided_slice %544 {offsets = [0, 0], sizes = [32, 32], strides = [1, 1]} : vector<32x64xf32> to vector<32x32xf32>
    %546 = vector.extract_strided_slice %544 {offsets = [0, 32], sizes = [32, 32], strides = [1, 1]} : vector<32x64xf32> to vector<32x32xf32>
    %547 = vector.extract_strided_slice %535 {offsets = [0, 64], sizes = [32, 32], strides = [1, 1]} : vector<32x96xf32> to vector<32x32xf32>
    %548 = vector.extract_strided_slice %536 {offsets = [0, 64], sizes = [32, 32], strides = [1, 1]} : vector<32x96xf32> to vector<32x32xf32>
    %549 = arith.addf %548, %413 : vector<32x32xf32>
    %550 = arith.mulf %545, %549 : vector<32x32xf32>
    %551 = arith.addf %547, %550 : vector<32x32xf32>
    %552 = math.tanh %551 : vector<32x32xf32>
    %cst_170 = arith.constant 1.000000e+00 : f32
    %553 = vector.broadcast %cst_170 : f32 to vector<32x32xf32>
    %554 = arith.subf %553, %546 : vector<32x32xf32>
    %555 = arith.mulf %554, %552 : vector<32x32xf32>
    %556 = arith.mulf %546, %533 : vector<32x32xf32>
    %557 = arith.addf %555, %556 : vector<32x32xf32>
    %c0_171 = arith.constant 0 : index
    %c160_172 = arith.constant 160 : index
    %558 = vector.load %arg10[%c0_171, %c160_172] : memref<32x480xf32, #tpu.memory_space<vmem>>, vector<32x32xf32>
    tpu.vector_store %arg10[%c0_171, %c160_172], %557 {strides = array<i32>} : memref<32x480xf32, #tpu.memory_space<vmem>>, vector<32x32xf32>,
    %c192_173 = arith.constant 192 : index
    %c0_174 = arith.constant 0 : index
    %559 = vector.load %arg12[%c192_173, %c0_174] : memref<480x96xf32, #tpu.memory_space<vmem>>, vector<32x96xf32>
    %cst_175 = arith.constant dense<0.000000e+00> : vector<32x96xf32>
    %560 = tpu.matmul %557, %410, %cst_175 {dimension_numbers = #tpu.dot_dimension_numbers<[1], [0], [0], [1], [0, 0, 1, 1], [], []>} : vector<32x32xf32>, vector<32x96xf32>, vector<32x96xf32> -> vector<32x96xf32>
    %561 = vector.extract_strided_slice %559 {offsets = [0, 0], sizes = [32, 64], strides = [1, 1]} : vector<32x96xf32> to vector<32x64xf32>
    %562 = vector.extract_strided_slice %560 {offsets = [0, 0], sizes = [32, 64], strides = [1, 1]} : vector<32x96xf32> to vector<32x64xf32>
    %563 = arith.addf %561, %562 : vector<32x64xf32>
    %564 = arith.negf %563 : vector<32x64xf32>
    %565 = math.exp %564 : vector<32x64xf32>
    %cst_176 = arith.constant 1.000000e+00 : f32
    %566 = vector.broadcast %cst_176 : f32 to vector<32x64xf32>
    %567 = arith.addf %566, %565 : vector<32x64xf32>
    %568 = arith.divf %566, %567 : vector<32x64xf32>
    %569 = vector.extract_strided_slice %568 {offsets = [0, 0], sizes = [32, 32], strides = [1, 1]} : vector<32x64xf32> to vector<32x32xf32>
    %570 = vector.extract_strided_slice %568 {offsets = [0, 32], sizes = [32, 32], strides = [1, 1]} : vector<32x64xf32> to vector<32x32xf32>
    %571 = vector.extract_strided_slice %559 {offsets = [0, 64], sizes = [32, 32], strides = [1, 1]} : vector<32x96xf32> to vector<32x32xf32>
    %572 = vector.extract_strided_slice %560 {offsets = [0, 64], sizes = [32, 32], strides = [1, 1]} : vector<32x96xf32> to vector<32x32xf32>
    %573 = arith.addf %572, %413 : vector<32x32xf32>
    %574 = arith.mulf %569, %573 : vector<32x32xf32>
    %575 = arith.addf %571, %574 : vector<32x32xf32>
    %576 = math.tanh %575 : vector<32x32xf32>
    %cst_177 = arith.constant 1.000000e+00 : f32
    %577 = vector.broadcast %cst_177 : f32 to vector<32x32xf32>
    %578 = arith.subf %577, %570 : vector<32x32xf32>
    %579 = arith.mulf %578, %576 : vector<32x32xf32>
    %580 = arith.mulf %570, %557 : vector<32x32xf32>
    %581 = arith.addf %579, %580 : vector<32x32xf32>
    %c0_178 = arith.constant 0 : index
    %c192_179 = arith.constant 192 : index
    %582 = vector.load %arg10[%c0_178, %c192_179] : memref<32x480xf32, #tpu.memory_space<vmem>>, vector<32x32xf32>
    tpu.vector_store %arg10[%c0_178, %c192_179], %581 {strides = array<i32>} : memref<32x480xf32, #tpu.memory_space<vmem>>, vector<32x32xf32>,
    %c224_180 = arith.constant 224 : index
    %c0_181 = arith.constant 0 : index
    %583 = vector.load %arg12[%c224_180, %c0_181] : memref<480x96xf32, #tpu.memory_space<vmem>>, vector<32x96xf32>
    %cst_182 = arith.constant dense<0.000000e+00> : vector<32x96xf32>
    %584 = tpu.matmul %581, %410, %cst_182 {dimension_numbers = #tpu.dot_dimension_numbers<[1], [0], [0], [1], [0, 0, 1, 1], [], []>} : vector<32x32xf32>, vector<32x96xf32>, vector<32x96xf32> -> vector<32x96xf32>
    %585 = vector.extract_strided_slice %583 {offsets = [0, 0], sizes = [32, 64], strides = [1, 1]} : vector<32x96xf32> to vector<32x64xf32>
    %586 = vector.extract_strided_slice %584 {offsets = [0, 0], sizes = [32, 64], strides = [1, 1]} : vector<32x96xf32> to vector<32x64xf32>
    %587 = arith.addf %585, %586 : vector<32x64xf32>
    %588 = arith.negf %587 : vector<32x64xf32>
    %589 = math.exp %588 : vector<32x64xf32>
    %cst_183 = arith.constant 1.000000e+00 : f32
    %590 = vector.broadcast %cst_183 : f32 to vector<32x64xf32>
    %591 = arith.addf %590, %589 : vector<32x64xf32>
    %592 = arith.divf %590, %591 : vector<32x64xf32>
    %593 = vector.extract_strided_slice %592 {offsets = [0, 0], sizes = [32, 32], strides = [1, 1]} : vector<32x64xf32> to vector<32x32xf32>
    %594 = vector.extract_strided_slice %592 {offsets = [0, 32], sizes = [32, 32], strides = [1, 1]} : vector<32x64xf32> to vector<32x32xf32>
    %595 = vector.extract_strided_slice %583 {offsets = [0, 64], sizes = [32, 32], strides = [1, 1]} : vector<32x96xf32> to vector<32x32xf32>
    %596 = vector.extract_strided_slice %584 {offsets = [0, 64], sizes = [32, 32], strides = [1, 1]} : vector<32x96xf32> to vector<32x32xf32>
    %597 = arith.addf %596, %413 : vector<32x32xf32>
    %598 = arith.mulf %593, %597 : vector<32x32xf32>
    %599 = arith.addf %595, %598 : vector<32x32xf32>
    %600 = math.tanh %599 : vector<32x32xf32>
    %cst_184 = arith.constant 1.000000e+00 : f32
    %601 = vector.broadcast %cst_184 : f32 to vector<32x32xf32>
    %602 = arith.subf %601, %594 : vector<32x32xf32>
    %603 = arith.mulf %602, %600 : vector<32x32xf32>
    %604 = arith.mulf %594, %581 : vector<32x32xf32>
    %605 = arith.addf %603, %604 : vector<32x32xf32>
    %c0_185 = arith.constant 0 : index
    %c224_186 = arith.constant 224 : index
    %606 = vector.load %arg10[%c0_185, %c224_186] : memref<32x480xf32, #tpu.memory_space<vmem>>, vector<32x32xf32>
    tpu.vector_store %arg10[%c0_185, %c224_186], %605 {strides = array<i32>} : memref<32x480xf32, #tpu.memory_space<vmem>>, vector<32x32xf32>,
    %c256_187 = arith.constant 256 : index
    %c0_188 = arith.constant 0 : index
    %607 = vector.load %arg12[%c256_187, %c0_188] : memref<480x96xf32, #tpu.memory_space<vmem>>, vector<32x96xf32>
    %cst_189 = arith.constant dense<0.000000e+00> : vector<32x96xf32>
    %608 = tpu.matmul %605, %410, %cst_189 {dimension_numbers = #tpu.dot_dimension_numbers<[1], [0], [0], [1], [0, 0, 1, 1], [], []>} : vector<32x32xf32>, vector<32x96xf32>, vector<32x96xf32> -> vector<32x96xf32>
    %609 = vector.extract_strided_slice %607 {offsets = [0, 0], sizes = [32, 64], strides = [1, 1]} : vector<32x96xf32> to vector<32x64xf32>
    %610 = vector.extract_strided_slice %608 {offsets = [0, 0], sizes = [32, 64], strides = [1, 1]} : vector<32x96xf32> to vector<32x64xf32>
    %611 = arith.addf %609, %610 : vector<32x64xf32>
    %612 = arith.negf %611 : vector<32x64xf32>
    %613 = math.exp %612 : vector<32x64xf32>
    %cst_190 = arith.constant 1.000000e+00 : f32
    %614 = vector.broadcast %cst_190 : f32 to vector<32x64xf32>
    %615 = arith.addf %614, %613 : vector<32x64xf32>
    %616 = arith.divf %614, %615 : vector<32x64xf32>
    %617 = vector.extract_strided_slice %616 {offsets = [0, 0], sizes = [32, 32], strides = [1, 1]} : vector<32x64xf32> to vector<32x32xf32>
    %618 = vector.extract_strided_slice %616 {offsets = [0, 32], sizes = [32, 32], strides = [1, 1]} : vector<32x64xf32> to vector<32x32xf32>
    %619 = vector.extract_strided_slice %607 {offsets = [0, 64], sizes = [32, 32], strides = [1, 1]} : vector<32x96xf32> to vector<32x32xf32>
    %620 = vector.extract_strided_slice %608 {offsets = [0, 64], sizes = [32, 32], strides = [1, 1]} : vector<32x96xf32> to vector<32x32xf32>
    %621 = arith.addf %620, %413 : vector<32x32xf32>
    %622 = arith.mulf %617, %621 : vector<32x32xf32>
    %623 = arith.addf %619, %622 : vector<32x32xf32>
    %624 = math.tanh %623 : vector<32x32xf32>
    %cst_191 = arith.constant 1.000000e+00 : f32
    %625 = vector.broadcast %cst_191 : f32 to vector<32x32xf32>
    %626 = arith.subf %625, %618 : vector<32x32xf32>
    %627 = arith.mulf %626, %624 : vector<32x32xf32>
    %628 = arith.mulf %618, %605 : vector<32x32xf32>
    %629 = arith.addf %627, %628 : vector<32x32xf32>
    %c0_192 = arith.constant 0 : index
    %c256_193 = arith.constant 256 : index
    %630 = vector.load %arg10[%c0_192, %c256_193] : memref<32x480xf32, #tpu.memory_space<vmem>>, vector<32x32xf32>
    tpu.vector_store %arg10[%c0_192, %c256_193], %629 {strides = array<i32>} : memref<32x480xf32, #tpu.memory_space<vmem>>, vector<32x32xf32>,
    %c288_194 = arith.constant 288 : index
    %c0_195 = arith.constant 0 : index
    %631 = vector.load %arg12[%c288_194, %c0_195] : memref<480x96xf32, #tpu.memory_space<vmem>>, vector<32x96xf32>
    %cst_196 = arith.constant dense<0.000000e+00> : vector<32x96xf32>
    %632 = tpu.matmul %629, %410, %cst_196 {dimension_numbers = #tpu.dot_dimension_numbers<[1], [0], [0], [1], [0, 0, 1, 1], [], []>} : vector<32x32xf32>, vector<32x96xf32>, vector<32x96xf32> -> vector<32x96xf32>
    %633 = vector.extract_strided_slice %631 {offsets = [0, 0], sizes = [32, 64], strides = [1, 1]} : vector<32x96xf32> to vector<32x64xf32>
    %634 = vector.extract_strided_slice %632 {offsets = [0, 0], sizes = [32, 64], strides = [1, 1]} : vector<32x96xf32> to vector<32x64xf32>
    %635 = arith.addf %633, %634 : vector<32x64xf32>
    %636 = arith.negf %635 : vector<32x64xf32>
    %637 = math.exp %636 : vector<32x64xf32>
    %cst_197 = arith.constant 1.000000e+00 : f32
    %638 = vector.broadcast %cst_197 : f32 to vector<32x64xf32>
    %639 = arith.addf %638, %637 : vector<32x64xf32>
    %640 = arith.divf %638, %639 : vector<32x64xf32>
    %641 = vector.extract_strided_slice %640 {offsets = [0, 0], sizes = [32, 32], strides = [1, 1]} : vector<32x64xf32> to vector<32x32xf32>
    %642 = vector.extract_strided_slice %640 {offsets = [0, 32], sizes = [32, 32], strides = [1, 1]} : vector<32x64xf32> to vector<32x32xf32>
    %643 = vector.extract_strided_slice %631 {offsets = [0, 64], sizes = [32, 32], strides = [1, 1]} : vector<32x96xf32> to vector<32x32xf32>
    %644 = vector.extract_strided_slice %632 {offsets = [0, 64], sizes = [32, 32], strides = [1, 1]} : vector<32x96xf32> to vector<32x32xf32>
    %645 = arith.addf %644, %413 : vector<32x32xf32>
    %646 = arith.mulf %641, %645 : vector<32x32xf32>
    %647 = arith.addf %643, %646 : vector<32x32xf32>
    %648 = math.tanh %647 : vector<32x32xf32>
    %cst_198 = arith.constant 1.000000e+00 : f32
    %649 = vector.broadcast %cst_198 : f32 to vector<32x32xf32>
    %650 = arith.subf %649, %642 : vector<32x32xf32>
    %651 = arith.mulf %650, %648 : vector<32x32xf32>
    %652 = arith.mulf %642, %629 : vector<32x32xf32>
    %653 = arith.addf %651, %652 : vector<32x32xf32>
    %c0_199 = arith.constant 0 : index
    %c288_200 = arith.constant 288 : index
    %654 = vector.load %arg10[%c0_199, %c288_200] : memref<32x480xf32, #tpu.memory_space<vmem>>, vector<32x32xf32>
    tpu.vector_store %arg10[%c0_199, %c288_200], %653 {strides = array<i32>} : memref<32x480xf32, #tpu.memory_space<vmem>>, vector<32x32xf32>,
    %c320_201 = arith.constant 320 : index
    %c0_202 = arith.constant 0 : index
    %655 = vector.load %arg12[%c320_201, %c0_202] : memref<480x96xf32, #tpu.memory_space<vmem>>, vector<32x96xf32>
    %cst_203 = arith.constant dense<0.000000e+00> : vector<32x96xf32>
    %656 = tpu.matmul %653, %410, %cst_203 {dimension_numbers = #tpu.dot_dimension_numbers<[1], [0], [0], [1], [0, 0, 1, 1], [], []>} : vector<32x32xf32>, vector<32x96xf32>, vector<32x96xf32> -> vector<32x96xf32>
    %657 = vector.extract_strided_slice %655 {offsets = [0, 0], sizes = [32, 64], strides = [1, 1]} : vector<32x96xf32> to vector<32x64xf32>
    %658 = vector.extract_strided_slice %656 {offsets = [0, 0], sizes = [32, 64], strides = [1, 1]} : vector<32x96xf32> to vector<32x64xf32>
    %659 = arith.addf %657, %658 : vector<32x64xf32>
    %660 = arith.negf %659 : vector<32x64xf32>
    %661 = math.exp %660 : vector<32x64xf32>
    %cst_204 = arith.constant 1.000000e+00 : f32
    %662 = vector.broadcast %cst_204 : f32 to vector<32x64xf32>
    %663 = arith.addf %662, %661 : vector<32x64xf32>
    %664 = arith.divf %662, %663 : vector<32x64xf32>
    %665 = vector.extract_strided_slice %664 {offsets = [0, 0], sizes = [32, 32], strides = [1, 1]} : vector<32x64xf32> to vector<32x32xf32>
    %666 = vector.extract_strided_slice %664 {offsets = [0, 32], sizes = [32, 32], strides = [1, 1]} : vector<32x64xf32> to vector<32x32xf32>
    %667 = vector.extract_strided_slice %655 {offsets = [0, 64], sizes = [32, 32], strides = [1, 1]} : vector<32x96xf32> to vector<32x32xf32>
    %668 = vector.extract_strided_slice %656 {offsets = [0, 64], sizes = [32, 32], strides = [1, 1]} : vector<32x96xf32> to vector<32x32xf32>
    %669 = arith.addf %668, %413 : vector<32x32xf32>
    %670 = arith.mulf %665, %669 : vector<32x32xf32>
    %671 = arith.addf %667, %670 : vector<32x32xf32>
    %672 = math.tanh %671 : vector<32x32xf32>
    %cst_205 = arith.constant 1.000000e+00 : f32
    %673 = vector.broadcast %cst_205 : f32 to vector<32x32xf32>
    %674 = arith.subf %673, %666 : vector<32x32xf32>
    %675 = arith.mulf %674, %672 : vector<32x32xf32>
    %676 = arith.mulf %666, %653 : vector<32x32xf32>
    %677 = arith.addf %675, %676 : vector<32x32xf32>
    %c0_206 = arith.constant 0 : index
    %c320_207 = arith.constant 320 : index
    %678 = vector.load %arg10[%c0_206, %c320_207] : memref<32x480xf32, #tpu.memory_space<vmem>>, vector<32x32xf32>
    tpu.vector_store %arg10[%c0_206, %c320_207], %677 {strides = array<i32>} : memref<32x480xf32, #tpu.memory_space<vmem>>, vector<32x32xf32>,
    %c352_208 = arith.constant 352 : index
    %c0_209 = arith.constant 0 : index
    %679 = vector.load %arg12[%c352_208, %c0_209] : memref<480x96xf32, #tpu.memory_space<vmem>>, vector<32x96xf32>
    %cst_210 = arith.constant dense<0.000000e+00> : vector<32x96xf32>
    %680 = tpu.matmul %677, %410, %cst_210 {dimension_numbers = #tpu.dot_dimension_numbers<[1], [0], [0], [1], [0, 0, 1, 1], [], []>} : vector<32x32xf32>, vector<32x96xf32>, vector<32x96xf32> -> vector<32x96xf32>
    %681 = vector.extract_strided_slice %679 {offsets = [0, 0], sizes = [32, 64], strides = [1, 1]} : vector<32x96xf32> to vector<32x64xf32>
    %682 = vector.extract_strided_slice %680 {offsets = [0, 0], sizes = [32, 64], strides = [1, 1]} : vector<32x96xf32> to vector<32x64xf32>
    %683 = arith.addf %681, %682 : vector<32x64xf32>
    %684 = arith.negf %683 : vector<32x64xf32>
    %685 = math.exp %684 : vector<32x64xf32>
    %cst_211 = arith.constant 1.000000e+00 : f32
    %686 = vector.broadcast %cst_211 : f32 to vector<32x64xf32>
    %687 = arith.addf %686, %685 : vector<32x64xf32>
    %688 = arith.divf %686, %687 : vector<32x64xf32>
    %689 = vector.extract_strided_slice %688 {offsets = [0, 0], sizes = [32, 32], strides = [1, 1]} : vector<32x64xf32> to vector<32x32xf32>
    %690 = vector.extract_strided_slice %688 {offsets = [0, 32], sizes = [32, 32], strides = [1, 1]} : vector<32x64xf32> to vector<32x32xf32>
    %691 = vector.extract_strided_slice %679 {offsets = [0, 64], sizes = [32, 32], strides = [1, 1]} : vector<32x96xf32> to vector<32x32xf32>
    %692 = vector.extract_strided_slice %680 {offsets = [0, 64], sizes = [32, 32], strides = [1, 1]} : vector<32x96xf32> to vector<32x32xf32>
    %693 = arith.addf %692, %413 : vector<32x32xf32>
    %694 = arith.mulf %689, %693 : vector<32x32xf32>
    %695 = arith.addf %691, %694 : vector<32x32xf32>
    %696 = math.tanh %695 : vector<32x32xf32>
    %cst_212 = arith.constant 1.000000e+00 : f32
    %697 = vector.broadcast %cst_212 : f32 to vector<32x32xf32>
    %698 = arith.subf %697, %690 : vector<32x32xf32>
    %699 = arith.mulf %698, %696 : vector<32x32xf32>
    %700 = arith.mulf %690, %677 : vector<32x32xf32>
    %701 = arith.addf %699, %700 : vector<32x32xf32>
    %c0_213 = arith.constant 0 : index
    %c352_214 = arith.constant 352 : index
    %702 = vector.load %arg10[%c0_213, %c352_214] : memref<32x480xf32, #tpu.memory_space<vmem>>, vector<32x32xf32>
    tpu.vector_store %arg10[%c0_213, %c352_214], %701 {strides = array<i32>} : memref<32x480xf32, #tpu.memory_space<vmem>>, vector<32x32xf32>,
    %c384_215 = arith.constant 384 : index
    %c0_216 = arith.constant 0 : index
    %703 = vector.load %arg12[%c384_215, %c0_216] : memref<480x96xf32, #tpu.memory_space<vmem>>, vector<32x96xf32>
    %cst_217 = arith.constant dense<0.000000e+00> : vector<32x96xf32>
    %704 = tpu.matmul %701, %410, %cst_217 {dimension_numbers = #tpu.dot_dimension_numbers<[1], [0], [0], [1], [0, 0, 1, 1], [], []>} : vector<32x32xf32>, vector<32x96xf32>, vector<32x96xf32> -> vector<32x96xf32>
    %705 = vector.extract_strided_slice %703 {offsets = [0, 0], sizes = [32, 64], strides = [1, 1]} : vector<32x96xf32> to vector<32x64xf32>
    %706 = vector.extract_strided_slice %704 {offsets = [0, 0], sizes = [32, 64], strides = [1, 1]} : vector<32x96xf32> to vector<32x64xf32>
    %707 = arith.addf %705, %706 : vector<32x64xf32>
    %708 = arith.negf %707 : vector<32x64xf32>
    %709 = math.exp %708 : vector<32x64xf32>
    %cst_218 = arith.constant 1.000000e+00 : f32
    %710 = vector.broadcast %cst_218 : f32 to vector<32x64xf32>
    %711 = arith.addf %710, %709 : vector<32x64xf32>
    %712 = arith.divf %710, %711 : vector<32x64xf32>
    %713 = vector.extract_strided_slice %712 {offsets = [0, 0], sizes = [32, 32], strides = [1, 1]} : vector<32x64xf32> to vector<32x32xf32>
    %714 = vector.extract_strided_slice %712 {offsets = [0, 32], sizes = [32, 32], strides = [1, 1]} : vector<32x64xf32> to vector<32x32xf32>
    %715 = vector.extract_strided_slice %703 {offsets = [0, 64], sizes = [32, 32], strides = [1, 1]} : vector<32x96xf32> to vector<32x32xf32>
    %716 = vector.extract_strided_slice %704 {offsets = [0, 64], sizes = [32, 32], strides = [1, 1]} : vector<32x96xf32> to vector<32x32xf32>
    %717 = arith.addf %716, %413 : vector<32x32xf32>
    %718 = arith.mulf %713, %717 : vector<32x32xf32>
    %719 = arith.addf %715, %718 : vector<32x32xf32>
    %720 = math.tanh %719 : vector<32x32xf32>
    %cst_219 = arith.constant 1.000000e+00 : f32
    %721 = vector.broadcast %cst_219 : f32 to vector<32x32xf32>
    %722 = arith.subf %721, %714 : vector<32x32xf32>
    %723 = arith.mulf %722, %720 : vector<32x32xf32>
    %724 = arith.mulf %714, %701 : vector<32x32xf32>
    %725 = arith.addf %723, %724 : vector<32x32xf32>
    %c0_220 = arith.constant 0 : index
    %c384_221 = arith.constant 384 : index
    %726 = vector.load %arg10[%c0_220, %c384_221] : memref<32x480xf32, #tpu.memory_space<vmem>>, vector<32x32xf32>
    tpu.vector_store %arg10[%c0_220, %c384_221], %725 {strides = array<i32>} : memref<32x480xf32, #tpu.memory_space<vmem>>, vector<32x32xf32>,
    %c416_222 = arith.constant 416 : index
    %c0_223 = arith.constant 0 : index
    %727 = vector.load %arg12[%c416_222, %c0_223] : memref<480x96xf32, #tpu.memory_space<vmem>>, vector<32x96xf32>
    %cst_224 = arith.constant dense<0.000000e+00> : vector<32x96xf32>
    %728 = tpu.matmul %725, %410, %cst_224 {dimension_numbers = #tpu.dot_dimension_numbers<[1], [0], [0], [1], [0, 0, 1, 1], [], []>} : vector<32x32xf32>, vector<32x96xf32>, vector<32x96xf32> -> vector<32x96xf32>
    %729 = vector.extract_strided_slice %727 {offsets = [0, 0], sizes = [32, 64], strides = [1, 1]} : vector<32x96xf32> to vector<32x64xf32>
    %730 = vector.extract_strided_slice %728 {offsets = [0, 0], sizes = [32, 64], strides = [1, 1]} : vector<32x96xf32> to vector<32x64xf32>
    %731 = arith.addf %729, %730 : vector<32x64xf32>
    %732 = arith.negf %731 : vector<32x64xf32>
    %733 = math.exp %732 : vector<32x64xf32>
    %cst_225 = arith.constant 1.000000e+00 : f32
    %734 = vector.broadcast %cst_225 : f32 to vector<32x64xf32>
    %735 = arith.addf %734, %733 : vector<32x64xf32>
    %736 = arith.divf %734, %735 : vector<32x64xf32>
    %737 = vector.extract_strided_slice %736 {offsets = [0, 0], sizes = [32, 32], strides = [1, 1]} : vector<32x64xf32> to vector<32x32xf32>
    %738 = vector.extract_strided_slice %736 {offsets = [0, 32], sizes = [32, 32], strides = [1, 1]} : vector<32x64xf32> to vector<32x32xf32>
    %739 = vector.extract_strided_slice %727 {offsets = [0, 64], sizes = [32, 32], strides = [1, 1]} : vector<32x96xf32> to vector<32x32xf32>
    %740 = vector.extract_strided_slice %728 {offsets = [0, 64], sizes = [32, 32], strides = [1, 1]} : vector<32x96xf32> to vector<32x32xf32>
    %741 = arith.addf %740, %413 : vector<32x32xf32>
    %742 = arith.mulf %737, %741 : vector<32x32xf32>
    %743 = arith.addf %739, %742 : vector<32x32xf32>
    %744 = math.tanh %743 : vector<32x32xf32>
    %cst_226 = arith.constant 1.000000e+00 : f32
    %745 = vector.broadcast %cst_226 : f32 to vector<32x32xf32>
    %746 = arith.subf %745, %738 : vector<32x32xf32>
    %747 = arith.mulf %746, %744 : vector<32x32xf32>
    %748 = arith.mulf %738, %725 : vector<32x32xf32>
    %749 = arith.addf %747, %748 : vector<32x32xf32>
    %c0_227 = arith.constant 0 : index
    %c416_228 = arith.constant 416 : index
    %750 = vector.load %arg10[%c0_227, %c416_228] : memref<32x480xf32, #tpu.memory_space<vmem>>, vector<32x32xf32>
    tpu.vector_store %arg10[%c0_227, %c416_228], %749 {strides = array<i32>} : memref<32x480xf32, #tpu.memory_space<vmem>>, vector<32x32xf32>,
    %c448_229 = arith.constant 448 : index
    %c0_230 = arith.constant 0 : index
    %751 = vector.load %arg12[%c448_229, %c0_230] : memref<480x96xf32, #tpu.memory_space<vmem>>, vector<32x96xf32>
    %cst_231 = arith.constant dense<0.000000e+00> : vector<32x96xf32>
    %752 = tpu.matmul %749, %410, %cst_231 {dimension_numbers = #tpu.dot_dimension_numbers<[1], [0], [0], [1], [0, 0, 1, 1], [], []>} : vector<32x32xf32>, vector<32x96xf32>, vector<32x96xf32> -> vector<32x96xf32>
    %753 = vector.extract_strided_slice %751 {offsets = [0, 0], sizes = [32, 64], strides = [1, 1]} : vector<32x96xf32> to vector<32x64xf32>
    %754 = vector.extract_strided_slice %752 {offsets = [0, 0], sizes = [32, 64], strides = [1, 1]} : vector<32x96xf32> to vector<32x64xf32>
    %755 = arith.addf %753, %754 : vector<32x64xf32>
    %756 = arith.negf %755 : vector<32x64xf32>
    %757 = math.exp %756 : vector<32x64xf32>
    %cst_232 = arith.constant 1.000000e+00 : f32
    %758 = vector.broadcast %cst_232 : f32 to vector<32x64xf32>
    %759 = arith.addf %758, %757 : vector<32x64xf32>
    %760 = arith.divf %758, %759 : vector<32x64xf32>
    %761 = vector.extract_strided_slice %760 {offsets = [0, 0], sizes = [32, 32], strides = [1, 1]} : vector<32x64xf32> to vector<32x32xf32>
    %762 = vector.extract_strided_slice %760 {offsets = [0, 32], sizes = [32, 32], strides = [1, 1]} : vector<32x64xf32> to vector<32x32xf32>
    %763 = vector.extract_strided_slice %751 {offsets = [0, 64], sizes = [32, 32], strides = [1, 1]} : vector<32x96xf32> to vector<32x32xf32>
    %764 = vector.extract_strided_slice %752 {offsets = [0, 64], sizes = [32, 32], strides = [1, 1]} : vector<32x96xf32> to vector<32x32xf32>
    %765 = arith.addf %764, %413 : vector<32x32xf32>
    %766 = arith.mulf %761, %765 : vector<32x32xf32>
    %767 = arith.addf %763, %766 : vector<32x32xf32>
    %768 = math.tanh %767 : vector<32x32xf32>
    %cst_233 = arith.constant 1.000000e+00 : f32
    %769 = vector.broadcast %cst_233 : f32 to vector<32x32xf32>
    %770 = arith.subf %769, %762 : vector<32x32xf32>
    %771 = arith.mulf %770, %768 : vector<32x32xf32>
    %772 = arith.mulf %762, %749 : vector<32x32xf32>
    %773 = arith.addf %771, %772 : vector<32x32xf32>
    %c0_234 = arith.constant 0 : index
    %c448_235 = arith.constant 448 : index
    %774 = vector.load %arg10[%c0_234, %c448_235] : memref<32x480xf32, #tpu.memory_space<vmem>>, vector<32x32xf32>
    tpu.vector_store %arg10[%c0_234, %c448_235], %773 {strides = array<i32>} : memref<32x480xf32, #tpu.memory_space<vmem>>, vector<32x32xf32>,
    %c1 = arith.constant 1 : index
    %c0_236 = arith.constant 0 : index
    %c0_237 = arith.constant 0 : index
    %775 = vector.load %arg11[%c1, %c0_236, %c0_237] : memref<2x32x32xf32, #tpu.memory_space<vmem>>, vector<1x32x32xf32>
    %776 = vector.shape_cast %775 : vector<1x32x32xf32> to vector<32x32xf32>
    %777 = vector.shape_cast %773 : vector<32x32xf32> to vector<1x32x32xf32>
    tpu.vector_store %arg11[%c1, %c0_236, %c0_237], %777 {strides = array<i32>} : memref<2x32x32xf32, #tpu.memory_space<vmem>>, vector<1x32x32xf32>,
    return
  }
  func.func @transform_0(%arg0: i32) -> (i32, i32, i32) {
    %c0_i32 = arith.constant 0 : i32
    %c0_i32_0 = arith.constant 0 : i32
    %c0_i32_1 = arith.constant 0 : i32
    return %c0_i32, %arg0, %c0_i32_0 : i32, i32, i32
  }
  func.func @transform_1(%arg0: i32) -> (i32, i32) {
    %c0_i32 = arith.constant 0 : i32
    %c0_i32_0 = arith.constant 0 : i32
    %c0_i32_1 = arith.constant 0 : i32
    return %c0_i32, %c0_i32_0 : i32, i32
  }
  func.func @transform_2(%arg0: i32) -> (i32, i32) {
    %c0_i32 = arith.constant 0 : i32
    %c0_i32_0 = arith.constant 0 : i32
    %c0_i32_1 = arith.constant 0 : i32
    return %c0_i32, %c0_i32_0 : i32, i32
  }
  func.func @transform_3(%arg0: i32) -> (i32, i32) {
    %c0_i32 = arith.constant 0 : i32
    %c0_i32_0 = arith.constant 0 : i32
    %c0_i32_1 = arith.constant 0 : i32
    return %c0_i32, %c0_i32_0 : i32, i32
  }
  func.func @transform_4(%arg0: i32) -> (i32, i32) {
    %c0_i32 = arith.constant 0 : i32
    %c0_i32_0 = arith.constant 0 : i32
    %c0_i32_1 = arith.constant 0 : i32
    return %c0_i32, %c0_i32_0 : i32, i32
  }
  func.func @transform_5(%arg0: i32) -> (i32, i32) {
    %c0_i32 = arith.constant 0 : i32
    %c0_i32_0 = arith.constant 0 : i32
    %c0_i32_1 = arith.constant 0 : i32
    return %c0_i32, %c0_i32_0 : i32, i32
  }
  func.func @transform_6(%arg0: i32) -> (i32, i32) {
    %c0_i32 = arith.constant 0 : i32
    %c0_i32_0 = arith.constant 0 : i32
    %c0_i32_1 = arith.constant 0 : i32
    return %c0_i32, %c0_i32_0 : i32, i32
  }
  func.func @transform_7(%arg0: i32) -> (i32, i32) {
    %c0_i32 = arith.constant 0 : i32
    %c0_i32_0 = arith.constant 0 : i32
    %c0_i32_1 = arith.constant 0 : i32
    return %c0_i32, %c0_i32_0 : i32, i32
  }
  func.func @transform_8(%arg0: i32) -> (i32, i32) {
    %c0_i32 = arith.constant 0 : i32
    %c0_i32_0 = arith.constant 0 : i32
    %c0_i32_1 = arith.constant 0 : i32
    return %c0_i32, %c0_i32_0 : i32, i32
  }
  func.func @transform_9(%arg0: i32) -> (i32, i32) {
    %c0_i32 = arith.constant 0 : i32
    %c0_i32_0 = arith.constant 0 : i32
    return %arg0, %c0_i32 : i32, i32
  }
  func.func @transform_10(%arg0: i32) -> (i32, i32, i32) {
    %c0_i32 = arith.constant 0 : i32
    %c0_i32_0 = arith.constant 0 : i32
    %c0_i32_1 = arith.constant 0 : i32
    return %c0_i32, %arg0, %c0_i32_0 : i32, i32, i32
  }
}

</mosaic_0001>

<llo_original>
// kernel: seq2seq_encoder_forward.1
$region0: #{seq2seq_encoder_forward.1}
  #allocation0 [shape = 'u32[]', space=smem, size = 0x4, offset = 0x4, fixed_abs, tag = 'smem constant byte address 0x4 - core index']
  #allocation1 [shape = 'u32[72,128]{1,0:T(1,128)}', space=vmem, size = 0x9000, scoped, tag = 'internal scratch']
  #allocation2 [shape = 'f32[480,96]{1,0:T(8,128)}', space=vmem, size = 0x3c000, scoped, tag = 'scratch operand']
  %s0 = inlined_call_operand.vmem [shape: f32[15,32,32], index: 0, kind: input, shape index: {}]
  %s1 = inlined_call_operand.vmem [shape: f32[32,96], index: 1, kind: input, shape index: {}]
  %s2 = inlined_call_operand.vmem [shape: f32[32,96], index: 2, kind: input, shape index: {}]
  %s3 = inlined_call_operand.vmem [shape: f32[1,96], index: 3, kind: input, shape index: {}]
  %s4 = inlined_call_operand.vmem [shape: f32[1,32], index: 4, kind: input, shape index: {}]
  %s5 = inlined_call_operand.vmem [shape: f32[32,96], index: 5, kind: input, shape index: {}]
  %s6 = inlined_call_operand.vmem [shape: f32[32,96], index: 6, kind: input, shape index: {}]
  %s7 = inlined_call_operand.vmem [shape: f32[1,96], index: 7, kind: input, shape index: {}]
  %s8 = inlined_call_operand.vmem [shape: f32[1,32], index: 8, kind: input, shape index: {}]
  %s9 = inlined_call_operand.vmem [shape: f32[32,480], index: 9, kind: output, shape index: {0}]
  %s10 = inlined_call_operand.hbm [shape: f32[2,32,32], index: 10, kind: output, shape index: {1}]
  %11 = xla_tuple %s9, %s10
  %s12 = sld [smem:[#allocation0]]
  $region54: #{seq2seq_encoder_forward.1} parent=0
    _
  %s14 = ssub.s32 1, %s12
  %s15 = scalar_select 0, %s14, %s12
  $region1: #{seq2seq_encoder_forward.1} parent=0
    #allocation3 [shape = 'u8[32768]{0}', space=vmem, size = 0x8000, scoped, tag = 'output window, operand 1, single buffered']
    #allocation4 [shape = 's32[1]{0}', space=sflag, size = 0x4, scoped, tag = 'scoped memory for seq2seq_encoder_forward.1']
    %16 = vsyncpa [#allocation4], 0
    // Predicated region
    $region2: #{seq2seq_encoder_forward.1} parent=1 // pred_check
      _
    $region3: #{seq2seq_encoder_forward.1} parent=1 // pred_check_branch
      %18 = sbr.rel (0) target = $region5
    $region4: #{seq2seq_encoder_forward.1} parent=1 // pred_region
      _
    $region5: #{seq2seq_encoder_forward.1} parent=1 // pred_fallthru
      _
    // Predicated region
    $region6: #{seq2seq_encoder_forward.1} parent=1 // pred_check
      _
    $region7: #{seq2seq_encoder_forward.1} parent=1 // pred_check_branch
      %20 = sbr.rel (0) target = $region9
    $region8: #{seq2seq_encoder_forward.1} parent=1 // pred_region
      _
    $region9: #{seq2seq_encoder_forward.1} parent=1 // pred_fallthru
      _
    // Predicated region
    $region10: #{seq2seq_encoder_forward.1} parent=1 // pred_check
      _
    $region11: #{seq2seq_encoder_forward.1} parent=1 // pred_check_branch
      %22 = sbr.rel (0) target = $region13
    $region12: #{seq2seq_encoder_forward.1} parent=1 // pred_region
      _
    $region13: #{seq2seq_encoder_forward.1} parent=1 // pred_fallthru
      _
    // Predicated region
    $region14: #{seq2seq_encoder_forward.1} parent=1 // pred_check
      _
    $region15: #{seq2seq_encoder_forward.1} parent=1 // pred_check_branch
      %24 = sbr.rel (0) target = $region17
    $region16: #{seq2seq_encoder_forward.1} parent=1 // pred_region
      _
    $region17: #{seq2seq_encoder_forward.1} parent=1 // pred_fallthru
      _
    // Predicated region
    $region18: #{seq2seq_encoder_forward.1} parent=1 // pred_check
      _
    $region19: #{seq2seq_encoder_forward.1} parent=1 // pred_check_branch
      %26 = sbr.rel (0) target = $region21
    $region20: #{seq2seq_encoder_forward.1} parent=1 // pred_region
      _
    $region21: #{seq2seq_encoder_forward.1} parent=1 // pred_fallthru
      _
    // Predicated region
    $region22: #{seq2seq_encoder_forward.1} parent=1 // pred_check
      _
    $region23: #{seq2seq_encoder_forward.1} parent=1 // pred_check_branch
      %28 = sbr.rel (0) target = $region25
    $region24: #{seq2seq_encoder_forward.1} parent=1 // pred_region
      _
    $region25: #{seq2seq_encoder_forward.1} parent=1 // pred_fallthru
      _
    // Predicated region
    $region26: #{seq2seq_encoder_forward.1} parent=1 // pred_check
      _
    $region27: #{seq2seq_encoder_forward.1} parent=1 // pred_check_branch
      %30 = sbr.rel (0) target = $region29
    $region28: #{seq2seq_encoder_forward.1} parent=1 // pred_region
      _
    $region29: #{seq2seq_encoder_forward.1} parent=1 // pred_fallthru
      _
    // Predicated region
    $region30: #{seq2seq_encoder_forward.1} parent=1 // pred_check
      _
    $region31: #{seq2seq_encoder_forward.1} parent=1 // pred_check_branch
      %32 = sbr.rel (0) target = $region33
    $region32: #{seq2seq_encoder_forward.1} parent=1 // pred_region
      _
    $region33: #{seq2seq_encoder_forward.1} parent=1 // pred_fallthru
      _
    // Predicated region
    $region34: #{seq2seq_encoder_forward.1} parent=1 // pred_check
      _
    $region35: #{seq2seq_encoder_forward.1} parent=1 // pred_check_branch
      %34 = sbr.rel (0) target = $region37
    $region36: #{seq2seq_encoder_forward.1} parent=1 // pred_region
      _
    $region37: #{seq2seq_encoder_forward.1} parent=1 // pred_fallthru
      _
    %v35 = vld [vmem:[%s0] sm:$0xff]
    %v36 = vld [vmem:[%s0 + $0x8] sm:$0xff]
    %v37 = vld [vmem:[%s0 + $0x10] sm:$0xff]
    %v38 = vld [vmem:[%s0 + $0x18] sm:$0xff]
    %v39 = vld [vmem:[%s0 + $0x20] sm:$0xff]
    %v40 = vld [vmem:[%s0 + $0x28] sm:$0xff]
    %v41 = vld [vmem:[%s0 + $0x30] sm:$0xff]
    %v42 = vld [vmem:[%s0 + $0x38] sm:$0xff]
    %v43 = vld [vmem:[%s0 + $0x40] sm:$0xff]
    %v44 = vld [vmem:[%s0 + $0x48] sm:$0xff]
    %v45 = vld [vmem:[%s0 + $0x50] sm:$0xff]
    %v46 = vld [vmem:[%s0 + $0x58] sm:$0xff]
    %v47 = vld [vmem:[%s0 + $0x60] sm:$0xff]
    %v48 = vld [vmem:[%s0 + $0x68] sm:$0xff]
    %v49 = vld [vmem:[%s0 + $0x70] sm:$0xff]
    %v50 = vld [vmem:[%s0 + $0x78] sm:$0xff]
    %v51 = vld [vmem:[%s0 + $0x80] sm:$0xff]
    %v52 = vld [vmem:[%s0 + $0x88] sm:$0xff]
    %v53 = vld [vmem:[%s0 + $0x90] sm:$0xff]
    %v54 = vld [vmem:[%s0 + $0x98] sm:$0xff]
    %v55 = vld [vmem:[%s0 + $0xa0] sm:$0xff]
    %v56 = vld [vmem:[%s0 + $0xa8] sm:$0xff]
    %v57 = vld [vmem:[%s0 + $0xb0] sm:$0xff]
    %v58 = vld [vmem:[%s0 + $0xb8] sm:$0xff]
    %v59 = vld [vmem:[%s0 + $0xc0] sm:$0xff]
    %v60 = vld [vmem:[%s0 + $0xc8] sm:$0xff]
    %v61 = vld [vmem:[%s0 + $0xd0] sm:$0xff]
    %v62 = vld [vmem:[%s0 + $0xd8] sm:$0xff]
    %v63 = vld [vmem:[%s0 + $0xe0] sm:$0xff]
    %v64 = vld [vmem:[%s0 + $0xe8] sm:$0xff]
    %v65 = vld [vmem:[%s0 + $0xf0] sm:$0xff]
    %v66 = vld [vmem:[%s0 + $0xf8] sm:$0xff]
    %v67 = vld [vmem:[%s0 + $0x100] sm:$0xff]
    %v68 = vld [vmem:[%s0 + $0x108] sm:$0xff]
    %v69 = vld [vmem:[%s0 + $0x110] sm:$0xff]
    %v70 = vld [vmem:[%s0 + $0x118] sm:$0xff]
    %v71 = vld [vmem:[%s0 + $0x120] sm:$0xff]
    %v72 = vld [vmem:[%s0 + $0x128] sm:$0xff]
    %v73 = vld [vmem:[%s0 + $0x130] sm:$0xff]
    %v74 = vld [vmem:[%s0 + $0x138] sm:$0xff]
    %v75 = vld [vmem:[%s0 + $0x140] sm:$0xff]
    %v76 = vld [vmem:[%s0 + $0x148] sm:$0xff]
    %v77 = vld [vmem:[%s0 + $0x150] sm:$0xff]
    %v78 = vld [vmem:[%s0 + $0x158] sm:$0xff]
    %v79 = vld [vmem:[%s0 + $0x160] sm:$0xff]
    %v80 = vld [vmem:[%s0 + $0x168] sm:$0xff]
    %v81 = vld [vmem:[%s0 + $0x170] sm:$0xff]
    %v82 = vld [vmem:[%s0 + $0x178] sm:$0xff]
    %v83 = vld [vmem:[%s0 + $0x180] sm:$0xff]
    %v84 = vld [vmem:[%s0 + $0x188] sm:$0xff]
    %v85 = vld [vmem:[%s0 + $0x190] sm:$0xff]
    %v86 = vld [vmem:[%s0 + $0x198] sm:$0xff]
    %v87 = vld [vmem:[%s0 + $0x1a0] sm:$0xff]
    %v88 = vld [vmem:[%s0 + $0x1a8] sm:$0xff]
    %v89 = vld [vmem:[%s0 + $0x1b0] sm:$0xff]
    %v90 = vld [vmem:[%s0 + $0x1b8] sm:$0xff]
    %v91 = vld [vmem:[%s0 + $0x1c0] sm:$0xff]
    %v92 = vld [vmem:[%s0 + $0x1c8] sm:$0xff]
    %v93 = vld [vmem:[%s0 + $0x1d0] sm:$0xff]
    %v94 = vld [vmem:[%s0 + $0x1d8] sm:$0xff]
    %v95 = vld [vmem:[%s1] sm:$0xff]
    %v96 = vld [vmem:[%s1 + $0x8] sm:$0xff]
    %v97 = vld [vmem:[%s1 + $0x10] sm:$0xff]
    %v98 = vld [vmem:[%s1 + $0x18] sm:$0xff]
    %v99 = vld [vmem:[%s3] sm:$0x1]
    %v101 = vperm.slane %v99, 0
    %vm103 = vcmask 261120
    %v105 = vsel %vm103, %v35, 0
    %v108 = vsel %vm103, %v36, 0
    %v111 = vsel %vm103, %v37, 0
    %v114 = vsel %vm103, %v38, 0
    %v117 = vsel %vm103, %v39, 0
    %v120 = vsel %vm103, %v40, 0
    %v123 = vsel %vm103, %v41, 0
    %v126 = vsel %vm103, %v42, 0
    %v129 = vsel %vm103, %v43, 0
    %v132 = vsel %vm103, %v44, 0
    %v135 = vsel %vm103, %v45, 0
    %v138 = vsel %vm103, %v46, 0
    %v141 = vsel %vm103, %v47, 0
    %v144 = vsel %vm103, %v48, 0
    %v147 = vsel %vm103, %v49, 0
    %v150 = vsel %vm103, %v50, 0
    %v153 = vsel %vm103, %v51, 0
    %v156 = vsel %vm103, %v52, 0
    %v159 = vsel %vm103, %v53, 0
    %v162 = vsel %vm103, %v54, 0
    %v165 = vsel %vm103, %v55, 0
    %v168 = vsel %vm103, %v56, 0
    %v171 = vsel %vm103, %v57, 0
    %v174 = vsel %vm103, %v58, 0
    %v177 = vsel %vm103, %v59, 0
    %v180 = vsel %vm103, %v60, 0
    %v183 = vsel %vm103, %v61, 0
    %v186 = vsel %vm103, %v62, 0
    %v189 = vsel %vm103, %v63, 0
    %v192 = vsel %vm103, %v64, 0
    %v195 = vsel %vm103, %v65, 0
    %v198 = vsel %vm103, %v66, 0
    %v201 = vsel %vm103, %v67, 0
    %v204 = vsel %vm103, %v68, 0
    %v207 = vsel %vm103, %v69, 0
    %v210 = vsel %vm103, %v70, 0
    %v213 = vsel %vm103, %v71, 0
    %v216 = vsel %vm103, %v72, 0
    %v219 = vsel %vm103, %v73, 0
    %v222 = vsel %vm103, %v74, 0
    %v225 = vsel %vm103, %v75, 0
    %v228 = vsel %vm103, %v76, 0
    %v231 = vsel %vm103, %v77, 0
    %v234 = vsel %vm103, %v78, 0
    %v237 = vsel %vm103, %v79, 0
    %v240 = vsel %vm103, %v80, 0
    %v243 = vsel %vm103, %v81, 0
    %v246 = vsel %vm103, %v82, 0
    %v249 = vsel %vm103, %v83, 0
    %v252 = vsel %vm103, %v84, 0
    %v255 = vsel %vm103, %v85, 0
    %v258 = vsel %vm103, %v86, 0
    %v261 = vsel %vm103, %v87, 0
    %v264 = vsel %vm103, %v88, 0
    %v267 = vsel %vm103, %v89, 0
    %v270 = vsel %vm103, %v90, 0
    %v273 = vsel %vm103, %v91, 0
    %v276 = vsel %vm103, %v92, 0
    %v279 = vsel %vm103, %v93, 0
    %v282 = vsel %vm103, %v94, 0
    %284 = vmatpush.msra.mxu0 0.0
    %285 = vmatpush.msra.mxu0 0.0
    %286 = vmatpush.msra.mxu0 0.0
    %287 = vmatpush.msra.mxu0 0.0
    %288 = vmatpush.msra.mxu0 0.0
    %289 = vmatpush.msra.mxu0 0.0
    %290 = vmatpush.msra.mxu0 0.0
    %291 = vmatpush.msra.mxu0 0.0
    %292 = vmatpush.msra.mxu0 0.0
    %293 = vmatpush.msra.mxu0 0.0
    %294 = vmatpush.msra.mxu0 0.0
    %295 = vmatpush.msra.mxu0 0.0
    %296 = vmatpush.msra.mxu0 %v98
    %297 = vmatpush.msra.mxu0 %v97
    %298 = vmatpush.msra.mxu0 %v96
    %299 = vmatpush.msra.mxu0 %v95
    %300 = vmatmul.f32.gmra.mxu0 %v105
    %v301 = vpop.f32.mrf.mxu0
    %v302 = vadd.f32 %v101, %v301
    %303 = vmatmul.f32.gmra.mxu0 %v108
    %v304 = vpop.f32.mrf.mxu0
    %v305 = vadd.f32 %v101, %v304
    %306 = vmatmul.f32.gmra.mxu0 %v111
    %v307 = vpop.f32.mrf.mxu0
    %v308 = vadd.f32 %v101, %v307
    %309 = vmatmul.f32.gmra.mxu0 %v114
    %v310 = vpop.f32.mrf.mxu0
    %v311 = vadd.f32 %v101, %v310
    %312 = vmatmul.f32.gmra.mxu0 %v117
    %v313 = vpop.f32.mrf.mxu0
    %v314 = vadd.f32 %v101, %v313
    %315 = vmatmul.f32.gmra.mxu0 %v120
    %v316 = vpop.f32.mrf.mxu0
    %v317 = vadd.f32 %v101, %v316
    %318 = vmatmul.f32.gmra.mxu0 %v123
    %v319 = vpop.f32.mrf.mxu0
    %v320 = vadd.f32 %v101, %v319
    %321 = vmatmul.f32.gmra.mxu0 %v126
    %v322 = vpop.f32.mrf.mxu0
    %v323 = vadd.f32 %v101, %v322
    %324 = vmatmul.f32.gmra.mxu0 %v129
    %v325 = vpop.f32.mrf.mxu0
    %v326 = vadd.f32 %v101, %v325
    %327 = vmatmul.f32.gmra.mxu0 %v132
    %v328 = vpop.f32.mrf.mxu0
    %v329 = vadd.f32 %v101, %v328
    %330 = vmatmul.f32.gmra.mxu0 %v135
    %v331 = vpop.f32.mrf.mxu0
    %v332 = vadd.f32 %v101, %v331
    %333 = vmatmul.f32.gmra.mxu0 %v138
    %v334 = vpop.f32.mrf.mxu0
    %v335 = vadd.f32 %v101, %v334
    %336 = vmatmul.f32.gmra.mxu0 %v141
    %v337 = vpop.f32.mrf.mxu0
    %v338 = vadd.f32 %v101, %v337
    %339 = vmatmul.f32.gmra.mxu0 %v144
    %v340 = vpop.f32.mrf.mxu0
    %v341 = vadd.f32 %v101, %v340
    %342 = vmatmul.f32.gmra.mxu0 %v147
    %v343 = vpop.f32.mrf.mxu0
    %v344 = vadd.f32 %v101, %v343
    %345 = vmatmul.f32.gmra.mxu0 %v150
    %v346 = vpop.f32.mrf.mxu0
    %v347 = vadd.f32 %v101, %v346
    %348 = vmatmul.f32.gmra.mxu0 %v153
    %v349 = vpop.f32.mrf.mxu0
    %v350 = vadd.f32 %v101, %v349
    %351 = vmatmul.f32.gmra.mxu0 %v156
    %v352 = vpop.f32.mrf.mxu0
    %v353 = vadd.f32 %v101, %v352
    %354 = vmatmul.f32.gmra.mxu0 %v159
    %v355 = vpop.f32.mrf.mxu0
    %v356 = vadd.f32 %v101, %v355
    %357 = vmatmul.f32.gmra.mxu0 %v162
    %v358 = vpop.f32.mrf.mxu0
    %v359 = vadd.f32 %v101, %v358
    %360 = vmatmul.f32.gmra.mxu0 %v165
    %v361 = vpop.f32.mrf.mxu0
    %v362 = vadd.f32 %v101, %v361
    %363 = vmatmul.f32.gmra.mxu0 %v168
    %v364 = vpop.f32.mrf.mxu0
    %v365 = vadd.f32 %v101, %v364
    %366 = vmatmul.f32.gmra.mxu0 %v171
    %v367 = vpop.f32.mrf.mxu0
    %v368 = vadd.f32 %v101, %v367
    %369 = vmatmul.f32.gmra.mxu0 %v174
    %v370 = vpop.f32.mrf.mxu0
    %v371 = vadd.f32 %v101, %v370
    %372 = vmatmul.f32.gmra.mxu0 %v177
    %v373 = vpop.f32.mrf.mxu0
    %v374 = vadd.f32 %v101, %v373
    %375 = vmatmul.f32.gmra.mxu0 %v180
    %v376 = vpop.f32.mrf.mxu0
    %v377 = vadd.f32 %v101, %v376
    %378 = vmatmul.f32.gmra.mxu0 %v183
    %v379 = vpop.f32.mrf.mxu0
    %v380 = vadd.f32 %v101, %v379
    %381 = vmatmul.f32.gmra.mxu0 %v186
    %v382 = vpop.f32.mrf.mxu0
    %v383 = vadd.f32 %v101, %v382
    %384 = vmatmul.f32.gmra.mxu0 %v189
    %v385 = vpop.f32.mrf.mxu0
    %v386 = vadd.f32 %v101, %v385
    %387 = vmatmul.f32.gmra.mxu0 %v192
    %v388 = vpop.f32.mrf.mxu0
    %v389 = vadd.f32 %v101, %v388
    %390 = vmatmul.f32.gmra.mxu0 %v195
    %v391 = vpop.f32.mrf.mxu0
    %v392 = vadd.f32 %v101, %v391
    %393 = vmatmul.f32.gmra.mxu0 %v198
    %v394 = vpop.f32.mrf.mxu0
    %v395 = vadd.f32 %v101, %v394
    %396 = vmatmul.f32.gmra.mxu0 %v201
    %v397 = vpop.f32.mrf.mxu0
    %v398 = vadd.f32 %v101, %v397
    %399 = vmatmul.f32.gmra.mxu0 %v204
    %v400 = vpop.f32.mrf.mxu0
    %v401 = vadd.f32 %v101, %v400
    %402 = vmatmul.f32.gmra.mxu0 %v207
    %v403 = vpop.f32.mrf.mxu0
    %v404 = vadd.f32 %v101, %v403
    %405 = vmatmul.f32.gmra.mxu0 %v210
    %v406 = vpop.f32.mrf.mxu0
    %v407 = vadd.f32 %v101, %v406
    %408 = vmatmul.f32.gmra.mxu0 %v213
    %v409 = vpop.f32.mrf.mxu0
    %v410 = vadd.f32 %v101, %v409
    %411 = vmatmul.f32.gmra.mxu0 %v216
    %v412 = vpop.f32.mrf.mxu0
    %v413 = vadd.f32 %v101, %v412
    %414 = vmatmul.f32.gmra.mxu0 %v219
    %v415 = vpop.f32.mrf.mxu0
    %v416 = vadd.f32 %v101, %v415
    %417 = vmatmul.f32.gmra.mxu0 %v222
    %v418 = vpop.f32.mrf.mxu0
    %v419 = vadd.f32 %v101, %v418
    %420 = vmatmul.f32.gmra.mxu0 %v225
    %v421 = vpop.f32.mrf.mxu0
    %v422 = vadd.f32 %v101, %v421
    %423 = vmatmul.f32.gmra.mxu0 %v228
    %v424 = vpop.f32.mrf.mxu0
    %v425 = vadd.f32 %v101, %v424
    %426 = vmatmul.f32.gmra.mxu0 %v231
    %v427 = vpop.f32.mrf.mxu0
    %v428 = vadd.f32 %v101, %v427
    %429 = vmatmul.f32.gmra.mxu0 %v234
    %v430 = vpop.f32.mrf.mxu0
    %v431 = vadd.f32 %v101, %v430
    %432 = vmatmul.f32.gmra.mxu0 %v237
    %v433 = vpop.f32.mrf.mxu0
    %v434 = vadd.f32 %v101, %v433
    %435 = vmatmul.f32.gmra.mxu0 %v240
    %v436 = vpop.f32.mrf.mxu0
    %v437 = vadd.f32 %v101, %v436
    %438 = vmatmul.f32.gmra.mxu0 %v243
    %v439 = vpop.f32.mrf.mxu0
    %v440 = vadd.f32 %v101, %v439
    %441 = vmatmul.f32.gmra.mxu0 %v246
    %v442 = vpop.f32.mrf.mxu0
    %v443 = vadd.f32 %v101, %v442
    %444 = vmatmul.f32.gmra.mxu0 %v249
    %v445 = vpop.f32.mrf.mxu0
    %v446 = vadd.f32 %v101, %v445
    %447 = vmatmul.f32.gmra.mxu0 %v252
    %v448 = vpop.f32.mrf.mxu0
    %v449 = vadd.f32 %v101, %v448
    %450 = vmatmul.f32.gmra.mxu0 %v255
    %v451 = vpop.f32.mrf.mxu0
    %v452 = vadd.f32 %v101, %v451
    %453 = vmatmul.f32.gmra.mxu0 %v258
    %v454 = vpop.f32.mrf.mxu0
    %v455 = vadd.f32 %v101, %v454
    %456 = vmatmul.f32.gmra.mxu0 %v261
    %v457 = vpop.f32.mrf.mxu0
    %v458 = vadd.f32 %v101, %v457
    %459 = vmatmul.f32.gmra.mxu0 %v264
    %v460 = vpop.f32.mrf.mxu0
    %v461 = vadd.f32 %v101, %v460
    %462 = vmatmul.f32.gmra.mxu0 %v267
    %v463 = vpop.f32.mrf.mxu0
    %v464 = vadd.f32 %v101, %v463
    %465 = vmatmul.f32.gmra.mxu0 %v270
    %v466 = vpop.f32.mrf.mxu0
    %v467 = vadd.f32 %v101, %v466
    %468 = vmatmul.f32.gmra.mxu0 %v273
    %v469 = vpop.f32.mrf.mxu0
    %v470 = vadd.f32 %v101, %v469
    %471 = vmatmul.f32.gmra.mxu0 %v276
    %v472 = vpop.f32.mrf.mxu0
    %v473 = vadd.f32 %v101, %v472
    %474 = vmatmul.f32.gmra.mxu0 %v279
    %v475 = vpop.f32.mrf.mxu0
    %v476 = vadd.f32 %v101, %v475
    %477 = vmatmul.f32.gmra.mxu0 %v282
    %v478 = vpop.f32.mrf.mxu0
    %v479 = vadd.f32 %v101, %v478
    %480 = vdwg.mxu0
    %vm481 = vcmask 785408
    %482 = vst.msk [vmem:[#allocation2] sm:$0xff] %vm481, %v302
    %483 = vst.msk [vmem:[#allocation2 + $0x8] sm:$0xff] %vm481, %v305
    %484 = vst.msk [vmem:[#allocation2 + $0x10] sm:$0xff] %vm481, %v308
    %485 = vst.msk [vmem:[#allocation2 + $0x18] sm:$0xff] %vm481, %v311
    %486 = vst.msk [vmem:[#allocation2 + $0x20] sm:$0xff] %vm481, %v314
    %487 = vst.msk [vmem:[#allocation2 + $0x28] sm:$0xff] %vm481, %v317
    %488 = vst.msk [vmem:[#allocation2 + $0x30] sm:$0xff] %vm481, %v320
    %489 = vst.msk [vmem:[#allocation2 + $0x38] sm:$0xff] %vm481, %v323
    %490 = vst.msk [vmem:[#allocation2 + $0x40] sm:$0xff] %vm481, %v326
    %491 = vst.msk [vmem:[#allocation2 + $0x48] sm:$0xff] %vm481, %v329
    %492 = vst.msk [vmem:[#allocation2 + $0x50] sm:$0xff] %vm481, %v332
    %493 = vst.msk [vmem:[#allocation2 + $0x58] sm:$0xff] %vm481, %v335
    %494 = vst.msk [vmem:[#allocation2 + $0x60] sm:$0xff] %vm481, %v338
    %495 = vst.msk [vmem:[#allocation2 + $0x68] sm:$0xff] %vm481, %v341
    %496 = vst.msk [vmem:[#allocation2 + $0x70] sm:$0xff] %vm481, %v344
    %497 = vst.msk [vmem:[#allocation2 + $0x78] sm:$0xff] %vm481, %v347
    %498 = vst.msk [vmem:[#allocation2 + $0x80] sm:$0xff] %vm481, %v350
    %499 = vst.msk [vmem:[#allocation2 + $0x88] sm:$0xff] %vm481, %v353
    %500 = vst.msk [vmem:[#allocation2 + $0x90] sm:$0xff] %vm481, %v356
    %501 = vst.msk [vmem:[#allocation2 + $0x98] sm:$0xff] %vm481, %v359
    %502 = vst.msk [vmem:[#allocation2 + $0xa0] sm:$0xff] %vm481, %v362
    %503 = vst.msk [vmem:[#allocation2 + $0xa8] sm:$0xff] %vm481, %v365
    %504 = vst.msk [vmem:[#allocation2 + $0xb0] sm:$0xff] %vm481, %v368
    %505 = vst.msk [vmem:[#allocation2 + $0xb8] sm:$0xff] %vm481, %v371
    %506 = vst.msk [vmem:[#allocation2 + $0xc0] sm:$0xff] %vm481, %v374
    %507 = vst.msk [vmem:[#allocation2 + $0xc8] sm:$0xff] %vm481, %v377
    %508 = vst.msk [vmem:[#allocation2 + $0xd0] sm:$0xff] %vm481, %v380
    %509 = vst.msk [vmem:[#allocation2 + $0xd8] sm:$0xff] %vm481, %v383
    %510 = vst.msk [vmem:[#allocation2 + $0xe0] sm:$0xff] %vm481, %v386
    %511 = vst.msk [vmem:[#allocation2 + $0xe8] sm:$0xff] %vm481, %v389
    %512 = vst.msk [vmem:[#allocation2 + $0xf0] sm:$0xff] %vm481, %v392
    %513 = vst.msk [vmem:[#allocation2 + $0xf8] sm:$0xff] %vm481, %v395
    %514 = vst.msk [vmem:[#allocation2 + $0x100] sm:$0xff] %vm481, %v398
    %515 = vst.msk [vmem:[#allocation2 + $0x108] sm:$0xff] %vm481, %v401
    %516 = vst.msk [vmem:[#allocation2 + $0x110] sm:$0xff] %vm481, %v404
    %517 = vst.msk [vmem:[#allocation2 + $0x118] sm:$0xff] %vm481, %v407
    %518 = vst.msk [vmem:[#allocation2 + $0x120] sm:$0xff] %vm481, %v410
    %519 = vst.msk [vmem:[#allocation2 + $0x128] sm:$0xff] %vm481, %v413
    %520 = vst.msk [vmem:[#allocation2 + $0x130] sm:$0xff] %vm481, %v416
    %521 = vst.msk [vmem:[#allocation2 + $0x138] sm:$0xff] %vm481, %v419
    %522 = vst.msk [vmem:[#allocation2 + $0x140] sm:$0xff] %vm481, %v422
    %523 = vst.msk [vmem:[#allocation2 + $0x148] sm:$0xff] %vm481, %v425
    %524 = vst.msk [vmem:[#allocation2 + $0x150] sm:$0xff] %vm481, %v428
    %525 = vst.msk [vmem:[#allocation2 + $0x158] sm:$0xff] %vm481, %v431
    %526 = vst.msk [vmem:[#allocation2 + $0x160] sm:$0xff] %vm481, %v434
    %527 = vst.msk [vmem:[#allocation2 + $0x168] sm:$0xff] %vm481, %v437
    %528 = vst.msk [vmem:[#allocation2 + $0x170] sm:$0xff] %vm481, %v440
    %529 = vst.msk [vmem:[#allocation2 + $0x178] sm:$0xff] %vm481, %v443
    %530 = vst.msk [vmem:[#allocation2 + $0x180] sm:$0xff] %vm481, %v446
    %531 = vst.msk [vmem:[#allocation2 + $0x188] sm:$0xff] %vm481, %v449
    %532 = vst.msk [vmem:[#allocation2 + $0x190] sm:$0xff] %vm481, %v452
    %533 = vst.msk [vmem:[#allocation2 + $0x198] sm:$0xff] %vm481, %v455
    %534 = vst.msk [vmem:[#allocation2 + $0x1a0] sm:$0xff] %vm481, %v458
    %535 = vst.msk [vmem:[#allocation2 + $0x1a8] sm:$0xff] %vm481, %v461
    %536 = vst.msk [vmem:[#allocation2 + $0x1b0] sm:$0xff] %vm481, %v464
    %537 = vst.msk [vmem:[#allocation2 + $0x1b8] sm:$0xff] %vm481, %v467
    %538 = vst.msk [vmem:[#allocation2 + $0x1c0] sm:$0xff] %vm481, %v470
    %539 = vst.msk [vmem:[#allocation2 + $0x1c8] sm:$0xff] %vm481, %v473
    %540 = vst.msk [vmem:[#allocation2 + $0x1d0] sm:$0xff] %vm481, %v476
    %541 = vst.msk [vmem:[#allocation2 + $0x1d8] sm:$0xff] %vm481, %v479
    %v542 = vld [vmem:[%s2] sm:$0xff]
    %v543 = vld [vmem:[%s2 + $0x8] sm:$0xff]
    %v544 = vld [vmem:[%s2 + $0x10] sm:$0xff]
    %v545 = vld [vmem:[%s2 + $0x18] sm:$0xff]
    %v546 = vld [vmem:[%s4] sm:$0x1]
    %v548 = vperm.slane %v546, 0
    %v549 = vld [vmem:[%s5] sm:$0xff]
    %v550 = vld [vmem:[%s5 + $0x8] sm:$0xff]
    %v551 = vld [vmem:[%s5 + $0x10] sm:$0xff]
    %v552 = vld [vmem:[%s5 + $0x18] sm:$0xff]
    %v553 = vld [vmem:[%s7] sm:$0x1]
    %v555 = vperm.slane %v553, 0
    %v557 = vld [vmem:[#allocation2] sm:$0xff]
    %v558 = vld [vmem:[#allocation2 + $0x8] sm:$0xff]
    %v559 = vld [vmem:[#allocation2 + $0x10] sm:$0xff]
    %v560 = vld [vmem:[#allocation2 + $0x18] sm:$0xff]
    %v562 = vsel %vm103, 0.0, 0
    %564 = vmatpush.msra.mxu0 0.0
    %565 = vmatpush.msra.mxu0 0.0
    %566 = vmatpush.msra.mxu0 0.0
    %567 = vmatpush.msra.mxu0 0.0
    %568 = vmatpush.msra.mxu0 0.0
    %569 = vmatpush.msra.mxu0 0.0
    %570 = vmatpush.msra.mxu0 0.0
    %571 = vmatpush.msra.mxu0 0.0
    %572 = vmatpush.msra.mxu0 0.0
    %573 = vmatpush.msra.mxu0 0.0
    %574 = vmatpush.msra.mxu0 0.0
    %575 = vmatpush.msra.mxu0 0.0
    %576 = vmatpush.msra.mxu0 %v545
    %577 = vmatpush.msra.mxu0 %v544
    %578 = vmatpush.msra.mxu0 %v543
    %579 = vmatpush.msra.mxu0 %v542
    %580 = vmatmul.f32.gmra.mxu0 %v562
    %v581 = vpop.f32.mrf.mxu0
    %v582 = vadd.f32 0.0, %v581
    %583 = vmatmul.f32.gmra.mxu0 %v562
    %v584 = vpop.f32.mrf.mxu0
    %v585 = vadd.f32 0.0, %v584
    %586 = vmatmul.f32.gmra.mxu0 %v562
    %v587 = vpop.f32.mrf.mxu0
    %v588 = vadd.f32 0.0, %v587
    %589 = vmatmul.f32.gmra.mxu0 %v562
    %v590 = vpop.f32.mrf.mxu0
    %v591 = vadd.f32 0.0, %v590
    %592 = vdwg.mxu0
    %v593 = vadd.f32 %v557, %v582
    %v594 = vadd.f32 %v558, %v585
    %v595 = vadd.f32 %v559, %v588
    %v596 = vadd.f32 %v560, %v591
    %v597 = vxor.u32 %v593, 2147483648
    %v598 = vxor.u32 %v594, 2147483648
    %v599 = vxor.u32 %v595, 2147483648
    %v600 = vxor.u32 %v596, 2147483648
    %v601 = vmul.f32 %v597, 1.442695
    %v602 = vpow.pop %v601
    %v603 = vmul.f32 %v598, 1.442695
    %v604 = vpow.pop %v603
    %v605 = vmul.f32 %v599, 1.442695
    %v606 = vpow.pop %v605
    %v607 = vmul.f32 %v600, 1.442695
    %v608 = vpow.pop %v607
    %v609 = vadd.f32 %v602, 1.0
    %v610 = vadd.f32 %v604, 1.0
    %v611 = vadd.f32 %v606, 1.0
    %v612 = vadd.f32 %v608, 1.0
    %v613 = vrcp.pop %v609
    %v614 = vmul.f32 %v609, %v613
    %v615 = vsub.f32 1.0, %v614
    %v616 = vmul.f32 %v613, %v615
    %v617 = vadd.f32 %v613, %v616
    %vm618 = vweird.f32 %v609
    %vm619 = vweird.f32 %v613
    %vm620 = vmor %vm618, %vm619
    %v621 = vsel %vm620, %v613, %v617
    %v622 = vand.u32 2147483647, %v609
    %vm623 = vcmp.eq.f32.partialorder %v622, 8.507059e+37
    %v624 = vand.u32 %v609, 2147483648
    %v625 = vor.u32 1.1754944e-38, %v624
    %v626 = vsel %vm623, %v625, %v621
    %v627 = vmul.f32 1.0, %v626
    %v628 = vrcp.pop %v610
    %v629 = vmul.f32 %v610, %v628
    %v630 = vsub.f32 1.0, %v629
    %v631 = vmul.f32 %v628, %v630
    %v632 = vadd.f32 %v628, %v631
    %vm633 = vweird.f32 %v610
    %vm634 = vweird.f32 %v628
    %vm635 = vmor %vm633, %vm634
    %v636 = vsel %vm635, %v628, %v632
    %v637 = vand.u32 2147483647, %v610
    %vm638 = vcmp.eq.f32.partialorder %v637, 8.507059e+37
    %v639 = vand.u32 %v610, 2147483648
    %v640 = vor.u32 1.1754944e-38, %v639
    %v641 = vsel %vm638, %v640, %v636
    %v642 = vmul.f32 1.0, %v641
    %v643 = vrcp.pop %v611
    %v644 = vmul.f32 %v611, %v643
    %v645 = vsub.f32 1.0, %v644
    %v646 = vmul.f32 %v643, %v645
    %v647 = vadd.f32 %v643, %v646
    %vm648 = vweird.f32 %v611
    %vm649 = vweird.f32 %v643
    %vm650 = vmor %vm648, %vm649
    %v651 = vsel %vm650, %v643, %v647
    %v652 = vand.u32 2147483647, %v611
    %vm653 = vcmp.eq.f32.partialorder %v652, 8.507059e+37
    %v654 = vand.u32 %v611, 2147483648
    %v655 = vor.u32 1.1754944e-38, %v654
    %v656 = vsel %vm653, %v655, %v651
    %v657 = vmul.f32 1.0, %v656
    %v658 = vrcp.pop %v612
    %v659 = vmul.f32 %v612, %v658
    %v660 = vsub.f32 1.0, %v659
    %v661 = vmul.f32 %v658, %v660
    %v662 = vadd.f32 %v658, %v661
    %vm663 = vweird.f32 %v612
    %vm664 = vweird.f32 %v658
    %vm665 = vmor %vm663, %vm664
    %v666 = vsel %vm665, %v658, %v662
    %v667 = vand.u32 2147483647, %v612
    %vm668 = vcmp.eq.f32.partialorder %v667, 8.507059e+37
    %v669 = vand.u32 %v612, 2147483648
    %v670 = vor.u32 1.1754944e-38, %v669
    %v671 = vsel %vm668, %v670, %v666
    %v672 = vmul.f32 1.0, %v671
    %673 = vrot.lane.b32.xlu0 %v548, 64
    %v674 = vpop.permute.xlu0 %673
    %v676 = vadd.f32 %v582, %v674
    %v677 = vadd.f32 %v585, %v674
    %v678 = vadd.f32 %v588, %v674
    %v679 = vadd.f32 %v591, %v674
    %684 = vrot.lane.b32.xlu0 %v676, 64
    %v685 = vpop.permute.xlu0 %684
    %686 = vrot.lane.b32.xlu0 %v677, 64
    %v687 = vpop.permute.xlu0 %686
    %688 = vrot.lane.b32.xlu0 %v678, 64
    %v689 = vpop.permute.xlu0 %688
    %690 = vrot.lane.b32.xlu0 %v679, 64
    %v691 = vpop.permute.xlu0 %690
    %v696 = vmul.f32 %v627, %v685
    %v697 = vmul.f32 %v642, %v687
    %v698 = vmul.f32 %v657, %v689
    %v699 = vmul.f32 %v672, %v691
    %704 = vrot.lane.b32.xlu0 %v696, 64
    %v705 = vpop.permute.xlu0 %704
    %706 = vrot.lane.b32.xlu0 %v697, 64
    %v707 = vpop.permute.xlu0 %706
    %708 = vrot.lane.b32.xlu0 %v698, 64
    %v709 = vpop.permute.xlu0 %708
    %710 = vrot.lane.b32.xlu0 %v699, 64
    %v711 = vpop.permute.xlu0 %710
    %v716 = vadd.f32 %v557, %v705
    %v717 = vadd.f32 %v558, %v707
    %v718 = vadd.f32 %v559, %v709
    %v719 = vadd.f32 %v560, %v711
    %v720 = vtanh.pop %v716
    %v721 = vtanh.pop %v717
    %v722 = vtanh.pop %v718
    %v723 = vtanh.pop %v719
    %v724 = vsub.f32 1.0, %v627
    %v725 = vsub.f32 1.0, %v642
    %v726 = vsub.f32 1.0, %v657
    %v727 = vsub.f32 1.0, %v672
    %732 = vrot.lane.b32.xlu0 %v720, 96
    %v733 = vpop.permute.xlu0 %732
    %734 = vrot.lane.b32.xlu0 %v721, 96
    %v735 = vpop.permute.xlu0 %734
    %736 = vrot.lane.b32.xlu0 %v722, 96
    %v737 = vpop.permute.xlu0 %736
    %738 = vrot.lane.b32.xlu0 %v723, 96
    %v739 = vpop.permute.xlu0 %738
    %v744 = vmul.f32 %v724, %v733
    %v745 = vmul.f32 %v725, %v735
    %v746 = vmul.f32 %v726, %v737
    %v747 = vmul.f32 %v727, %v739
    %v748 = vmul.f32 %v627, 0.0
    %v749 = vmul.f32 %v642, 0.0
    %v750 = vmul.f32 %v657, 0.0
    %v751 = vmul.f32 %v672, 0.0
    %v752 = vadd.f32 %v744, %v748
    %v753 = vadd.f32 %v745, %v749
    %v754 = vadd.f32 %v746, %v750
    %v755 = vadd.f32 %v747, %v751
    %760 = vrot.lane.b32.xlu0 %v752, 96
    %v761 = vpop.permute.xlu0 %760
    %762 = vrot.lane.b32.xlu0 %v753, 96
    %v763 = vpop.permute.xlu0 %762
    %764 = vrot.lane.b32.xlu0 %v754, 96
    %v765 = vpop.permute.xlu0 %764
    %766 = vrot.lane.b32.xlu0 %v755, 96
    %v767 = vpop.permute.xlu0 %766
    %v768 = vsel %vm103, %v761, 0
    %v770 = vsel %vm103, %v763, 0
    %v772 = vsel %vm103, %v765, 0
    %v774 = vsel %vm103, %v767, 0
    %776 = vmatpush.msra.mxu0 0.0
    %777 = vmatpush.msra.mxu0 0.0
    %778 = vmatpush.msra.mxu0 0.0
    %779 = vmatpush.msra.mxu0 0.0
    %780 = vmatpush.msra.mxu0 0.0
    %781 = vmatpush.msra.mxu0 0.0
    %782 = vmatpush.msra.mxu0 0.0
    %783 = vmatpush.msra.mxu0 0.0
    %784 = vmatpush.msra.mxu0 0.0
    %785 = vmatpush.msra.mxu0 0.0
    %786 = vmatpush.msra.mxu0 0.0
    %787 = vmatpush.msra.mxu0 0.0
    %788 = vmatpush.msra.mxu0 %v552
    %789 = vmatpush.msra.mxu0 %v551
    %790 = vmatpush.msra.mxu0 %v550
    %791 = vmatpush.msra.mxu0 %v549
    %792 = vmatmul.f32.gmra.mxu0 %v768
    %v793 = vpop.f32.mrf.mxu0
    %v794 = vadd.f32 %v555, %v793
    %795 = vmatmul.f32.gmra.mxu0 %v770
    %v796 = vpop.f32.mrf.mxu0
    %v797 = vadd.f32 %v555, %v796
    %798 = vmatmul.f32.gmra.mxu0 %v772
    %v799 = vpop.f32.mrf.mxu0
    %v800 = vadd.f32 %v555, %v799
    %801 = vmatmul.f32.gmra.mxu0 %v774
    %v802 = vpop.f32.mrf.mxu0
    %v803 = vadd.f32 %v555, %v802
    %804 = vdwg.mxu0
    %805 = vst.msk [vmem:[#allocation2] sm:$0xff] %vm481, %v794
    %806 = vst.msk [vmem:[#allocation2 + $0x8] sm:$0xff] %vm481, %v797
    %807 = vst.msk [vmem:[#allocation2 + $0x10] sm:$0xff] %vm481, %v800
    %808 = vst.msk [vmem:[#allocation2 + $0x18] sm:$0xff] %vm481, %v803
    %v809 = vld [vmem:[#allocation2 + $0x20] sm:$0xff]
    %v810 = vld [vmem:[#allocation2 + $0x28] sm:$0xff]
    %v811 = vld [vmem:[#allocation2 + $0x30] sm:$0xff]
    %v812 = vld [vmem:[#allocation2 + $0x38] sm:$0xff]
    %813 = vmatpush.msra.mxu0 0.0
    %814 = vmatpush.msra.mxu0 0.0
    %815 = vmatpush.msra.mxu0 0.0
    %816 = vmatpush.msra.mxu0 0.0
    %817 = vmatpush.msra.mxu0 0.0
    %818 = vmatpush.msra.mxu0 0.0
    %819 = vmatpush.msra.mxu0 0.0
    %820 = vmatpush.msra.mxu0 0.0
    %821 = vmatpush.msra.mxu0 0.0
    %822 = vmatpush.msra.mxu0 0.0
    %823 = vmatpush.msra.mxu0 0.0
    %824 = vmatpush.msra.mxu0 0.0
    %825 = vmatpush.msra.mxu0 %v545
    %826 = vmatpush.msra.mxu0 %v544
    %827 = vmatpush.msra.mxu0 %v543
    %828 = vmatpush.msra.mxu0 %v542
    %829 = vmatmul.f32.gmra.mxu0 %v768
    %v830 = vpop.f32.mrf.mxu0
    %v831 = vadd.f32 0.0, %v830
    %832 = vmatmul.f32.gmra.mxu0 %v770
    %v833 = vpop.f32.mrf.mxu0
    %v834 = vadd.f32 0.0, %v833
    %835 = vmatmul.f32.gmra.mxu0 %v772
    %v836 = vpop.f32.mrf.mxu0
    %v837 = vadd.f32 0.0, %v836
    %838 = vmatmul.f32.gmra.mxu0 %v774
    %v839 = vpop.f32.mrf.mxu0
    %v840 = vadd.f32 0.0, %v839
    %841 = vdwg.mxu0
    %v842 = vadd.f32 %v809, %v831
    %v843 = vadd.f32 %v810, %v834
    %v844 = vadd.f32 %v811, %v837
    %v845 = vadd.f32 %v812, %v840
    %v846 = vxor.u32 %v842, 2147483648
    %v847 = vxor.u32 %v843, 2147483648
    %v848 = vxor.u32 %v844, 2147483648
    %v849 = vxor.u32 %v845, 2147483648
    %v850 = vmul.f32 %v846, 1.442695
    %v851 = vpow.pop %v850
    %v852 = vmul.f32 %v847, 1.442695
    %v853 = vpow.pop %v852
    %v854 = vmul.f32 %v848, 1.442695
    %v855 = vpow.pop %v854
    %v856 = vmul.f32 %v849, 1.442695
    %v857 = vpow.pop %v856
    %v858 = vadd.f32 %v851, 1.0
    %v859 = vadd.f32 %v853, 1.0
    %v860 = vadd.f32 %v855, 1.0
    %v861 = vadd.f32 %v857, 1.0
    %v862 = vrcp.pop %v858
    %v863 = vmul.f32 %v858, %v862
    %v864 = vsub.f32 1.0, %v863
    %v865 = vmul.f32 %v862, %v864
    %v866 = vadd.f32 %v862, %v865
    %vm867 = vweird.f32 %v858
    %vm868 = vweird.f32 %v862
    %vm869 = vmor %vm867, %vm868
    %v870 = vsel %vm869, %v862, %v866
    %v871 = vand.u32 2147483647, %v858
    %vm872 = vcmp.eq.f32.partialorder %v871, 8.507059e+37
    %v873 = vand.u32 %v858, 2147483648
    %v874 = vor.u32 1.1754944e-38, %v873
    %v875 = vsel %vm872, %v874, %v870
    %v876 = vmul.f32 1.0, %v875
    %v877 = vrcp.pop %v859
    %v878 = vmul.f32 %v859, %v877
    %v879 = vsub.f32 1.0, %v878
    %v880 = vmul.f32 %v877, %v879
    %v881 = vadd.f32 %v877, %v880
    %vm882 = vweird.f32 %v859
    %vm883 = vweird.f32 %v877
    %vm884 = vmor %vm882, %vm883
    %v885 = vsel %vm884, %v877, %v881
    %v886 = vand.u32 2147483647, %v859
    %vm887 = vcmp.eq.f32.partialorder %v886, 8.507059e+37
    %v888 = vand.u32 %v859, 2147483648
    %v889 = vor.u32 1.1754944e-38, %v888
    %v890 = vsel %vm887, %v889, %v885
    %v891 = vmul.f32 1.0, %v890
    %v892 = vrcp.pop %v860
    %v893 = vmul.f32 %v860, %v892
    %v894 = vsub.f32 1.0, %v893
    %v895 = vmul.f32 %v892, %v894
    %v896 = vadd.f32 %v892, %v895
    %vm897 = vweird.f32 %v860
    %vm898 = vweird.f32 %v892
    %vm899 = vmor %vm897, %vm898
    %v900 = vsel %vm899, %v892, %v896
    %v901 = vand.u32 2147483647, %v860
    %vm902 = vcmp.eq.f32.partialorder %v901, 8.507059e+37
    %v903 = vand.u32 %v860, 2147483648
    %v904 = vor.u32 1.1754944e-38, %v903
    %v905 = vsel %vm902, %v904, %v900
    %v906 = vmul.f32 1.0, %v905
    %v907 = vrcp.pop %v861
    %v908 = vmul.f32 %v861, %v907
    %v909 = vsub.f32 1.0, %v908
    %v910 = vmul.f32 %v907, %v909
    %v911 = vadd.f32 %v907, %v910
    %vm912 = vweird.f32 %v861
    %vm913 = vweird.f32 %v907
    %vm914 = vmor %vm912, %vm913
    %v915 = vsel %vm914, %v907, %v911
    %v916 = vand.u32 2147483647, %v861
    %vm917 = vcmp.eq.f32.partialorder %v916, 8.507059e+37
    %v918 = vand.u32 %v861, 2147483648
    %v919 = vor.u32 1.1754944e-38, %v918
    %v920 = vsel %vm917, %v919, %v915
    %v921 = vmul.f32 1.0, %v920
    %v922 = vadd.f32 %v831, %v674
    %v923 = vadd.f32 %v834, %v674
    %v924 = vadd.f32 %v837, %v674
    %v925 = vadd.f32 %v840, %v674
    %930 = vrot.lane.b32.xlu0 %v922, 64
    %v931 = vpop.permute.xlu0 %930
    %932 = vrot.lane.b32.xlu0 %v923, 64
    %v933 = vpop.permute.xlu0 %932
    %934 = vrot.lane.b32.xlu0 %v924, 64
    %v935 = vpop.permute.xlu0 %934
    %936 = vrot.lane.b32.xlu0 %v925, 64
    %v937 = vpop.permute.xlu0 %936
    %v942 = vmul.f32 %v876, %v931
    %v943 = vmul.f32 %v891, %v933
    %v944 = vmul.f32 %v906, %v935
    %v945 = vmul.f32 %v921, %v937
    %950 = vrot.lane.b32.xlu0 %v942, 64
    %v951 = vpop.permute.xlu0 %950
    %952 = vrot.lane.b32.xlu0 %v943, 64
    %v953 = vpop.permute.xlu0 %952
    %954 = vrot.lane.b32.xlu0 %v944, 64
    %v955 = vpop.permute.xlu0 %954
    %956 = vrot.lane.b32.xlu0 %v945, 64
    %v957 = vpop.permute.xlu0 %956
    %v962 = vadd.f32 %v809, %v951
    %v963 = vadd.f32 %v810, %v953
    %v964 = vadd.f32 %v811, %v955
    %v965 = vadd.f32 %v812, %v957
    %v966 = vtanh.pop %v962
    %v967 = vtanh.pop %v963
    %v968 = vtanh.pop %v964
    %v969 = vtanh.pop %v965
    %v970 = vsub.f32 1.0, %v876
    %v971 = vsub.f32 1.0, %v891
    %v972 = vsub.f32 1.0, %v906
    %v973 = vsub.f32 1.0, %v921
    %978 = vrot.lane.b32.xlu0 %v966, 96
    %v979 = vpop.permute.xlu0 %978
    %980 = vrot.lane.b32.xlu0 %v967, 96
    %v981 = vpop.permute.xlu0 %980
    %982 = vrot.lane.b32.xlu0 %v968, 96
    %v983 = vpop.permute.xlu0 %982
    %984 = vrot.lane.b32.xlu0 %v969, 96
    %v985 = vpop.permute.xlu0 %984
    %v990 = vmul.f32 %v970, %v979
    %v991 = vmul.f32 %v971, %v981
    %v992 = vmul.f32 %v972, %v983
    %v993 = vmul.f32 %v973, %v985
    %v994 = vmul.f32 %v876, %v752
    %v995 = vmul.f32 %v891, %v753
    %v996 = vmul.f32 %v906, %v754
    %v997 = vmul.f32 %v921, %v755
    %v998 = vadd.f32 %v990, %v994
    %v999 = vadd.f32 %v991, %v995
    %v1000 = vadd.f32 %v992, %v996
    %v1001 = vadd.f32 %v993, %v997
    %1006 = vrot.lane.b32.xlu0 %v998, 96
    %v1007 = vpop.permute.xlu0 %1006
    %1008 = vrot.lane.b32.xlu0 %v999, 96
    %v1009 = vpop.permute.xlu0 %1008
    %1010 = vrot.lane.b32.xlu0 %v1000, 96
    %v1011 = vpop.permute.xlu0 %1010
    %1012 = vrot.lane.b32.xlu0 %v1001, 96
    %v1013 = vpop.permute.xlu0 %1012
    %v1014 = vsel %vm103, %v1007, 0
    %v1016 = vsel %vm103, %v1009, 0
    %v1018 = vsel %vm103, %v1011, 0
    %v1020 = vsel %vm103, %v1013, 0
    %1022 = vmatpush.msra.mxu0 0.0
    %1023 = vmatpush.msra.mxu0 0.0
    %1024 = vmatpush.msra.mxu0 0.0
    %1025 = vmatpush.msra.mxu0 0.0
    %1026 = vmatpush.msra.mxu0 0.0
    %1027 = vmatpush.msra.mxu0 0.0
    %1028 = vmatpush.msra.mxu0 0.0
    %1029 = vmatpush.msra.mxu0 0.0
    %1030 = vmatpush.msra.mxu0 0.0
    %1031 = vmatpush.msra.mxu0 0.0
    %1032 = vmatpush.msra.mxu0 0.0
    %1033 = vmatpush.msra.mxu0 0.0
    %1034 = vmatpush.msra.mxu0 %v552
    %1035 = vmatpush.msra.mxu0 %v551
    %1036 = vmatpush.msra.mxu0 %v550
    %1037 = vmatpush.msra.mxu0 %v549
    %1038 = vmatmul.f32.gmra.mxu0 %v1014
    %v1039 = vpop.f32.mrf.mxu0
    %v1040 = vadd.f32 %v555, %v1039
    %1041 = vmatmul.f32.gmra.mxu0 %v1016
    %v1042 = vpop.f32.mrf.mxu0
    %v1043 = vadd.f32 %v555, %v1042
    %1044 = vmatmul.f32.gmra.mxu0 %v1018
    %v1045 = vpop.f32.mrf.mxu0
    %v1046 = vadd.f32 %v555, %v1045
    %1047 = vmatmul.f32.gmra.mxu0 %v1020
    %v1048 = vpop.f32.mrf.mxu0
    %v1049 = vadd.f32 %v555, %v1048
    %1050 = vdwg.mxu0
    %1051 = vst.msk [vmem:[#allocation2 + $0x20] sm:$0xff] %vm481, %v1040
    %1052 = vst.msk [vmem:[#allocation2 + $0x28] sm:$0xff] %vm481, %v1043
    %1053 = vst.msk [vmem:[#allocation2 + $0x30] sm:$0xff] %vm481, %v1046
    %1054 = vst.msk [vmem:[#allocation2 + $0x38] sm:$0xff] %vm481, %v1049
    %v1055 = vld [vmem:[#allocation2 + $0x40] sm:$0xff]
    %v1056 = vld [vmem:[#allocation2 + $0x48] sm:$0xff]
    %v1057 = vld [vmem:[#allocation2 + $0x50] sm:$0xff]
    %v1058 = vld [vmem:[#allocation2 + $0x58] sm:$0xff]
    %1059 = vmatpush.msra.mxu0 0.0
    %1060 = vmatpush.msra.mxu0 0.0
    %1061 = vmatpush.msra.mxu0 0.0
    %1062 = vmatpush.msra.mxu0 0.0
    %1063 = vmatpush.msra.mxu0 0.0
    %1064 = vmatpush.msra.mxu0 0.0
    %1065 = vmatpush.msra.mxu0 0.0
    %1066 = vmatpush.msra.mxu0 0.0
    %1067 = vmatpush.msra.mxu0 0.0
    %1068 = vmatpush.msra.mxu0 0.0
    %1069 = vmatpush.msra.mxu0 0.0
    %1070 = vmatpush.msra.mxu0 0.0
    %1071 = vmatpush.msra.mxu0 %v545
    %1072 = vmatpush.msra.mxu0 %v544
    %1073 = vmatpush.msra.mxu0 %v543
    %1074 = vmatpush.msra.mxu0 %v542
    %1075 = vmatmul.f32.gmra.mxu0 %v1014
    %v1076 = vpop.f32.mrf.mxu0
    %v1077 = vadd.f32 0.0, %v1076
    %1078 = vmatmul.f32.gmra.mxu0 %v1016
    %v1079 = vpop.f32.mrf.mxu0
    %v1080 = vadd.f32 0.0, %v1079
    %1081 = vmatmul.f32.gmra.mxu0 %v1018
    %v1082 = vpop.f32.mrf.mxu0
    %v1083 = vadd.f32 0.0, %v1082
    %1084 = vmatmul.f32.gmra.mxu0 %v1020
    %v1085 = vpop.f32.mrf.mxu0
    %v1086 = vadd.f32 0.0, %v1085
    %1087 = vdwg.mxu0
    %v1088 = vadd.f32 %v1055, %v1077
    %v1089 = vadd.f32 %v1056, %v1080
    %v1090 = vadd.f32 %v1057, %v1083
    %v1091 = vadd.f32 %v1058, %v1086
    %v1092 = vxor.u32 %v1088, 2147483648
    %v1093 = vxor.u32 %v1089, 2147483648
    %v1094 = vxor.u32 %v1090, 2147483648
    %v1095 = vxor.u32 %v1091, 2147483648
    %v1096 = vmul.f32 %v1092, 1.442695
    %v1097 = vpow.pop %v1096
    %v1098 = vmul.f32 %v1093, 1.442695
    %v1099 = vpow.pop %v1098
    %v1100 = vmul.f32 %v1094, 1.442695
    %v1101 = vpow.pop %v1100
    %v1102 = vmul.f32 %v1095, 1.442695
    %v1103 = vpow.pop %v1102
    %v1104 = vadd.f32 %v1097, 1.0
    %v1105 = vadd.f32 %v1099, 1.0
    %v1106 = vadd.f32 %v1101, 1.0
    %v1107 = vadd.f32 %v1103, 1.0
    %v1108 = vrcp.pop %v1104
    %v1109 = vmul.f32 %v1104, %v1108
    %v1110 = vsub.f32 1.0, %v1109
    %v1111 = vmul.f32 %v1108, %v1110
    %v1112 = vadd.f32 %v1108, %v1111
    %vm1113 = vweird.f32 %v1104
    %vm1114 = vweird.f32 %v1108
    %vm1115 = vmor %vm1113, %vm1114
    %v1116 = vsel %vm1115, %v1108, %v1112
    %v1117 = vand.u32 2147483647, %v1104
    %vm1118 = vcmp.eq.f32.partialorder %v1117, 8.507059e+37
    %v1119 = vand.u32 %v1104, 2147483648
    %v1120 = vor.u32 1.1754944e-38, %v1119
    %v1121 = vsel %vm1118, %v1120, %v1116
    %v1122 = vmul.f32 1.0, %v1121
    %v1123 = vrcp.pop %v1105
    %v1124 = vmul.f32 %v1105, %v1123
    %v1125 = vsub.f32 1.0, %v1124
    %v1126 = vmul.f32 %v1123, %v1125
    %v1127 = vadd.f32 %v1123, %v1126
    %vm1128 = vweird.f32 %v1105
    %vm1129 = vweird.f32 %v1123
    %vm1130 = vmor %vm1128, %vm1129
    %v1131 = vsel %vm1130, %v1123, %v1127
    %v1132 = vand.u32 2147483647, %v1105
    %vm1133 = vcmp.eq.f32.partialorder %v1132, 8.507059e+37
    %v1134 = vand.u32 %v1105, 2147483648
    %v1135 = vor.u32 1.1754944e-38, %v1134
    %v1136 = vsel %vm1133, %v1135, %v1131
    %v1137 = vmul.f32 1.0, %v1136
    %v1138 = vrcp.pop %v1106
    %v1139 = vmul.f32 %v1106, %v1138
    %v1140 = vsub.f32 1.0, %v1139
    %v1141 = vmul.f32 %v1138, %v1140
    %v1142 = vadd.f32 %v1138, %v1141
    %vm1143 = vweird.f32 %v1106
    %vm1144 = vweird.f32 %v1138
    %vm1145 = vmor %vm1143, %vm1144
    %v1146 = vsel %vm1145, %v1138, %v1142
    %v1147 = vand.u32 2147483647, %v1106
    %vm1148 = vcmp.eq.f32.partialorder %v1147, 8.507059e+37
    %v1149 = vand.u32 %v1106, 2147483648
    %v1150 = vor.u32 1.1754944e-38, %v1149
    %v1151 = vsel %vm1148, %v1150, %v1146
    %v1152 = vmul.f32 1.0, %v1151
    %v1153 = vrcp.pop %v1107
    %v1154 = vmul.f32 %v1107, %v1153
    %v1155 = vsub.f32 1.0, %v1154
    %v1156 = vmul.f32 %v1153, %v1155
    %v1157 = vadd.f32 %v1153, %v1156
    %vm1158 = vweird.f32 %v1107
    %vm1159 = vweird.f32 %v1153
    %vm1160 = vmor %vm1158, %vm1159
    %v1161 = vsel %vm1160, %v1153, %v1157
    %v1162 = vand.u32 2147483647, %v1107
    %vm1163 = vcmp.eq.f32.partialorder %v1162, 8.507059e+37
    %v1164 = vand.u32 %v1107, 2147483648
    %v1165 = vor.u32 1.1754944e-38, %v1164
    %v1166 = vsel %vm1163, %v1165, %v1161
    %v1167 = vmul.f32 1.0, %v1166
    %v1168 = vadd.f32 %v1077, %v674
    %v1169 = vadd.f32 %v1080, %v674
    %v1170 = vadd.f32 %v1083, %v674
    %v1171 = vadd.f32 %v1086, %v674
    %1176 = vrot.lane.b32.xlu0 %v1168, 64
    %v1177 = vpop.permute.xlu0 %1176
    %1178 = vrot.lane.b32.xlu0 %v1169, 64
    %v1179 = vpop.permute.xlu0 %1178
    %1180 = vrot.lane.b32.xlu0 %v1170, 64
    %v1181 = vpop.permute.xlu0 %1180
    %1182 = vrot.lane.b32.xlu0 %v1171, 64
    %v1183 = vpop.permute.xlu0 %1182
    %v1188 = vmul.f32 %v1122, %v1177
    %v1189 = vmul.f32 %v1137, %v1179
    %v1190 = vmul.f32 %v1152, %v1181
    %v1191 = vmul.f32 %v1167, %v1183
    %1196 = vrot.lane.b32.xlu0 %v1188, 64
    %v1197 = vpop.permute.xlu0 %1196
    %1198 = vrot.lane.b32.xlu0 %v1189, 64
    %v1199 = vpop.permute.xlu0 %1198
    %1200 = vrot.lane.b32.xlu0 %v1190, 64
    %v1201 = vpop.permute.xlu0 %1200
    %1202 = vrot.lane.b32.xlu0 %v1191, 64
    %v1203 = vpop.permute.xlu0 %1202
    %v1208 = vadd.f32 %v1055, %v1197
    %v1209 = vadd.f32 %v1056, %v1199
    %v1210 = vadd.f32 %v1057, %v1201
    %v1211 = vadd.f32 %v1058, %v1203
    %v1212 = vtanh.pop %v1208
    %v1213 = vtanh.pop %v1209
    %v1214 = vtanh.pop %v1210
    %v1215 = vtanh.pop %v1211
    %v1216 = vsub.f32 1.0, %v1122
    %v1217 = vsub.f32 1.0, %v1137
    %v1218 = vsub.f32 1.0, %v1152
    %v1219 = vsub.f32 1.0, %v1167
    %1224 = vrot.lane.b32.xlu0 %v1212, 96
    %v1225 = vpop.permute.xlu0 %1224
    %1226 = vrot.lane.b32.xlu0 %v1213, 96
    %v1227 = vpop.permute.xlu0 %1226
    %1228 = vrot.lane.b32.xlu0 %v1214, 96
    %v1229 = vpop.permute.xlu0 %1228
    %1230 = vrot.lane.b32.xlu0 %v1215, 96
    %v1231 = vpop.permute.xlu0 %1230
    %v1236 = vmul.f32 %v1216, %v1225
    %v1237 = vmul.f32 %v1217, %v1227
    %v1238 = vmul.f32 %v1218, %v1229
    %v1239 = vmul.f32 %v1219, %v1231
    %v1240 = vmul.f32 %v1122, %v998
    %v1241 = vmul.f32 %v1137, %v999
    %v1242 = vmul.f32 %v1152, %v1000
    %v1243 = vmul.f32 %v1167, %v1001
    %v1244 = vadd.f32 %v1236, %v1240
    %v1245 = vadd.f32 %v1237, %v1241
    %v1246 = vadd.f32 %v1238, %v1242
    %v1247 = vadd.f32 %v1239, %v1243
    %1252 = vrot.lane.b32.xlu0 %v1244, 96
    %v1253 = vpop.permute.xlu0 %1252
    %1254 = vrot.lane.b32.xlu0 %v1245, 96
    %v1255 = vpop.permute.xlu0 %1254
    %1256 = vrot.lane.b32.xlu0 %v1246, 96
    %v1257 = vpop.permute.xlu0 %1256
    %1258 = vrot.lane.b32.xlu0 %v1247, 96
    %v1259 = vpop.permute.xlu0 %1258
    %v1260 = vsel %vm103, %v1253, 0
    %v1262 = vsel %vm103, %v1255, 0
    %v1264 = vsel %vm103, %v1257, 0
    %v1266 = vsel %vm103, %v1259, 0
    %1268 = vmatpush.msra.mxu0 0.0
    %1269 = vmatpush.msra.mxu0 0.0
    %1270 = vmatpush.msra.mxu0 0.0
    %1271 = vmatpush.msra.mxu0 0.0
    %1272 = vmatpush.msra.mxu0 0.0
    %1273 = vmatpush.msra.mxu0 0.0
    %1274 = vmatpush.msra.mxu0 0.0
    %1275 = vmatpush.msra.mxu0 0.0
    %1276 = vmatpush.msra.mxu0 0.0
    %1277 = vmatpush.msra.mxu0 0.0
    %1278 = vmatpush.msra.mxu0 0.0
    %1279 = vmatpush.msra.mxu0 0.0
    %1280 = vmatpush.msra.mxu0 %v552
    %1281 = vmatpush.msra.mxu0 %v551
    %1282 = vmatpush.msra.mxu0 %v550
    %1283 = vmatpush.msra.mxu0 %v549
    %1284 = vmatmul.f32.gmra.mxu0 %v1260
    %v1285 = vpop.f32.mrf.mxu0
    %v1286 = vadd.f32 %v555, %v1285
    %1287 = vmatmul.f32.gmra.mxu0 %v1262
    %v1288 = vpop.f32.mrf.mxu0
    %v1289 = vadd.f32 %v555, %v1288
    %1290 = vmatmul.f32.gmra.mxu0 %v1264
    %v1291 = vpop.f32.mrf.mxu0
    %v1292 = vadd.f32 %v555, %v1291
    %1293 = vmatmul.f32.gmra.mxu0 %v1266
    %v1294 = vpop.f32.mrf.mxu0
    %v1295 = vadd.f32 %v555, %v1294
    %1296 = vdwg.mxu0
    %1297 = vst.msk [vmem:[#allocation2 + $0x40] sm:$0xff] %vm481, %v1286
    %1298 = vst.msk [vmem:[#allocation2 + $0x48] sm:$0xff] %vm481, %v1289
    %1299 = vst.msk [vmem:[#allocation2 + $0x50] sm:$0xff] %vm481, %v1292
    %1300 = vst.msk [vmem:[#allocation2 + $0x58] sm:$0xff] %vm481, %v1295
    %v1301 = vld [vmem:[#allocation2 + $0x60] sm:$0xff]
    %v1302 = vld [vmem:[#allocation2 + $0x68] sm:$0xff]
    %v1303 = vld [vmem:[#allocation2 + $0x70] sm:$0xff]
    %v1304 = vld [vmem:[#allocation2 + $0x78] sm:$0xff]
    %1305 = vmatpush.msra.mxu0 0.0
    %1306 = vmatpush.msra.mxu0 0.0
    %1307 = vmatpush.msra.mxu0 0.0
    %1308 = vmatpush.msra.mxu0 0.0
    %1309 = vmatpush.msra.mxu0 0.0
    %1310 = vmatpush.msra.mxu0 0.0
    %1311 = vmatpush.msra.mxu0 0.0
    %1312 = vmatpush.msra.mxu0 0.0
    %1313 = vmatpush.msra.mxu0 0.0
    %1314 = vmatpush.msra.mxu0 0.0
    %1315 = vmatpush.msra.mxu0 0.0
    %1316 = vmatpush.msra.mxu0 0.0
    %1317 = vmatpush.msra.mxu0 %v545
    %1318 = vmatpush.msra.mxu0 %v544
    %1319 = vmatpush.msra.mxu0 %v543
    %1320 = vmatpush.msra.mxu0 %v542
    %1321 = vmatmul.f32.gmra.mxu0 %v1260
    %v1322 = vpop.f32.mrf.mxu0
    %v1323 = vadd.f32 0.0, %v1322
    %1324 = vmatmul.f32.gmra.mxu0 %v1262
    %v1325 = vpop.f32.mrf.mxu0
    %v1326 = vadd.f32 0.0, %v1325
    %1327 = vmatmul.f32.gmra.mxu0 %v1264
    %v1328 = vpop.f32.mrf.mxu0
    %v1329 = vadd.f32 0.0, %v1328
    %1330 = vmatmul.f32.gmra.mxu0 %v1266
    %v1331 = vpop.f32.mrf.mxu0
    %v1332 = vadd.f32 0.0, %v1331
    %1333 = vdwg.mxu0
    %v1334 = vadd.f32 %v1301, %v1323
    %v1335 = vadd.f32 %v1302, %v1326
    %v1336 = vadd.f32 %v1303, %v1329
    %v1337 = vadd.f32 %v1304, %v1332
    %v1338 = vxor.u32 %v1334, 2147483648
    %v1339 = vxor.u32 %v1335, 2147483648
    %v1340 = vxor.u32 %v1336, 2147483648
    %v1341 = vxor.u32 %v1337, 2147483648
    %v1342 = vmul.f32 %v1338, 1.442695
    %v1343 = vpow.pop %v1342
    %v1344 = vmul.f32 %v1339, 1.442695
    %v1345 = vpow.pop %v1344
    %v1346 = vmul.f32 %v1340, 1.442695
    %v1347 = vpow.pop %v1346
    %v1348 = vmul.f32 %v1341, 1.442695
    %v1349 = vpow.pop %v1348
    %v1350 = vadd.f32 %v1343, 1.0
    %v1351 = vadd.f32 %v1345, 1.0
    %v1352 = vadd.f32 %v1347, 1.0
    %v1353 = vadd.f32 %v1349, 1.0
    %v1354 = vrcp.pop %v1350
    %v1355 = vmul.f32 %v1350, %v1354
    %v1356 = vsub.f32 1.0, %v1355
    %v1357 = vmul.f32 %v1354, %v1356
    %v1358 = vadd.f32 %v1354, %v1357
    %vm1359 = vweird.f32 %v1350
    %vm1360 = vweird.f32 %v1354
    %vm1361 = vmor %vm1359, %vm1360
    %v1362 = vsel %vm1361, %v1354, %v1358
    %v1363 = vand.u32 2147483647, %v1350
    %vm1364 = vcmp.eq.f32.partialorder %v1363, 8.507059e+37
    %v1365 = vand.u32 %v1350, 2147483648
    %v1366 = vor.u32 1.1754944e-38, %v1365
    %v1367 = vsel %vm1364, %v1366, %v1362
    %v1368 = vmul.f32 1.0, %v1367
    %v1369 = vrcp.pop %v1351
    %v1370 = vmul.f32 %v1351, %v1369
    %v1371 = vsub.f32 1.0, %v1370
    %v1372 = vmul.f32 %v1369, %v1371
    %v1373 = vadd.f32 %v1369, %v1372
    %vm1374 = vweird.f32 %v1351
    %vm1375 = vweird.f32 %v1369
    %vm1376 = vmor %vm1374, %vm1375
    %v1377 = vsel %vm1376, %v1369, %v1373
    %v1378 = vand.u32 2147483647, %v1351
    %vm1379 = vcmp.eq.f32.partialorder %v1378, 8.507059e+37
    %v1380 = vand.u32 %v1351, 2147483648
    %v1381 = vor.u32 1.1754944e-38, %v1380
    %v1382 = vsel %vm1379, %v1381, %v1377
    %v1383 = vmul.f32 1.0, %v1382
    %v1384 = vrcp.pop %v1352
    %v1385 = vmul.f32 %v1352, %v1384
    %v1386 = vsub.f32 1.0, %v1385
    %v1387 = vmul.f32 %v1384, %v1386
    %v1388 = vadd.f32 %v1384, %v1387
    %vm1389 = vweird.f32 %v1352
    %vm1390 = vweird.f32 %v1384
    %vm1391 = vmor %vm1389, %vm1390
    %v1392 = vsel %vm1391, %v1384, %v1388
    %v1393 = vand.u32 2147483647, %v1352
    %vm1394 = vcmp.eq.f32.partialorder %v1393, 8.507059e+37
    %v1395 = vand.u32 %v1352, 2147483648
    %v1396 = vor.u32 1.1754944e-38, %v1395
    %v1397 = vsel %vm1394, %v1396, %v1392
    %v1398 = vmul.f32 1.0, %v1397
    %v1399 = vrcp.pop %v1353
    %v1400 = vmul.f32 %v1353, %v1399
    %v1401 = vsub.f32 1.0, %v1400
    %v1402 = vmul.f32 %v1399, %v1401
    %v1403 = vadd.f32 %v1399, %v1402
    %vm1404 = vweird.f32 %v1353
    %vm1405 = vweird.f32 %v1399
    %vm1406 = vmor %vm1404, %vm1405
    %v1407 = vsel %vm1406, %v1399, %v1403
    %v1408 = vand.u32 2147483647, %v1353
    %vm1409 = vcmp.eq.f32.partialorder %v1408, 8.507059e+37
    %v1410 = vand.u32 %v1353, 2147483648
    %v1411 = vor.u32 1.1754944e-38, %v1410
    %v1412 = vsel %vm1409, %v1411, %v1407
    %v1413 = vmul.f32 1.0, %v1412
    %v1414 = vadd.f32 %v1323, %v674
    %v1415 = vadd.f32 %v1326, %v674
    %v1416 = vadd.f32 %v1329, %v674
    %v1417 = vadd.f32 %v1332, %v674
    %1422 = vrot.lane.b32.xlu0 %v1414, 64
    %v1423 = vpop.permute.xlu0 %1422
    %1424 = vrot.lane.b32.xlu0 %v1415, 64
    %v1425 = vpop.permute.xlu0 %1424
    %1426 = vrot.lane.b32.xlu0 %v1416, 64
    %v1427 = vpop.permute.xlu0 %1426
    %1428 = vrot.lane.b32.xlu0 %v1417, 64
    %v1429 = vpop.permute.xlu0 %1428
    %v1434 = vmul.f32 %v1368, %v1423
    %v1435 = vmul.f32 %v1383, %v1425
    %v1436 = vmul.f32 %v1398, %v1427
    %v1437 = vmul.f32 %v1413, %v1429
    %1442 = vrot.lane.b32.xlu0 %v1434, 64
    %v1443 = vpop.permute.xlu0 %1442
    %1444 = vrot.lane.b32.xlu0 %v1435, 64
    %v1445 = vpop.permute.xlu0 %1444
    %1446 = vrot.lane.b32.xlu0 %v1436, 64
    %v1447 = vpop.permute.xlu0 %1446
    %1448 = vrot.lane.b32.xlu0 %v1437, 64
    %v1449 = vpop.permute.xlu0 %1448
    %v1454 = vadd.f32 %v1301, %v1443
    %v1455 = vadd.f32 %v1302, %v1445
    %v1456 = vadd.f32 %v1303, %v1447
    %v1457 = vadd.f32 %v1304, %v1449
    %v1458 = vtanh.pop %v1454
    %v1459 = vtanh.pop %v1455
    %v1460 = vtanh.pop %v1456
    %v1461 = vtanh.pop %v1457
    %v1462 = vsub.f32 1.0, %v1368
    %v1463 = vsub.f32 1.0, %v1383
    %v1464 = vsub.f32 1.0, %v1398
    %v1465 = vsub.f32 1.0, %v1413
    %1470 = vrot.lane.b32.xlu0 %v1458, 96
    %v1471 = vpop.permute.xlu0 %1470
    %1472 = vrot.lane.b32.xlu0 %v1459, 96
    %v1473 = vpop.permute.xlu0 %1472
    %1474 = vrot.lane.b32.xlu0 %v1460, 96
    %v1475 = vpop.permute.xlu0 %1474
    %1476 = vrot.lane.b32.xlu0 %v1461, 96
    %v1477 = vpop.permute.xlu0 %1476
    %v1482 = vmul.f32 %v1462, %v1471
    %v1483 = vmul.f32 %v1463, %v1473
    %v1484 = vmul.f32 %v1464, %v1475
    %v1485 = vmul.f32 %v1465, %v1477
    %v1486 = vmul.f32 %v1368, %v1244
    %v1487 = vmul.f32 %v1383, %v1245
    %v1488 = vmul.f32 %v1398, %v1246
    %v1489 = vmul.f32 %v1413, %v1247
    %v1490 = vadd.f32 %v1482, %v1486
    %v1491 = vadd.f32 %v1483, %v1487
    %v1492 = vadd.f32 %v1484, %v1488
    %v1493 = vadd.f32 %v1485, %v1489
    %1498 = vrot.lane.b32.xlu0 %v1490, 96
    %v1499 = vpop.permute.xlu0 %1498
    %1500 = vrot.lane.b32.xlu0 %v1491, 96
    %v1501 = vpop.permute.xlu0 %1500
    %1502 = vrot.lane.b32.xlu0 %v1492, 96
    %v1503 = vpop.permute.xlu0 %1502
    %1504 = vrot.lane.b32.xlu0 %v1493, 96
    %v1505 = vpop.permute.xlu0 %1504
    %v1506 = vsel %vm103, %v1499, 0
    %v1508 = vsel %vm103, %v1501, 0
    %v1510 = vsel %vm103, %v1503, 0
    %v1512 = vsel %vm103, %v1505, 0
    %1514 = vmatpush.msra.mxu0 0.0
    %1515 = vmatpush.msra.mxu0 0.0
    %1516 = vmatpush.msra.mxu0 0.0
    %1517 = vmatpush.msra.mxu0 0.0
    %1518 = vmatpush.msra.mxu0 0.0
    %1519 = vmatpush.msra.mxu0 0.0
    %1520 = vmatpush.msra.mxu0 0.0
    %1521 = vmatpush.msra.mxu0 0.0
    %1522 = vmatpush.msra.mxu0 0.0
    %1523 = vmatpush.msra.mxu0 0.0
    %1524 = vmatpush.msra.mxu0 0.0
    %1525 = vmatpush.msra.mxu0 0.0
    %1526 = vmatpush.msra.mxu0 %v552
    %1527 = vmatpush.msra.mxu0 %v551
    %1528 = vmatpush.msra.mxu0 %v550
    %1529 = vmatpush.msra.mxu0 %v549
    %1530 = vmatmul.f32.gmra.mxu0 %v1506
    %v1531 = vpop.f32.mrf.mxu0
    %v1532 = vadd.f32 %v555, %v1531
    %1533 = vmatmul.f32.gmra.mxu0 %v1508
    %v1534 = vpop.f32.mrf.mxu0
    %v1535 = vadd.f32 %v555, %v1534
    %1536 = vmatmul.f32.gmra.mxu0 %v1510
    %v1537 = vpop.f32.mrf.mxu0
    %v1538 = vadd.f32 %v555, %v1537
    %1539 = vmatmul.f32.gmra.mxu0 %v1512
    %v1540 = vpop.f32.mrf.mxu0
    %v1541 = vadd.f32 %v555, %v1540
    %1542 = vdwg.mxu0
    %1543 = vst.msk [vmem:[#allocation2 + $0x60] sm:$0xff] %vm481, %v1532
    %1544 = vst.msk [vmem:[#allocation2 + $0x68] sm:$0xff] %vm481, %v1535
    %1545 = vst.msk [vmem:[#allocation2 + $0x70] sm:$0xff] %vm481, %v1538
    %1546 = vst.msk [vmem:[#allocation2 + $0x78] sm:$0xff] %vm481, %v1541
    %v1547 = vld [vmem:[#allocation2 + $0x80] sm:$0xff]
    %v1548 = vld [vmem:[#allocation2 + $0x88] sm:$0xff]
    %v1549 = vld [vmem:[#allocation2 + $0x90] sm:$0xff]
    %v1550 = vld [vmem:[#allocation2 + $0x98] sm:$0xff]
    %1551 = vmatpush.msra.mxu0 0.0
    %1552 = vmatpush.msra.mxu0 0.0
    %1553 = vmatpush.msra.mxu0 0.0
    %1554 = vmatpush.msra.mxu0 0.0
    %1555 = vmatpush.msra.mxu0 0.0
    %1556 = vmatpush.msra.mxu0 0.0
    %1557 = vmatpush.msra.mxu0 0.0
    %1558 = vmatpush.msra.mxu0 0.0
    %1559 = vmatpush.msra.mxu0 0.0
    %1560 = vmatpush.msra.mxu0 0.0
    %1561 = vmatpush.msra.mxu0 0.0
    %1562 = vmatpush.msra.mxu0 0.0
    %1563 = vmatpush.msra.mxu0 %v545
    %1564 = vmatpush.msra.mxu0 %v544
    %1565 = vmatpush.msra.mxu0 %v543
    %1566 = vmatpush.msra.mxu0 %v542
    %1567 = vmatmul.f32.gmra.mxu0 %v1506
    %v1568 = vpop.f32.mrf.mxu0
    %v1569 = vadd.f32 0.0, %v1568
    %1570 = vmatmul.f32.gmra.mxu0 %v1508
    %v1571 = vpop.f32.mrf.mxu0
    %v1572 = vadd.f32 0.0, %v1571
    %1573 = vmatmul.f32.gmra.mxu0 %v1510
    %v1574 = vpop.f32.mrf.mxu0
    %v1575 = vadd.f32 0.0, %v1574
    %1576 = vmatmul.f32.gmra.mxu0 %v1512
    %v1577 = vpop.f32.mrf.mxu0
    %v1578 = vadd.f32 0.0, %v1577
    %1579 = vdwg.mxu0
    %v1580 = vadd.f32 %v1547, %v1569
    %v1581 = vadd.f32 %v1548, %v1572
    %v1582 = vadd.f32 %v1549, %v1575
    %v1583 = vadd.f32 %v1550, %v1578
    %v1584 = vxor.u32 %v1580, 2147483648
    %v1585 = vxor.u32 %v1581, 2147483648
    %v1586 = vxor.u32 %v1582, 2147483648
    %v1587 = vxor.u32 %v1583, 2147483648
    %v1588 = vmul.f32 %v1584, 1.442695
    %v1589 = vpow.pop %v1588
    %v1590 = vmul.f32 %v1585, 1.442695
    %v1591 = vpow.pop %v1590
    %v1592 = vmul.f32 %v1586, 1.442695
    %v1593 = vpow.pop %v1592
    %v1594 = vmul.f32 %v1587, 1.442695
    %v1595 = vpow.pop %v1594
    %v1596 = vadd.f32 %v1589, 1.0
    %v1597 = vadd.f32 %v1591, 1.0
    %v1598 = vadd.f32 %v1593, 1.0
    %v1599 = vadd.f32 %v1595, 1.0
    %v1600 = vrcp.pop %v1596
    %v1601 = vmul.f32 %v1596, %v1600
    %v1602 = vsub.f32 1.0, %v1601
    %v1603 = vmul.f32 %v1600, %v1602
    %v1604 = vadd.f32 %v1600, %v1603
    %vm1605 = vweird.f32 %v1596
    %vm1606 = vweird.f32 %v1600
    %vm1607 = vmor %vm1605, %vm1606
    %v1608 = vsel %vm1607, %v1600, %v1604
    %v1609 = vand.u32 2147483647, %v1596
    %vm1610 = vcmp.eq.f32.partialorder %v1609, 8.507059e+37
    %v1611 = vand.u32 %v1596, 2147483648
    %v1612 = vor.u32 1.1754944e-38, %v1611
    %v1613 = vsel %vm1610, %v1612, %v1608
    %v1614 = vmul.f32 1.0, %v1613
    %v1615 = vrcp.pop %v1597
    %v1616 = vmul.f32 %v1597, %v1615
    %v1617 = vsub.f32 1.0, %v1616
    %v1618 = vmul.f32 %v1615, %v1617
    %v1619 = vadd.f32 %v1615, %v1618
    %vm1620 = vweird.f32 %v1597
    %vm1621 = vweird.f32 %v1615
    %vm1622 = vmor %vm1620, %vm1621
    %v1623 = vsel %vm1622, %v1615, %v1619
    %v1624 = vand.u32 2147483647, %v1597
    %vm1625 = vcmp.eq.f32.partialorder %v1624, 8.507059e+37
    %v1626 = vand.u32 %v1597, 2147483648
    %v1627 = vor.u32 1.1754944e-38, %v1626
    %v1628 = vsel %vm1625, %v1627, %v1623
    %v1629 = vmul.f32 1.0, %v1628
    %v1630 = vrcp.pop %v1598
    %v1631 = vmul.f32 %v1598, %v1630
    %v1632 = vsub.f32 1.0, %v1631
    %v1633 = vmul.f32 %v1630, %v1632
    %v1634 = vadd.f32 %v1630, %v1633
    %vm1635 = vweird.f32 %v1598
    %vm1636 = vweird.f32 %v1630
    %vm1637 = vmor %vm1635, %vm1636
    %v1638 = vsel %vm1637, %v1630, %v1634
    %v1639 = vand.u32 2147483647, %v1598
    %vm1640 = vcmp.eq.f32.partialorder %v1639, 8.507059e+37
    %v1641 = vand.u32 %v1598, 2147483648
    %v1642 = vor.u32 1.1754944e-38, %v1641
    %v1643 = vsel %vm1640, %v1642, %v1638
    %v1644 = vmul.f32 1.0, %v1643
    %v1645 = vrcp.pop %v1599
    %v1646 = vmul.f32 %v1599, %v1645
    %v1647 = vsub.f32 1.0, %v1646
    %v1648 = vmul.f32 %v1645, %v1647
    %v1649 = vadd.f32 %v1645, %v1648
    %vm1650 = vweird.f32 %v1599
    %vm1651 = vweird.f32 %v1645
    %vm1652 = vmor %vm1650, %vm1651
    %v1653 = vsel %vm1652, %v1645, %v1649
    %v1654 = vand.u32 2147483647, %v1599
    %vm1655 = vcmp.eq.f32.partialorder %v1654, 8.507059e+37
    %v1656 = vand.u32 %v1599, 2147483648
    %v1657 = vor.u32 1.1754944e-38, %v1656
    %v1658 = vsel %vm1655, %v1657, %v1653
    %v1659 = vmul.f32 1.0, %v1658
    %v1660 = vadd.f32 %v1569, %v674
    %v1661 = vadd.f32 %v1572, %v674
    %v1662 = vadd.f32 %v1575, %v674
    %v1663 = vadd.f32 %v1578, %v674
    %1668 = vrot.lane.b32.xlu0 %v1660, 64
    %v1669 = vpop.permute.xlu0 %1668
    %1670 = vrot.lane.b32.xlu0 %v1661, 64
    %v1671 = vpop.permute.xlu0 %1670
    %1672 = vrot.lane.b32.xlu0 %v1662, 64
    %v1673 = vpop.permute.xlu0 %1672
    %1674 = vrot.lane.b32.xlu0 %v1663, 64
    %v1675 = vpop.permute.xlu0 %1674
    %v1680 = vmul.f32 %v1614, %v1669
    %v1681 = vmul.f32 %v1629, %v1671
    %v1682 = vmul.f32 %v1644, %v1673
    %v1683 = vmul.f32 %v1659, %v1675
    %1688 = vrot.lane.b32.xlu0 %v1680, 64
    %v1689 = vpop.permute.xlu0 %1688
    %1690 = vrot.lane.b32.xlu0 %v1681, 64
    %v1691 = vpop.permute.xlu0 %1690
    %1692 = vrot.lane.b32.xlu0 %v1682, 64
    %v1693 = vpop.permute.xlu0 %1692
    %1694 = vrot.lane.b32.xlu0 %v1683, 64
    %v1695 = vpop.permute.xlu0 %1694
    %v1700 = vadd.f32 %v1547, %v1689
    %v1701 = vadd.f32 %v1548, %v1691
    %v1702 = vadd.f32 %v1549, %v1693
    %v1703 = vadd.f32 %v1550, %v1695
    %v1704 = vtanh.pop %v1700
    %v1705 = vtanh.pop %v1701
    %v1706 = vtanh.pop %v1702
    %v1707 = vtanh.pop %v1703
    %v1708 = vsub.f32 1.0, %v1614
    %v1709 = vsub.f32 1.0, %v1629
    %v1710 = vsub.f32 1.0, %v1644
    %v1711 = vsub.f32 1.0, %v1659
    %1716 = vrot.lane.b32.xlu0 %v1704, 96
    %v1717 = vpop.permute.xlu0 %1716
    %1718 = vrot.lane.b32.xlu0 %v1705, 96
    %v1719 = vpop.permute.xlu0 %1718
    %1720 = vrot.lane.b32.xlu0 %v1706, 96
    %v1721 = vpop.permute.xlu0 %1720
    %1722 = vrot.lane.b32.xlu0 %v1707, 96
    %v1723 = vpop.permute.xlu0 %1722
    %v1728 = vmul.f32 %v1708, %v1717
    %v1729 = vmul.f32 %v1709, %v1719
    %v1730 = vmul.f32 %v1710, %v1721
    %v1731 = vmul.f32 %v1711, %v1723
    %v1732 = vmul.f32 %v1614, %v1490
    %v1733 = vmul.f32 %v1629, %v1491
    %v1734 = vmul.f32 %v1644, %v1492
    %v1735 = vmul.f32 %v1659, %v1493
    %v1736 = vadd.f32 %v1728, %v1732
    %v1737 = vadd.f32 %v1729, %v1733
    %v1738 = vadd.f32 %v1730, %v1734
    %v1739 = vadd.f32 %v1731, %v1735
    %1744 = vrot.lane.b32.xlu0 %v1736, 96
    %v1745 = vpop.permute.xlu0 %1744
    %1746 = vrot.lane.b32.xlu0 %v1737, 96
    %v1747 = vpop.permute.xlu0 %1746
    %1748 = vrot.lane.b32.xlu0 %v1738, 96
    %v1749 = vpop.permute.xlu0 %1748
    %1750 = vrot.lane.b32.xlu0 %v1739, 96
    %v1751 = vpop.permute.xlu0 %1750
    %v1752 = vsel %vm103, %v1745, 0
    %v1754 = vsel %vm103, %v1747, 0
    %v1756 = vsel %vm103, %v1749, 0
    %v1758 = vsel %vm103, %v1751, 0
    %1760 = vmatpush.msra.mxu0 0.0
    %1761 = vmatpush.msra.mxu0 0.0
    %1762 = vmatpush.msra.mxu0 0.0
    %1763 = vmatpush.msra.mxu0 0.0
    %1764 = vmatpush.msra.mxu0 0.0
    %1765 = vmatpush.msra.mxu0 0.0
    %1766 = vmatpush.msra.mxu0 0.0
    %1767 = vmatpush.msra.mxu0 0.0
    %1768 = vmatpush.msra.mxu0 0.0
    %1769 = vmatpush.msra.mxu0 0.0
    %1770 = vmatpush.msra.mxu0 0.0
    %1771 = vmatpush.msra.mxu0 0.0
    %1772 = vmatpush.msra.mxu0 %v552
    %1773 = vmatpush.msra.mxu0 %v551
    %1774 = vmatpush.msra.mxu0 %v550
    %1775 = vmatpush.msra.mxu0 %v549
    %1776 = vmatmul.f32.gmra.mxu0 %v1752
    %v1777 = vpop.f32.mrf.mxu0
    %v1778 = vadd.f32 %v555, %v1777
    %1779 = vmatmul.f32.gmra.mxu0 %v1754
    %v1780 = vpop.f32.mrf.mxu0
    %v1781 = vadd.f32 %v555, %v1780
    %1782 = vmatmul.f32.gmra.mxu0 %v1756
    %v1783 = vpop.f32.mrf.mxu0
    %v1784 = vadd.f32 %v555, %v1783
    %1785 = vmatmul.f32.gmra.mxu0 %v1758
    %v1786 = vpop.f32.mrf.mxu0
    %v1787 = vadd.f32 %v555, %v1786
    %1788 = vdwg.mxu0
    %1789 = vst.msk [vmem:[#allocation2 + $0x80] sm:$0xff] %vm481, %v1778
    %1790 = vst.msk [vmem:[#allocation2 + $0x88] sm:$0xff] %vm481, %v1781
    %1791 = vst.msk [vmem:[#allocation2 + $0x90] sm:$0xff] %vm481, %v1784
    %1792 = vst.msk [vmem:[#allocation2 + $0x98] sm:$0xff] %vm481, %v1787
    %v1793 = vld [vmem:[#allocation2 + $0xa0] sm:$0xff]
    %v1794 = vld [vmem:[#allocation2 + $0xa8] sm:$0xff]
    %v1795 = vld [vmem:[#allocation2 + $0xb0] sm:$0xff]
    %v1796 = vld [vmem:[#allocation2 + $0xb8] sm:$0xff]
    %1797 = vmatpush.msra.mxu0 0.0
    %1798 = vmatpush.msra.mxu0 0.0
    %1799 = vmatpush.msra.mxu0 0.0
    %1800 = vmatpush.msra.mxu0 0.0
    %1801 = vmatpush.msra.mxu0 0.0
    %1802 = vmatpush.msra.mxu0 0.0
    %1803 = vmatpush.msra.mxu0 0.0
    %1804 = vmatpush.msra.mxu0 0.0
    %1805 = vmatpush.msra.mxu0 0.0
    %1806 = vmatpush.msra.mxu0 0.0
    %1807 = vmatpush.msra.mxu0 0.0
    %1808 = vmatpush.msra.mxu0 0.0
    %1809 = vmatpush.msra.mxu0 %v545
    %1810 = vmatpush.msra.mxu0 %v544
    %1811 = vmatpush.msra.mxu0 %v543
    %1812 = vmatpush.msra.mxu0 %v542
    %1813 = vmatmul.f32.gmra.mxu0 %v1752
    %v1814 = vpop.f32.mrf.mxu0
    %v1815 = vadd.f32 0.0, %v1814
    %1816 = vmatmul.f32.gmra.mxu0 %v1754
    %v1817 = vpop.f32.mrf.mxu0
    %v1818 = vadd.f32 0.0, %v1817
    %1819 = vmatmul.f32.gmra.mxu0 %v1756
    %v1820 = vpop.f32.mrf.mxu0
    %v1821 = vadd.f32 0.0, %v1820
    %1822 = vmatmul.f32.gmra.mxu0 %v1758
    %v1823 = vpop.f32.mrf.mxu0
    %v1824 = vadd.f32 0.0, %v1823
    %1825 = vdwg.mxu0
    %v1826 = vadd.f32 %v1793, %v1815
    %v1827 = vadd.f32 %v1794, %v1818
    %v1828 = vadd.f32 %v1795, %v1821
    %v1829 = vadd.f32 %v1796, %v1824
    %v1830 = vxor.u32 %v1826, 2147483648
    %v1831 = vxor.u32 %v1827, 2147483648
    %v1832 = vxor.u32 %v1828, 2147483648
    %v1833 = vxor.u32 %v1829, 2147483648
    %v1834 = vmul.f32 %v1830, 1.442695
    %v1835 = vpow.pop %v1834
    %v1836 = vmul.f32 %v1831, 1.442695
    %v1837 = vpow.pop %v1836
    %v1838 = vmul.f32 %v1832, 1.442695
    %v1839 = vpow.pop %v1838
    %v1840 = vmul.f32 %v1833, 1.442695
    %v1841 = vpow.pop %v1840
    %v1842 = vadd.f32 %v1835, 1.0
    %v1843 = vadd.f32 %v1837, 1.0
    %v1844 = vadd.f32 %v1839, 1.0
    %v1845 = vadd.f32 %v1841, 1.0
    %v1846 = vrcp.pop %v1842
    %v1847 = vmul.f32 %v1842, %v1846
    %v1848 = vsub.f32 1.0, %v1847
    %v1849 = vmul.f32 %v1846, %v1848
    %v1850 = vadd.f32 %v1846, %v1849
    %vm1851 = vweird.f32 %v1842
    %vm1852 = vweird.f32 %v1846
    %vm1853 = vmor %vm1851, %vm1852
    %v1854 = vsel %vm1853, %v1846, %v1850
    %v1855 = vand.u32 2147483647, %v1842
    %vm1856 = vcmp.eq.f32.partialorder %v1855, 8.507059e+37
    %v1857 = vand.u32 %v1842, 2147483648
    %v1858 = vor.u32 1.1754944e-38, %v1857
    %v1859 = vsel %vm1856, %v1858, %v1854
    %v1860 = vmul.f32 1.0, %v1859
    %v1861 = vrcp.pop %v1843
    %v1862 = vmul.f32 %v1843, %v1861
    %v1863 = vsub.f32 1.0, %v1862
    %v1864 = vmul.f32 %v1861, %v1863
    %v1865 = vadd.f32 %v1861, %v1864
    %vm1866 = vweird.f32 %v1843
    %vm1867 = vweird.f32 %v1861
    %vm1868 = vmor %vm1866, %vm1867
    %v1869 = vsel %vm1868, %v1861, %v1865
    %v1870 = vand.u32 2147483647, %v1843
    %vm1871 = vcmp.eq.f32.partialorder %v1870, 8.507059e+37
    %v1872 = vand.u32 %v1843, 2147483648
    %v1873 = vor.u32 1.1754944e-38, %v1872
    %v1874 = vsel %vm1871, %v1873, %v1869
    %v1875 = vmul.f32 1.0, %v1874
    %v1876 = vrcp.pop %v1844
    %v1877 = vmul.f32 %v1844, %v1876
    %v1878 = vsub.f32 1.0, %v1877
    %v1879 = vmul.f32 %v1876, %v1878
    %v1880 = vadd.f32 %v1876, %v1879
    %vm1881 = vweird.f32 %v1844
    %vm1882 = vweird.f32 %v1876
    %vm1883 = vmor %vm1881, %vm1882
    %v1884 = vsel %vm1883, %v1876, %v1880
    %v1885 = vand.u32 2147483647, %v1844
    %vm1886 = vcmp.eq.f32.partialorder %v1885, 8.507059e+37
    %v1887 = vand.u32 %v1844, 2147483648
    %v1888 = vor.u32 1.1754944e-38, %v1887
    %v1889 = vsel %vm1886, %v1888, %v1884
    %v1890 = vmul.f32 1.0, %v1889
    %v1891 = vrcp.pop %v1845
    %v1892 = vmul.f32 %v1845, %v1891
    %v1893 = vsub.f32 1.0, %v1892
    %v1894 = vmul.f32 %v1891, %v1893
    %v1895 = vadd.f32 %v1891, %v1894
    %vm1896 = vweird.f32 %v1845
    %vm1897 = vweird.f32 %v1891
    %vm1898 = vmor %vm1896, %vm1897
    %v1899 = vsel %vm1898, %v1891, %v1895
    %v1900 = vand.u32 2147483647, %v1845
    %vm1901 = vcmp.eq.f32.partialorder %v1900, 8.507059e+37
    %v1902 = vand.u32 %v1845, 2147483648
    %v1903 = vor.u32 1.1754944e-38, %v1902
    %v1904 = vsel %vm1901, %v1903, %v1899
    %v1905 = vmul.f32 1.0, %v1904
    %v1906 = vadd.f32 %v1815, %v674
    %v1907 = vadd.f32 %v1818, %v674
    %v1908 = vadd.f32 %v1821, %v674
    %v1909 = vadd.f32 %v1824, %v674
    %1914 = vrot.lane.b32.xlu0 %v1906, 64
    %v1915 = vpop.permute.xlu0 %1914
    %1916 = vrot.lane.b32.xlu0 %v1907, 64
    %v1917 = vpop.permute.xlu0 %1916
    %1918 = vrot.lane.b32.xlu0 %v1908, 64
    %v1919 = vpop.permute.xlu0 %1918
    %1920 = vrot.lane.b32.xlu0 %v1909, 64
    %v1921 = vpop.permute.xlu0 %1920
    %v1926 = vmul.f32 %v1860, %v1915
    %v1927 = vmul.f32 %v1875, %v1917
    %v1928 = vmul.f32 %v1890, %v1919
    %v1929 = vmul.f32 %v1905, %v1921
    %1934 = vrot.lane.b32.xlu0 %v1926, 64
    %v1935 = vpop.permute.xlu0 %1934
    %1936 = vrot.lane.b32.xlu0 %v1927, 64
    %v1937 = vpop.permute.xlu0 %1936
    %1938 = vrot.lane.b32.xlu0 %v1928, 64
    %v1939 = vpop.permute.xlu0 %1938
    %1940 = vrot.lane.b32.xlu0 %v1929, 64
    %v1941 = vpop.permute.xlu0 %1940
    %v1946 = vadd.f32 %v1793, %v1935
    %v1947 = vadd.f32 %v1794, %v1937
    %v1948 = vadd.f32 %v1795, %v1939
    %v1949 = vadd.f32 %v1796, %v1941
    %v1950 = vtanh.pop %v1946
    %v1951 = vtanh.pop %v1947
    %v1952 = vtanh.pop %v1948
    %v1953 = vtanh.pop %v1949
    %v1954 = vsub.f32 1.0, %v1860
    %v1955 = vsub.f32 1.0, %v1875
    %v1956 = vsub.f32 1.0, %v1890
    %v1957 = vsub.f32 1.0, %v1905
    %1962 = vrot.lane.b32.xlu0 %v1950, 96
    %v1963 = vpop.permute.xlu0 %1962
    %1964 = vrot.lane.b32.xlu0 %v1951, 96
    %v1965 = vpop.permute.xlu0 %1964
    %1966 = vrot.lane.b32.xlu0 %v1952, 96
    %v1967 = vpop.permute.xlu0 %1966
    %1968 = vrot.lane.b32.xlu0 %v1953, 96
    %v1969 = vpop.permute.xlu0 %1968
    %v1974 = vmul.f32 %v1954, %v1963
    %v1975 = vmul.f32 %v1955, %v1965
    %v1976 = vmul.f32 %v1956, %v1967
    %v1977 = vmul.f32 %v1957, %v1969
    %v1978 = vmul.f32 %v1860, %v1736
    %v1979 = vmul.f32 %v1875, %v1737
    %v1980 = vmul.f32 %v1890, %v1738
    %v1981 = vmul.f32 %v1905, %v1739
    %v1982 = vadd.f32 %v1974, %v1978
    %v1983 = vadd.f32 %v1975, %v1979
    %v1984 = vadd.f32 %v1976, %v1980
    %v1985 = vadd.f32 %v1977, %v1981
    %1990 = vrot.lane.b32.xlu0 %v1982, 96
    %v1991 = vpop.permute.xlu0 %1990
    %1992 = vrot.lane.b32.xlu0 %v1983, 96
    %v1993 = vpop.permute.xlu0 %1992
    %1994 = vrot.lane.b32.xlu0 %v1984, 96
    %v1995 = vpop.permute.xlu0 %1994
    %1996 = vrot.lane.b32.xlu0 %v1985, 96
    %v1997 = vpop.permute.xlu0 %1996
    %v1998 = vsel %vm103, %v1991, 0
    %v2000 = vsel %vm103, %v1993, 0
    %v2002 = vsel %vm103, %v1995, 0
    %v2004 = vsel %vm103, %v1997, 0
    %2006 = vmatpush.msra.mxu0 0.0
    %2007 = vmatpush.msra.mxu0 0.0
    %2008 = vmatpush.msra.mxu0 0.0
    %2009 = vmatpush.msra.mxu0 0.0
    %2010 = vmatpush.msra.mxu0 0.0
    %2011 = vmatpush.msra.mxu0 0.0
    %2012 = vmatpush.msra.mxu0 0.0
    %2013 = vmatpush.msra.mxu0 0.0
    %2014 = vmatpush.msra.mxu0 0.0
    %2015 = vmatpush.msra.mxu0 0.0
    %2016 = vmatpush.msra.mxu0 0.0
    %2017 = vmatpush.msra.mxu0 0.0
    %2018 = vmatpush.msra.mxu0 %v552
    %2019 = vmatpush.msra.mxu0 %v551
    %2020 = vmatpush.msra.mxu0 %v550
    %2021 = vmatpush.msra.mxu0 %v549
    %2022 = vmatmul.f32.gmra.mxu0 %v1998
    %v2023 = vpop.f32.mrf.mxu0
    %v2024 = vadd.f32 %v555, %v2023
    %2025 = vmatmul.f32.gmra.mxu0 %v2000
    %v2026 = vpop.f32.mrf.mxu0
    %v2027 = vadd.f32 %v555, %v2026
    %2028 = vmatmul.f32.gmra.mxu0 %v2002
    %v2029 = vpop.f32.mrf.mxu0
    %v2030 = vadd.f32 %v555, %v2029
    %2031 = vmatmul.f32.gmra.mxu0 %v2004
    %v2032 = vpop.f32.mrf.mxu0
    %v2033 = vadd.f32 %v555, %v2032
    %2034 = vdwg.mxu0
    %2035 = vst.msk [vmem:[#allocation2 + $0xa0] sm:$0xff] %vm481, %v2024
    %2036 = vst.msk [vmem:[#allocation2 + $0xa8] sm:$0xff] %vm481, %v2027
    %2037 = vst.msk [vmem:[#allocation2 + $0xb0] sm:$0xff] %vm481, %v2030
    %2038 = vst.msk [vmem:[#allocation2 + $0xb8] sm:$0xff] %vm481, %v2033
    %v2039 = vld [vmem:[#allocation2 + $0xc0] sm:$0xff]
    %v2040 = vld [vmem:[#allocation2 + $0xc8] sm:$0xff]
    %v2041 = vld [vmem:[#allocation2 + $0xd0] sm:$0xff]
    %v2042 = vld [vmem:[#allocation2 + $0xd8] sm:$0xff]
    %2043 = vmatpush.msra.mxu0 0.0
    %2044 = vmatpush.msra.mxu0 0.0
    %2045 = vmatpush.msra.mxu0 0.0
    %2046 = vmatpush.msra.mxu0 0.0
    %2047 = vmatpush.msra.mxu0 0.0
    %2048 = vmatpush.msra.mxu0 0.0
    %2049 = vmatpush.msra.mxu0 0.0
    %2050 = vmatpush.msra.mxu0 0.0
    %2051 = vmatpush.msra.mxu0 0.0
    %2052 = vmatpush.msra.mxu0 0.0
    %2053 = vmatpush.msra.mxu0 0.0
    %2054 = vmatpush.msra.mxu0 0.0
    %2055 = vmatpush.msra.mxu0 %v545
    %2056 = vmatpush.msra.mxu0 %v544
    %2057 = vmatpush.msra.mxu0 %v543
    %2058 = vmatpush.msra.mxu0 %v542
    %2059 = vmatmul.f32.gmra.mxu0 %v1998
    %v2060 = vpop.f32.mrf.mxu0
    %v2061 = vadd.f32 0.0, %v2060
    %2062 = vmatmul.f32.gmra.mxu0 %v2000
    %v2063 = vpop.f32.mrf.mxu0
    %v2064 = vadd.f32 0.0, %v2063
    %2065 = vmatmul.f32.gmra.mxu0 %v2002
    %v2066 = vpop.f32.mrf.mxu0
    %v2067 = vadd.f32 0.0, %v2066
    %2068 = vmatmul.f32.gmra.mxu0 %v2004
    %v2069 = vpop.f32.mrf.mxu0
    %v2070 = vadd.f32 0.0, %v2069
    %2071 = vdwg.mxu0
    %v2072 = vadd.f32 %v2039, %v2061
    %v2073 = vadd.f32 %v2040, %v2064
    %v2074 = vadd.f32 %v2041, %v2067
    %v2075 = vadd.f32 %v2042, %v2070
    %v2076 = vxor.u32 %v2072, 2147483648
    %v2077 = vxor.u32 %v2073, 2147483648
    %v2078 = vxor.u32 %v2074, 2147483648
    %v2079 = vxor.u32 %v2075, 2147483648
    %v2080 = vmul.f32 %v2076, 1.442695
    %v2081 = vpow.pop %v2080
    %v2082 = vmul.f32 %v2077, 1.442695
    %v2083 = vpow.pop %v2082
    %v2084 = vmul.f32 %v2078, 1.442695
    %v2085 = vpow.pop %v2084
    %v2086 = vmul.f32 %v2079, 1.442695
    %v2087 = vpow.pop %v2086
    %v2088 = vadd.f32 %v2081, 1.0
    %v2089 = vadd.f32 %v2083, 1.0
    %v2090 = vadd.f32 %v2085, 1.0
    %v2091 = vadd.f32 %v2087, 1.0
    %v2092 = vrcp.pop %v2088
    %v2093 = vmul.f32 %v2088, %v2092
    %v2094 = vsub.f32 1.0, %v2093
    %v2095 = vmul.f32 %v2092, %v2094
    %v2096 = vadd.f32 %v2092, %v2095
    %vm2097 = vweird.f32 %v2088
    %vm2098 = vweird.f32 %v2092
    %vm2099 = vmor %vm2097, %vm2098
    %v2100 = vsel %vm2099, %v2092, %v2096
    %v2101 = vand.u32 2147483647, %v2088
    %vm2102 = vcmp.eq.f32.partialorder %v2101, 8.507059e+37
    %v2103 = vand.u32 %v2088, 2147483648
    %v2104 = vor.u32 1.1754944e-38, %v2103
    %v2105 = vsel %vm2102, %v2104, %v2100
    %v2106 = vmul.f32 1.0, %v2105
    %v2107 = vrcp.pop %v2089
    %v2108 = vmul.f32 %v2089, %v2107
    %v2109 = vsub.f32 1.0, %v2108
    %v2110 = vmul.f32 %v2107, %v2109
    %v2111 = vadd.f32 %v2107, %v2110
    %vm2112 = vweird.f32 %v2089
    %vm2113 = vweird.f32 %v2107
    %vm2114 = vmor %vm2112, %vm2113
    %v2115 = vsel %vm2114, %v2107, %v2111
    %v2116 = vand.u32 2147483647, %v2089
    %vm2117 = vcmp.eq.f32.partialorder %v2116, 8.507059e+37
    %v2118 = vand.u32 %v2089, 2147483648
    %v2119 = vor.u32 1.1754944e-38, %v2118
    %v2120 = vsel %vm2117, %v2119, %v2115
    %v2121 = vmul.f32 1.0, %v2120
    %v2122 = vrcp.pop %v2090
    %v2123 = vmul.f32 %v2090, %v2122
    %v2124 = vsub.f32 1.0, %v2123
    %v2125 = vmul.f32 %v2122, %v2124
    %v2126 = vadd.f32 %v2122, %v2125
    %vm2127 = vweird.f32 %v2090
    %vm2128 = vweird.f32 %v2122
    %vm2129 = vmor %vm2127, %vm2128
    %v2130 = vsel %vm2129, %v2122, %v2126
    %v2131 = vand.u32 2147483647, %v2090
    %vm2132 = vcmp.eq.f32.partialorder %v2131, 8.507059e+37
    %v2133 = vand.u32 %v2090, 2147483648
    %v2134 = vor.u32 1.1754944e-38, %v2133
    %v2135 = vsel %vm2132, %v2134, %v2130
    %v2136 = vmul.f32 1.0, %v2135
    %v2137 = vrcp.pop %v2091
    %v2138 = vmul.f32 %v2091, %v2137
    %v2139 = vsub.f32 1.0, %v2138
    %v2140 = vmul.f32 %v2137, %v2139
    %v2141 = vadd.f32 %v2137, %v2140
    %vm2142 = vweird.f32 %v2091
    %vm2143 = vweird.f32 %v2137
    %vm2144 = vmor %vm2142, %vm2143
    %v2145 = vsel %vm2144, %v2137, %v2141
    %v2146 = vand.u32 2147483647, %v2091
    %vm2147 = vcmp.eq.f32.partialorder %v2146, 8.507059e+37
    %v2148 = vand.u32 %v2091, 2147483648
    %v2149 = vor.u32 1.1754944e-38, %v2148
    %v2150 = vsel %vm2147, %v2149, %v2145
    %v2151 = vmul.f32 1.0, %v2150
    %v2152 = vadd.f32 %v2061, %v674
    %v2153 = vadd.f32 %v2064, %v674
    %v2154 = vadd.f32 %v2067, %v674
    %v2155 = vadd.f32 %v2070, %v674
    %2160 = vrot.lane.b32.xlu0 %v2152, 64
    %v2161 = vpop.permute.xlu0 %2160
    %2162 = vrot.lane.b32.xlu0 %v2153, 64
    %v2163 = vpop.permute.xlu0 %2162
    %2164 = vrot.lane.b32.xlu0 %v2154, 64
    %v2165 = vpop.permute.xlu0 %2164
    %2166 = vrot.lane.b32.xlu0 %v2155, 64
    %v2167 = vpop.permute.xlu0 %2166
    %v2172 = vmul.f32 %v2106, %v2161
    %v2173 = vmul.f32 %v2121, %v2163
    %v2174 = vmul.f32 %v2136, %v2165
    %v2175 = vmul.f32 %v2151, %v2167
    %2180 = vrot.lane.b32.xlu0 %v2172, 64
    %v2181 = vpop.permute.xlu0 %2180
    %2182 = vrot.lane.b32.xlu0 %v2173, 64
    %v2183 = vpop.permute.xlu0 %2182
    %2184 = vrot.lane.b32.xlu0 %v2174, 64
    %v2185 = vpop.permute.xlu0 %2184
    %2186 = vrot.lane.b32.xlu0 %v2175, 64
    %v2187 = vpop.permute.xlu0 %2186
    %v2192 = vadd.f32 %v2039, %v2181
    %v2193 = vadd.f32 %v2040, %v2183
    %v2194 = vadd.f32 %v2041, %v2185
    %v2195 = vadd.f32 %v2042, %v2187
    %v2196 = vtanh.pop %v2192
    %v2197 = vtanh.pop %v2193
    %v2198 = vtanh.pop %v2194
    %v2199 = vtanh.pop %v2195
    %v2200 = vsub.f32 1.0, %v2106
    %v2201 = vsub.f32 1.0, %v2121
    %v2202 = vsub.f32 1.0, %v2136
    %v2203 = vsub.f32 1.0, %v2151
    %2208 = vrot.lane.b32.xlu0 %v2196, 96
    %v2209 = vpop.permute.xlu0 %2208
    %2210 = vrot.lane.b32.xlu0 %v2197, 96
    %v2211 = vpop.permute.xlu0 %2210
    %2212 = vrot.lane.b32.xlu0 %v2198, 96
    %v2213 = vpop.permute.xlu0 %2212
    %2214 = vrot.lane.b32.xlu0 %v2199, 96
    %v2215 = vpop.permute.xlu0 %2214
    %v2220 = vmul.f32 %v2200, %v2209
    %v2221 = vmul.f32 %v2201, %v2211
    %v2222 = vmul.f32 %v2202, %v2213
    %v2223 = vmul.f32 %v2203, %v2215
    %v2224 = vmul.f32 %v2106, %v1982
    %v2225 = vmul.f32 %v2121, %v1983
    %v2226 = vmul.f32 %v2136, %v1984
    %v2227 = vmul.f32 %v2151, %v1985
    %v2228 = vadd.f32 %v2220, %v2224
    %v2229 = vadd.f32 %v2221, %v2225
    %v2230 = vadd.f32 %v2222, %v2226
    %v2231 = vadd.f32 %v2223, %v2227
    %2236 = vrot.lane.b32.xlu0 %v2228, 96
    %v2237 = vpop.permute.xlu0 %2236
    %2238 = vrot.lane.b32.xlu0 %v2229, 96
    %v2239 = vpop.permute.xlu0 %2238
    %2240 = vrot.lane.b32.xlu0 %v2230, 96
    %v2241 = vpop.permute.xlu0 %2240
    %2242 = vrot.lane.b32.xlu0 %v2231, 96
    %v2243 = vpop.permute.xlu0 %2242
    %v2244 = vsel %vm103, %v2237, 0
    %v2246 = vsel %vm103, %v2239, 0
    %v2248 = vsel %vm103, %v2241, 0
    %v2250 = vsel %vm103, %v2243, 0
    %2252 = vmatpush.msra.mxu0 0.0
    %2253 = vmatpush.msra.mxu0 0.0
    %2254 = vmatpush.msra.mxu0 0.0
    %2255 = vmatpush.msra.mxu0 0.0
    %2256 = vmatpush.msra.mxu0 0.0
    %2257 = vmatpush.msra.mxu0 0.0
    %2258 = vmatpush.msra.mxu0 0.0
    %2259 = vmatpush.msra.mxu0 0.0
    %2260 = vmatpush.msra.mxu0 0.0
    %2261 = vmatpush.msra.mxu0 0.0
    %2262 = vmatpush.msra.mxu0 0.0
    %2263 = vmatpush.msra.mxu0 0.0
    %2264 = vmatpush.msra.mxu0 %v552
    %2265 = vmatpush.msra.mxu0 %v551
    %2266 = vmatpush.msra.mxu0 %v550
    %2267 = vmatpush.msra.mxu0 %v549
    %2268 = vmatmul.f32.gmra.mxu0 %v2244
    %v2269 = vpop.f32.mrf.mxu0
    %v2270 = vadd.f32 %v555, %v2269
    %2271 = vmatmul.f32.gmra.mxu0 %v2246
    %v2272 = vpop.f32.mrf.mxu0
    %v2273 = vadd.f32 %v555, %v2272
    %2274 = vmatmul.f32.gmra.mxu0 %v2248
    %v2275 = vpop.f32.mrf.mxu0
    %v2276 = vadd.f32 %v555, %v2275
    %2277 = vmatmul.f32.gmra.mxu0 %v2250
    %v2278 = vpop.f32.mrf.mxu0
    %v2279 = vadd.f32 %v555, %v2278
    %2280 = vdwg.mxu0
    %2281 = vst.msk [vmem:[#allocation2 + $0xc0] sm:$0xff] %vm481, %v2270
    %2282 = vst.msk [vmem:[#allocation2 + $0xc8] sm:$0xff] %vm481, %v2273
    %2283 = vst.msk [vmem:[#allocation2 + $0xd0] sm:$0xff] %vm481, %v2276
    %2284 = vst.msk [vmem:[#allocation2 + $0xd8] sm:$0xff] %vm481, %v2279
    %v2285 = vld [vmem:[#allocation2 + $0xe0] sm:$0xff]
    %v2286 = vld [vmem:[#allocation2 + $0xe8] sm:$0xff]
    %v2287 = vld [vmem:[#allocation2 + $0xf0] sm:$0xff]
    %v2288 = vld [vmem:[#allocation2 + $0xf8] sm:$0xff]
    %2289 = vmatpush.msra.mxu0 0.0
    %2290 = vmatpush.msra.mxu0 0.0
    %2291 = vmatpush.msra.mxu0 0.0
    %2292 = vmatpush.msra.mxu0 0.0
    %2293 = vmatpush.msra.mxu0 0.0
    %2294 = vmatpush.msra.mxu0 0.0
    %2295 = vmatpush.msra.mxu0 0.0
    %2296 = vmatpush.msra.mxu0 0.0
    %2297 = vmatpush.msra.mxu0 0.0
    %2298 = vmatpush.msra.mxu0 0.0
    %2299 = vmatpush.msra.mxu0 0.0
    %2300 = vmatpush.msra.mxu0 0.0
    %2301 = vmatpush.msra.mxu0 %v545
    %2302 = vmatpush.msra.mxu0 %v544
    %2303 = vmatpush.msra.mxu0 %v543
    %2304 = vmatpush.msra.mxu0 %v542
    %2305 = vmatmul.f32.gmra.mxu0 %v2244
    %v2306 = vpop.f32.mrf.mxu0
    %v2307 = vadd.f32 0.0, %v2306
    %2308 = vmatmul.f32.gmra.mxu0 %v2246
    %v2309 = vpop.f32.mrf.mxu0
    %v2310 = vadd.f32 0.0, %v2309
    %2311 = vmatmul.f32.gmra.mxu0 %v2248
    %v2312 = vpop.f32.mrf.mxu0
    %v2313 = vadd.f32 0.0, %v2312
    %2314 = vmatmul.f32.gmra.mxu0 %v2250
    %v2315 = vpop.f32.mrf.mxu0
    %v2316 = vadd.f32 0.0, %v2315
    %2317 = vdwg.mxu0
    %v2318 = vadd.f32 %v2285, %v2307
    %v2319 = vadd.f32 %v2286, %v2310
    %v2320 = vadd.f32 %v2287, %v2313
    %v2321 = vadd.f32 %v2288, %v2316
    %v2322 = vxor.u32 %v2318, 2147483648
    %v2323 = vxor.u32 %v2319, 2147483648
    %v2324 = vxor.u32 %v2320, 2147483648
    %v2325 = vxor.u32 %v2321, 2147483648
    %v2326 = vmul.f32 %v2322, 1.442695
    %v2327 = vpow.pop %v2326
    %v2328 = vmul.f32 %v2323, 1.442695
    %v2329 = vpow.pop %v2328
    %v2330 = vmul.f32 %v2324, 1.442695
    %v2331 = vpow.pop %v2330
    %v2332 = vmul.f32 %v2325, 1.442695
    %v2333 = vpow.pop %v2332
    %v2334 = vadd.f32 %v2327, 1.0
    %v2335 = vadd.f32 %v2329, 1.0
    %v2336 = vadd.f32 %v2331, 1.0
    %v2337 = vadd.f32 %v2333, 1.0
    %v2338 = vrcp.pop %v2334
    %v2339 = vmul.f32 %v2334, %v2338
    %v2340 = vsub.f32 1.0, %v2339
    %v2341 = vmul.f32 %v2338, %v2340
    %v2342 = vadd.f32 %v2338, %v2341
    %vm2343 = vweird.f32 %v2334
    %vm2344 = vweird.f32 %v2338
    %vm2345 = vmor %vm2343, %vm2344
    %v2346 = vsel %vm2345, %v2338, %v2342
    %v2347 = vand.u32 2147483647, %v2334
    %vm2348 = vcmp.eq.f32.partialorder %v2347, 8.507059e+37
    %v2349 = vand.u32 %v2334, 2147483648
    %v2350 = vor.u32 1.1754944e-38, %v2349
    %v2351 = vsel %vm2348, %v2350, %v2346
    %v2352 = vmul.f32 1.0, %v2351
    %v2353 = vrcp.pop %v2335
    %v2354 = vmul.f32 %v2335, %v2353
    %v2355 = vsub.f32 1.0, %v2354
    %v2356 = vmul.f32 %v2353, %v2355
    %v2357 = vadd.f32 %v2353, %v2356
    %vm2358 = vweird.f32 %v2335
    %vm2359 = vweird.f32 %v2353
    %vm2360 = vmor %vm2358, %vm2359
    %v2361 = vsel %vm2360, %v2353, %v2357
    %v2362 = vand.u32 2147483647, %v2335
    %vm2363 = vcmp.eq.f32.partialorder %v2362, 8.507059e+37
    %v2364 = vand.u32 %v2335, 2147483648
    %v2365 = vor.u32 1.1754944e-38, %v2364
    %v2366 = vsel %vm2363, %v2365, %v2361
    %v2367 = vmul.f32 1.0, %v2366
    %v2368 = vrcp.pop %v2336
    %v2369 = vmul.f32 %v2336, %v2368
    %v2370 = vsub.f32 1.0, %v2369
    %v2371 = vmul.f32 %v2368, %v2370
    %v2372 = vadd.f32 %v2368, %v2371
    %vm2373 = vweird.f32 %v2336
    %vm2374 = vweird.f32 %v2368
    %vm2375 = vmor %vm2373, %vm2374
    %v2376 = vsel %vm2375, %v2368, %v2372
    %v2377 = vand.u32 2147483647, %v2336
    %vm2378 = vcmp.eq.f32.partialorder %v2377, 8.507059e+37
    %v2379 = vand.u32 %v2336, 2147483648
    %v2380 = vor.u32 1.1754944e-38, %v2379
    %v2381 = vsel %vm2378, %v2380, %v2376
    %v2382 = vmul.f32 1.0, %v2381
    %v2383 = vrcp.pop %v2337
    %v2384 = vmul.f32 %v2337, %v2383
    %v2385 = vsub.f32 1.0, %v2384
    %v2386 = vmul.f32 %v2383, %v2385
    %v2387 = vadd.f32 %v2383, %v2386
    %vm2388 = vweird.f32 %v2337
    %vm2389 = vweird.f32 %v2383
    %vm2390 = vmor %vm2388, %vm2389
    %v2391 = vsel %vm2390, %v2383, %v2387
    %v2392 = vand.u32 2147483647, %v2337
    %vm2393 = vcmp.eq.f32.partialorder %v2392, 8.507059e+37
    %v2394 = vand.u32 %v2337, 2147483648
    %v2395 = vor.u32 1.1754944e-38, %v2394
    %v2396 = vsel %vm2393, %v2395, %v2391
    %v2397 = vmul.f32 1.0, %v2396
    %v2398 = vadd.f32 %v2307, %v674
    %v2399 = vadd.f32 %v2310, %v674
    %v2400 = vadd.f32 %v2313, %v674
    %v2401 = vadd.f32 %v2316, %v674
    %2406 = vrot.lane.b32.xlu0 %v2398, 64
    %v2407 = vpop.permute.xlu0 %2406
    %2408 = vrot.lane.b32.xlu0 %v2399, 64
    %v2409 = vpop.permute.xlu0 %2408
    %2410 = vrot.lane.b32.xlu0 %v2400, 64
    %v2411 = vpop.permute.xlu0 %2410
    %2412 = vrot.lane.b32.xlu0 %v2401, 64
    %v2413 = vpop.permute.xlu0 %2412
    %v2418 = vmul.f32 %v2352, %v2407
    %v2419 = vmul.f32 %v2367, %v2409
    %v2420 = vmul.f32 %v2382, %v2411
    %v2421 = vmul.f32 %v2397, %v2413
    %2426 = vrot.lane.b32.xlu0 %v2418, 64
    %v2427 = vpop.permute.xlu0 %2426
    %2428 = vrot.lane.b32.xlu0 %v2419, 64
    %v2429 = vpop.permute.xlu0 %2428
    %2430 = vrot.lane.b32.xlu0 %v2420, 64
    %v2431 = vpop.permute.xlu0 %2430
    %2432 = vrot.lane.b32.xlu0 %v2421, 64
    %v2433 = vpop.permute.xlu0 %2432
    %v2438 = vadd.f32 %v2285, %v2427
    %v2439 = vadd.f32 %v2286, %v2429
    %v2440 = vadd.f32 %v2287, %v2431
    %v2441 = vadd.f32 %v2288, %v2433
    %v2442 = vtanh.pop %v2438
    %v2443 = vtanh.pop %v2439
    %v2444 = vtanh.pop %v2440
    %v2445 = vtanh.pop %v2441
    %v2446 = vsub.f32 1.0, %v2352
    %v2447 = vsub.f32 1.0, %v2367
    %v2448 = vsub.f32 1.0, %v2382
    %v2449 = vsub.f32 1.0, %v2397
    %2454 = vrot.lane.b32.xlu0 %v2442, 96
    %v2455 = vpop.permute.xlu0 %2454
    %2456 = vrot.lane.b32.xlu0 %v2443, 96
    %v2457 = vpop.permute.xlu0 %2456
    %2458 = vrot.lane.b32.xlu0 %v2444, 96
    %v2459 = vpop.permute.xlu0 %2458
    %2460 = vrot.lane.b32.xlu0 %v2445, 96
    %v2461 = vpop.permute.xlu0 %2460
    %v2466 = vmul.f32 %v2446, %v2455
    %v2467 = vmul.f32 %v2447, %v2457
    %v2468 = vmul.f32 %v2448, %v2459
    %v2469 = vmul.f32 %v2449, %v2461
    %v2470 = vmul.f32 %v2352, %v2228
    %v2471 = vmul.f32 %v2367, %v2229
    %v2472 = vmul.f32 %v2382, %v2230
    %v2473 = vmul.f32 %v2397, %v2231
    %v2474 = vadd.f32 %v2466, %v2470
    %v2475 = vadd.f32 %v2467, %v2471
    %v2476 = vadd.f32 %v2468, %v2472
    %v2477 = vadd.f32 %v2469, %v2473
    %2482 = vrot.lane.b32.xlu0 %v2474, 96
    %v2483 = vpop.permute.xlu0 %2482
    %2484 = vrot.lane.b32.xlu0 %v2475, 96
    %v2485 = vpop.permute.xlu0 %2484
    %2486 = vrot.lane.b32.xlu0 %v2476, 96
    %v2487 = vpop.permute.xlu0 %2486
    %2488 = vrot.lane.b32.xlu0 %v2477, 96
    %v2489 = vpop.permute.xlu0 %2488
    %v2490 = vsel %vm103, %v2483, 0
    %v2492 = vsel %vm103, %v2485, 0
    %v2494 = vsel %vm103, %v2487, 0
    %v2496 = vsel %vm103, %v2489, 0
    %2498 = vmatpush.msra.mxu0 0.0
    %2499 = vmatpush.msra.mxu0 0.0
    %2500 = vmatpush.msra.mxu0 0.0
    %2501 = vmatpush.msra.mxu0 0.0
    %2502 = vmatpush.msra.mxu0 0.0
    %2503 = vmatpush.msra.mxu0 0.0
    %2504 = vmatpush.msra.mxu0 0.0
    %2505 = vmatpush.msra.mxu0 0.0
    %2506 = vmatpush.msra.mxu0 0.0
    %2507 = vmatpush.msra.mxu0 0.0
    %2508 = vmatpush.msra.mxu0 0.0
    %2509 = vmatpush.msra.mxu0 0.0
    %2510 = vmatpush.msra.mxu0 %v552
    %2511 = vmatpush.msra.mxu0 %v551
    %2512 = vmatpush.msra.mxu0 %v550
    %2513 = vmatpush.msra.mxu0 %v549
    %2514 = vmatmul.f32.gmra.mxu0 %v2490
    %v2515 = vpop.f32.mrf.mxu0
    %v2516 = vadd.f32 %v555, %v2515
    %2517 = vmatmul.f32.gmra.mxu0 %v2492
    %v2518 = vpop.f32.mrf.mxu0
    %v2519 = vadd.f32 %v555, %v2518
    %2520 = vmatmul.f32.gmra.mxu0 %v2494
    %v2521 = vpop.f32.mrf.mxu0
    %v2522 = vadd.f32 %v555, %v2521
    %2523 = vmatmul.f32.gmra.mxu0 %v2496
    %v2524 = vpop.f32.mrf.mxu0
    %v2525 = vadd.f32 %v555, %v2524
    %2526 = vdwg.mxu0
    %2527 = vst.msk [vmem:[#allocation2 + $0xe0] sm:$0xff] %vm481, %v2516
    %2528 = vst.msk [vmem:[#allocation2 + $0xe8] sm:$0xff] %vm481, %v2519
    %2529 = vst.msk [vmem:[#allocation2 + $0xf0] sm:$0xff] %vm481, %v2522
    %2530 = vst.msk [vmem:[#allocation2 + $0xf8] sm:$0xff] %vm481, %v2525
    %v2531 = vld [vmem:[#allocation2 + $0x100] sm:$0xff]
    %v2532 = vld [vmem:[#allocation2 + $0x108] sm:$0xff]
    %v2533 = vld [vmem:[#allocation2 + $0x110] sm:$0xff]
    %v2534 = vld [vmem:[#allocation2 + $0x118] sm:$0xff]
    %2535 = vmatpush.msra.mxu0 0.0
    %2536 = vmatpush.msra.mxu0 0.0
    %2537 = vmatpush.msra.mxu0 0.0
    %2538 = vmatpush.msra.mxu0 0.0
    %2539 = vmatpush.msra.mxu0 0.0
    %2540 = vmatpush.msra.mxu0 0.0
    %2541 = vmatpush.msra.mxu0 0.0
    %2542 = vmatpush.msra.mxu0 0.0
    %2543 = vmatpush.msra.mxu0 0.0
    %2544 = vmatpush.msra.mxu0 0.0
    %2545 = vmatpush.msra.mxu0 0.0
    %2546 = vmatpush.msra.mxu0 0.0
    %2547 = vmatpush.msra.mxu0 %v545
    %2548 = vmatpush.msra.mxu0 %v544
    %2549 = vmatpush.msra.mxu0 %v543
    %2550 = vmatpush.msra.mxu0 %v542
    %2551 = vmatmul.f32.gmra.mxu0 %v2490
    %v2552 = vpop.f32.mrf.mxu0
    %v2553 = vadd.f32 0.0, %v2552
    %2554 = vmatmul.f32.gmra.mxu0 %v2492
    %v2555 = vpop.f32.mrf.mxu0
    %v2556 = vadd.f32 0.0, %v2555
    %2557 = vmatmul.f32.gmra.mxu0 %v2494
    %v2558 = vpop.f32.mrf.mxu0
    %v2559 = vadd.f32 0.0, %v2558
    %2560 = vmatmul.f32.gmra.mxu0 %v2496
    %v2561 = vpop.f32.mrf.mxu0
    %v2562 = vadd.f32 0.0, %v2561
    %2563 = vdwg.mxu0
    %v2564 = vadd.f32 %v2531, %v2553
    %v2565 = vadd.f32 %v2532, %v2556
    %v2566 = vadd.f32 %v2533, %v2559
    %v2567 = vadd.f32 %v2534, %v2562
    %v2568 = vxor.u32 %v2564, 2147483648
    %v2569 = vxor.u32 %v2565, 2147483648
    %v2570 = vxor.u32 %v2566, 2147483648
    %v2571 = vxor.u32 %v2567, 2147483648
    %v2572 = vmul.f32 %v2568, 1.442695
    %v2573 = vpow.pop %v2572
    %v2574 = vmul.f32 %v2569, 1.442695
    %v2575 = vpow.pop %v2574
    %v2576 = vmul.f32 %v2570, 1.442695
    %v2577 = vpow.pop %v2576
    %v2578 = vmul.f32 %v2571, 1.442695
    %v2579 = vpow.pop %v2578
    %v2580 = vadd.f32 %v2573, 1.0
    %v2581 = vadd.f32 %v2575, 1.0
    %v2582 = vadd.f32 %v2577, 1.0
    %v2583 = vadd.f32 %v2579, 1.0
    %v2584 = vrcp.pop %v2580
    %v2585 = vmul.f32 %v2580, %v2584
    %v2586 = vsub.f32 1.0, %v2585
    %v2587 = vmul.f32 %v2584, %v2586
    %v2588 = vadd.f32 %v2584, %v2587
    %vm2589 = vweird.f32 %v2580
    %vm2590 = vweird.f32 %v2584
    %vm2591 = vmor %vm2589, %vm2590
    %v2592 = vsel %vm2591, %v2584, %v2588
    %v2593 = vand.u32 2147483647, %v2580
    %vm2594 = vcmp.eq.f32.partialorder %v2593, 8.507059e+37
    %v2595 = vand.u32 %v2580, 2147483648
    %v2596 = vor.u32 1.1754944e-38, %v2595
    %v2597 = vsel %vm2594, %v2596, %v2592
    %v2598 = vmul.f32 1.0, %v2597
    %v2599 = vrcp.pop %v2581
    %v2600 = vmul.f32 %v2581, %v2599
    %v2601 = vsub.f32 1.0, %v2600
    %v2602 = vmul.f32 %v2599, %v2601
    %v2603 = vadd.f32 %v2599, %v2602
    %vm2604 = vweird.f32 %v2581
    %vm2605 = vweird.f32 %v2599
    %vm2606 = vmor %vm2604, %vm2605
    %v2607 = vsel %vm2606, %v2599, %v2603
    %v2608 = vand.u32 2147483647, %v2581
    %vm2609 = vcmp.eq.f32.partialorder %v2608, 8.507059e+37
    %v2610 = vand.u32 %v2581, 2147483648
    %v2611 = vor.u32 1.1754944e-38, %v2610
    %v2612 = vsel %vm2609, %v2611, %v2607
    %v2613 = vmul.f32 1.0, %v2612
    %v2614 = vrcp.pop %v2582
    %v2615 = vmul.f32 %v2582, %v2614
    %v2616 = vsub.f32 1.0, %v2615
    %v2617 = vmul.f32 %v2614, %v2616
    %v2618 = vadd.f32 %v2614, %v2617
    %vm2619 = vweird.f32 %v2582
    %vm2620 = vweird.f32 %v2614
    %vm2621 = vmor %vm2619, %vm2620
    %v2622 = vsel %vm2621, %v2614, %v2618
    %v2623 = vand.u32 2147483647, %v2582
    %vm2624 = vcmp.eq.f32.partialorder %v2623, 8.507059e+37
    %v2625 = vand.u32 %v2582, 2147483648
    %v2626 = vor.u32 1.1754944e-38, %v2625
    %v2627 = vsel %vm2624, %v2626, %v2622
    %v2628 = vmul.f32 1.0, %v2627
    %v2629 = vrcp.pop %v2583
    %v2630 = vmul.f32 %v2583, %v2629
    %v2631 = vsub.f32 1.0, %v2630
    %v2632 = vmul.f32 %v2629, %v2631
    %v2633 = vadd.f32 %v2629, %v2632
    %vm2634 = vweird.f32 %v2583
    %vm2635 = vweird.f32 %v2629
    %vm2636 = vmor %vm2634, %vm2635
    %v2637 = vsel %vm2636, %v2629, %v2633
    %v2638 = vand.u32 2147483647, %v2583
    %vm2639 = vcmp.eq.f32.partialorder %v2638, 8.507059e+37
    %v2640 = vand.u32 %v2583, 2147483648
    %v2641 = vor.u32 1.1754944e-38, %v2640
    %v2642 = vsel %vm2639, %v2641, %v2637
    %v2643 = vmul.f32 1.0, %v2642
    %v2644 = vadd.f32 %v2553, %v674
    %v2645 = vadd.f32 %v2556, %v674
    %v2646 = vadd.f32 %v2559, %v674
    %v2647 = vadd.f32 %v2562, %v674
    %2652 = vrot.lane.b32.xlu0 %v2644, 64
    %v2653 = vpop.permute.xlu0 %2652
    %2654 = vrot.lane.b32.xlu0 %v2645, 64
    %v2655 = vpop.permute.xlu0 %2654
    %2656 = vrot.lane.b32.xlu0 %v2646, 64
    %v2657 = vpop.permute.xlu0 %2656
    %2658 = vrot.lane.b32.xlu0 %v2647, 64
    %v2659 = vpop.permute.xlu0 %2658
    %v2664 = vmul.f32 %v2598, %v2653
    %v2665 = vmul.f32 %v2613, %v2655
    %v2666 = vmul.f32 %v2628, %v2657
    %v2667 = vmul.f32 %v2643, %v2659
    %2672 = vrot.lane.b32.xlu0 %v2664, 64
    %v2673 = vpop.permute.xlu0 %2672
    %2674 = vrot.lane.b32.xlu0 %v2665, 64
    %v2675 = vpop.permute.xlu0 %2674
    %2676 = vrot.lane.b32.xlu0 %v2666, 64
    %v2677 = vpop.permute.xlu0 %2676
    %2678 = vrot.lane.b32.xlu0 %v2667, 64
    %v2679 = vpop.permute.xlu0 %2678
    %v2684 = vadd.f32 %v2531, %v2673
    %v2685 = vadd.f32 %v2532, %v2675
    %v2686 = vadd.f32 %v2533, %v2677
    %v2687 = vadd.f32 %v2534, %v2679
    %v2688 = vtanh.pop %v2684
    %v2689 = vtanh.pop %v2685
    %v2690 = vtanh.pop %v2686
    %v2691 = vtanh.pop %v2687
    %v2692 = vsub.f32 1.0, %v2598
    %v2693 = vsub.f32 1.0, %v2613
    %v2694 = vsub.f32 1.0, %v2628
    %v2695 = vsub.f32 1.0, %v2643
    %2700 = vrot.lane.b32.xlu0 %v2688, 96
    %v2701 = vpop.permute.xlu0 %2700
    %2702 = vrot.lane.b32.xlu0 %v2689, 96
    %v2703 = vpop.permute.xlu0 %2702
    %2704 = vrot.lane.b32.xlu0 %v2690, 96
    %v2705 = vpop.permute.xlu0 %2704
    %2706 = vrot.lane.b32.xlu0 %v2691, 96
    %v2707 = vpop.permute.xlu0 %2706
    %v2712 = vmul.f32 %v2692, %v2701
    %v2713 = vmul.f32 %v2693, %v2703
    %v2714 = vmul.f32 %v2694, %v2705
    %v2715 = vmul.f32 %v2695, %v2707
    %v2716 = vmul.f32 %v2598, %v2474
    %v2717 = vmul.f32 %v2613, %v2475
    %v2718 = vmul.f32 %v2628, %v2476
    %v2719 = vmul.f32 %v2643, %v2477
    %v2720 = vadd.f32 %v2712, %v2716
    %v2721 = vadd.f32 %v2713, %v2717
    %v2722 = vadd.f32 %v2714, %v2718
    %v2723 = vadd.f32 %v2715, %v2719
    %2728 = vrot.lane.b32.xlu0 %v2720, 96
    %v2729 = vpop.permute.xlu0 %2728
    %2730 = vrot.lane.b32.xlu0 %v2721, 96
    %v2731 = vpop.permute.xlu0 %2730
    %2732 = vrot.lane.b32.xlu0 %v2722, 96
    %v2733 = vpop.permute.xlu0 %2732
    %2734 = vrot.lane.b32.xlu0 %v2723, 96
    %v2735 = vpop.permute.xlu0 %2734
    %v2736 = vsel %vm103, %v2729, 0
    %v2738 = vsel %vm103, %v2731, 0
    %v2740 = vsel %vm103, %v2733, 0
    %v2742 = vsel %vm103, %v2735, 0
    %2744 = vmatpush.msra.mxu0 0.0
    %2745 = vmatpush.msra.mxu0 0.0
    %2746 = vmatpush.msra.mxu0 0.0
    %2747 = vmatpush.msra.mxu0 0.0
    %2748 = vmatpush.msra.mxu0 0.0
    %2749 = vmatpush.msra.mxu0 0.0
    %2750 = vmatpush.msra.mxu0 0.0
    %2751 = vmatpush.msra.mxu0 0.0
    %2752 = vmatpush.msra.mxu0 0.0
    %2753 = vmatpush.msra.mxu0 0.0
    %2754 = vmatpush.msra.mxu0 0.0
    %2755 = vmatpush.msra.mxu0 0.0
    %2756 = vmatpush.msra.mxu0 %v552
    %2757 = vmatpush.msra.mxu0 %v551
    %2758 = vmatpush.msra.mxu0 %v550
    %2759 = vmatpush.msra.mxu0 %v549
    %2760 = vmatmul.f32.gmra.mxu0 %v2736
    %v2761 = vpop.f32.mrf.mxu0
    %v2762 = vadd.f32 %v555, %v2761
    %2763 = vmatmul.f32.gmra.mxu0 %v2738
    %v2764 = vpop.f32.mrf.mxu0
    %v2765 = vadd.f32 %v555, %v2764
    %2766 = vmatmul.f32.gmra.mxu0 %v2740
    %v2767 = vpop.f32.mrf.mxu0
    %v2768 = vadd.f32 %v555, %v2767
    %2769 = vmatmul.f32.gmra.mxu0 %v2742
    %v2770 = vpop.f32.mrf.mxu0
    %v2771 = vadd.f32 %v555, %v2770
    %2772 = vdwg.mxu0
    %2773 = vst.msk [vmem:[#allocation2 + $0x100] sm:$0xff] %vm481, %v2762
    %2774 = vst.msk [vmem:[#allocation2 + $0x108] sm:$0xff] %vm481, %v2765
    %2775 = vst.msk [vmem:[#allocation2 + $0x110] sm:$0xff] %vm481, %v2768
    %2776 = vst.msk [vmem:[#allocation2 + $0x118] sm:$0xff] %vm481, %v2771
    %v2777 = vld [vmem:[#allocation2 + $0x120] sm:$0xff]
    %v2778 = vld [vmem:[#allocation2 + $0x128] sm:$0xff]
    %v2779 = vld [vmem:[#allocation2 + $0x130] sm:$0xff]
    %v2780 = vld [vmem:[#allocation2 + $0x138] sm:$0xff]
    %2781 = vmatpush.msra.mxu0 0.0
    %2782 = vmatpush.msra.mxu0 0.0
    %2783 = vmatpush.msra.mxu0 0.0
    %2784 = vmatpush.msra.mxu0 0.0
    %2785 = vmatpush.msra.mxu0 0.0
    %2786 = vmatpush.msra.mxu0 0.0
    %2787 = vmatpush.msra.mxu0 0.0
    %2788 = vmatpush.msra.mxu0 0.0
    %2789 = vmatpush.msra.mxu0 0.0
    %2790 = vmatpush.msra.mxu0 0.0
    %2791 = vmatpush.msra.mxu0 0.0
    %2792 = vmatpush.msra.mxu0 0.0
    %2793 = vmatpush.msra.mxu0 %v545
    %2794 = vmatpush.msra.mxu0 %v544
    %2795 = vmatpush.msra.mxu0 %v543
    %2796 = vmatpush.msra.mxu0 %v542
    %2797 = vmatmul.f32.gmra.mxu0 %v2736
    %v2798 = vpop.f32.mrf.mxu0
    %v2799 = vadd.f32 0.0, %v2798
    %2800 = vmatmul.f32.gmra.mxu0 %v2738
    %v2801 = vpop.f32.mrf.mxu0
    %v2802 = vadd.f32 0.0, %v2801
    %2803 = vmatmul.f32.gmra.mxu0 %v2740
    %v2804 = vpop.f32.mrf.mxu0
    %v2805 = vadd.f32 0.0, %v2804
    %2806 = vmatmul.f32.gmra.mxu0 %v2742
    %v2807 = vpop.f32.mrf.mxu0
    %v2808 = vadd.f32 0.0, %v2807
    %2809 = vdwg.mxu0
    %v2810 = vadd.f32 %v2777, %v2799
    %v2811 = vadd.f32 %v2778, %v2802
    %v2812 = vadd.f32 %v2779, %v2805
    %v2813 = vadd.f32 %v2780, %v2808
    %v2814 = vxor.u32 %v2810, 2147483648
    %v2815 = vxor.u32 %v2811, 2147483648
    %v2816 = vxor.u32 %v2812, 2147483648
    %v2817 = vxor.u32 %v2813, 2147483648
    %v2818 = vmul.f32 %v2814, 1.442695
    %v2819 = vpow.pop %v2818
    %v2820 = vmul.f32 %v2815, 1.442695
    %v2821 = vpow.pop %v2820
    %v2822 = vmul.f32 %v2816, 1.442695
    %v2823 = vpow.pop %v2822
    %v2824 = vmul.f32 %v2817, 1.442695
    %v2825 = vpow.pop %v2824
    %v2826 = vadd.f32 %v2819, 1.0
    %v2827 = vadd.f32 %v2821, 1.0
    %v2828 = vadd.f32 %v2823, 1.0
    %v2829 = vadd.f32 %v2825, 1.0
    %v2830 = vrcp.pop %v2826
    %v2831 = vmul.f32 %v2826, %v2830
    %v2832 = vsub.f32 1.0, %v2831
    %v2833 = vmul.f32 %v2830, %v2832
    %v2834 = vadd.f32 %v2830, %v2833
    %vm2835 = vweird.f32 %v2826
    %vm2836 = vweird.f32 %v2830
    %vm2837 = vmor %vm2835, %vm2836
    %v2838 = vsel %vm2837, %v2830, %v2834
    %v2839 = vand.u32 2147483647, %v2826
    %vm2840 = vcmp.eq.f32.partialorder %v2839, 8.507059e+37
    %v2841 = vand.u32 %v2826, 2147483648
    %v2842 = vor.u32 1.1754944e-38, %v2841
    %v2843 = vsel %vm2840, %v2842, %v2838
    %v2844 = vmul.f32 1.0, %v2843
    %v2845 = vrcp.pop %v2827
    %v2846 = vmul.f32 %v2827, %v2845
    %v2847 = vsub.f32 1.0, %v2846
    %v2848 = vmul.f32 %v2845, %v2847
    %v2849 = vadd.f32 %v2845, %v2848
    %vm2850 = vweird.f32 %v2827
    %vm2851 = vweird.f32 %v2845
    %vm2852 = vmor %vm2850, %vm2851
    %v2853 = vsel %vm2852, %v2845, %v2849
    %v2854 = vand.u32 2147483647, %v2827
    %vm2855 = vcmp.eq.f32.partialorder %v2854, 8.507059e+37
    %v2856 = vand.u32 %v2827, 2147483648
    %v2857 = vor.u32 1.1754944e-38, %v2856
    %v2858 = vsel %vm2855, %v2857, %v2853
    %v2859 = vmul.f32 1.0, %v2858
    %v2860 = vrcp.pop %v2828
    %v2861 = vmul.f32 %v2828, %v2860
    %v2862 = vsub.f32 1.0, %v2861
    %v2863 = vmul.f32 %v2860, %v2862
    %v2864 = vadd.f32 %v2860, %v2863
    %vm2865 = vweird.f32 %v2828
    %vm2866 = vweird.f32 %v2860
    %vm2867 = vmor %vm2865, %vm2866
    %v2868 = vsel %vm2867, %v2860, %v2864
    %v2869 = vand.u32 2147483647, %v2828
    %vm2870 = vcmp.eq.f32.partialorder %v2869, 8.507059e+37
    %v2871 = vand.u32 %v2828, 2147483648
    %v2872 = vor.u32 1.1754944e-38, %v2871
    %v2873 = vsel %vm2870, %v2872, %v2868
    %v2874 = vmul.f32 1.0, %v2873
    %v2875 = vrcp.pop %v2829
    %v2876 = vmul.f32 %v2829, %v2875
    %v2877 = vsub.f32 1.0, %v2876
    %v2878 = vmul.f32 %v2875, %v2877
    %v2879 = vadd.f32 %v2875, %v2878
    %vm2880 = vweird.f32 %v2829
    %vm2881 = vweird.f32 %v2875
    %vm2882 = vmor %vm2880, %vm2881
    %v2883 = vsel %vm2882, %v2875, %v2879
    %v2884 = vand.u32 2147483647, %v2829
    %vm2885 = vcmp.eq.f32.partialorder %v2884, 8.507059e+37
    %v2886 = vand.u32 %v2829, 2147483648
    %v2887 = vor.u32 1.1754944e-38, %v2886
    %v2888 = vsel %vm2885, %v2887, %v2883
    %v2889 = vmul.f32 1.0, %v2888
    %v2890 = vadd.f32 %v2799, %v674
    %v2891 = vadd.f32 %v2802, %v674
    %v2892 = vadd.f32 %v2805, %v674
    %v2893 = vadd.f32 %v2808, %v674
    %2898 = vrot.lane.b32.xlu0 %v2890, 64
    %v2899 = vpop.permute.xlu0 %2898
    %2900 = vrot.lane.b32.xlu0 %v2891, 64
    %v2901 = vpop.permute.xlu0 %2900
    %2902 = vrot.lane.b32.xlu0 %v2892, 64
    %v2903 = vpop.permute.xlu0 %2902
    %2904 = vrot.lane.b32.xlu0 %v2893, 64
    %v2905 = vpop.permute.xlu0 %2904
    %v2910 = vmul.f32 %v2844, %v2899
    %v2911 = vmul.f32 %v2859, %v2901
    %v2912 = vmul.f32 %v2874, %v2903
    %v2913 = vmul.f32 %v2889, %v2905
    %2918 = vrot.lane.b32.xlu0 %v2910, 64
    %v2919 = vpop.permute.xlu0 %2918
    %2920 = vrot.lane.b32.xlu0 %v2911, 64
    %v2921 = vpop.permute.xlu0 %2920
    %2922 = vrot.lane.b32.xlu0 %v2912, 64
    %v2923 = vpop.permute.xlu0 %2922
    %2924 = vrot.lane.b32.xlu0 %v2913, 64
    %v2925 = vpop.permute.xlu0 %2924
    %v2930 = vadd.f32 %v2777, %v2919
    %v2931 = vadd.f32 %v2778, %v2921
    %v2932 = vadd.f32 %v2779, %v2923
    %v2933 = vadd.f32 %v2780, %v2925
    %v2934 = vtanh.pop %v2930
    %v2935 = vtanh.pop %v2931
    %v2936 = vtanh.pop %v2932
    %v2937 = vtanh.pop %v2933
    %v2938 = vsub.f32 1.0, %v2844
    %v2939 = vsub.f32 1.0, %v2859
    %v2940 = vsub.f32 1.0, %v2874
    %v2941 = vsub.f32 1.0, %v2889
    %2946 = vrot.lane.b32.xlu0 %v2934, 96
    %v2947 = vpop.permute.xlu0 %2946
    %2948 = vrot.lane.b32.xlu0 %v2935, 96
    %v2949 = vpop.permute.xlu0 %2948
    %2950 = vrot.lane.b32.xlu0 %v2936, 96
    %v2951 = vpop.permute.xlu0 %2950
    %2952 = vrot.lane.b32.xlu0 %v2937, 96
    %v2953 = vpop.permute.xlu0 %2952
    %v2958 = vmul.f32 %v2938, %v2947
    %v2959 = vmul.f32 %v2939, %v2949
    %v2960 = vmul.f32 %v2940, %v2951
    %v2961 = vmul.f32 %v2941, %v2953
    %v2962 = vmul.f32 %v2844, %v2720
    %v2963 = vmul.f32 %v2859, %v2721
    %v2964 = vmul.f32 %v2874, %v2722
    %v2965 = vmul.f32 %v2889, %v2723
    %v2966 = vadd.f32 %v2958, %v2962
    %v2967 = vadd.f32 %v2959, %v2963
    %v2968 = vadd.f32 %v2960, %v2964
    %v2969 = vadd.f32 %v2961, %v2965
    %2974 = vrot.lane.b32.xlu0 %v2966, 96
    %v2975 = vpop.permute.xlu0 %2974
    %2976 = vrot.lane.b32.xlu0 %v2967, 96
    %v2977 = vpop.permute.xlu0 %2976
    %2978 = vrot.lane.b32.xlu0 %v2968, 96
    %v2979 = vpop.permute.xlu0 %2978
    %2980 = vrot.lane.b32.xlu0 %v2969, 96
    %v2981 = vpop.permute.xlu0 %2980
    %v2982 = vsel %vm103, %v2975, 0
    %v2984 = vsel %vm103, %v2977, 0
    %v2986 = vsel %vm103, %v2979, 0
    %v2988 = vsel %vm103, %v2981, 0
    %2990 = vmatpush.msra.mxu0 0.0
    %2991 = vmatpush.msra.mxu0 0.0
    %2992 = vmatpush.msra.mxu0 0.0
    %2993 = vmatpush.msra.mxu0 0.0
    %2994 = vmatpush.msra.mxu0 0.0
    %2995 = vmatpush.msra.mxu0 0.0
    %2996 = vmatpush.msra.mxu0 0.0
    %2997 = vmatpush.msra.mxu0 0.0
    %2998 = vmatpush.msra.mxu0 0.0
    %2999 = vmatpush.msra.mxu0 0.0
    %3000 = vmatpush.msra.mxu0 0.0
    %3001 = vmatpush.msra.mxu0 0.0
    %3002 = vmatpush.msra.mxu0 %v552
    %3003 = vmatpush.msra.mxu0 %v551
    %3004 = vmatpush.msra.mxu0 %v550
    %3005 = vmatpush.msra.mxu0 %v549
    %3006 = vmatmul.f32.gmra.mxu0 %v2982
    %v3007 = vpop.f32.mrf.mxu0
    %v3008 = vadd.f32 %v555, %v3007
    %3009 = vmatmul.f32.gmra.mxu0 %v2984
    %v3010 = vpop.f32.mrf.mxu0
    %v3011 = vadd.f32 %v555, %v3010
    %3012 = vmatmul.f32.gmra.mxu0 %v2986
    %v3013 = vpop.f32.mrf.mxu0
    %v3014 = vadd.f32 %v555, %v3013
    %3015 = vmatmul.f32.gmra.mxu0 %v2988
    %v3016 = vpop.f32.mrf.mxu0
    %v3017 = vadd.f32 %v555, %v3016
    %3018 = vdwg.mxu0
    %3019 = vst.msk [vmem:[#allocation2 + $0x120] sm:$0xff] %vm481, %v3008
    %3020 = vst.msk [vmem:[#allocation2 + $0x128] sm:$0xff] %vm481, %v3011
    %3021 = vst.msk [vmem:[#allocation2 + $0x130] sm:$0xff] %vm481, %v3014
    %3022 = vst.msk [vmem:[#allocation2 + $0x138] sm:$0xff] %vm481, %v3017
    %v3023 = vld [vmem:[#allocation2 + $0x140] sm:$0xff]
    %v3024 = vld [vmem:[#allocation2 + $0x148] sm:$0xff]
    %v3025 = vld [vmem:[#allocation2 + $0x150] sm:$0xff]
    %v3026 = vld [vmem:[#allocation2 + $0x158] sm:$0xff]
    %3027 = vmatpush.msra.mxu0 0.0
    %3028 = vmatpush.msra.mxu0 0.0
    %3029 = vmatpush.msra.mxu0 0.0
    %3030 = vmatpush.msra.mxu0 0.0
    %3031 = vmatpush.msra.mxu0 0.0
    %3032 = vmatpush.msra.mxu0 0.0
    %3033 = vmatpush.msra.mxu0 0.0
    %3034 = vmatpush.msra.mxu0 0.0
    %3035 = vmatpush.msra.mxu0 0.0
    %3036 = vmatpush.msra.mxu0 0.0
    %3037 = vmatpush.msra.mxu0 0.0
    %3038 = vmatpush.msra.mxu0 0.0
    %3039 = vmatpush.msra.mxu0 %v545
    %3040 = vmatpush.msra.mxu0 %v544
    %3041 = vmatpush.msra.mxu0 %v543
    %3042 = vmatpush.msra.mxu0 %v542
    %3043 = vmatmul.f32.gmra.mxu0 %v2982
    %v3044 = vpop.f32.mrf.mxu0
    %v3045 = vadd.f32 0.0, %v3044
    %3046 = vmatmul.f32.gmra.mxu0 %v2984
    %v3047 = vpop.f32.mrf.mxu0
    %v3048 = vadd.f32 0.0, %v3047
    %3049 = vmatmul.f32.gmra.mxu0 %v2986
    %v3050 = vpop.f32.mrf.mxu0
    %v3051 = vadd.f32 0.0, %v3050
    %3052 = vmatmul.f32.gmra.mxu0 %v2988
    %v3053 = vpop.f32.mrf.mxu0
    %v3054 = vadd.f32 0.0, %v3053
    %3055 = vdwg.mxu0
    %v3056 = vadd.f32 %v3023, %v3045
    %v3057 = vadd.f32 %v3024, %v3048
    %v3058 = vadd.f32 %v3025, %v3051
    %v3059 = vadd.f32 %v3026, %v3054
    %v3060 = vxor.u32 %v3056, 2147483648
    %v3061 = vxor.u32 %v3057, 2147483648
    %v3062 = vxor.u32 %v3058, 2147483648
    %v3063 = vxor.u32 %v3059, 2147483648
    %v3064 = vmul.f32 %v3060, 1.442695
    %v3065 = vpow.pop %v3064
    %v3066 = vmul.f32 %v3061, 1.442695
    %v3067 = vpow.pop %v3066
    %v3068 = vmul.f32 %v3062, 1.442695
    %v3069 = vpow.pop %v3068
    %v3070 = vmul.f32 %v3063, 1.442695
    %v3071 = vpow.pop %v3070
    %v3072 = vadd.f32 %v3065, 1.0
    %v3073 = vadd.f32 %v3067, 1.0
    %v3074 = vadd.f32 %v3069, 1.0
    %v3075 = vadd.f32 %v3071, 1.0
    %v3076 = vrcp.pop %v3072
    %v3077 = vmul.f32 %v3072, %v3076
    %v3078 = vsub.f32 1.0, %v3077
    %v3079 = vmul.f32 %v3076, %v3078
    %v3080 = vadd.f32 %v3076, %v3079
    %vm3081 = vweird.f32 %v3072
    %vm3082 = vweird.f32 %v3076
    %vm3083 = vmor %vm3081, %vm3082
    %v3084 = vsel %vm3083, %v3076, %v3080
    %v3085 = vand.u32 2147483647, %v3072
    %vm3086 = vcmp.eq.f32.partialorder %v3085, 8.507059e+37
    %v3087 = vand.u32 %v3072, 2147483648
    %v3088 = vor.u32 1.1754944e-38, %v3087
    %v3089 = vsel %vm3086, %v3088, %v3084
    %v3090 = vmul.f32 1.0, %v3089
    %v3091 = vrcp.pop %v3073
    %v3092 = vmul.f32 %v3073, %v3091
    %v3093 = vsub.f32 1.0, %v3092
    %v3094 = vmul.f32 %v3091, %v3093
    %v3095 = vadd.f32 %v3091, %v3094
    %vm3096 = vweird.f32 %v3073
    %vm3097 = vweird.f32 %v3091
    %vm3098 = vmor %vm3096, %vm3097
    %v3099 = vsel %vm3098, %v3091, %v3095
    %v3100 = vand.u32 2147483647, %v3073
    %vm3101 = vcmp.eq.f32.partialorder %v3100, 8.507059e+37
    %v3102 = vand.u32 %v3073, 2147483648
    %v3103 = vor.u32 1.1754944e-38, %v3102
    %v3104 = vsel %vm3101, %v3103, %v3099
    %v3105 = vmul.f32 1.0, %v3104
    %v3106 = vrcp.pop %v3074
    %v3107 = vmul.f32 %v3074, %v3106
    %v3108 = vsub.f32 1.0, %v3107
    %v3109 = vmul.f32 %v3106, %v3108
    %v3110 = vadd.f32 %v3106, %v3109
    %vm3111 = vweird.f32 %v3074
    %vm3112 = vweird.f32 %v3106
    %vm3113 = vmor %vm3111, %vm3112
    %v3114 = vsel %vm3113, %v3106, %v3110
    %v3115 = vand.u32 2147483647, %v3074
    %vm3116 = vcmp.eq.f32.partialorder %v3115, 8.507059e+37
    %v3117 = vand.u32 %v3074, 2147483648
    %v3118 = vor.u32 1.1754944e-38, %v3117
    %v3119 = vsel %vm3116, %v3118, %v3114
    %v3120 = vmul.f32 1.0, %v3119
    %v3121 = vrcp.pop %v3075
    %v3122 = vmul.f32 %v3075, %v3121
    %v3123 = vsub.f32 1.0, %v3122
    %v3124 = vmul.f32 %v3121, %v3123
    %v3125 = vadd.f32 %v3121, %v3124
    %vm3126 = vweird.f32 %v3075
    %vm3127 = vweird.f32 %v3121
    %vm3128 = vmor %vm3126, %vm3127
    %v3129 = vsel %vm3128, %v3121, %v3125
    %v3130 = vand.u32 2147483647, %v3075
    %vm3131 = vcmp.eq.f32.partialorder %v3130, 8.507059e+37
    %v3132 = vand.u32 %v3075, 2147483648
    %v3133 = vor.u32 1.1754944e-38, %v3132
    %v3134 = vsel %vm3131, %v3133, %v3129
    %v3135 = vmul.f32 1.0, %v3134
    %v3136 = vadd.f32 %v3045, %v674
    %v3137 = vadd.f32 %v3048, %v674
    %v3138 = vadd.f32 %v3051, %v674
    %v3139 = vadd.f32 %v3054, %v674
    %3144 = vrot.lane.b32.xlu0 %v3136, 64
    %v3145 = vpop.permute.xlu0 %3144
    %3146 = vrot.lane.b32.xlu0 %v3137, 64
    %v3147 = vpop.permute.xlu0 %3146
    %3148 = vrot.lane.b32.xlu0 %v3138, 64
    %v3149 = vpop.permute.xlu0 %3148
    %3150 = vrot.lane.b32.xlu0 %v3139, 64
    %v3151 = vpop.permute.xlu0 %3150
    %v3156 = vmul.f32 %v3090, %v3145
    %v3157 = vmul.f32 %v3105, %v3147
    %v3158 = vmul.f32 %v3120, %v3149
    %v3159 = vmul.f32 %v3135, %v3151
    %3164 = vrot.lane.b32.xlu0 %v3156, 64
    %v3165 = vpop.permute.xlu0 %3164
    %3166 = vrot.lane.b32.xlu0 %v3157, 64
    %v3167 = vpop.permute.xlu0 %3166
    %3168 = vrot.lane.b32.xlu0 %v3158, 64
    %v3169 = vpop.permute.xlu0 %3168
    %3170 = vrot.lane.b32.xlu0 %v3159, 64
    %v3171 = vpop.permute.xlu0 %3170
    %v3176 = vadd.f32 %v3023, %v3165
    %v3177 = vadd.f32 %v3024, %v3167
    %v3178 = vadd.f32 %v3025, %v3169
    %v3179 = vadd.f32 %v3026, %v3171
    %v3180 = vtanh.pop %v3176
    %v3181 = vtanh.pop %v3177
    %v3182 = vtanh.pop %v3178
    %v3183 = vtanh.pop %v3179
    %v3184 = vsub.f32 1.0, %v3090
    %v3185 = vsub.f32 1.0, %v3105
    %v3186 = vsub.f32 1.0, %v3120
    %v3187 = vsub.f32 1.0, %v3135
    %3192 = vrot.lane.b32.xlu0 %v3180, 96
    %v3193 = vpop.permute.xlu0 %3192
    %3194 = vrot.lane.b32.xlu0 %v3181, 96
    %v3195 = vpop.permute.xlu0 %3194
    %3196 = vrot.lane.b32.xlu0 %v3182, 96
    %v3197 = vpop.permute.xlu0 %3196
    %3198 = vrot.lane.b32.xlu0 %v3183, 96
    %v3199 = vpop.permute.xlu0 %3198
    %v3204 = vmul.f32 %v3184, %v3193
    %v3205 = vmul.f32 %v3185, %v3195
    %v3206 = vmul.f32 %v3186, %v3197
    %v3207 = vmul.f32 %v3187, %v3199
    %v3208 = vmul.f32 %v3090, %v2966
    %v3209 = vmul.f32 %v3105, %v2967
    %v3210 = vmul.f32 %v3120, %v2968
    %v3211 = vmul.f32 %v3135, %v2969
    %v3212 = vadd.f32 %v3204, %v3208
    %v3213 = vadd.f32 %v3205, %v3209
    %v3214 = vadd.f32 %v3206, %v3210
    %v3215 = vadd.f32 %v3207, %v3211
    %3220 = vrot.lane.b32.xlu0 %v3212, 96
    %v3221 = vpop.permute.xlu0 %3220
    %3222 = vrot.lane.b32.xlu0 %v3213, 96
    %v3223 = vpop.permute.xlu0 %3222
    %3224 = vrot.lane.b32.xlu0 %v3214, 96
    %v3225 = vpop.permute.xlu0 %3224
    %3226 = vrot.lane.b32.xlu0 %v3215, 96
    %v3227 = vpop.permute.xlu0 %3226
    %v3228 = vsel %vm103, %v3221, 0
    %v3230 = vsel %vm103, %v3223, 0
    %v3232 = vsel %vm103, %v3225, 0
    %v3234 = vsel %vm103, %v3227, 0
    %3236 = vmatpush.msra.mxu0 0.0
    %3237 = vmatpush.msra.mxu0 0.0
    %3238 = vmatpush.msra.mxu0 0.0
    %3239 = vmatpush.msra.mxu0 0.0
    %3240 = vmatpush.msra.mxu0 0.0
    %3241 = vmatpush.msra.mxu0 0.0
    %3242 = vmatpush.msra.mxu0 0.0
    %3243 = vmatpush.msra.mxu0 0.0
    %3244 = vmatpush.msra.mxu0 0.0
    %3245 = vmatpush.msra.mxu0 0.0
    %3246 = vmatpush.msra.mxu0 0.0
    %3247 = vmatpush.msra.mxu0 0.0
    %3248 = vmatpush.msra.mxu0 %v552
    %3249 = vmatpush.msra.mxu0 %v551
    %3250 = vmatpush.msra.mxu0 %v550
    %3251 = vmatpush.msra.mxu0 %v549
    %3252 = vmatmul.f32.gmra.mxu0 %v3228
    %v3253 = vpop.f32.mrf.mxu0
    %v3254 = vadd.f32 %v555, %v3253
    %3255 = vmatmul.f32.gmra.mxu0 %v3230
    %v3256 = vpop.f32.mrf.mxu0
    %v3257 = vadd.f32 %v555, %v3256
    %3258 = vmatmul.f32.gmra.mxu0 %v3232
    %v3259 = vpop.f32.mrf.mxu0
    %v3260 = vadd.f32 %v555, %v3259
    %3261 = vmatmul.f32.gmra.mxu0 %v3234
    %v3262 = vpop.f32.mrf.mxu0
    %v3263 = vadd.f32 %v555, %v3262
    %3264 = vdwg.mxu0
    %3265 = vst.msk [vmem:[#allocation2 + $0x140] sm:$0xff] %vm481, %v3254
    %3266 = vst.msk [vmem:[#allocation2 + $0x148] sm:$0xff] %vm481, %v3257
    %3267 = vst.msk [vmem:[#allocation2 + $0x150] sm:$0xff] %vm481, %v3260
    %3268 = vst.msk [vmem:[#allocation2 + $0x158] sm:$0xff] %vm481, %v3263
    %v3269 = vld [vmem:[#allocation2 + $0x160] sm:$0xff]
    %v3270 = vld [vmem:[#allocation2 + $0x168] sm:$0xff]
    %v3271 = vld [vmem:[#allocation2 + $0x170] sm:$0xff]
    %v3272 = vld [vmem:[#allocation2 + $0x178] sm:$0xff]
    %3273 = vmatpush.msra.mxu0 0.0
    %3274 = vmatpush.msra.mxu0 0.0
    %3275 = vmatpush.msra.mxu0 0.0
    %3276 = vmatpush.msra.mxu0 0.0
    %3277 = vmatpush.msra.mxu0 0.0
    %3278 = vmatpush.msra.mxu0 0.0
    %3279 = vmatpush.msra.mxu0 0.0
    %3280 = vmatpush.msra.mxu0 0.0
    %3281 = vmatpush.msra.mxu0 0.0
    %3282 = vmatpush.msra.mxu0 0.0
    %3283 = vmatpush.msra.mxu0 0.0
    %3284 = vmatpush.msra.mxu0 0.0
    %3285 = vmatpush.msra.mxu0 %v545
    %3286 = vmatpush.msra.mxu0 %v544
    %3287 = vmatpush.msra.mxu0 %v543
    %3288 = vmatpush.msra.mxu0 %v542
    %3289 = vmatmul.f32.gmra.mxu0 %v3228
    %v3290 = vpop.f32.mrf.mxu0
    %v3291 = vadd.f32 0.0, %v3290
    %3292 = vmatmul.f32.gmra.mxu0 %v3230
    %v3293 = vpop.f32.mrf.mxu0
    %v3294 = vadd.f32 0.0, %v3293
    %3295 = vmatmul.f32.gmra.mxu0 %v3232
    %v3296 = vpop.f32.mrf.mxu0
    %v3297 = vadd.f32 0.0, %v3296
    %3298 = vmatmul.f32.gmra.mxu0 %v3234
    %v3299 = vpop.f32.mrf.mxu0
    %v3300 = vadd.f32 0.0, %v3299
    %3301 = vdwg.mxu0
    %v3302 = vadd.f32 %v3269, %v3291
    %v3303 = vadd.f32 %v3270, %v3294
    %v3304 = vadd.f32 %v3271, %v3297
    %v3305 = vadd.f32 %v3272, %v3300
    %v3306 = vxor.u32 %v3302, 2147483648
    %v3307 = vxor.u32 %v3303, 2147483648
    %v3308 = vxor.u32 %v3304, 2147483648
    %v3309 = vxor.u32 %v3305, 2147483648
    %v3310 = vmul.f32 %v3306, 1.442695
    %v3311 = vpow.pop %v3310
    %v3312 = vmul.f32 %v3307, 1.442695
    %v3313 = vpow.pop %v3312
    %v3314 = vmul.f32 %v3308, 1.442695
    %v3315 = vpow.pop %v3314
    %v3316 = vmul.f32 %v3309, 1.442695
    %v3317 = vpow.pop %v3316
    %v3318 = vadd.f32 %v3311, 1.0
    %v3319 = vadd.f32 %v3313, 1.0
    %v3320 = vadd.f32 %v3315, 1.0
    %v3321 = vadd.f32 %v3317, 1.0
    %v3322 = vrcp.pop %v3318
    %v3323 = vmul.f32 %v3318, %v3322
    %v3324 = vsub.f32 1.0, %v3323
    %v3325 = vmul.f32 %v3322, %v3324
    %v3326 = vadd.f32 %v3322, %v3325
    %vm3327 = vweird.f32 %v3318
    %vm3328 = vweird.f32 %v3322
    %vm3329 = vmor %vm3327, %vm3328
    %v3330 = vsel %vm3329, %v3322, %v3326
    %v3331 = vand.u32 2147483647, %v3318
    %vm3332 = vcmp.eq.f32.partialorder %v3331, 8.507059e+37
    %v3333 = vand.u32 %v3318, 2147483648
    %v3334 = vor.u32 1.1754944e-38, %v3333
    %v3335 = vsel %vm3332, %v3334, %v3330
    %v3336 = vmul.f32 1.0, %v3335
    %v3337 = vrcp.pop %v3319
    %v3338 = vmul.f32 %v3319, %v3337
    %v3339 = vsub.f32 1.0, %v3338
    %v3340 = vmul.f32 %v3337, %v3339
    %v3341 = vadd.f32 %v3337, %v3340
    %vm3342 = vweird.f32 %v3319
    %vm3343 = vweird.f32 %v3337
    %vm3344 = vmor %vm3342, %vm3343
    %v3345 = vsel %vm3344, %v3337, %v3341
    %v3346 = vand.u32 2147483647, %v3319
    %vm3347 = vcmp.eq.f32.partialorder %v3346, 8.507059e+37
    %v3348 = vand.u32 %v3319, 2147483648
    %v3349 = vor.u32 1.1754944e-38, %v3348
    %v3350 = vsel %vm3347, %v3349, %v3345
    %v3351 = vmul.f32 1.0, %v3350
    %v3352 = vrcp.pop %v3320
    %v3353 = vmul.f32 %v3320, %v3352
    %v3354 = vsub.f32 1.0, %v3353
    %v3355 = vmul.f32 %v3352, %v3354
    %v3356 = vadd.f32 %v3352, %v3355
    %vm3357 = vweird.f32 %v3320
    %vm3358 = vweird.f32 %v3352
    %vm3359 = vmor %vm3357, %vm3358
    %v3360 = vsel %vm3359, %v3352, %v3356
    %v3361 = vand.u32 2147483647, %v3320
    %vm3362 = vcmp.eq.f32.partialorder %v3361, 8.507059e+37
    %v3363 = vand.u32 %v3320, 2147483648
    %v3364 = vor.u32 1.1754944e-38, %v3363
    %v3365 = vsel %vm3362, %v3364, %v3360
    %v3366 = vmul.f32 1.0, %v3365
    %v3367 = vrcp.pop %v3321
    %v3368 = vmul.f32 %v3321, %v3367
    %v3369 = vsub.f32 1.0, %v3368
    %v3370 = vmul.f32 %v3367, %v3369
    %v3371 = vadd.f32 %v3367, %v3370
    %vm3372 = vweird.f32 %v3321
    %vm3373 = vweird.f32 %v3367
    %vm3374 = vmor %vm3372, %vm3373
    %v3375 = vsel %vm3374, %v3367, %v3371
    %v3376 = vand.u32 2147483647, %v3321
    %vm3377 = vcmp.eq.f32.partialorder %v3376, 8.507059e+37
    %v3378 = vand.u32 %v3321, 2147483648
    %v3379 = vor.u32 1.1754944e-38, %v3378
    %v3380 = vsel %vm3377, %v3379, %v3375
    %v3381 = vmul.f32 1.0, %v3380
    %v3382 = vadd.f32 %v3291, %v674
    %v3383 = vadd.f32 %v3294, %v674
    %v3384 = vadd.f32 %v3297, %v674
    %v3385 = vadd.f32 %v3300, %v674
    %3390 = vrot.lane.b32.xlu0 %v3382, 64
    %v3391 = vpop.permute.xlu0 %3390
    %3392 = vrot.lane.b32.xlu0 %v3383, 64
    %v3393 = vpop.permute.xlu0 %3392
    %3394 = vrot.lane.b32.xlu0 %v3384, 64
    %v3395 = vpop.permute.xlu0 %3394
    %3396 = vrot.lane.b32.xlu0 %v3385, 64
    %v3397 = vpop.permute.xlu0 %3396
    %v3402 = vmul.f32 %v3336, %v3391
    %v3403 = vmul.f32 %v3351, %v3393
    %v3404 = vmul.f32 %v3366, %v3395
    %v3405 = vmul.f32 %v3381, %v3397
    %3410 = vrot.lane.b32.xlu0 %v3402, 64
    %v3411 = vpop.permute.xlu0 %3410
    %3412 = vrot.lane.b32.xlu0 %v3403, 64
    %v3413 = vpop.permute.xlu0 %3412
    %3414 = vrot.lane.b32.xlu0 %v3404, 64
    %v3415 = vpop.permute.xlu0 %3414
    %3416 = vrot.lane.b32.xlu0 %v3405, 64
    %v3417 = vpop.permute.xlu0 %3416
    %v3422 = vadd.f32 %v3269, %v3411
    %v3423 = vadd.f32 %v3270, %v3413
    %v3424 = vadd.f32 %v3271, %v3415
    %v3425 = vadd.f32 %v3272, %v3417
    %v3426 = vtanh.pop %v3422
    %v3427 = vtanh.pop %v3423
    %v3428 = vtanh.pop %v3424
    %v3429 = vtanh.pop %v3425
    %v3430 = vsub.f32 1.0, %v3336
    %v3431 = vsub.f32 1.0, %v3351
    %v3432 = vsub.f32 1.0, %v3366
    %v3433 = vsub.f32 1.0, %v3381
    %3438 = vrot.lane.b32.xlu0 %v3426, 96
    %v3439 = vpop.permute.xlu0 %3438
    %3440 = vrot.lane.b32.xlu0 %v3427, 96
    %v3441 = vpop.permute.xlu0 %3440
    %3442 = vrot.lane.b32.xlu0 %v3428, 96
    %v3443 = vpop.permute.xlu0 %3442
    %3444 = vrot.lane.b32.xlu0 %v3429, 96
    %v3445 = vpop.permute.xlu0 %3444
    %v3450 = vmul.f32 %v3430, %v3439
    %v3451 = vmul.f32 %v3431, %v3441
    %v3452 = vmul.f32 %v3432, %v3443
    %v3453 = vmul.f32 %v3433, %v3445
    %v3454 = vmul.f32 %v3336, %v3212
    %v3455 = vmul.f32 %v3351, %v3213
    %v3456 = vmul.f32 %v3366, %v3214
    %v3457 = vmul.f32 %v3381, %v3215
    %v3458 = vadd.f32 %v3450, %v3454
    %v3459 = vadd.f32 %v3451, %v3455
    %v3460 = vadd.f32 %v3452, %v3456
    %v3461 = vadd.f32 %v3453, %v3457
    %3466 = vrot.lane.b32.xlu0 %v3458, 96
    %v3467 = vpop.permute.xlu0 %3466
    %3468 = vrot.lane.b32.xlu0 %v3459, 96
    %v3469 = vpop.permute.xlu0 %3468
    %3470 = vrot.lane.b32.xlu0 %v3460, 96
    %v3471 = vpop.permute.xlu0 %3470
    %3472 = vrot.lane.b32.xlu0 %v3461, 96
    %v3473 = vpop.permute.xlu0 %3472
    %v3474 = vsel %vm103, %v3467, 0
    %v3476 = vsel %vm103, %v3469, 0
    %v3478 = vsel %vm103, %v3471, 0
    %v3480 = vsel %vm103, %v3473, 0
    %3482 = vmatpush.msra.mxu0 0.0
    %3483 = vmatpush.msra.mxu0 0.0
    %3484 = vmatpush.msra.mxu0 0.0
    %3485 = vmatpush.msra.mxu0 0.0
    %3486 = vmatpush.msra.mxu0 0.0
    %3487 = vmatpush.msra.mxu0 0.0
    %3488 = vmatpush.msra.mxu0 0.0
    %3489 = vmatpush.msra.mxu0 0.0
    %3490 = vmatpush.msra.mxu0 0.0
    %3491 = vmatpush.msra.mxu0 0.0
    %3492 = vmatpush.msra.mxu0 0.0
    %3493 = vmatpush.msra.mxu0 0.0
    %3494 = vmatpush.msra.mxu0 %v552
    %3495 = vmatpush.msra.mxu0 %v551
    %3496 = vmatpush.msra.mxu0 %v550
    %3497 = vmatpush.msra.mxu0 %v549
    %3498 = vmatmul.f32.gmra.mxu0 %v3474
    %v3499 = vpop.f32.mrf.mxu0
    %v3500 = vadd.f32 %v555, %v3499
    %3501 = vmatmul.f32.gmra.mxu0 %v3476
    %v3502 = vpop.f32.mrf.mxu0
    %v3503 = vadd.f32 %v555, %v3502
    %3504 = vmatmul.f32.gmra.mxu0 %v3478
    %v3505 = vpop.f32.mrf.mxu0
    %v3506 = vadd.f32 %v555, %v3505
    %3507 = vmatmul.f32.gmra.mxu0 %v3480
    %v3508 = vpop.f32.mrf.mxu0
    %v3509 = vadd.f32 %v555, %v3508
    %3510 = vdwg.mxu0
    %3511 = vst.msk [vmem:[#allocation2 + $0x160] sm:$0xff] %vm481, %v3500
    %3512 = vst.msk [vmem:[#allocation2 + $0x168] sm:$0xff] %vm481, %v3503
    %3513 = vst.msk [vmem:[#allocation2 + $0x170] sm:$0xff] %vm481, %v3506
    %3514 = vst.msk [vmem:[#allocation2 + $0x178] sm:$0xff] %vm481, %v3509
    %v3515 = vld [vmem:[#allocation2 + $0x180] sm:$0xff]
    %v3516 = vld [vmem:[#allocation2 + $0x188] sm:$0xff]
    %v3517 = vld [vmem:[#allocation2 + $0x190] sm:$0xff]
    %v3518 = vld [vmem:[#allocation2 + $0x198] sm:$0xff]
    %3519 = vmatpush.msra.mxu0 0.0
    %3520 = vmatpush.msra.mxu0 0.0
    %3521 = vmatpush.msra.mxu0 0.0
    %3522 = vmatpush.msra.mxu0 0.0
    %3523 = vmatpush.msra.mxu0 0.0
    %3524 = vmatpush.msra.mxu0 0.0
    %3525 = vmatpush.msra.mxu0 0.0
    %3526 = vmatpush.msra.mxu0 0.0
    %3527 = vmatpush.msra.mxu0 0.0
    %3528 = vmatpush.msra.mxu0 0.0
    %3529 = vmatpush.msra.mxu0 0.0
    %3530 = vmatpush.msra.mxu0 0.0
    %3531 = vmatpush.msra.mxu0 %v545
    %3532 = vmatpush.msra.mxu0 %v544
    %3533 = vmatpush.msra.mxu0 %v543
    %3534 = vmatpush.msra.mxu0 %v542
    %3535 = vmatmul.f32.gmra.mxu0 %v3474
    %v3536 = vpop.f32.mrf.mxu0
    %v3537 = vadd.f32 0.0, %v3536
    %3538 = vmatmul.f32.gmra.mxu0 %v3476
    %v3539 = vpop.f32.mrf.mxu0
    %v3540 = vadd.f32 0.0, %v3539
    %3541 = vmatmul.f32.gmra.mxu0 %v3478
    %v3542 = vpop.f32.mrf.mxu0
    %v3543 = vadd.f32 0.0, %v3542
    %3544 = vmatmul.f32.gmra.mxu0 %v3480
    %v3545 = vpop.f32.mrf.mxu0
    %v3546 = vadd.f32 0.0, %v3545
    %3547 = vdwg.mxu0
    %v3548 = vadd.f32 %v3515, %v3537
    %v3549 = vadd.f32 %v3516, %v3540
    %v3550 = vadd.f32 %v3517, %v3543
    %v3551 = vadd.f32 %v3518, %v3546
    %v3552 = vxor.u32 %v3548, 2147483648
    %v3553 = vxor.u32 %v3549, 2147483648
    %v3554 = vxor.u32 %v3550, 2147483648
    %v3555 = vxor.u32 %v3551, 2147483648
    %v3556 = vmul.f32 %v3552, 1.442695
    %v3557 = vpow.pop %v3556
    %v3558 = vmul.f32 %v3553, 1.442695
    %v3559 = vpow.pop %v3558
    %v3560 = vmul.f32 %v3554, 1.442695
    %v3561 = vpow.pop %v3560
    %v3562 = vmul.f32 %v3555, 1.442695
    %v3563 = vpow.pop %v3562
    %v3564 = vadd.f32 %v3557, 1.0
    %v3565 = vadd.f32 %v3559, 1.0
    %v3566 = vadd.f32 %v3561, 1.0
    %v3567 = vadd.f32 %v3563, 1.0
    %v3568 = vrcp.pop %v3564
    %v3569 = vmul.f32 %v3564, %v3568
    %v3570 = vsub.f32 1.0, %v3569
    %v3571 = vmul.f32 %v3568, %v3570
    %v3572 = vadd.f32 %v3568, %v3571
    %vm3573 = vweird.f32 %v3564
    %vm3574 = vweird.f32 %v3568
    %vm3575 = vmor %vm3573, %vm3574
    %v3576 = vsel %vm3575, %v3568, %v3572
    %v3577 = vand.u32 2147483647, %v3564
    %vm3578 = vcmp.eq.f32.partialorder %v3577, 8.507059e+37
    %v3579 = vand.u32 %v3564, 2147483648
    %v3580 = vor.u32 1.1754944e-38, %v3579
    %v3581 = vsel %vm3578, %v3580, %v3576
    %v3582 = vmul.f32 1.0, %v3581
    %v3583 = vrcp.pop %v3565
    %v3584 = vmul.f32 %v3565, %v3583
    %v3585 = vsub.f32 1.0, %v3584
    %v3586 = vmul.f32 %v3583, %v3585
    %v3587 = vadd.f32 %v3583, %v3586
    %vm3588 = vweird.f32 %v3565
    %vm3589 = vweird.f32 %v3583
    %vm3590 = vmor %vm3588, %vm3589
    %v3591 = vsel %vm3590, %v3583, %v3587
    %v3592 = vand.u32 2147483647, %v3565
    %vm3593 = vcmp.eq.f32.partialorder %v3592, 8.507059e+37
    %v3594 = vand.u32 %v3565, 2147483648
    %v3595 = vor.u32 1.1754944e-38, %v3594
    %v3596 = vsel %vm3593, %v3595, %v3591
    %v3597 = vmul.f32 1.0, %v3596
    %v3598 = vrcp.pop %v3566
    %v3599 = vmul.f32 %v3566, %v3598
    %v3600 = vsub.f32 1.0, %v3599
    %v3601 = vmul.f32 %v3598, %v3600
    %v3602 = vadd.f32 %v3598, %v3601
    %vm3603 = vweird.f32 %v3566
    %vm3604 = vweird.f32 %v3598
    %vm3605 = vmor %vm3603, %vm3604
    %v3606 = vsel %vm3605, %v3598, %v3602
    %v3607 = vand.u32 2147483647, %v3566
    %vm3608 = vcmp.eq.f32.partialorder %v3607, 8.507059e+37
    %v3609 = vand.u32 %v3566, 2147483648
    %v3610 = vor.u32 1.1754944e-38, %v3609
    %v3611 = vsel %vm3608, %v3610, %v3606
    %v3612 = vmul.f32 1.0, %v3611
    %v3613 = vrcp.pop %v3567
    %v3614 = vmul.f32 %v3567, %v3613
    %v3615 = vsub.f32 1.0, %v3614
    %v3616 = vmul.f32 %v3613, %v3615
    %v3617 = vadd.f32 %v3613, %v3616
    %vm3618 = vweird.f32 %v3567
    %vm3619 = vweird.f32 %v3613
    %vm3620 = vmor %vm3618, %vm3619
    %v3621 = vsel %vm3620, %v3613, %v3617
    %v3622 = vand.u32 2147483647, %v3567
    %vm3623 = vcmp.eq.f32.partialorder %v3622, 8.507059e+37
    %v3624 = vand.u32 %v3567, 2147483648
    %v3625 = vor.u32 1.1754944e-38, %v3624
    %v3626 = vsel %vm3623, %v3625, %v3621
    %v3627 = vmul.f32 1.0, %v3626
    %v3628 = vadd.f32 %v3537, %v674
    %v3629 = vadd.f32 %v3540, %v674
    %v3630 = vadd.f32 %v3543, %v674
    %v3631 = vadd.f32 %v3546, %v674
    %3636 = vrot.lane.b32.xlu0 %v3628, 64
    %v3637 = vpop.permute.xlu0 %3636
    %3638 = vrot.lane.b32.xlu0 %v3629, 64
    %v3639 = vpop.permute.xlu0 %3638
    %3640 = vrot.lane.b32.xlu0 %v3630, 64
    %v3641 = vpop.permute.xlu0 %3640
    %3642 = vrot.lane.b32.xlu0 %v3631, 64
    %v3643 = vpop.permute.xlu0 %3642
    %v3648 = vmul.f32 %v3582, %v3637
    %v3649 = vmul.f32 %v3597, %v3639
    %v3650 = vmul.f32 %v3612, %v3641
    %v3651 = vmul.f32 %v3627, %v3643
    %3656 = vrot.lane.b32.xlu0 %v3648, 64
    %v3657 = vpop.permute.xlu0 %3656
    %3658 = vrot.lane.b32.xlu0 %v3649, 64
    %v3659 = vpop.permute.xlu0 %3658
    %3660 = vrot.lane.b32.xlu0 %v3650, 64
    %v3661 = vpop.permute.xlu0 %3660
    %3662 = vrot.lane.b32.xlu0 %v3651, 64
    %v3663 = vpop.permute.xlu0 %3662
    %v3668 = vadd.f32 %v3515, %v3657
    %v3669 = vadd.f32 %v3516, %v3659
    %v3670 = vadd.f32 %v3517, %v3661
    %v3671 = vadd.f32 %v3518, %v3663
    %v3672 = vtanh.pop %v3668
    %v3673 = vtanh.pop %v3669
    %v3674 = vtanh.pop %v3670
    %v3675 = vtanh.pop %v3671
    %v3676 = vsub.f32 1.0, %v3582
    %v3677 = vsub.f32 1.0, %v3597
    %v3678 = vsub.f32 1.0, %v3612
    %v3679 = vsub.f32 1.0, %v3627
    %3684 = vrot.lane.b32.xlu0 %v3672, 96
    %v3685 = vpop.permute.xlu0 %3684
    %3686 = vrot.lane.b32.xlu0 %v3673, 96
    %v3687 = vpop.permute.xlu0 %3686
    %3688 = vrot.lane.b32.xlu0 %v3674, 96
    %v3689 = vpop.permute.xlu0 %3688
    %3690 = vrot.lane.b32.xlu0 %v3675, 96
    %v3691 = vpop.permute.xlu0 %3690
    %v3696 = vmul.f32 %v3676, %v3685
    %v3697 = vmul.f32 %v3677, %v3687
    %v3698 = vmul.f32 %v3678, %v3689
    %v3699 = vmul.f32 %v3679, %v3691
    %v3700 = vmul.f32 %v3582, %v3458
    %v3701 = vmul.f32 %v3597, %v3459
    %v3702 = vmul.f32 %v3612, %v3460
    %v3703 = vmul.f32 %v3627, %v3461
    %v3704 = vadd.f32 %v3696, %v3700
    %v3705 = vadd.f32 %v3697, %v3701
    %v3706 = vadd.f32 %v3698, %v3702
    %v3707 = vadd.f32 %v3699, %v3703
    %3712 = vrot.lane.b32.xlu0 %v3704, 96
    %v3713 = vpop.permute.xlu0 %3712
    %3714 = vrot.lane.b32.xlu0 %v3705, 96
    %v3715 = vpop.permute.xlu0 %3714
    %3716 = vrot.lane.b32.xlu0 %v3706, 96
    %v3717 = vpop.permute.xlu0 %3716
    %3718 = vrot.lane.b32.xlu0 %v3707, 96
    %v3719 = vpop.permute.xlu0 %3718
    %v3720 = vsel %vm103, %v3713, 0
    %v3722 = vsel %vm103, %v3715, 0
    %v3724 = vsel %vm103, %v3717, 0
    %v3726 = vsel %vm103, %v3719, 0
    %3728 = vmatpush.msra.mxu0 0.0
    %3729 = vmatpush.msra.mxu0 0.0
    %3730 = vmatpush.msra.mxu0 0.0
    %3731 = vmatpush.msra.mxu0 0.0
    %3732 = vmatpush.msra.mxu0 0.0
    %3733 = vmatpush.msra.mxu0 0.0
    %3734 = vmatpush.msra.mxu0 0.0
    %3735 = vmatpush.msra.mxu0 0.0
    %3736 = vmatpush.msra.mxu0 0.0
    %3737 = vmatpush.msra.mxu0 0.0
    %3738 = vmatpush.msra.mxu0 0.0
    %3739 = vmatpush.msra.mxu0 0.0
    %3740 = vmatpush.msra.mxu0 %v552
    %3741 = vmatpush.msra.mxu0 %v551
    %3742 = vmatpush.msra.mxu0 %v550
    %3743 = vmatpush.msra.mxu0 %v549
    %3744 = vmatmul.f32.gmra.mxu0 %v3720
    %v3745 = vpop.f32.mrf.mxu0
    %v3746 = vadd.f32 %v555, %v3745
    %3747 = vmatmul.f32.gmra.mxu0 %v3722
    %v3748 = vpop.f32.mrf.mxu0
    %v3749 = vadd.f32 %v555, %v3748
    %3750 = vmatmul.f32.gmra.mxu0 %v3724
    %v3751 = vpop.f32.mrf.mxu0
    %v3752 = vadd.f32 %v555, %v3751
    %3753 = vmatmul.f32.gmra.mxu0 %v3726
    %v3754 = vpop.f32.mrf.mxu0
    %v3755 = vadd.f32 %v555, %v3754
    %3756 = vdwg.mxu0
    %3757 = vst.msk [vmem:[#allocation2 + $0x180] sm:$0xff] %vm481, %v3746
    %3758 = vst.msk [vmem:[#allocation2 + $0x188] sm:$0xff] %vm481, %v3749
    %3759 = vst.msk [vmem:[#allocation2 + $0x190] sm:$0xff] %vm481, %v3752
    %3760 = vst.msk [vmem:[#allocation2 + $0x198] sm:$0xff] %vm481, %v3755
    %v3761 = vld [vmem:[#allocation2 + $0x1a0] sm:$0xff]
    %v3762 = vld [vmem:[#allocation2 + $0x1a8] sm:$0xff]
    %v3763 = vld [vmem:[#allocation2 + $0x1b0] sm:$0xff]
    %v3764 = vld [vmem:[#allocation2 + $0x1b8] sm:$0xff]
    %3765 = vmatpush.msra.mxu0 0.0
    %3766 = vmatpush.msra.mxu0 0.0
    %3767 = vmatpush.msra.mxu0 0.0
    %3768 = vmatpush.msra.mxu0 0.0
    %3769 = vmatpush.msra.mxu0 0.0
    %3770 = vmatpush.msra.mxu0 0.0
    %3771 = vmatpush.msra.mxu0 0.0
    %3772 = vmatpush.msra.mxu0 0.0
    %3773 = vmatpush.msra.mxu0 0.0
    %3774 = vmatpush.msra.mxu0 0.0
    %3775 = vmatpush.msra.mxu0 0.0
    %3776 = vmatpush.msra.mxu0 0.0
    %3777 = vmatpush.msra.mxu0 %v545
    %3778 = vmatpush.msra.mxu0 %v544
    %3779 = vmatpush.msra.mxu0 %v543
    %3780 = vmatpush.msra.mxu0 %v542
    %3781 = vmatmul.f32.gmra.mxu0 %v3720
    %v3782 = vpop.f32.mrf.mxu0
    %v3783 = vadd.f32 0.0, %v3782
    %3784 = vmatmul.f32.gmra.mxu0 %v3722
    %v3785 = vpop.f32.mrf.mxu0
    %v3786 = vadd.f32 0.0, %v3785
    %3787 = vmatmul.f32.gmra.mxu0 %v3724
    %v3788 = vpop.f32.mrf.mxu0
    %v3789 = vadd.f32 0.0, %v3788
    %3790 = vmatmul.f32.gmra.mxu0 %v3726
    %v3791 = vpop.f32.mrf.mxu0
    %v3792 = vadd.f32 0.0, %v3791
    %3793 = vdwg.mxu0
    %v3794 = vadd.f32 %v3761, %v3783
    %v3795 = vadd.f32 %v3762, %v3786
    %v3796 = vadd.f32 %v3763, %v3789
    %v3797 = vadd.f32 %v3764, %v3792
    %v3798 = vxor.u32 %v3794, 2147483648
    %v3799 = vxor.u32 %v3795, 2147483648
    %v3800 = vxor.u32 %v3796, 2147483648
    %v3801 = vxor.u32 %v3797, 2147483648
    %v3802 = vmul.f32 %v3798, 1.442695
    %v3803 = vpow.pop %v3802
    %v3804 = vmul.f32 %v3799, 1.442695
    %v3805 = vpow.pop %v3804
    %v3806 = vmul.f32 %v3800, 1.442695
    %v3807 = vpow.pop %v3806
    %v3808 = vmul.f32 %v3801, 1.442695
    %v3809 = vpow.pop %v3808
    %v3810 = vadd.f32 %v3803, 1.0
    %v3811 = vadd.f32 %v3805, 1.0
    %v3812 = vadd.f32 %v3807, 1.0
    %v3813 = vadd.f32 %v3809, 1.0
    %v3814 = vrcp.pop %v3810
    %v3815 = vmul.f32 %v3810, %v3814
    %v3816 = vsub.f32 1.0, %v3815
    %v3817 = vmul.f32 %v3814, %v3816
    %v3818 = vadd.f32 %v3814, %v3817
    %vm3819 = vweird.f32 %v3810
    %vm3820 = vweird.f32 %v3814
    %vm3821 = vmor %vm3819, %vm3820
    %v3822 = vsel %vm3821, %v3814, %v3818
    %v3823 = vand.u32 2147483647, %v3810
    %vm3824 = vcmp.eq.f32.partialorder %v3823, 8.507059e+37
    %v3825 = vand.u32 %v3810, 2147483648
    %v3826 = vor.u32 1.1754944e-38, %v3825
    %v3827 = vsel %vm3824, %v3826, %v3822
    %v3828 = vmul.f32 1.0, %v3827
    %v3829 = vrcp.pop %v3811
    %v3830 = vmul.f32 %v3811, %v3829
    %v3831 = vsub.f32 1.0, %v3830
    %v3832 = vmul.f32 %v3829, %v3831
    %v3833 = vadd.f32 %v3829, %v3832
    %vm3834 = vweird.f32 %v3811
    %vm3835 = vweird.f32 %v3829
    %vm3836 = vmor %vm3834, %vm3835
    %v3837 = vsel %vm3836, %v3829, %v3833
    %v3838 = vand.u32 2147483647, %v3811
    %vm3839 = vcmp.eq.f32.partialorder %v3838, 8.507059e+37
    %v3840 = vand.u32 %v3811, 2147483648
    %v3841 = vor.u32 1.1754944e-38, %v3840
    %v3842 = vsel %vm3839, %v3841, %v3837
    %v3843 = vmul.f32 1.0, %v3842
    %v3844 = vrcp.pop %v3812
    %v3845 = vmul.f32 %v3812, %v3844
    %v3846 = vsub.f32 1.0, %v3845
    %v3847 = vmul.f32 %v3844, %v3846
    %v3848 = vadd.f32 %v3844, %v3847
    %vm3849 = vweird.f32 %v3812
    %vm3850 = vweird.f32 %v3844
    %vm3851 = vmor %vm3849, %vm3850
    %v3852 = vsel %vm3851, %v3844, %v3848
    %v3853 = vand.u32 2147483647, %v3812
    %vm3854 = vcmp.eq.f32.partialorder %v3853, 8.507059e+37
    %v3855 = vand.u32 %v3812, 2147483648
    %v3856 = vor.u32 1.1754944e-38, %v3855
    %v3857 = vsel %vm3854, %v3856, %v3852
    %v3858 = vmul.f32 1.0, %v3857
    %v3859 = vrcp.pop %v3813
    %v3860 = vmul.f32 %v3813, %v3859
    %v3861 = vsub.f32 1.0, %v3860
    %v3862 = vmul.f32 %v3859, %v3861
    %v3863 = vadd.f32 %v3859, %v3862
    %vm3864 = vweird.f32 %v3813
    %vm3865 = vweird.f32 %v3859
    %vm3866 = vmor %vm3864, %vm3865
    %v3867 = vsel %vm3866, %v3859, %v3863
    %v3868 = vand.u32 2147483647, %v3813
    %vm3869 = vcmp.eq.f32.partialorder %v3868, 8.507059e+37
    %v3870 = vand.u32 %v3813, 2147483648
    %v3871 = vor.u32 1.1754944e-38, %v3870
    %v3872 = vsel %vm3869, %v3871, %v3867
    %v3873 = vmul.f32 1.0, %v3872
    %v3874 = vadd.f32 %v3783, %v674
    %v3875 = vadd.f32 %v3786, %v674
    %v3876 = vadd.f32 %v3789, %v674
    %v3877 = vadd.f32 %v3792, %v674
    %3882 = vrot.lane.b32.xlu0 %v3874, 64
    %v3883 = vpop.permute.xlu0 %3882
    %3884 = vrot.lane.b32.xlu0 %v3875, 64
    %v3885 = vpop.permute.xlu0 %3884
    %3886 = vrot.lane.b32.xlu0 %v3876, 64
    %v3887 = vpop.permute.xlu0 %3886
    %3888 = vrot.lane.b32.xlu0 %v3877, 64
    %v3889 = vpop.permute.xlu0 %3888
    %v3894 = vmul.f32 %v3828, %v3883
    %v3895 = vmul.f32 %v3843, %v3885
    %v3896 = vmul.f32 %v3858, %v3887
    %v3897 = vmul.f32 %v3873, %v3889
    %3902 = vrot.lane.b32.xlu0 %v3894, 64
    %v3903 = vpop.permute.xlu0 %3902
    %3904 = vrot.lane.b32.xlu0 %v3895, 64
    %v3905 = vpop.permute.xlu0 %3904
    %3906 = vrot.lane.b32.xlu0 %v3896, 64
    %v3907 = vpop.permute.xlu0 %3906
    %3908 = vrot.lane.b32.xlu0 %v3897, 64
    %v3909 = vpop.permute.xlu0 %3908
    %v3914 = vadd.f32 %v3761, %v3903
    %v3915 = vadd.f32 %v3762, %v3905
    %v3916 = vadd.f32 %v3763, %v3907
    %v3917 = vadd.f32 %v3764, %v3909
    %v3918 = vtanh.pop %v3914
    %v3919 = vtanh.pop %v3915
    %v3920 = vtanh.pop %v3916
    %v3921 = vtanh.pop %v3917
    %v3922 = vsub.f32 1.0, %v3828
    %v3923 = vsub.f32 1.0, %v3843
    %v3924 = vsub.f32 1.0, %v3858
    %v3925 = vsub.f32 1.0, %v3873
    %3930 = vrot.lane.b32.xlu0 %v3918, 96
    %v3931 = vpop.permute.xlu0 %3930
    %3932 = vrot.lane.b32.xlu0 %v3919, 96
    %v3933 = vpop.permute.xlu0 %3932
    %3934 = vrot.lane.b32.xlu0 %v3920, 96
    %v3935 = vpop.permute.xlu0 %3934
    %3936 = vrot.lane.b32.xlu0 %v3921, 96
    %v3937 = vpop.permute.xlu0 %3936
    %v3942 = vmul.f32 %v3922, %v3931
    %v3943 = vmul.f32 %v3923, %v3933
    %v3944 = vmul.f32 %v3924, %v3935
    %v3945 = vmul.f32 %v3925, %v3937
    %v3946 = vmul.f32 %v3828, %v3704
    %v3947 = vmul.f32 %v3843, %v3705
    %v3948 = vmul.f32 %v3858, %v3706
    %v3949 = vmul.f32 %v3873, %v3707
    %v3950 = vadd.f32 %v3942, %v3946
    %v3951 = vadd.f32 %v3943, %v3947
    %v3952 = vadd.f32 %v3944, %v3948
    %v3953 = vadd.f32 %v3945, %v3949
    %3958 = vrot.lane.b32.xlu0 %v3950, 96
    %v3959 = vpop.permute.xlu0 %3958
    %3960 = vrot.lane.b32.xlu0 %v3951, 96
    %v3961 = vpop.permute.xlu0 %3960
    %3962 = vrot.lane.b32.xlu0 %v3952, 96
    %v3963 = vpop.permute.xlu0 %3962
    %3964 = vrot.lane.b32.xlu0 %v3953, 96
    %v3965 = vpop.permute.xlu0 %3964
    %v3966 = vsel %vm103, %v3959, 0
    %v3968 = vsel %vm103, %v3961, 0
    %v3970 = vsel %vm103, %v3963, 0
    %v3972 = vsel %vm103, %v3965, 0
    %3974 = vmatpush.msra.mxu0 0.0
    %3975 = vmatpush.msra.mxu0 0.0
    %3976 = vmatpush.msra.mxu0 0.0
    %3977 = vmatpush.msra.mxu0 0.0
    %3978 = vmatpush.msra.mxu0 0.0
    %3979 = vmatpush.msra.mxu0 0.0
    %3980 = vmatpush.msra.mxu0 0.0
    %3981 = vmatpush.msra.mxu0 0.0
    %3982 = vmatpush.msra.mxu0 0.0
    %3983 = vmatpush.msra.mxu0 0.0
    %3984 = vmatpush.msra.mxu0 0.0
    %3985 = vmatpush.msra.mxu0 0.0
    %3986 = vmatpush.msra.mxu0 %v552
    %3987 = vmatpush.msra.mxu0 %v551
    %3988 = vmatpush.msra.mxu0 %v550
    %3989 = vmatpush.msra.mxu0 %v549
    %3990 = vmatmul.f32.gmra.mxu0 %v3966
    %v3991 = vpop.f32.mrf.mxu0
    %v3992 = vadd.f32 %v555, %v3991
    %3993 = vmatmul.f32.gmra.mxu0 %v3968
    %v3994 = vpop.f32.mrf.mxu0
    %v3995 = vadd.f32 %v555, %v3994
    %3996 = vmatmul.f32.gmra.mxu0 %v3970
    %v3997 = vpop.f32.mrf.mxu0
    %v3998 = vadd.f32 %v555, %v3997
    %3999 = vmatmul.f32.gmra.mxu0 %v3972
    %v4000 = vpop.f32.mrf.mxu0
    %v4001 = vadd.f32 %v555, %v4000
    %4002 = vdwg.mxu0
    %4003 = vst.msk [vmem:[#allocation2 + $0x1a0] sm:$0xff] %vm481, %v3992
    %4004 = vst.msk [vmem:[#allocation2 + $0x1a8] sm:$0xff] %vm481, %v3995
    %4005 = vst.msk [vmem:[#allocation2 + $0x1b0] sm:$0xff] %vm481, %v3998
    %4006 = vst.msk [vmem:[#allocation2 + $0x1b8] sm:$0xff] %vm481, %v4001
    %v4007 = vld [vmem:[#allocation2 + $0x1c0] sm:$0xff]
    %v4008 = vld [vmem:[#allocation2 + $0x1c8] sm:$0xff]
    %v4009 = vld [vmem:[#allocation2 + $0x1d0] sm:$0xff]
    %v4010 = vld [vmem:[#allocation2 + $0x1d8] sm:$0xff]
    %4011 = vmatpush.msra.mxu0 0.0
    %4012 = vmatpush.msra.mxu0 0.0
    %4013 = vmatpush.msra.mxu0 0.0
    %4014 = vmatpush.msra.mxu0 0.0
    %4015 = vmatpush.msra.mxu0 0.0
    %4016 = vmatpush.msra.mxu0 0.0
    %4017 = vmatpush.msra.mxu0 0.0
    %4018 = vmatpush.msra.mxu0 0.0
    %4019 = vmatpush.msra.mxu0 0.0
    %4020 = vmatpush.msra.mxu0 0.0
    %4021 = vmatpush.msra.mxu0 0.0
    %4022 = vmatpush.msra.mxu0 0.0
    %4023 = vmatpush.msra.mxu0 %v545
    %4024 = vmatpush.msra.mxu0 %v544
    %4025 = vmatpush.msra.mxu0 %v543
    %4026 = vmatpush.msra.mxu0 %v542
    %4027 = vmatmul.f32.gmra.mxu0 %v3966
    %v4028 = vpop.f32.mrf.mxu0
    %v4029 = vadd.f32 0.0, %v4028
    %4030 = vmatmul.f32.gmra.mxu0 %v3968
    %v4031 = vpop.f32.mrf.mxu0
    %v4032 = vadd.f32 0.0, %v4031
    %4033 = vmatmul.f32.gmra.mxu0 %v3970
    %v4034 = vpop.f32.mrf.mxu0
    %v4035 = vadd.f32 0.0, %v4034
    %4036 = vmatmul.f32.gmra.mxu0 %v3972
    %v4037 = vpop.f32.mrf.mxu0
    %v4038 = vadd.f32 0.0, %v4037
    %4039 = vdwg.mxu0
    %v4040 = vadd.f32 %v4007, %v4029
    %v4041 = vadd.f32 %v4008, %v4032
    %v4042 = vadd.f32 %v4009, %v4035
    %v4043 = vadd.f32 %v4010, %v4038
    %v4044 = vxor.u32 %v4040, 2147483648
    %v4045 = vxor.u32 %v4041, 2147483648
    %v4046 = vxor.u32 %v4042, 2147483648
    %v4047 = vxor.u32 %v4043, 2147483648
    %v4048 = vmul.f32 %v4044, 1.442695
    %v4049 = vpow.pop %v4048
    %v4050 = vmul.f32 %v4045, 1.442695
    %v4051 = vpow.pop %v4050
    %v4052 = vmul.f32 %v4046, 1.442695
    %v4053 = vpow.pop %v4052
    %v4054 = vmul.f32 %v4047, 1.442695
    %v4055 = vpow.pop %v4054
    %v4056 = vadd.f32 %v4049, 1.0
    %v4057 = vadd.f32 %v4051, 1.0
    %v4058 = vadd.f32 %v4053, 1.0
    %v4059 = vadd.f32 %v4055, 1.0
    %v4060 = vrcp.pop %v4056
    %v4061 = vmul.f32 %v4056, %v4060
    %v4062 = vsub.f32 1.0, %v4061
    %v4063 = vmul.f32 %v4060, %v4062
    %v4064 = vadd.f32 %v4060, %v4063
    %vm4065 = vweird.f32 %v4056
    %vm4066 = vweird.f32 %v4060
    %vm4067 = vmor %vm4065, %vm4066
    %v4068 = vsel %vm4067, %v4060, %v4064
    %v4069 = vand.u32 2147483647, %v4056
    %vm4070 = vcmp.eq.f32.partialorder %v4069, 8.507059e+37
    %v4071 = vand.u32 %v4056, 2147483648
    %v4072 = vor.u32 1.1754944e-38, %v4071
    %v4073 = vsel %vm4070, %v4072, %v4068
    %v4074 = vmul.f32 1.0, %v4073
    %v4075 = vrcp.pop %v4057
    %v4076 = vmul.f32 %v4057, %v4075
    %v4077 = vsub.f32 1.0, %v4076
    %v4078 = vmul.f32 %v4075, %v4077
    %v4079 = vadd.f32 %v4075, %v4078
    %vm4080 = vweird.f32 %v4057
    %vm4081 = vweird.f32 %v4075
    %vm4082 = vmor %vm4080, %vm4081
    %v4083 = vsel %vm4082, %v4075, %v4079
    %v4084 = vand.u32 2147483647, %v4057
    %vm4085 = vcmp.eq.f32.partialorder %v4084, 8.507059e+37
    %v4086 = vand.u32 %v4057, 2147483648
    %v4087 = vor.u32 1.1754944e-38, %v4086
    %v4088 = vsel %vm4085, %v4087, %v4083
    %v4089 = vmul.f32 1.0, %v4088
    %v4090 = vrcp.pop %v4058
    %v4091 = vmul.f32 %v4058, %v4090
    %v4092 = vsub.f32 1.0, %v4091
    %v4093 = vmul.f32 %v4090, %v4092
    %v4094 = vadd.f32 %v4090, %v4093
    %vm4095 = vweird.f32 %v4058
    %vm4096 = vweird.f32 %v4090
    %vm4097 = vmor %vm4095, %vm4096
    %v4098 = vsel %vm4097, %v4090, %v4094
    %v4099 = vand.u32 2147483647, %v4058
    %vm4100 = vcmp.eq.f32.partialorder %v4099, 8.507059e+37
    %v4101 = vand.u32 %v4058, 2147483648
    %v4102 = vor.u32 1.1754944e-38, %v4101
    %v4103 = vsel %vm4100, %v4102, %v4098
    %v4104 = vmul.f32 1.0, %v4103
    %v4105 = vrcp.pop %v4059
    %v4106 = vmul.f32 %v4059, %v4105
    %v4107 = vsub.f32 1.0, %v4106
    %v4108 = vmul.f32 %v4105, %v4107
    %v4109 = vadd.f32 %v4105, %v4108
    %vm4110 = vweird.f32 %v4059
    %vm4111 = vweird.f32 %v4105
    %vm4112 = vmor %vm4110, %vm4111
    %v4113 = vsel %vm4112, %v4105, %v4109
    %v4114 = vand.u32 2147483647, %v4059
    %vm4115 = vcmp.eq.f32.partialorder %v4114, 8.507059e+37
    %v4116 = vand.u32 %v4059, 2147483648
    %v4117 = vor.u32 1.1754944e-38, %v4116
    %v4118 = vsel %vm4115, %v4117, %v4113
    %v4119 = vmul.f32 1.0, %v4118
    %v4120 = vadd.f32 %v4029, %v674
    %v4121 = vadd.f32 %v4032, %v674
    %v4122 = vadd.f32 %v4035, %v674
    %v4123 = vadd.f32 %v4038, %v674
    %4128 = vrot.lane.b32.xlu0 %v4120, 64
    %v4129 = vpop.permute.xlu0 %4128
    %4130 = vrot.lane.b32.xlu0 %v4121, 64
    %v4131 = vpop.permute.xlu0 %4130
    %4132 = vrot.lane.b32.xlu0 %v4122, 64
    %v4133 = vpop.permute.xlu0 %4132
    %4134 = vrot.lane.b32.xlu0 %v4123, 64
    %v4135 = vpop.permute.xlu0 %4134
    %v4140 = vmul.f32 %v4074, %v4129
    %v4141 = vmul.f32 %v4089, %v4131
    %v4142 = vmul.f32 %v4104, %v4133
    %v4143 = vmul.f32 %v4119, %v4135
    %4148 = vrot.lane.b32.xlu0 %v4140, 64
    %v4149 = vpop.permute.xlu0 %4148
    %4150 = vrot.lane.b32.xlu0 %v4141, 64
    %v4151 = vpop.permute.xlu0 %4150
    %4152 = vrot.lane.b32.xlu0 %v4142, 64
    %v4153 = vpop.permute.xlu0 %4152
    %4154 = vrot.lane.b32.xlu0 %v4143, 64
    %v4155 = vpop.permute.xlu0 %4154
    %v4160 = vadd.f32 %v4007, %v4149
    %v4161 = vadd.f32 %v4008, %v4151
    %v4162 = vadd.f32 %v4009, %v4153
    %v4163 = vadd.f32 %v4010, %v4155
    %v4164 = vtanh.pop %v4160
    %v4165 = vtanh.pop %v4161
    %v4166 = vtanh.pop %v4162
    %v4167 = vtanh.pop %v4163
    %v4168 = vsub.f32 1.0, %v4074
    %v4169 = vsub.f32 1.0, %v4089
    %v4170 = vsub.f32 1.0, %v4104
    %v4171 = vsub.f32 1.0, %v4119
    %4176 = vrot.lane.b32.xlu0 %v4164, 96
    %v4177 = vpop.permute.xlu0 %4176
    %4178 = vrot.lane.b32.xlu0 %v4165, 96
    %v4179 = vpop.permute.xlu0 %4178
    %4180 = vrot.lane.b32.xlu0 %v4166, 96
    %v4181 = vpop.permute.xlu0 %4180
    %4182 = vrot.lane.b32.xlu0 %v4167, 96
    %v4183 = vpop.permute.xlu0 %4182
    %v4188 = vmul.f32 %v4168, %v4177
    %v4189 = vmul.f32 %v4169, %v4179
    %v4190 = vmul.f32 %v4170, %v4181
    %v4191 = vmul.f32 %v4171, %v4183
    %v4192 = vmul.f32 %v4074, %v3950
    %v4193 = vmul.f32 %v4089, %v3951
    %v4194 = vmul.f32 %v4104, %v3952
    %v4195 = vmul.f32 %v4119, %v3953
    %v4196 = vadd.f32 %v4188, %v4192
    %v4197 = vadd.f32 %v4189, %v4193
    %v4198 = vadd.f32 %v4190, %v4194
    %v4199 = vadd.f32 %v4191, %v4195
    %4204 = vrot.lane.b32.xlu0 %v4196, 96
    %v4205 = vpop.permute.xlu0 %4204
    %4206 = vrot.lane.b32.xlu0 %v4197, 96
    %v4207 = vpop.permute.xlu0 %4206
    %4208 = vrot.lane.b32.xlu0 %v4198, 96
    %v4209 = vpop.permute.xlu0 %4208
    %4210 = vrot.lane.b32.xlu0 %v4199, 96
    %v4211 = vpop.permute.xlu0 %4210
    %v4212 = vsel %vm103, %v4205, 0
    %v4214 = vsel %vm103, %v4207, 0
    %v4216 = vsel %vm103, %v4209, 0
    %v4218 = vsel %vm103, %v4211, 0
    %4220 = vmatpush.msra.mxu0 0.0
    %4221 = vmatpush.msra.mxu0 0.0
    %4222 = vmatpush.msra.mxu0 0.0
    %4223 = vmatpush.msra.mxu0 0.0
    %4224 = vmatpush.msra.mxu0 0.0
    %4225 = vmatpush.msra.mxu0 0.0
    %4226 = vmatpush.msra.mxu0 0.0
    %4227 = vmatpush.msra.mxu0 0.0
    %4228 = vmatpush.msra.mxu0 0.0
    %4229 = vmatpush.msra.mxu0 0.0
    %4230 = vmatpush.msra.mxu0 0.0
    %4231 = vmatpush.msra.mxu0 0.0
    %4232 = vmatpush.msra.mxu0 %v552
    %4233 = vmatpush.msra.mxu0 %v551
    %4234 = vmatpush.msra.mxu0 %v550
    %4235 = vmatpush.msra.mxu0 %v549
    %4236 = vmatmul.f32.gmra.mxu0 %v4212
    %v4237 = vpop.f32.mrf.mxu0
    %v4238 = vadd.f32 %v555, %v4237
    %4239 = vmatmul.f32.gmra.mxu0 %v4214
    %v4240 = vpop.f32.mrf.mxu0
    %v4241 = vadd.f32 %v555, %v4240
    %4242 = vmatmul.f32.gmra.mxu0 %v4216
    %v4243 = vpop.f32.mrf.mxu0
    %v4244 = vadd.f32 %v555, %v4243
    %4245 = vmatmul.f32.gmra.mxu0 %v4218
    %v4246 = vpop.f32.mrf.mxu0
    %v4247 = vadd.f32 %v555, %v4246
    %4248 = vdwg.mxu0
    %4249 = vst.msk [vmem:[#allocation2 + $0x1c0] sm:$0xff] %vm481, %v4238
    %4250 = vst.msk [vmem:[#allocation2 + $0x1c8] sm:$0xff] %vm481, %v4241
    %4251 = vst.msk [vmem:[#allocation2 + $0x1d0] sm:$0xff] %vm481, %v4244
    %4252 = vst.msk [vmem:[#allocation2 + $0x1d8] sm:$0xff] %vm481, %v4247
    %4257 = vst.msk [vmem:[#allocation3] sm:$0xff] %vm103, %v4205
    %4258 = vst.msk [vmem:[#allocation3 + $0x8] sm:$0xff] %vm103, %v4207
    %4259 = vst.msk [vmem:[#allocation3 + $0x10] sm:$0xff] %vm103, %v4209
    %4260 = vst.msk [vmem:[#allocation3 + $0x18] sm:$0xff] %vm103, %v4211
    %v4261 = vld [vmem:[%s6] sm:$0xff]
    %v4262 = vld [vmem:[%s6 + $0x8] sm:$0xff]
    %v4263 = vld [vmem:[%s6 + $0x10] sm:$0xff]
    %v4264 = vld [vmem:[%s6 + $0x18] sm:$0xff]
    %v4265 = vld [vmem:[%s8] sm:$0x1]
    %v4267 = vperm.slane %v4265, 0
    %v4268 = vld [vmem:[#allocation2] sm:$0xff]
    %v4269 = vld [vmem:[#allocation2 + $0x8] sm:$0xff]
    %v4270 = vld [vmem:[#allocation2 + $0x10] sm:$0xff]
    %v4271 = vld [vmem:[#allocation2 + $0x18] sm:$0xff]
    %4272 = vmatpush.msra.mxu0 0.0
    %4273 = vmatpush.msra.mxu0 0.0
    %4274 = vmatpush.msra.mxu0 0.0
    %4275 = vmatpush.msra.mxu0 0.0
    %4276 = vmatpush.msra.mxu0 0.0
    %4277 = vmatpush.msra.mxu0 0.0
    %4278 = vmatpush.msra.mxu0 0.0
    %4279 = vmatpush.msra.mxu0 0.0
    %4280 = vmatpush.msra.mxu0 0.0
    %4281 = vmatpush.msra.mxu0 0.0
    %4282 = vmatpush.msra.mxu0 0.0
    %4283 = vmatpush.msra.mxu0 0.0
    %4284 = vmatpush.msra.mxu0 %v4264
    %4285 = vmatpush.msra.mxu0 %v4263
    %4286 = vmatpush.msra.mxu0 %v4262
    %4287 = vmatpush.msra.mxu0 %v4261
    %4288 = vmatmul.f32.gmra.mxu0 %v562
    %v4289 = vpop.f32.mrf.mxu0
    %v4290 = vadd.f32 0.0, %v4289
    %4291 = vmatmul.f32.gmra.mxu0 %v562
    %v4292 = vpop.f32.mrf.mxu0
    %v4293 = vadd.f32 0.0, %v4292
    %4294 = vmatmul.f32.gmra.mxu0 %v562
    %v4295 = vpop.f32.mrf.mxu0
    %v4296 = vadd.f32 0.0, %v4295
    %4297 = vmatmul.f32.gmra.mxu0 %v562
    %v4298 = vpop.f32.mrf.mxu0
    %v4299 = vadd.f32 0.0, %v4298
    %4300 = vdwg.mxu0
    %v4301 = vadd.f32 %v4268, %v4290
    %v4302 = vadd.f32 %v4269, %v4293
    %v4303 = vadd.f32 %v4270, %v4296
    %v4304 = vadd.f32 %v4271, %v4299
    %v4305 = vxor.u32 %v4301, 2147483648
    %v4306 = vxor.u32 %v4302, 2147483648
    %v4307 = vxor.u32 %v4303, 2147483648
    %v4308 = vxor.u32 %v4304, 2147483648
    %v4309 = vmul.f32 %v4305, 1.442695
    %v4310 = vpow.pop %v4309
    %v4311 = vmul.f32 %v4306, 1.442695
    %v4312 = vpow.pop %v4311
    %v4313 = vmul.f32 %v4307, 1.442695
    %v4314 = vpow.pop %v4313
    %v4315 = vmul.f32 %v4308, 1.442695
    %v4316 = vpow.pop %v4315
    %v4317 = vadd.f32 %v4310, 1.0
    %v4318 = vadd.f32 %v4312, 1.0
    %v4319 = vadd.f32 %v4314, 1.0
    %v4320 = vadd.f32 %v4316, 1.0
    %v4321 = vrcp.pop %v4317
    %v4322 = vmul.f32 %v4317, %v4321
    %v4323 = vsub.f32 1.0, %v4322
    %v4324 = vmul.f32 %v4321, %v4323
    %v4325 = vadd.f32 %v4321, %v4324
    %vm4326 = vweird.f32 %v4317
    %vm4327 = vweird.f32 %v4321
    %vm4328 = vmor %vm4326, %vm4327
    %v4329 = vsel %vm4328, %v4321, %v4325
    %v4330 = vand.u32 2147483647, %v4317
    %vm4331 = vcmp.eq.f32.partialorder %v4330, 8.507059e+37
    %v4332 = vand.u32 %v4317, 2147483648
    %v4333 = vor.u32 1.1754944e-38, %v4332
    %v4334 = vsel %vm4331, %v4333, %v4329
    %v4335 = vmul.f32 1.0, %v4334
    %v4336 = vrcp.pop %v4318
    %v4337 = vmul.f32 %v4318, %v4336
    %v4338 = vsub.f32 1.0, %v4337
    %v4339 = vmul.f32 %v4336, %v4338
    %v4340 = vadd.f32 %v4336, %v4339
    %vm4341 = vweird.f32 %v4318
    %vm4342 = vweird.f32 %v4336
    %vm4343 = vmor %vm4341, %vm4342
    %v4344 = vsel %vm4343, %v4336, %v4340
    %v4345 = vand.u32 2147483647, %v4318
    %vm4346 = vcmp.eq.f32.partialorder %v4345, 8.507059e+37
    %v4347 = vand.u32 %v4318, 2147483648
    %v4348 = vor.u32 1.1754944e-38, %v4347
    %v4349 = vsel %vm4346, %v4348, %v4344
    %v4350 = vmul.f32 1.0, %v4349
    %v4351 = vrcp.pop %v4319
    %v4352 = vmul.f32 %v4319, %v4351
    %v4353 = vsub.f32 1.0, %v4352
    %v4354 = vmul.f32 %v4351, %v4353
    %v4355 = vadd.f32 %v4351, %v4354
    %vm4356 = vweird.f32 %v4319
    %vm4357 = vweird.f32 %v4351
    %vm4358 = vmor %vm4356, %vm4357
    %v4359 = vsel %vm4358, %v4351, %v4355
    %v4360 = vand.u32 2147483647, %v4319
    %vm4361 = vcmp.eq.f32.partialorder %v4360, 8.507059e+37
    %v4362 = vand.u32 %v4319, 2147483648
    %v4363 = vor.u32 1.1754944e-38, %v4362
    %v4364 = vsel %vm4361, %v4363, %v4359
    %v4365 = vmul.f32 1.0, %v4364
    %v4366 = vrcp.pop %v4320
    %v4367 = vmul.f32 %v4320, %v4366
    %v4368 = vsub.f32 1.0, %v4367
    %v4369 = vmul.f32 %v4366, %v4368
    %v4370 = vadd.f32 %v4366, %v4369
    %vm4371 = vweird.f32 %v4320
    %vm4372 = vweird.f32 %v4366
    %vm4373 = vmor %vm4371, %vm4372
    %v4374 = vsel %vm4373, %v4366, %v4370
    %v4375 = vand.u32 2147483647, %v4320
    %vm4376 = vcmp.eq.f32.partialorder %v4375, 8.507059e+37
    %v4377 = vand.u32 %v4320, 2147483648
    %v4378 = vor.u32 1.1754944e-38, %v4377
    %v4379 = vsel %vm4376, %v4378, %v4374
    %v4380 = vmul.f32 1.0, %v4379
    %4381 = vrot.lane.b32.xlu0 %v4267, 64
    %v4382 = vpop.permute.xlu0 %4381
    %v4384 = vadd.f32 %v4290, %v4382
    %v4385 = vadd.f32 %v4293, %v4382
    %v4386 = vadd.f32 %v4296, %v4382
    %v4387 = vadd.f32 %v4299, %v4382
    %4392 = vrot.lane.b32.xlu0 %v4384, 64
    %v4393 = vpop.permute.xlu0 %4392
    %4394 = vrot.lane.b32.xlu0 %v4385, 64
    %v4395 = vpop.permute.xlu0 %4394
    %4396 = vrot.lane.b32.xlu0 %v4386, 64
    %v4397 = vpop.permute.xlu0 %4396
    %4398 = vrot.lane.b32.xlu0 %v4387, 64
    %v4399 = vpop.permute.xlu0 %4398
    %v4404 = vmul.f32 %v4335, %v4393
    %v4405 = vmul.f32 %v4350, %v4395
    %v4406 = vmul.f32 %v4365, %v4397
    %v4407 = vmul.f32 %v4380, %v4399
    %4412 = vrot.lane.b32.xlu0 %v4404, 64
    %v4413 = vpop.permute.xlu0 %4412
    %4414 = vrot.lane.b32.xlu0 %v4405, 64
    %v4415 = vpop.permute.xlu0 %4414
    %4416 = vrot.lane.b32.xlu0 %v4406, 64
    %v4417 = vpop.permute.xlu0 %4416
    %4418 = vrot.lane.b32.xlu0 %v4407, 64
    %v4419 = vpop.permute.xlu0 %4418
    %v4424 = vadd.f32 %v4268, %v4413
    %v4425 = vadd.f32 %v4269, %v4415
    %v4426 = vadd.f32 %v4270, %v4417
    %v4427 = vadd.f32 %v4271, %v4419
    %v4428 = vtanh.pop %v4424
    %v4429 = vtanh.pop %v4425
    %v4430 = vtanh.pop %v4426
    %v4431 = vtanh.pop %v4427
    %v4432 = vsub.f32 1.0, %v4335
    %v4433 = vsub.f32 1.0, %v4350
    %v4434 = vsub.f32 1.0, %v4365
    %v4435 = vsub.f32 1.0, %v4380
    %4440 = vrot.lane.b32.xlu0 %v4428, 96
    %v4441 = vpop.permute.xlu0 %4440
    %4442 = vrot.lane.b32.xlu0 %v4429, 96
    %v4443 = vpop.permute.xlu0 %4442
    %4444 = vrot.lane.b32.xlu0 %v4430, 96
    %v4445 = vpop.permute.xlu0 %4444
    %4446 = vrot.lane.b32.xlu0 %v4431, 96
    %v4447 = vpop.permute.xlu0 %4446
    %v4452 = vmul.f32 %v4432, %v4441
    %v4453 = vmul.f32 %v4433, %v4443
    %v4454 = vmul.f32 %v4434, %v4445
    %v4455 = vmul.f32 %v4435, %v4447
    %v4456 = vmul.f32 %v4335, 0.0
    %v4457 = vmul.f32 %v4350, 0.0
    %v4458 = vmul.f32 %v4365, 0.0
    %v4459 = vmul.f32 %v4380, 0.0
    %v4460 = vadd.f32 %v4452, %v4456
    %v4461 = vadd.f32 %v4453, %v4457
    %v4462 = vadd.f32 %v4454, %v4458
    %v4463 = vadd.f32 %v4455, %v4459
    %4468 = vrot.lane.b32.xlu0 %v4460, 96
    %v4469 = vpop.permute.xlu0 %4468
    %4470 = vrot.lane.b32.xlu0 %v4461, 96
    %v4471 = vpop.permute.xlu0 %4470
    %4472 = vrot.lane.b32.xlu0 %v4462, 96
    %v4473 = vpop.permute.xlu0 %4472
    %4474 = vrot.lane.b32.xlu0 %v4463, 96
    %v4475 = vpop.permute.xlu0 %4474
    %4480 = vst.msk [vmem:[%s9] sm:$0xff] %vm103, %v4469
    %4481 = vst.msk [vmem:[%s9 + $0x20] sm:$0xff] %vm103, %v4471
    %4482 = vst.msk [vmem:[%s9 + $0x40] sm:$0xff] %vm103, %v4473
    %4483 = vst.msk [vmem:[%s9 + $0x60] sm:$0xff] %vm103, %v4475
    %v4484 = vld [vmem:[#allocation2 + $0x20] sm:$0xff]
    %v4485 = vld [vmem:[#allocation2 + $0x28] sm:$0xff]
    %v4486 = vld [vmem:[#allocation2 + $0x30] sm:$0xff]
    %v4487 = vld [vmem:[#allocation2 + $0x38] sm:$0xff]
    %v4488 = vsel %vm103, %v4469, 0
    %v4490 = vsel %vm103, %v4471, 0
    %v4492 = vsel %vm103, %v4473, 0
    %v4494 = vsel %vm103, %v4475, 0
    %4496 = vmatpush.msra.mxu0 0.0
    %4497 = vmatpush.msra.mxu0 0.0
    %4498 = vmatpush.msra.mxu0 0.0
    %4499 = vmatpush.msra.mxu0 0.0
    %4500 = vmatpush.msra.mxu0 0.0
    %4501 = vmatpush.msra.mxu0 0.0
    %4502 = vmatpush.msra.mxu0 0.0
    %4503 = vmatpush.msra.mxu0 0.0
    %4504 = vmatpush.msra.mxu0 0.0
    %4505 = vmatpush.msra.mxu0 0.0
    %4506 = vmatpush.msra.mxu0 0.0
    %4507 = vmatpush.msra.mxu0 0.0
    %4508 = vmatpush.msra.mxu0 %v4264
    %4509 = vmatpush.msra.mxu0 %v4263
    %4510 = vmatpush.msra.mxu0 %v4262
    %4511 = vmatpush.msra.mxu0 %v4261
    %4512 = vmatmul.f32.gmra.mxu0 %v4488
    %v4513 = vpop.f32.mrf.mxu0
    %v4514 = vadd.f32 0.0, %v4513
    %4515 = vmatmul.f32.gmra.mxu0 %v4490
    %v4516 = vpop.f32.mrf.mxu0
    %v4517 = vadd.f32 0.0, %v4516
    %4518 = vmatmul.f32.gmra.mxu0 %v4492
    %v4519 = vpop.f32.mrf.mxu0
    %v4520 = vadd.f32 0.0, %v4519
    %4521 = vmatmul.f32.gmra.mxu0 %v4494
    %v4522 = vpop.f32.mrf.mxu0
    %v4523 = vadd.f32 0.0, %v4522
    %4524 = vdwg.mxu0
    %v4525 = vadd.f32 %v4484, %v4514
    %v4526 = vadd.f32 %v4485, %v4517
    %v4527 = vadd.f32 %v4486, %v4520
    %v4528 = vadd.f32 %v4487, %v4523
    %v4529 = vxor.u32 %v4525, 2147483648
    %v4530 = vxor.u32 %v4526, 2147483648
    %v4531 = vxor.u32 %v4527, 2147483648
    %v4532 = vxor.u32 %v4528, 2147483648
    %v4533 = vmul.f32 %v4529, 1.442695
    %v4534 = vpow.pop %v4533
    %v4535 = vmul.f32 %v4530, 1.442695
    %v4536 = vpow.pop %v4535
    %v4537 = vmul.f32 %v4531, 1.442695
    %v4538 = vpow.pop %v4537
    %v4539 = vmul.f32 %v4532, 1.442695
    %v4540 = vpow.pop %v4539
    %v4541 = vadd.f32 %v4534, 1.0
    %v4542 = vadd.f32 %v4536, 1.0
    %v4543 = vadd.f32 %v4538, 1.0
    %v4544 = vadd.f32 %v4540, 1.0
    %v4545 = vrcp.pop %v4541
    %v4546 = vmul.f32 %v4541, %v4545
    %v4547 = vsub.f32 1.0, %v4546
    %v4548 = vmul.f32 %v4545, %v4547
    %v4549 = vadd.f32 %v4545, %v4548
    %vm4550 = vweird.f32 %v4541
    %vm4551 = vweird.f32 %v4545
    %vm4552 = vmor %vm4550, %vm4551
    %v4553 = vsel %vm4552, %v4545, %v4549
    %v4554 = vand.u32 2147483647, %v4541
    %vm4555 = vcmp.eq.f32.partialorder %v4554, 8.507059e+37
    %v4556 = vand.u32 %v4541, 2147483648
    %v4557 = vor.u32 1.1754944e-38, %v4556
    %v4558 = vsel %vm4555, %v4557, %v4553
    %v4559 = vmul.f32 1.0, %v4558
    %v4560 = vrcp.pop %v4542
    %v4561 = vmul.f32 %v4542, %v4560
    %v4562 = vsub.f32 1.0, %v4561
    %v4563 = vmul.f32 %v4560, %v4562
    %v4564 = vadd.f32 %v4560, %v4563
    %vm4565 = vweird.f32 %v4542
    %vm4566 = vweird.f32 %v4560
    %vm4567 = vmor %vm4565, %vm4566
    %v4568 = vsel %vm4567, %v4560, %v4564
    %v4569 = vand.u32 2147483647, %v4542
    %vm4570 = vcmp.eq.f32.partialorder %v4569, 8.507059e+37
    %v4571 = vand.u32 %v4542, 2147483648
    %v4572 = vor.u32 1.1754944e-38, %v4571
    %v4573 = vsel %vm4570, %v4572, %v4568
    %v4574 = vmul.f32 1.0, %v4573
    %v4575 = vrcp.pop %v4543
    %v4576 = vmul.f32 %v4543, %v4575
    %v4577 = vsub.f32 1.0, %v4576
    %v4578 = vmul.f32 %v4575, %v4577
    %v4579 = vadd.f32 %v4575, %v4578
    %vm4580 = vweird.f32 %v4543
    %vm4581 = vweird.f32 %v4575
    %vm4582 = vmor %vm4580, %vm4581
    %v4583 = vsel %vm4582, %v4575, %v4579
    %v4584 = vand.u32 2147483647, %v4543
    %vm4585 = vcmp.eq.f32.partialorder %v4584, 8.507059e+37
    %v4586 = vand.u32 %v4543, 2147483648
    %v4587 = vor.u32 1.1754944e-38, %v4586
    %v4588 = vsel %vm4585, %v4587, %v4583
    %v4589 = vmul.f32 1.0, %v4588
    %v4590 = vrcp.pop %v4544
    %v4591 = vmul.f32 %v4544, %v4590
    %v4592 = vsub.f32 1.0, %v4591
    %v4593 = vmul.f32 %v4590, %v4592
    %v4594 = vadd.f32 %v4590, %v4593
    %vm4595 = vweird.f32 %v4544
    %vm4596 = vweird.f32 %v4590
    %vm4597 = vmor %vm4595, %vm4596
    %v4598 = vsel %vm4597, %v4590, %v4594
    %v4599 = vand.u32 2147483647, %v4544
    %vm4600 = vcmp.eq.f32.partialorder %v4599, 8.507059e+37
    %v4601 = vand.u32 %v4544, 2147483648
    %v4602 = vor.u32 1.1754944e-38, %v4601
    %v4603 = vsel %vm4600, %v4602, %v4598
    %v4604 = vmul.f32 1.0, %v4603
    %v4605 = vadd.f32 %v4514, %v4382
    %v4606 = vadd.f32 %v4517, %v4382
    %v4607 = vadd.f32 %v4520, %v4382
    %v4608 = vadd.f32 %v4523, %v4382
    %4613 = vrot.lane.b32.xlu0 %v4605, 64
    %v4614 = vpop.permute.xlu0 %4613
    %4615 = vrot.lane.b32.xlu0 %v4606, 64
    %v4616 = vpop.permute.xlu0 %4615
    %4617 = vrot.lane.b32.xlu0 %v4607, 64
    %v4618 = vpop.permute.xlu0 %4617
    %4619 = vrot.lane.b32.xlu0 %v4608, 64
    %v4620 = vpop.permute.xlu0 %4619
    %v4625 = vmul.f32 %v4559, %v4614
    %v4626 = vmul.f32 %v4574, %v4616
    %v4627 = vmul.f32 %v4589, %v4618
    %v4628 = vmul.f32 %v4604, %v4620
    %4633 = vrot.lane.b32.xlu0 %v4625, 64
    %v4634 = vpop.permute.xlu0 %4633
    %4635 = vrot.lane.b32.xlu0 %v4626, 64
    %v4636 = vpop.permute.xlu0 %4635
    %4637 = vrot.lane.b32.xlu0 %v4627, 64
    %v4638 = vpop.permute.xlu0 %4637
    %4639 = vrot.lane.b32.xlu0 %v4628, 64
    %v4640 = vpop.permute.xlu0 %4639
    %v4645 = vadd.f32 %v4484, %v4634
    %v4646 = vadd.f32 %v4485, %v4636
    %v4647 = vadd.f32 %v4486, %v4638
    %v4648 = vadd.f32 %v4487, %v4640
    %v4649 = vtanh.pop %v4645
    %v4650 = vtanh.pop %v4646
    %v4651 = vtanh.pop %v4647
    %v4652 = vtanh.pop %v4648
    %v4653 = vsub.f32 1.0, %v4559
    %v4654 = vsub.f32 1.0, %v4574
    %v4655 = vsub.f32 1.0, %v4589
    %v4656 = vsub.f32 1.0, %v4604
    %4661 = vrot.lane.b32.xlu0 %v4649, 96
    %v4662 = vpop.permute.xlu0 %4661
    %4663 = vrot.lane.b32.xlu0 %v4650, 96
    %v4664 = vpop.permute.xlu0 %4663
    %4665 = vrot.lane.b32.xlu0 %v4651, 96
    %v4666 = vpop.permute.xlu0 %4665
    %4667 = vrot.lane.b32.xlu0 %v4652, 96
    %v4668 = vpop.permute.xlu0 %4667
    %v4673 = vmul.f32 %v4653, %v4662
    %v4674 = vmul.f32 %v4654, %v4664
    %v4675 = vmul.f32 %v4655, %v4666
    %v4676 = vmul.f32 %v4656, %v4668
    %v4677 = vmul.f32 %v4559, %v4460
    %v4678 = vmul.f32 %v4574, %v4461
    %v4679 = vmul.f32 %v4589, %v4462
    %v4680 = vmul.f32 %v4604, %v4463
    %v4681 = vadd.f32 %v4673, %v4677
    %v4682 = vadd.f32 %v4674, %v4678
    %v4683 = vadd.f32 %v4675, %v4679
    %v4684 = vadd.f32 %v4676, %v4680
    %vm4685 = vcmask 523520
    %4686 = vst.msk [vmem:[%s9] sm:$0xff] %vm4685, %v4681
    %4687 = vst.msk [vmem:[%s9 + $0x20] sm:$0xff] %vm4685, %v4682
    %4688 = vst.msk [vmem:[%s9 + $0x40] sm:$0xff] %vm4685, %v4683
    %4689 = vst.msk [vmem:[%s9 + $0x60] sm:$0xff] %vm4685, %v4684
    %v4690 = vld [vmem:[#allocation2 + $0x40] sm:$0xff]
    %v4691 = vld [vmem:[#allocation2 + $0x48] sm:$0xff]
    %v4692 = vld [vmem:[#allocation2 + $0x50] sm:$0xff]
    %v4693 = vld [vmem:[#allocation2 + $0x58] sm:$0xff]
    %4698 = vrot.lane.b32.xlu0 %v4681, 96
    %v4699 = vpop.permute.xlu0 %4698
    %4700 = vrot.lane.b32.xlu0 %v4682, 96
    %v4701 = vpop.permute.xlu0 %4700
    %4702 = vrot.lane.b32.xlu0 %v4683, 96
    %v4703 = vpop.permute.xlu0 %4702
    %4704 = vrot.lane.b32.xlu0 %v4684, 96
    %v4705 = vpop.permute.xlu0 %4704
    %v4706 = vsel %vm103, %v4699, 0
    %v4708 = vsel %vm103, %v4701, 0
    %v4710 = vsel %vm103, %v4703, 0
    %v4712 = vsel %vm103, %v4705, 0
    %4714 = vmatpush.msra.mxu0 0.0
    %4715 = vmatpush.msra.mxu0 0.0
    %4716 = vmatpush.msra.mxu0 0.0
    %4717 = vmatpush.msra.mxu0 0.0
    %4718 = vmatpush.msra.mxu0 0.0
    %4719 = vmatpush.msra.mxu0 0.0
    %4720 = vmatpush.msra.mxu0 0.0
    %4721 = vmatpush.msra.mxu0 0.0
    %4722 = vmatpush.msra.mxu0 0.0
    %4723 = vmatpush.msra.mxu0 0.0
    %4724 = vmatpush.msra.mxu0 0.0
    %4725 = vmatpush.msra.mxu0 0.0
    %4726 = vmatpush.msra.mxu0 %v4264
    %4727 = vmatpush.msra.mxu0 %v4263
    %4728 = vmatpush.msra.mxu0 %v4262
    %4729 = vmatpush.msra.mxu0 %v4261
    %4730 = vmatmul.f32.gmra.mxu0 %v4706
    %v4731 = vpop.f32.mrf.mxu0
    %v4732 = vadd.f32 0.0, %v4731
    %4733 = vmatmul.f32.gmra.mxu0 %v4708
    %v4734 = vpop.f32.mrf.mxu0
    %v4735 = vadd.f32 0.0, %v4734
    %4736 = vmatmul.f32.gmra.mxu0 %v4710
    %v4737 = vpop.f32.mrf.mxu0
    %v4738 = vadd.f32 0.0, %v4737
    %4739 = vmatmul.f32.gmra.mxu0 %v4712
    %v4740 = vpop.f32.mrf.mxu0
    %v4741 = vadd.f32 0.0, %v4740
    %4742 = vdwg.mxu0
    %v4743 = vadd.f32 %v4690, %v4732
    %v4744 = vadd.f32 %v4691, %v4735
    %v4745 = vadd.f32 %v4692, %v4738
    %v4746 = vadd.f32 %v4693, %v4741
    %v4747 = vxor.u32 %v4743, 2147483648
    %v4748 = vxor.u32 %v4744, 2147483648
    %v4749 = vxor.u32 %v4745, 2147483648
    %v4750 = vxor.u32 %v4746, 2147483648
    %v4751 = vmul.f32 %v4747, 1.442695
    %v4752 = vpow.pop %v4751
    %v4753 = vmul.f32 %v4748, 1.442695
    %v4754 = vpow.pop %v4753
    %v4755 = vmul.f32 %v4749, 1.442695
    %v4756 = vpow.pop %v4755
    %v4757 = vmul.f32 %v4750, 1.442695
    %v4758 = vpow.pop %v4757
    %v4759 = vadd.f32 %v4752, 1.0
    %v4760 = vadd.f32 %v4754, 1.0
    %v4761 = vadd.f32 %v4756, 1.0
    %v4762 = vadd.f32 %v4758, 1.0
    %v4763 = vrcp.pop %v4759
    %v4764 = vmul.f32 %v4759, %v4763
    %v4765 = vsub.f32 1.0, %v4764
    %v4766 = vmul.f32 %v4763, %v4765
    %v4767 = vadd.f32 %v4763, %v4766
    %vm4768 = vweird.f32 %v4759
    %vm4769 = vweird.f32 %v4763
    %vm4770 = vmor %vm4768, %vm4769
    %v4771 = vsel %vm4770, %v4763, %v4767
    %v4772 = vand.u32 2147483647, %v4759
    %vm4773 = vcmp.eq.f32.partialorder %v4772, 8.507059e+37
    %v4774 = vand.u32 %v4759, 2147483648
    %v4775 = vor.u32 1.1754944e-38, %v4774
    %v4776 = vsel %vm4773, %v4775, %v4771
    %v4777 = vmul.f32 1.0, %v4776
    %v4778 = vrcp.pop %v4760
    %v4779 = vmul.f32 %v4760, %v4778
    %v4780 = vsub.f32 1.0, %v4779
    %v4781 = vmul.f32 %v4778, %v4780
    %v4782 = vadd.f32 %v4778, %v4781
    %vm4783 = vweird.f32 %v4760
    %vm4784 = vweird.f32 %v4778
    %vm4785 = vmor %vm4783, %vm4784
    %v4786 = vsel %vm4785, %v4778, %v4782
    %v4787 = vand.u32 2147483647, %v4760
    %vm4788 = vcmp.eq.f32.partialorder %v4787, 8.507059e+37
    %v4789 = vand.u32 %v4760, 2147483648
    %v4790 = vor.u32 1.1754944e-38, %v4789
    %v4791 = vsel %vm4788, %v4790, %v4786
    %v4792 = vmul.f32 1.0, %v4791
    %v4793 = vrcp.pop %v4761
    %v4794 = vmul.f32 %v4761, %v4793
    %v4795 = vsub.f32 1.0, %v4794
    %v4796 = vmul.f32 %v4793, %v4795
    %v4797 = vadd.f32 %v4793, %v4796
    %vm4798 = vweird.f32 %v4761
    %vm4799 = vweird.f32 %v4793
    %vm4800 = vmor %vm4798, %vm4799
    %v4801 = vsel %vm4800, %v4793, %v4797
    %v4802 = vand.u32 2147483647, %v4761
    %vm4803 = vcmp.eq.f32.partialorder %v4802, 8.507059e+37
    %v4804 = vand.u32 %v4761, 2147483648
    %v4805 = vor.u32 1.1754944e-38, %v4804
    %v4806 = vsel %vm4803, %v4805, %v4801
    %v4807 = vmul.f32 1.0, %v4806
    %v4808 = vrcp.pop %v4762
    %v4809 = vmul.f32 %v4762, %v4808
    %v4810 = vsub.f32 1.0, %v4809
    %v4811 = vmul.f32 %v4808, %v4810
    %v4812 = vadd.f32 %v4808, %v4811
    %vm4813 = vweird.f32 %v4762
    %vm4814 = vweird.f32 %v4808
    %vm4815 = vmor %vm4813, %vm4814
    %v4816 = vsel %vm4815, %v4808, %v4812
    %v4817 = vand.u32 2147483647, %v4762
    %vm4818 = vcmp.eq.f32.partialorder %v4817, 8.507059e+37
    %v4819 = vand.u32 %v4762, 2147483648
    %v4820 = vor.u32 1.1754944e-38, %v4819
    %v4821 = vsel %vm4818, %v4820, %v4816
    %v4822 = vmul.f32 1.0, %v4821
    %v4823 = vadd.f32 %v4732, %v4382
    %v4824 = vadd.f32 %v4735, %v4382
    %v4825 = vadd.f32 %v4738, %v4382
    %v4826 = vadd.f32 %v4741, %v4382
    %4831 = vrot.lane.b32.xlu0 %v4823, 64
    %v4832 = vpop.permute.xlu0 %4831
    %4833 = vrot.lane.b32.xlu0 %v4824, 64
    %v4834 = vpop.permute.xlu0 %4833
    %4835 = vrot.lane.b32.xlu0 %v4825, 64
    %v4836 = vpop.permute.xlu0 %4835
    %4837 = vrot.lane.b32.xlu0 %v4826, 64
    %v4838 = vpop.permute.xlu0 %4837
    %v4843 = vmul.f32 %v4777, %v4832
    %v4844 = vmul.f32 %v4792, %v4834
    %v4845 = vmul.f32 %v4807, %v4836
    %v4846 = vmul.f32 %v4822, %v4838
    %4851 = vrot.lane.b32.xlu0 %v4843, 64
    %v4852 = vpop.permute.xlu0 %4851
    %4853 = vrot.lane.b32.xlu0 %v4844, 64
    %v4854 = vpop.permute.xlu0 %4853
    %4855 = vrot.lane.b32.xlu0 %v4845, 64
    %v4856 = vpop.permute.xlu0 %4855
    %4857 = vrot.lane.b32.xlu0 %v4846, 64
    %v4858 = vpop.permute.xlu0 %4857
    %v4863 = vadd.f32 %v4690, %v4852
    %v4864 = vadd.f32 %v4691, %v4854
    %v4865 = vadd.f32 %v4692, %v4856
    %v4866 = vadd.f32 %v4693, %v4858
    %v4867 = vtanh.pop %v4863
    %v4868 = vtanh.pop %v4864
    %v4869 = vtanh.pop %v4865
    %v4870 = vtanh.pop %v4866
    %v4871 = vsub.f32 1.0, %v4777
    %v4872 = vsub.f32 1.0, %v4792
    %v4873 = vsub.f32 1.0, %v4807
    %v4874 = vsub.f32 1.0, %v4822
    %4879 = vrot.lane.b32.xlu0 %v4867, 96
    %v4880 = vpop.permute.xlu0 %4879
    %4881 = vrot.lane.b32.xlu0 %v4868, 96
    %v4882 = vpop.permute.xlu0 %4881
    %4883 = vrot.lane.b32.xlu0 %v4869, 96
    %v4884 = vpop.permute.xlu0 %4883
    %4885 = vrot.lane.b32.xlu0 %v4870, 96
    %v4886 = vpop.permute.xlu0 %4885
    %v4891 = vmul.f32 %v4871, %v4880
    %v4892 = vmul.f32 %v4872, %v4882
    %v4893 = vmul.f32 %v4873, %v4884
    %v4894 = vmul.f32 %v4874, %v4886
    %v4895 = vmul.f32 %v4777, %v4681
    %v4896 = vmul.f32 %v4792, %v4682
    %v4897 = vmul.f32 %v4807, %v4683
    %v4898 = vmul.f32 %v4822, %v4684
    %v4899 = vadd.f32 %v4891, %v4895
    %v4900 = vadd.f32 %v4892, %v4896
    %v4901 = vadd.f32 %v4893, %v4897
    %v4902 = vadd.f32 %v4894, %v4898
    %4907 = vrot.lane.b32.xlu0 %v4899, 32
    %v4908 = vpop.permute.xlu0 %4907
    %4909 = vrot.lane.b32.xlu0 %v4900, 32
    %v4910 = vpop.permute.xlu0 %4909
    %4911 = vrot.lane.b32.xlu0 %v4901, 32
    %v4912 = vpop.permute.xlu0 %4911
    %4913 = vrot.lane.b32.xlu0 %v4902, 32
    %v4914 = vpop.permute.xlu0 %4913
    %vm4919 = vcmask 785920
    %4920 = vst.msk [vmem:[%s9] sm:$0xff] %vm4919, %v4908
    %4921 = vst.msk [vmem:[%s9 + $0x20] sm:$0xff] %vm4919, %v4910
    %4922 = vst.msk [vmem:[%s9 + $0x40] sm:$0xff] %vm4919, %v4912
    %4923 = vst.msk [vmem:[%s9 + $0x60] sm:$0xff] %vm4919, %v4914
    %v4924 = vld [vmem:[#allocation2 + $0x60] sm:$0xff]
    %v4925 = vld [vmem:[#allocation2 + $0x68] sm:$0xff]
    %v4926 = vld [vmem:[#allocation2 + $0x70] sm:$0xff]
    %v4927 = vld [vmem:[#allocation2 + $0x78] sm:$0xff]
    %4928 = vrot.lane.b32.xlu0 %v4899, 96
    %v4929 = vpop.permute.xlu0 %4928
    %4930 = vrot.lane.b32.xlu0 %v4900, 96
    %v4931 = vpop.permute.xlu0 %4930
    %4932 = vrot.lane.b32.xlu0 %v4901, 96
    %v4933 = vpop.permute.xlu0 %4932
    %4934 = vrot.lane.b32.xlu0 %v4902, 96
    %v4935 = vpop.permute.xlu0 %4934
    %v4936 = vsel %vm103, %v4929, 0
    %v4938 = vsel %vm103, %v4931, 0
    %v4940 = vsel %vm103, %v4933, 0
    %v4942 = vsel %vm103, %v4935, 0
    %4944 = vmatpush.msra.mxu0 0.0
    %4945 = vmatpush.msra.mxu0 0.0
    %4946 = vmatpush.msra.mxu0 0.0
    %4947 = vmatpush.msra.mxu0 0.0
    %4948 = vmatpush.msra.mxu0 0.0
    %4949 = vmatpush.msra.mxu0 0.0
    %4950 = vmatpush.msra.mxu0 0.0
    %4951 = vmatpush.msra.mxu0 0.0
    %4952 = vmatpush.msra.mxu0 0.0
    %4953 = vmatpush.msra.mxu0 0.0
    %4954 = vmatpush.msra.mxu0 0.0
    %4955 = vmatpush.msra.mxu0 0.0
    %4956 = vmatpush.msra.mxu0 %v4264
    %4957 = vmatpush.msra.mxu0 %v4263
    %4958 = vmatpush.msra.mxu0 %v4262
    %4959 = vmatpush.msra.mxu0 %v4261
    %4960 = vmatmul.f32.gmra.mxu0 %v4936
    %v4961 = vpop.f32.mrf.mxu0
    %v4962 = vadd.f32 0.0, %v4961
    %4963 = vmatmul.f32.gmra.mxu0 %v4938
    %v4964 = vpop.f32.mrf.mxu0
    %v4965 = vadd.f32 0.0, %v4964
    %4966 = vmatmul.f32.gmra.mxu0 %v4940
    %v4967 = vpop.f32.mrf.mxu0
    %v4968 = vadd.f32 0.0, %v4967
    %4969 = vmatmul.f32.gmra.mxu0 %v4942
    %v4970 = vpop.f32.mrf.mxu0
    %v4971 = vadd.f32 0.0, %v4970
    %4972 = vdwg.mxu0
    %v4973 = vadd.f32 %v4924, %v4962
    %v4974 = vadd.f32 %v4925, %v4965
    %v4975 = vadd.f32 %v4926, %v4968
    %v4976 = vadd.f32 %v4927, %v4971
    %v4977 = vxor.u32 %v4973, 2147483648
    %v4978 = vxor.u32 %v4974, 2147483648
    %v4979 = vxor.u32 %v4975, 2147483648
    %v4980 = vxor.u32 %v4976, 2147483648
    %v4981 = vmul.f32 %v4977, 1.442695
    %v4982 = vpow.pop %v4981
    %v4983 = vmul.f32 %v4978, 1.442695
    %v4984 = vpow.pop %v4983
    %v4985 = vmul.f32 %v4979, 1.442695
    %v4986 = vpow.pop %v4985
    %v4987 = vmul.f32 %v4980, 1.442695
    %v4988 = vpow.pop %v4987
    %v4989 = vadd.f32 %v4982, 1.0
    %v4990 = vadd.f32 %v4984, 1.0
    %v4991 = vadd.f32 %v4986, 1.0
    %v4992 = vadd.f32 %v4988, 1.0
    %v4993 = vrcp.pop %v4989
    %v4994 = vmul.f32 %v4989, %v4993
    %v4995 = vsub.f32 1.0, %v4994
    %v4996 = vmul.f32 %v4993, %v4995
    %v4997 = vadd.f32 %v4993, %v4996
    %vm4998 = vweird.f32 %v4989
    %vm4999 = vweird.f32 %v4993
    %vm5000 = vmor %vm4998, %vm4999
    %v5001 = vsel %vm5000, %v4993, %v4997
    %v5002 = vand.u32 2147483647, %v4989
    %vm5003 = vcmp.eq.f32.partialorder %v5002, 8.507059e+37
    %v5004 = vand.u32 %v4989, 2147483648
    %v5005 = vor.u32 1.1754944e-38, %v5004
    %v5006 = vsel %vm5003, %v5005, %v5001
    %v5007 = vmul.f32 1.0, %v5006
    %v5008 = vrcp.pop %v4990
    %v5009 = vmul.f32 %v4990, %v5008
    %v5010 = vsub.f32 1.0, %v5009
    %v5011 = vmul.f32 %v5008, %v5010
    %v5012 = vadd.f32 %v5008, %v5011
    %vm5013 = vweird.f32 %v4990
    %vm5014 = vweird.f32 %v5008
    %vm5015 = vmor %vm5013, %vm5014
    %v5016 = vsel %vm5015, %v5008, %v5012
    %v5017 = vand.u32 2147483647, %v4990
    %vm5018 = vcmp.eq.f32.partialorder %v5017, 8.507059e+37
    %v5019 = vand.u32 %v4990, 2147483648
    %v5020 = vor.u32 1.1754944e-38, %v5019
    %v5021 = vsel %vm5018, %v5020, %v5016
    %v5022 = vmul.f32 1.0, %v5021
    %v5023 = vrcp.pop %v4991
    %v5024 = vmul.f32 %v4991, %v5023
    %v5025 = vsub.f32 1.0, %v5024
    %v5026 = vmul.f32 %v5023, %v5025
    %v5027 = vadd.f32 %v5023, %v5026
    %vm5028 = vweird.f32 %v4991
    %vm5029 = vweird.f32 %v5023
    %vm5030 = vmor %vm5028, %vm5029
    %v5031 = vsel %vm5030, %v5023, %v5027
    %v5032 = vand.u32 2147483647, %v4991
    %vm5033 = vcmp.eq.f32.partialorder %v5032, 8.507059e+37
    %v5034 = vand.u32 %v4991, 2147483648
    %v5035 = vor.u32 1.1754944e-38, %v5034
    %v5036 = vsel %vm5033, %v5035, %v5031
    %v5037 = vmul.f32 1.0, %v5036
    %v5038 = vrcp.pop %v4992
    %v5039 = vmul.f32 %v4992, %v5038
    %v5040 = vsub.f32 1.0, %v5039
    %v5041 = vmul.f32 %v5038, %v5040
    %v5042 = vadd.f32 %v5038, %v5041
    %vm5043 = vweird.f32 %v4992
    %vm5044 = vweird.f32 %v5038
    %vm5045 = vmor %vm5043, %vm5044
    %v5046 = vsel %vm5045, %v5038, %v5042
    %v5047 = vand.u32 2147483647, %v4992
    %vm5048 = vcmp.eq.f32.partialorder %v5047, 8.507059e+37
    %v5049 = vand.u32 %v4992, 2147483648
    %v5050 = vor.u32 1.1754944e-38, %v5049
    %v5051 = vsel %vm5048, %v5050, %v5046
    %v5052 = vmul.f32 1.0, %v5051
    %v5053 = vadd.f32 %v4962, %v4382
    %v5054 = vadd.f32 %v4965, %v4382
    %v5055 = vadd.f32 %v4968, %v4382
    %v5056 = vadd.f32 %v4971, %v4382
    %5061 = vrot.lane.b32.xlu0 %v5053, 64
    %v5062 = vpop.permute.xlu0 %5061
    %5063 = vrot.lane.b32.xlu0 %v5054, 64
    %v5064 = vpop.permute.xlu0 %5063
    %5065 = vrot.lane.b32.xlu0 %v5055, 64
    %v5066 = vpop.permute.xlu0 %5065
    %5067 = vrot.lane.b32.xlu0 %v5056, 64
    %v5068 = vpop.permute.xlu0 %5067
    %v5073 = vmul.f32 %v5007, %v5062
    %v5074 = vmul.f32 %v5022, %v5064
    %v5075 = vmul.f32 %v5037, %v5066
    %v5076 = vmul.f32 %v5052, %v5068
    %5081 = vrot.lane.b32.xlu0 %v5073, 64
    %v5082 = vpop.permute.xlu0 %5081
    %5083 = vrot.lane.b32.xlu0 %v5074, 64
    %v5084 = vpop.permute.xlu0 %5083
    %5085 = vrot.lane.b32.xlu0 %v5075, 64
    %v5086 = vpop.permute.xlu0 %5085
    %5087 = vrot.lane.b32.xlu0 %v5076, 64
    %v5088 = vpop.permute.xlu0 %5087
    %v5093 = vadd.f32 %v4924, %v5082
    %v5094 = vadd.f32 %v4925, %v5084
    %v5095 = vadd.f32 %v4926, %v5086
    %v5096 = vadd.f32 %v4927, %v5088
    %v5097 = vtanh.pop %v5093
    %v5098 = vtanh.pop %v5094
    %v5099 = vtanh.pop %v5095
    %v5100 = vtanh.pop %v5096
    %v5101 = vsub.f32 1.0, %v5007
    %v5102 = vsub.f32 1.0, %v5022
    %v5103 = vsub.f32 1.0, %v5037
    %v5104 = vsub.f32 1.0, %v5052
    %5109 = vrot.lane.b32.xlu0 %v5097, 96
    %v5110 = vpop.permute.xlu0 %5109
    %5111 = vrot.lane.b32.xlu0 %v5098, 96
    %v5112 = vpop.permute.xlu0 %5111
    %5113 = vrot.lane.b32.xlu0 %v5099, 96
    %v5114 = vpop.permute.xlu0 %5113
    %5115 = vrot.lane.b32.xlu0 %v5100, 96
    %v5116 = vpop.permute.xlu0 %5115
    %v5121 = vmul.f32 %v5101, %v5110
    %v5122 = vmul.f32 %v5102, %v5112
    %v5123 = vmul.f32 %v5103, %v5114
    %v5124 = vmul.f32 %v5104, %v5116
    %v5125 = vmul.f32 %v5007, %v4899
    %v5126 = vmul.f32 %v5022, %v4900
    %v5127 = vmul.f32 %v5037, %v4901
    %v5128 = vmul.f32 %v5052, %v4902
    %v5129 = vadd.f32 %v5121, %v5125
    %v5130 = vadd.f32 %v5122, %v5126
    %v5131 = vadd.f32 %v5123, %v5127
    %v5132 = vadd.f32 %v5124, %v5128
    %5137 = vrot.lane.b32.xlu0 %v5129, 64
    %v5138 = vpop.permute.xlu0 %5137
    %5139 = vrot.lane.b32.xlu0 %v5130, 64
    %v5140 = vpop.permute.xlu0 %5139
    %5141 = vrot.lane.b32.xlu0 %v5131, 64
    %v5142 = vpop.permute.xlu0 %5141
    %5143 = vrot.lane.b32.xlu0 %v5132, 64
    %v5144 = vpop.permute.xlu0 %5143
    %vm5149 = vcmask 1048320
    %5150 = vst.msk [vmem:[%s9] sm:$0xff] %vm5149, %v5138
    %5151 = vst.msk [vmem:[%s9 + $0x20] sm:$0xff] %vm5149, %v5140
    %5152 = vst.msk [vmem:[%s9 + $0x40] sm:$0xff] %vm5149, %v5142
    %5153 = vst.msk [vmem:[%s9 + $0x60] sm:$0xff] %vm5149, %v5144
    %v5154 = vld [vmem:[#allocation2 + $0x80] sm:$0xff]
    %v5155 = vld [vmem:[#allocation2 + $0x88] sm:$0xff]
    %v5156 = vld [vmem:[#allocation2 + $0x90] sm:$0xff]
    %v5157 = vld [vmem:[#allocation2 + $0x98] sm:$0xff]
    %5158 = vrot.lane.b32.xlu0 %v5129, 96
    %v5159 = vpop.permute.xlu0 %5158
    %5160 = vrot.lane.b32.xlu0 %v5130, 96
    %v5161 = vpop.permute.xlu0 %5160
    %5162 = vrot.lane.b32.xlu0 %v5131, 96
    %v5163 = vpop.permute.xlu0 %5162
    %5164 = vrot.lane.b32.xlu0 %v5132, 96
    %v5165 = vpop.permute.xlu0 %5164
    %v5166 = vsel %vm103, %v5159, 0
    %v5168 = vsel %vm103, %v5161, 0
    %v5170 = vsel %vm103, %v5163, 0
    %v5172 = vsel %vm103, %v5165, 0
    %5174 = vmatpush.msra.mxu0 0.0
    %5175 = vmatpush.msra.mxu0 0.0
    %5176 = vmatpush.msra.mxu0 0.0
    %5177 = vmatpush.msra.mxu0 0.0
    %5178 = vmatpush.msra.mxu0 0.0
    %5179 = vmatpush.msra.mxu0 0.0
    %5180 = vmatpush.msra.mxu0 0.0
    %5181 = vmatpush.msra.mxu0 0.0
    %5182 = vmatpush.msra.mxu0 0.0
    %5183 = vmatpush.msra.mxu0 0.0
    %5184 = vmatpush.msra.mxu0 0.0
    %5185 = vmatpush.msra.mxu0 0.0
    %5186 = vmatpush.msra.mxu0 %v4264
    %5187 = vmatpush.msra.mxu0 %v4263
    %5188 = vmatpush.msra.mxu0 %v4262
    %5189 = vmatpush.msra.mxu0 %v4261
    %5190 = vmatmul.f32.gmra.mxu0 %v5166
    %v5191 = vpop.f32.mrf.mxu0
    %v5192 = vadd.f32 0.0, %v5191
    %5193 = vmatmul.f32.gmra.mxu0 %v5168
    %v5194 = vpop.f32.mrf.mxu0
    %v5195 = vadd.f32 0.0, %v5194
    %5196 = vmatmul.f32.gmra.mxu0 %v5170
    %v5197 = vpop.f32.mrf.mxu0
    %v5198 = vadd.f32 0.0, %v5197
    %5199 = vmatmul.f32.gmra.mxu0 %v5172
    %v5200 = vpop.f32.mrf.mxu0
    %v5201 = vadd.f32 0.0, %v5200
    %5202 = vdwg.mxu0
    %v5203 = vadd.f32 %v5154, %v5192
    %v5204 = vadd.f32 %v5155, %v5195
    %v5205 = vadd.f32 %v5156, %v5198
    %v5206 = vadd.f32 %v5157, %v5201
    %v5207 = vxor.u32 %v5203, 2147483648
    %v5208 = vxor.u32 %v5204, 2147483648
    %v5209 = vxor.u32 %v5205, 2147483648
    %v5210 = vxor.u32 %v5206, 2147483648
    %v5211 = vmul.f32 %v5207, 1.442695
    %v5212 = vpow.pop %v5211
    %v5213 = vmul.f32 %v5208, 1.442695
    %v5214 = vpow.pop %v5213
    %v5215 = vmul.f32 %v5209, 1.442695
    %v5216 = vpow.pop %v5215
    %v5217 = vmul.f32 %v5210, 1.442695
    %v5218 = vpow.pop %v5217
    %v5219 = vadd.f32 %v5212, 1.0
    %v5220 = vadd.f32 %v5214, 1.0
    %v5221 = vadd.f32 %v5216, 1.0
    %v5222 = vadd.f32 %v5218, 1.0
    %v5223 = vrcp.pop %v5219
    %v5224 = vmul.f32 %v5219, %v5223
    %v5225 = vsub.f32 1.0, %v5224
    %v5226 = vmul.f32 %v5223, %v5225
    %v5227 = vadd.f32 %v5223, %v5226
    %vm5228 = vweird.f32 %v5219
    %vm5229 = vweird.f32 %v5223
    %vm5230 = vmor %vm5228, %vm5229
    %v5231 = vsel %vm5230, %v5223, %v5227
    %v5232 = vand.u32 2147483647, %v5219
    %vm5233 = vcmp.eq.f32.partialorder %v5232, 8.507059e+37
    %v5234 = vand.u32 %v5219, 2147483648
    %v5235 = vor.u32 1.1754944e-38, %v5234
    %v5236 = vsel %vm5233, %v5235, %v5231
    %v5237 = vmul.f32 1.0, %v5236
    %v5238 = vrcp.pop %v5220
    %v5239 = vmul.f32 %v5220, %v5238
    %v5240 = vsub.f32 1.0, %v5239
    %v5241 = vmul.f32 %v5238, %v5240
    %v5242 = vadd.f32 %v5238, %v5241
    %vm5243 = vweird.f32 %v5220
    %vm5244 = vweird.f32 %v5238
    %vm5245 = vmor %vm5243, %vm5244
    %v5246 = vsel %vm5245, %v5238, %v5242
    %v5247 = vand.u32 2147483647, %v5220
    %vm5248 = vcmp.eq.f32.partialorder %v5247, 8.507059e+37
    %v5249 = vand.u32 %v5220, 2147483648
    %v5250 = vor.u32 1.1754944e-38, %v5249
    %v5251 = vsel %vm5248, %v5250, %v5246
    %v5252 = vmul.f32 1.0, %v5251
    %v5253 = vrcp.pop %v5221
    %v5254 = vmul.f32 %v5221, %v5253
    %v5255 = vsub.f32 1.0, %v5254
    %v5256 = vmul.f32 %v5253, %v5255
    %v5257 = vadd.f32 %v5253, %v5256
    %vm5258 = vweird.f32 %v5221
    %vm5259 = vweird.f32 %v5253
    %vm5260 = vmor %vm5258, %vm5259
    %v5261 = vsel %vm5260, %v5253, %v5257
    %v5262 = vand.u32 2147483647, %v5221
    %vm5263 = vcmp.eq.f32.partialorder %v5262, 8.507059e+37
    %v5264 = vand.u32 %v5221, 2147483648
    %v5265 = vor.u32 1.1754944e-38, %v5264
    %v5266 = vsel %vm5263, %v5265, %v5261
    %v5267 = vmul.f32 1.0, %v5266
    %v5268 = vrcp.pop %v5222
    %v5269 = vmul.f32 %v5222, %v5268
    %v5270 = vsub.f32 1.0, %v5269
    %v5271 = vmul.f32 %v5268, %v5270
    %v5272 = vadd.f32 %v5268, %v5271
    %vm5273 = vweird.f32 %v5222
    %vm5274 = vweird.f32 %v5268
    %vm5275 = vmor %vm5273, %vm5274
    %v5276 = vsel %vm5275, %v5268, %v5272
    %v5277 = vand.u32 2147483647, %v5222
    %vm5278 = vcmp.eq.f32.partialorder %v5277, 8.507059e+37
    %v5279 = vand.u32 %v5222, 2147483648
    %v5280 = vor.u32 1.1754944e-38, %v5279
    %v5281 = vsel %vm5278, %v5280, %v5276
    %v5282 = vmul.f32 1.0, %v5281
    %v5283 = vadd.f32 %v5192, %v4382
    %v5284 = vadd.f32 %v5195, %v4382
    %v5285 = vadd.f32 %v5198, %v4382
    %v5286 = vadd.f32 %v5201, %v4382
    %5291 = vrot.lane.b32.xlu0 %v5283, 64
    %v5292 = vpop.permute.xlu0 %5291
    %5293 = vrot.lane.b32.xlu0 %v5284, 64
    %v5294 = vpop.permute.xlu0 %5293
    %5295 = vrot.lane.b32.xlu0 %v5285, 64
    %v5296 = vpop.permute.xlu0 %5295
    %5297 = vrot.lane.b32.xlu0 %v5286, 64
    %v5298 = vpop.permute.xlu0 %5297
    %v5303 = vmul.f32 %v5237, %v5292
    %v5304 = vmul.f32 %v5252, %v5294
    %v5305 = vmul.f32 %v5267, %v5296
    %v5306 = vmul.f32 %v5282, %v5298
    %5311 = vrot.lane.b32.xlu0 %v5303, 64
    %v5312 = vpop.permute.xlu0 %5311
    %5313 = vrot.lane.b32.xlu0 %v5304, 64
    %v5314 = vpop.permute.xlu0 %5313
    %5315 = vrot.lane.b32.xlu0 %v5305, 64
    %v5316 = vpop.permute.xlu0 %5315
    %5317 = vrot.lane.b32.xlu0 %v5306, 64
    %v5318 = vpop.permute.xlu0 %5317
    %v5323 = vadd.f32 %v5154, %v5312
    %v5324 = vadd.f32 %v5155, %v5314
    %v5325 = vadd.f32 %v5156, %v5316
    %v5326 = vadd.f32 %v5157, %v5318
    %v5327 = vtanh.pop %v5323
    %v5328 = vtanh.pop %v5324
    %v5329 = vtanh.pop %v5325
    %v5330 = vtanh.pop %v5326
    %v5331 = vsub.f32 1.0, %v5237
    %v5332 = vsub.f32 1.0, %v5252
    %v5333 = vsub.f32 1.0, %v5267
    %v5334 = vsub.f32 1.0, %v5282
    %5339 = vrot.lane.b32.xlu0 %v5327, 96
    %v5340 = vpop.permute.xlu0 %5339
    %5341 = vrot.lane.b32.xlu0 %v5328, 96
    %v5342 = vpop.permute.xlu0 %5341
    %5343 = vrot.lane.b32.xlu0 %v5329, 96
    %v5344 = vpop.permute.xlu0 %5343
    %5345 = vrot.lane.b32.xlu0 %v5330, 96
    %v5346 = vpop.permute.xlu0 %5345
    %v5351 = vmul.f32 %v5331, %v5340
    %v5352 = vmul.f32 %v5332, %v5342
    %v5353 = vmul.f32 %v5333, %v5344
    %v5354 = vmul.f32 %v5334, %v5346
    %v5355 = vmul.f32 %v5237, %v5129
    %v5356 = vmul.f32 %v5252, %v5130
    %v5357 = vmul.f32 %v5267, %v5131
    %v5358 = vmul.f32 %v5282, %v5132
    %v5359 = vadd.f32 %v5351, %v5355
    %v5360 = vadd.f32 %v5352, %v5356
    %v5361 = vadd.f32 %v5353, %v5357
    %v5362 = vadd.f32 %v5354, %v5358
    %5367 = vrot.lane.b32.xlu0 %v5359, 96
    %v5368 = vpop.permute.xlu0 %5367
    %5369 = vrot.lane.b32.xlu0 %v5360, 96
    %v5370 = vpop.permute.xlu0 %5369
    %5371 = vrot.lane.b32.xlu0 %v5361, 96
    %v5372 = vpop.permute.xlu0 %5371
    %5373 = vrot.lane.b32.xlu0 %v5362, 96
    %v5374 = vpop.permute.xlu0 %5373
    %5379 = vst.msk [vmem:[%s9 + $0x8] sm:$0xff] %vm103, %v5368
    %5380 = vst.msk [vmem:[%s9 + $0x28] sm:$0xff] %vm103, %v5370
    %5381 = vst.msk [vmem:[%s9 + $0x48] sm:$0xff] %vm103, %v5372
    %5382 = vst.msk [vmem:[%s9 + $0x68] sm:$0xff] %vm103, %v5374
    %v5383 = vld [vmem:[#allocation2 + $0xa0] sm:$0xff]
    %v5384 = vld [vmem:[#allocation2 + $0xa8] sm:$0xff]
    %v5385 = vld [vmem:[#allocation2 + $0xb0] sm:$0xff]
    %v5386 = vld [vmem:[#allocation2 + $0xb8] sm:$0xff]
    %v5387 = vsel %vm103, %v5368, 0
    %v5389 = vsel %vm103, %v5370, 0
    %v5391 = vsel %vm103, %v5372, 0
    %v5393 = vsel %vm103, %v5374, 0
    %5395 = vmatpush.msra.mxu0 0.0
    %5396 = vmatpush.msra.mxu0 0.0
    %5397 = vmatpush.msra.mxu0 0.0
    %5398 = vmatpush.msra.mxu0 0.0
    %5399 = vmatpush.msra.mxu0 0.0
    %5400 = vmatpush.msra.mxu0 0.0
    %5401 = vmatpush.msra.mxu0 0.0
    %5402 = vmatpush.msra.mxu0 0.0
    %5403 = vmatpush.msra.mxu0 0.0
    %5404 = vmatpush.msra.mxu0 0.0
    %5405 = vmatpush.msra.mxu0 0.0
    %5406 = vmatpush.msra.mxu0 0.0
    %5407 = vmatpush.msra.mxu0 %v4264
    %5408 = vmatpush.msra.mxu0 %v4263
    %5409 = vmatpush.msra.mxu0 %v4262
    %5410 = vmatpush.msra.mxu0 %v4261
    %5411 = vmatmul.f32.gmra.mxu0 %v5387
    %v5412 = vpop.f32.mrf.mxu0
    %v5413 = vadd.f32 0.0, %v5412
    %5414 = vmatmul.f32.gmra.mxu0 %v5389
    %v5415 = vpop.f32.mrf.mxu0
    %v5416 = vadd.f32 0.0, %v5415
    %5417 = vmatmul.f32.gmra.mxu0 %v5391
    %v5418 = vpop.f32.mrf.mxu0
    %v5419 = vadd.f32 0.0, %v5418
    %5420 = vmatmul.f32.gmra.mxu0 %v5393
    %v5421 = vpop.f32.mrf.mxu0
    %v5422 = vadd.f32 0.0, %v5421
    %5423 = vdwg.mxu0
    %v5424 = vadd.f32 %v5383, %v5413
    %v5425 = vadd.f32 %v5384, %v5416
    %v5426 = vadd.f32 %v5385, %v5419
    %v5427 = vadd.f32 %v5386, %v5422
    %v5428 = vxor.u32 %v5424, 2147483648
    %v5429 = vxor.u32 %v5425, 2147483648
    %v5430 = vxor.u32 %v5426, 2147483648
    %v5431 = vxor.u32 %v5427, 2147483648
    %v5432 = vmul.f32 %v5428, 1.442695
    %v5433 = vpow.pop %v5432
    %v5434 = vmul.f32 %v5429, 1.442695
    %v5435 = vpow.pop %v5434
    %v5436 = vmul.f32 %v5430, 1.442695
    %v5437 = vpow.pop %v5436
    %v5438 = vmul.f32 %v5431, 1.442695
    %v5439 = vpow.pop %v5438
    %v5440 = vadd.f32 %v5433, 1.0
    %v5441 = vadd.f32 %v5435, 1.0
    %v5442 = vadd.f32 %v5437, 1.0
    %v5443 = vadd.f32 %v5439, 1.0
    %v5444 = vrcp.pop %v5440
    %v5445 = vmul.f32 %v5440, %v5444
    %v5446 = vsub.f32 1.0, %v5445
    %v5447 = vmul.f32 %v5444, %v5446
    %v5448 = vadd.f32 %v5444, %v5447
    %vm5449 = vweird.f32 %v5440
    %vm5450 = vweird.f32 %v5444
    %vm5451 = vmor %vm5449, %vm5450
    %v5452 = vsel %vm5451, %v5444, %v5448
    %v5453 = vand.u32 2147483647, %v5440
    %vm5454 = vcmp.eq.f32.partialorder %v5453, 8.507059e+37
    %v5455 = vand.u32 %v5440, 2147483648
    %v5456 = vor.u32 1.1754944e-38, %v5455
    %v5457 = vsel %vm5454, %v5456, %v5452
    %v5458 = vmul.f32 1.0, %v5457
    %v5459 = vrcp.pop %v5441
    %v5460 = vmul.f32 %v5441, %v5459
    %v5461 = vsub.f32 1.0, %v5460
    %v5462 = vmul.f32 %v5459, %v5461
    %v5463 = vadd.f32 %v5459, %v5462
    %vm5464 = vweird.f32 %v5441
    %vm5465 = vweird.f32 %v5459
    %vm5466 = vmor %vm5464, %vm5465
    %v5467 = vsel %vm5466, %v5459, %v5463
    %v5468 = vand.u32 2147483647, %v5441
    %vm5469 = vcmp.eq.f32.partialorder %v5468, 8.507059e+37
    %v5470 = vand.u32 %v5441, 2147483648
    %v5471 = vor.u32 1.1754944e-38, %v5470
    %v5472 = vsel %vm5469, %v5471, %v5467
    %v5473 = vmul.f32 1.0, %v5472
    %v5474 = vrcp.pop %v5442
    %v5475 = vmul.f32 %v5442, %v5474
    %v5476 = vsub.f32 1.0, %v5475
    %v5477 = vmul.f32 %v5474, %v5476
    %v5478 = vadd.f32 %v5474, %v5477
    %vm5479 = vweird.f32 %v5442
    %vm5480 = vweird.f32 %v5474
    %vm5481 = vmor %vm5479, %vm5480
    %v5482 = vsel %vm5481, %v5474, %v5478
    %v5483 = vand.u32 2147483647, %v5442
    %vm5484 = vcmp.eq.f32.partialorder %v5483, 8.507059e+37
    %v5485 = vand.u32 %v5442, 2147483648
    %v5486 = vor.u32 1.1754944e-38, %v5485
    %v5487 = vsel %vm5484, %v5486, %v5482
    %v5488 = vmul.f32 1.0, %v5487
    %v5489 = vrcp.pop %v5443
    %v5490 = vmul.f32 %v5443, %v5489
    %v5491 = vsub.f32 1.0, %v5490
    %v5492 = vmul.f32 %v5489, %v5491
    %v5493 = vadd.f32 %v5489, %v5492
    %vm5494 = vweird.f32 %v5443
    %vm5495 = vweird.f32 %v5489
    %vm5496 = vmor %vm5494, %vm5495
    %v5497 = vsel %vm5496, %v5489, %v5493
    %v5498 = vand.u32 2147483647, %v5443
    %vm5499 = vcmp.eq.f32.partialorder %v5498, 8.507059e+37
    %v5500 = vand.u32 %v5443, 2147483648
    %v5501 = vor.u32 1.1754944e-38, %v5500
    %v5502 = vsel %vm5499, %v5501, %v5497
    %v5503 = vmul.f32 1.0, %v5502
    %v5504 = vadd.f32 %v5413, %v4382
    %v5505 = vadd.f32 %v5416, %v4382
    %v5506 = vadd.f32 %v5419, %v4382
    %v5507 = vadd.f32 %v5422, %v4382
    %5512 = vrot.lane.b32.xlu0 %v5504, 64
    %v5513 = vpop.permute.xlu0 %5512
    %5514 = vrot.lane.b32.xlu0 %v5505, 64
    %v5515 = vpop.permute.xlu0 %5514
    %5516 = vrot.lane.b32.xlu0 %v5506, 64
    %v5517 = vpop.permute.xlu0 %5516
    %5518 = vrot.lane.b32.xlu0 %v5507, 64
    %v5519 = vpop.permute.xlu0 %5518
    %v5524 = vmul.f32 %v5458, %v5513
    %v5525 = vmul.f32 %v5473, %v5515
    %v5526 = vmul.f32 %v5488, %v5517
    %v5527 = vmul.f32 %v5503, %v5519
    %5532 = vrot.lane.b32.xlu0 %v5524, 64
    %v5533 = vpop.permute.xlu0 %5532
    %5534 = vrot.lane.b32.xlu0 %v5525, 64
    %v5535 = vpop.permute.xlu0 %5534
    %5536 = vrot.lane.b32.xlu0 %v5526, 64
    %v5537 = vpop.permute.xlu0 %5536
    %5538 = vrot.lane.b32.xlu0 %v5527, 64
    %v5539 = vpop.permute.xlu0 %5538
    %v5544 = vadd.f32 %v5383, %v5533
    %v5545 = vadd.f32 %v5384, %v5535
    %v5546 = vadd.f32 %v5385, %v5537
    %v5547 = vadd.f32 %v5386, %v5539
    %v5548 = vtanh.pop %v5544
    %v5549 = vtanh.pop %v5545
    %v5550 = vtanh.pop %v5546
    %v5551 = vtanh.pop %v5547
    %v5552 = vsub.f32 1.0, %v5458
    %v5553 = vsub.f32 1.0, %v5473
    %v5554 = vsub.f32 1.0, %v5488
    %v5555 = vsub.f32 1.0, %v5503
    %5560 = vrot.lane.b32.xlu0 %v5548, 96
    %v5561 = vpop.permute.xlu0 %5560
    %5562 = vrot.lane.b32.xlu0 %v5549, 96
    %v5563 = vpop.permute.xlu0 %5562
    %5564 = vrot.lane.b32.xlu0 %v5550, 96
    %v5565 = vpop.permute.xlu0 %5564
    %5566 = vrot.lane.b32.xlu0 %v5551, 96
    %v5567 = vpop.permute.xlu0 %5566
    %v5572 = vmul.f32 %v5552, %v5561
    %v5573 = vmul.f32 %v5553, %v5563
    %v5574 = vmul.f32 %v5554, %v5565
    %v5575 = vmul.f32 %v5555, %v5567
    %v5576 = vmul.f32 %v5458, %v5359
    %v5577 = vmul.f32 %v5473, %v5360
    %v5578 = vmul.f32 %v5488, %v5361
    %v5579 = vmul.f32 %v5503, %v5362
    %v5580 = vadd.f32 %v5572, %v5576
    %v5581 = vadd.f32 %v5573, %v5577
    %v5582 = vadd.f32 %v5574, %v5578
    %v5583 = vadd.f32 %v5575, %v5579
    %5584 = vst.msk [vmem:[%s9 + $0x8] sm:$0xff] %vm4685, %v5580
    %5585 = vst.msk [vmem:[%s9 + $0x28] sm:$0xff] %vm4685, %v5581
    %5586 = vst.msk [vmem:[%s9 + $0x48] sm:$0xff] %vm4685, %v5582
    %5587 = vst.msk [vmem:[%s9 + $0x68] sm:$0xff] %vm4685, %v5583
    %v5588 = vld [vmem:[#allocation2 + $0xc0] sm:$0xff]
    %v5589 = vld [vmem:[#allocation2 + $0xc8] sm:$0xff]
    %v5590 = vld [vmem:[#allocation2 + $0xd0] sm:$0xff]
    %v5591 = vld [vmem:[#allocation2 + $0xd8] sm:$0xff]
    %5596 = vrot.lane.b32.xlu0 %v5580, 96
    %v5597 = vpop.permute.xlu0 %5596
    %5598 = vrot.lane.b32.xlu0 %v5581, 96
    %v5599 = vpop.permute.xlu0 %5598
    %5600 = vrot.lane.b32.xlu0 %v5582, 96
    %v5601 = vpop.permute.xlu0 %5600
    %5602 = vrot.lane.b32.xlu0 %v5583, 96
    %v5603 = vpop.permute.xlu0 %5602
    %v5604 = vsel %vm103, %v5597, 0
    %v5606 = vsel %vm103, %v5599, 0
    %v5608 = vsel %vm103, %v5601, 0
    %v5610 = vsel %vm103, %v5603, 0
    %5612 = vmatpush.msra.mxu0 0.0
    %5613 = vmatpush.msra.mxu0 0.0
    %5614 = vmatpush.msra.mxu0 0.0
    %5615 = vmatpush.msra.mxu0 0.0
    %5616 = vmatpush.msra.mxu0 0.0
    %5617 = vmatpush.msra.mxu0 0.0
    %5618 = vmatpush.msra.mxu0 0.0
    %5619 = vmatpush.msra.mxu0 0.0
    %5620 = vmatpush.msra.mxu0 0.0
    %5621 = vmatpush.msra.mxu0 0.0
    %5622 = vmatpush.msra.mxu0 0.0
    %5623 = vmatpush.msra.mxu0 0.0
    %5624 = vmatpush.msra.mxu0 %v4264
    %5625 = vmatpush.msra.mxu0 %v4263
    %5626 = vmatpush.msra.mxu0 %v4262
    %5627 = vmatpush.msra.mxu0 %v4261
    %5628 = vmatmul.f32.gmra.mxu0 %v5604
    %v5629 = vpop.f32.mrf.mxu0
    %v5630 = vadd.f32 0.0, %v5629
    %5631 = vmatmul.f32.gmra.mxu0 %v5606
    %v5632 = vpop.f32.mrf.mxu0
    %v5633 = vadd.f32 0.0, %v5632
    %5634 = vmatmul.f32.gmra.mxu0 %v5608
    %v5635 = vpop.f32.mrf.mxu0
    %v5636 = vadd.f32 0.0, %v5635
    %5637 = vmatmul.f32.gmra.mxu0 %v5610
    %v5638 = vpop.f32.mrf.mxu0
    %v5639 = vadd.f32 0.0, %v5638
    %5640 = vdwg.mxu0
    %v5641 = vadd.f32 %v5588, %v5630
    %v5642 = vadd.f32 %v5589, %v5633
    %v5643 = vadd.f32 %v5590, %v5636
    %v5644 = vadd.f32 %v5591, %v5639
    %v5645 = vxor.u32 %v5641, 2147483648
    %v5646 = vxor.u32 %v5642, 2147483648
    %v5647 = vxor.u32 %v5643, 2147483648
    %v5648 = vxor.u32 %v5644, 2147483648
    %v5649 = vmul.f32 %v5645, 1.442695
    %v5650 = vpow.pop %v5649
    %v5651 = vmul.f32 %v5646, 1.442695
    %v5652 = vpow.pop %v5651
    %v5653 = vmul.f32 %v5647, 1.442695
    %v5654 = vpow.pop %v5653
    %v5655 = vmul.f32 %v5648, 1.442695
    %v5656 = vpow.pop %v5655
    %v5657 = vadd.f32 %v5650, 1.0
    %v5658 = vadd.f32 %v5652, 1.0
    %v5659 = vadd.f32 %v5654, 1.0
    %v5660 = vadd.f32 %v5656, 1.0
    %v5661 = vrcp.pop %v5657
    %v5662 = vmul.f32 %v5657, %v5661
    %v5663 = vsub.f32 1.0, %v5662
    %v5664 = vmul.f32 %v5661, %v5663
    %v5665 = vadd.f32 %v5661, %v5664
    %vm5666 = vweird.f32 %v5657
    %vm5667 = vweird.f32 %v5661
    %vm5668 = vmor %vm5666, %vm5667
    %v5669 = vsel %vm5668, %v5661, %v5665
    %v5670 = vand.u32 2147483647, %v5657
    %vm5671 = vcmp.eq.f32.partialorder %v5670, 8.507059e+37
    %v5672 = vand.u32 %v5657, 2147483648
    %v5673 = vor.u32 1.1754944e-38, %v5672
    %v5674 = vsel %vm5671, %v5673, %v5669
    %v5675 = vmul.f32 1.0, %v5674
    %v5676 = vrcp.pop %v5658
    %v5677 = vmul.f32 %v5658, %v5676
    %v5678 = vsub.f32 1.0, %v5677
    %v5679 = vmul.f32 %v5676, %v5678
    %v5680 = vadd.f32 %v5676, %v5679
    %vm5681 = vweird.f32 %v5658
    %vm5682 = vweird.f32 %v5676
    %vm5683 = vmor %vm5681, %vm5682
    %v5684 = vsel %vm5683, %v5676, %v5680
    %v5685 = vand.u32 2147483647, %v5658
    %vm5686 = vcmp.eq.f32.partialorder %v5685, 8.507059e+37
    %v5687 = vand.u32 %v5658, 2147483648
    %v5688 = vor.u32 1.1754944e-38, %v5687
    %v5689 = vsel %vm5686, %v5688, %v5684
    %v5690 = vmul.f32 1.0, %v5689
    %v5691 = vrcp.pop %v5659
    %v5692 = vmul.f32 %v5659, %v5691
    %v5693 = vsub.f32 1.0, %v5692
    %v5694 = vmul.f32 %v5691, %v5693
    %v5695 = vadd.f32 %v5691, %v5694
    %vm5696 = vweird.f32 %v5659
    %vm5697 = vweird.f32 %v5691
    %vm5698 = vmor %vm5696, %vm5697
    %v5699 = vsel %vm5698, %v5691, %v5695
    %v5700 = vand.u32 2147483647, %v5659
    %vm5701 = vcmp.eq.f32.partialorder %v5700, 8.507059e+37
    %v5702 = vand.u32 %v5659, 2147483648
    %v5703 = vor.u32 1.1754944e-38, %v5702
    %v5704 = vsel %vm5701, %v5703, %v5699
    %v5705 = vmul.f32 1.0, %v5704
    %v5706 = vrcp.pop %v5660
    %v5707 = vmul.f32 %v5660, %v5706
    %v5708 = vsub.f32 1.0, %v5707
    %v5709 = vmul.f32 %v5706, %v5708
    %v5710 = vadd.f32 %v5706, %v5709
    %vm5711 = vweird.f32 %v5660
    %vm5712 = vweird.f32 %v5706
    %vm5713 = vmor %vm5711, %vm5712
    %v5714 = vsel %vm5713, %v5706, %v5710
    %v5715 = vand.u32 2147483647, %v5660
    %vm5716 = vcmp.eq.f32.partialorder %v5715, 8.507059e+37
    %v5717 = vand.u32 %v5660, 2147483648
    %v5718 = vor.u32 1.1754944e-38, %v5717
    %v5719 = vsel %vm5716, %v5718, %v5714
    %v5720 = vmul.f32 1.0, %v5719
    %v5721 = vadd.f32 %v5630, %v4382
    %v5722 = vadd.f32 %v5633, %v4382
    %v5723 = vadd.f32 %v5636, %v4382
    %v5724 = vadd.f32 %v5639, %v4382
    %5729 = vrot.lane.b32.xlu0 %v5721, 64
    %v5730 = vpop.permute.xlu0 %5729
    %5731 = vrot.lane.b32.xlu0 %v5722, 64
    %v5732 = vpop.permute.xlu0 %5731
    %5733 = vrot.lane.b32.xlu0 %v5723, 64
    %v5734 = vpop.permute.xlu0 %5733
    %5735 = vrot.lane.b32.xlu0 %v5724, 64
    %v5736 = vpop.permute.xlu0 %5735
    %v5741 = vmul.f32 %v5675, %v5730
    %v5742 = vmul.f32 %v5690, %v5732
    %v5743 = vmul.f32 %v5705, %v5734
    %v5744 = vmul.f32 %v5720, %v5736
    %5749 = vrot.lane.b32.xlu0 %v5741, 64
    %v5750 = vpop.permute.xlu0 %5749
    %5751 = vrot.lane.b32.xlu0 %v5742, 64
    %v5752 = vpop.permute.xlu0 %5751
    %5753 = vrot.lane.b32.xlu0 %v5743, 64
    %v5754 = vpop.permute.xlu0 %5753
    %5755 = vrot.lane.b32.xlu0 %v5744, 64
    %v5756 = vpop.permute.xlu0 %5755
    %v5761 = vadd.f32 %v5588, %v5750
    %v5762 = vadd.f32 %v5589, %v5752
    %v5763 = vadd.f32 %v5590, %v5754
    %v5764 = vadd.f32 %v5591, %v5756
    %v5765 = vtanh.pop %v5761
    %v5766 = vtanh.pop %v5762
    %v5767 = vtanh.pop %v5763
    %v5768 = vtanh.pop %v5764
    %v5769 = vsub.f32 1.0, %v5675
    %v5770 = vsub.f32 1.0, %v5690
    %v5771 = vsub.f32 1.0, %v5705
    %v5772 = vsub.f32 1.0, %v5720
    %5777 = vrot.lane.b32.xlu0 %v5765, 96
    %v5778 = vpop.permute.xlu0 %5777
    %5779 = vrot.lane.b32.xlu0 %v5766, 96
    %v5780 = vpop.permute.xlu0 %5779
    %5781 = vrot.lane.b32.xlu0 %v5767, 96
    %v5782 = vpop.permute.xlu0 %5781
    %5783 = vrot.lane.b32.xlu0 %v5768, 96
    %v5784 = vpop.permute.xlu0 %5783
    %v5789 = vmul.f32 %v5769, %v5778
    %v5790 = vmul.f32 %v5770, %v5780
    %v5791 = vmul.f32 %v5771, %v5782
    %v5792 = vmul.f32 %v5772, %v5784
    %v5793 = vmul.f32 %v5675, %v5580
    %v5794 = vmul.f32 %v5690, %v5581
    %v5795 = vmul.f32 %v5705, %v5582
    %v5796 = vmul.f32 %v5720, %v5583
    %v5797 = vadd.f32 %v5789, %v5793
    %v5798 = vadd.f32 %v5790, %v5794
    %v5799 = vadd.f32 %v5791, %v5795
    %v5800 = vadd.f32 %v5792, %v5796
    %5805 = vrot.lane.b32.xlu0 %v5797, 32
    %v5806 = vpop.permute.xlu0 %5805
    %5807 = vrot.lane.b32.xlu0 %v5798, 32
    %v5808 = vpop.permute.xlu0 %5807
    %5809 = vrot.lane.b32.xlu0 %v5799, 32
    %v5810 = vpop.permute.xlu0 %5809
    %5811 = vrot.lane.b32.xlu0 %v5800, 32
    %v5812 = vpop.permute.xlu0 %5811
    %5817 = vst.msk [vmem:[%s9 + $0x8] sm:$0xff] %vm4919, %v5806
    %5818 = vst.msk [vmem:[%s9 + $0x28] sm:$0xff] %vm4919, %v5808
    %5819 = vst.msk [vmem:[%s9 + $0x48] sm:$0xff] %vm4919, %v5810
    %5820 = vst.msk [vmem:[%s9 + $0x68] sm:$0xff] %vm4919, %v5812
    %v5821 = vld [vmem:[#allocation2 + $0xe0] sm:$0xff]
    %v5822 = vld [vmem:[#allocation2 + $0xe8] sm:$0xff]
    %v5823 = vld [vmem:[#allocation2 + $0xf0] sm:$0xff]
    %v5824 = vld [vmem:[#allocation2 + $0xf8] sm:$0xff]
    %5825 = vrot.lane.b32.xlu0 %v5797, 96
    %v5826 = vpop.permute.xlu0 %5825
    %5827 = vrot.lane.b32.xlu0 %v5798, 96
    %v5828 = vpop.permute.xlu0 %5827
    %5829 = vrot.lane.b32.xlu0 %v5799, 96
    %v5830 = vpop.permute.xlu0 %5829
    %5831 = vrot.lane.b32.xlu0 %v5800, 96
    %v5832 = vpop.permute.xlu0 %5831
    %v5833 = vsel %vm103, %v5826, 0
    %v5835 = vsel %vm103, %v5828, 0
    %v5837 = vsel %vm103, %v5830, 0
    %v5839 = vsel %vm103, %v5832, 0
    %5841 = vmatpush.msra.mxu0 0.0
    %5842 = vmatpush.msra.mxu0 0.0
    %5843 = vmatpush.msra.mxu0 0.0
    %5844 = vmatpush.msra.mxu0 0.0
    %5845 = vmatpush.msra.mxu0 0.0
    %5846 = vmatpush.msra.mxu0 0.0
    %5847 = vmatpush.msra.mxu0 0.0
    %5848 = vmatpush.msra.mxu0 0.0
    %5849 = vmatpush.msra.mxu0 0.0
    %5850 = vmatpush.msra.mxu0 0.0
    %5851 = vmatpush.msra.mxu0 0.0
    %5852 = vmatpush.msra.mxu0 0.0
    %5853 = vmatpush.msra.mxu0 %v4264
    %5854 = vmatpush.msra.mxu0 %v4263
    %5855 = vmatpush.msra.mxu0 %v4262
    %5856 = vmatpush.msra.mxu0 %v4261
    %5857 = vmatmul.f32.gmra.mxu0 %v5833
    %v5858 = vpop.f32.mrf.mxu0
    %v5859 = vadd.f32 0.0, %v5858
    %5860 = vmatmul.f32.gmra.mxu0 %v5835
    %v5861 = vpop.f32.mrf.mxu0
    %v5862 = vadd.f32 0.0, %v5861
    %5863 = vmatmul.f32.gmra.mxu0 %v5837
    %v5864 = vpop.f32.mrf.mxu0
    %v5865 = vadd.f32 0.0, %v5864
    %5866 = vmatmul.f32.gmra.mxu0 %v5839
    %v5867 = vpop.f32.mrf.mxu0
    %v5868 = vadd.f32 0.0, %v5867
    %5869 = vdwg.mxu0
    %v5870 = vadd.f32 %v5821, %v5859
    %v5871 = vadd.f32 %v5822, %v5862
    %v5872 = vadd.f32 %v5823, %v5865
    %v5873 = vadd.f32 %v5824, %v5868
    %v5874 = vxor.u32 %v5870, 2147483648
    %v5875 = vxor.u32 %v5871, 2147483648
    %v5876 = vxor.u32 %v5872, 2147483648
    %v5877 = vxor.u32 %v5873, 2147483648
    %v5878 = vmul.f32 %v5874, 1.442695
    %v5879 = vpow.pop %v5878
    %v5880 = vmul.f32 %v5875, 1.442695
    %v5881 = vpow.pop %v5880
    %v5882 = vmul.f32 %v5876, 1.442695
    %v5883 = vpow.pop %v5882
    %v5884 = vmul.f32 %v5877, 1.442695
    %v5885 = vpow.pop %v5884
    %v5886 = vadd.f32 %v5879, 1.0
    %v5887 = vadd.f32 %v5881, 1.0
    %v5888 = vadd.f32 %v5883, 1.0
    %v5889 = vadd.f32 %v5885, 1.0
    %v5890 = vrcp.pop %v5886
    %v5891 = vmul.f32 %v5886, %v5890
    %v5892 = vsub.f32 1.0, %v5891
    %v5893 = vmul.f32 %v5890, %v5892
    %v5894 = vadd.f32 %v5890, %v5893
    %vm5895 = vweird.f32 %v5886
    %vm5896 = vweird.f32 %v5890
    %vm5897 = vmor %vm5895, %vm5896
    %v5898 = vsel %vm5897, %v5890, %v5894
    %v5899 = vand.u32 2147483647, %v5886
    %vm5900 = vcmp.eq.f32.partialorder %v5899, 8.507059e+37
    %v5901 = vand.u32 %v5886, 2147483648
    %v5902 = vor.u32 1.1754944e-38, %v5901
    %v5903 = vsel %vm5900, %v5902, %v5898
    %v5904 = vmul.f32 1.0, %v5903
    %v5905 = vrcp.pop %v5887
    %v5906 = vmul.f32 %v5887, %v5905
    %v5907 = vsub.f32 1.0, %v5906
    %v5908 = vmul.f32 %v5905, %v5907
    %v5909 = vadd.f32 %v5905, %v5908
    %vm5910 = vweird.f32 %v5887
    %vm5911 = vweird.f32 %v5905
    %vm5912 = vmor %vm5910, %vm5911
    %v5913 = vsel %vm5912, %v5905, %v5909
    %v5914 = vand.u32 2147483647, %v5887
    %vm5915 = vcmp.eq.f32.partialorder %v5914, 8.507059e+37
    %v5916 = vand.u32 %v5887, 2147483648
    %v5917 = vor.u32 1.1754944e-38, %v5916
    %v5918 = vsel %vm5915, %v5917, %v5913
    %v5919 = vmul.f32 1.0, %v5918
    %v5920 = vrcp.pop %v5888
    %v5921 = vmul.f32 %v5888, %v5920
    %v5922 = vsub.f32 1.0, %v5921
    %v5923 = vmul.f32 %v5920, %v5922
    %v5924 = vadd.f32 %v5920, %v5923
    %vm5925 = vweird.f32 %v5888
    %vm5926 = vweird.f32 %v5920
    %vm5927 = vmor %vm5925, %vm5926
    %v5928 = vsel %vm5927, %v5920, %v5924
    %v5929 = vand.u32 2147483647, %v5888
    %vm5930 = vcmp.eq.f32.partialorder %v5929, 8.507059e+37
    %v5931 = vand.u32 %v5888, 2147483648
    %v5932 = vor.u32 1.1754944e-38, %v5931
    %v5933 = vsel %vm5930, %v5932, %v5928
    %v5934 = vmul.f32 1.0, %v5933
    %v5935 = vrcp.pop %v5889
    %v5936 = vmul.f32 %v5889, %v5935
    %v5937 = vsub.f32 1.0, %v5936
    %v5938 = vmul.f32 %v5935, %v5937
    %v5939 = vadd.f32 %v5935, %v5938
    %vm5940 = vweird.f32 %v5889
    %vm5941 = vweird.f32 %v5935
    %vm5942 = vmor %vm5940, %vm5941
    %v5943 = vsel %vm5942, %v5935, %v5939
    %v5944 = vand.u32 2147483647, %v5889
    %vm5945 = vcmp.eq.f32.partialorder %v5944, 8.507059e+37
    %v5946 = vand.u32 %v5889, 2147483648
    %v5947 = vor.u32 1.1754944e-38, %v5946
    %v5948 = vsel %vm5945, %v5947, %v5943
    %v5949 = vmul.f32 1.0, %v5948
    %v5950 = vadd.f32 %v5859, %v4382
    %v5951 = vadd.f32 %v5862, %v4382
    %v5952 = vadd.f32 %v5865, %v4382
    %v5953 = vadd.f32 %v5868, %v4382
    %5958 = vrot.lane.b32.xlu0 %v5950, 64
    %v5959 = vpop.permute.xlu0 %5958
    %5960 = vrot.lane.b32.xlu0 %v5951, 64
    %v5961 = vpop.permute.xlu0 %5960
    %5962 = vrot.lane.b32.xlu0 %v5952, 64
    %v5963 = vpop.permute.xlu0 %5962
    %5964 = vrot.lane.b32.xlu0 %v5953, 64
    %v5965 = vpop.permute.xlu0 %5964
    %v5970 = vmul.f32 %v5904, %v5959
    %v5971 = vmul.f32 %v5919, %v5961
    %v5972 = vmul.f32 %v5934, %v5963
    %v5973 = vmul.f32 %v5949, %v5965
    %5978 = vrot.lane.b32.xlu0 %v5970, 64
    %v5979 = vpop.permute.xlu0 %5978
    %5980 = vrot.lane.b32.xlu0 %v5971, 64
    %v5981 = vpop.permute.xlu0 %5980
    %5982 = vrot.lane.b32.xlu0 %v5972, 64
    %v5983 = vpop.permute.xlu0 %5982
    %5984 = vrot.lane.b32.xlu0 %v5973, 64
    %v5985 = vpop.permute.xlu0 %5984
    %v5990 = vadd.f32 %v5821, %v5979
    %v5991 = vadd.f32 %v5822, %v5981
    %v5992 = vadd.f32 %v5823, %v5983
    %v5993 = vadd.f32 %v5824, %v5985
    %v5994 = vtanh.pop %v5990
    %v5995 = vtanh.pop %v5991
    %v5996 = vtanh.pop %v5992
    %v5997 = vtanh.pop %v5993
    %v5998 = vsub.f32 1.0, %v5904
    %v5999 = vsub.f32 1.0, %v5919
    %v6000 = vsub.f32 1.0, %v5934
    %v6001 = vsub.f32 1.0, %v5949
    %6006 = vrot.lane.b32.xlu0 %v5994, 96
    %v6007 = vpop.permute.xlu0 %6006
    %6008 = vrot.lane.b32.xlu0 %v5995, 96
    %v6009 = vpop.permute.xlu0 %6008
    %6010 = vrot.lane.b32.xlu0 %v5996, 96
    %v6011 = vpop.permute.xlu0 %6010
    %6012 = vrot.lane.b32.xlu0 %v5997, 96
    %v6013 = vpop.permute.xlu0 %6012
    %v6018 = vmul.f32 %v5998, %v6007
    %v6019 = vmul.f32 %v5999, %v6009
    %v6020 = vmul.f32 %v6000, %v6011
    %v6021 = vmul.f32 %v6001, %v6013
    %v6022 = vmul.f32 %v5904, %v5797
    %v6023 = vmul.f32 %v5919, %v5798
    %v6024 = vmul.f32 %v5934, %v5799
    %v6025 = vmul.f32 %v5949, %v5800
    %v6026 = vadd.f32 %v6018, %v6022
    %v6027 = vadd.f32 %v6019, %v6023
    %v6028 = vadd.f32 %v6020, %v6024
    %v6029 = vadd.f32 %v6021, %v6025
    %6034 = vrot.lane.b32.xlu0 %v6026, 64
    %v6035 = vpop.permute.xlu0 %6034
    %6036 = vrot.lane.b32.xlu0 %v6027, 64
    %v6037 = vpop.permute.xlu0 %6036
    %6038 = vrot.lane.b32.xlu0 %v6028, 64
    %v6039 = vpop.permute.xlu0 %6038
    %6040 = vrot.lane.b32.xlu0 %v6029, 64
    %v6041 = vpop.permute.xlu0 %6040
    %6046 = vst.msk [vmem:[%s9 + $0x8] sm:$0xff] %vm5149, %v6035
    %6047 = vst.msk [vmem:[%s9 + $0x28] sm:$0xff] %vm5149, %v6037
    %6048 = vst.msk [vmem:[%s9 + $0x48] sm:$0xff] %vm5149, %v6039
    %6049 = vst.msk [vmem:[%s9 + $0x68] sm:$0xff] %vm5149, %v6041
    %v6050 = vld [vmem:[#allocation2 + $0x100] sm:$0xff]
    %v6051 = vld [vmem:[#allocation2 + $0x108] sm:$0xff]
    %v6052 = vld [vmem:[#allocation2 + $0x110] sm:$0xff]
    %v6053 = vld [vmem:[#allocation2 + $0x118] sm:$0xff]
    %6054 = vrot.lane.b32.xlu0 %v6026, 96
    %v6055 = vpop.permute.xlu0 %6054
    %6056 = vrot.lane.b32.xlu0 %v6027, 96
    %v6057 = vpop.permute.xlu0 %6056
    %6058 = vrot.lane.b32.xlu0 %v6028, 96
    %v6059 = vpop.permute.xlu0 %6058
    %6060 = vrot.lane.b32.xlu0 %v6029, 96
    %v6061 = vpop.permute.xlu0 %6060
    %v6062 = vsel %vm103, %v6055, 0
    %v6064 = vsel %vm103, %v6057, 0
    %v6066 = vsel %vm103, %v6059, 0
    %v6068 = vsel %vm103, %v6061, 0
    %6070 = vmatpush.msra.mxu0 0.0
    %6071 = vmatpush.msra.mxu0 0.0
    %6072 = vmatpush.msra.mxu0 0.0
    %6073 = vmatpush.msra.mxu0 0.0
    %6074 = vmatpush.msra.mxu0 0.0
    %6075 = vmatpush.msra.mxu0 0.0
    %6076 = vmatpush.msra.mxu0 0.0
    %6077 = vmatpush.msra.mxu0 0.0
    %6078 = vmatpush.msra.mxu0 0.0
    %6079 = vmatpush.msra.mxu0 0.0
    %6080 = vmatpush.msra.mxu0 0.0
    %6081 = vmatpush.msra.mxu0 0.0
    %6082 = vmatpush.msra.mxu0 %v4264
    %6083 = vmatpush.msra.mxu0 %v4263
    %6084 = vmatpush.msra.mxu0 %v4262
    %6085 = vmatpush.msra.mxu0 %v4261
    %6086 = vmatmul.f32.gmra.mxu0 %v6062
    %v6087 = vpop.f32.mrf.mxu0
    %v6088 = vadd.f32 0.0, %v6087
    %6089 = vmatmul.f32.gmra.mxu0 %v6064
    %v6090 = vpop.f32.mrf.mxu0
    %v6091 = vadd.f32 0.0, %v6090
    %6092 = vmatmul.f32.gmra.mxu0 %v6066
    %v6093 = vpop.f32.mrf.mxu0
    %v6094 = vadd.f32 0.0, %v6093
    %6095 = vmatmul.f32.gmra.mxu0 %v6068
    %v6096 = vpop.f32.mrf.mxu0
    %v6097 = vadd.f32 0.0, %v6096
    %6098 = vdwg.mxu0
    %v6099 = vadd.f32 %v6050, %v6088
    %v6100 = vadd.f32 %v6051, %v6091
    %v6101 = vadd.f32 %v6052, %v6094
    %v6102 = vadd.f32 %v6053, %v6097
    %v6103 = vxor.u32 %v6099, 2147483648
    %v6104 = vxor.u32 %v6100, 2147483648
    %v6105 = vxor.u32 %v6101, 2147483648
    %v6106 = vxor.u32 %v6102, 2147483648
    %v6107 = vmul.f32 %v6103, 1.442695
    %v6108 = vpow.pop %v6107
    %v6109 = vmul.f32 %v6104, 1.442695
    %v6110 = vpow.pop %v6109
    %v6111 = vmul.f32 %v6105, 1.442695
    %v6112 = vpow.pop %v6111
    %v6113 = vmul.f32 %v6106, 1.442695
    %v6114 = vpow.pop %v6113
    %v6115 = vadd.f32 %v6108, 1.0
    %v6116 = vadd.f32 %v6110, 1.0
    %v6117 = vadd.f32 %v6112, 1.0
    %v6118 = vadd.f32 %v6114, 1.0
    %v6119 = vrcp.pop %v6115
    %v6120 = vmul.f32 %v6115, %v6119
    %v6121 = vsub.f32 1.0, %v6120
    %v6122 = vmul.f32 %v6119, %v6121
    %v6123 = vadd.f32 %v6119, %v6122
    %vm6124 = vweird.f32 %v6115
    %vm6125 = vweird.f32 %v6119
    %vm6126 = vmor %vm6124, %vm6125
    %v6127 = vsel %vm6126, %v6119, %v6123
    %v6128 = vand.u32 2147483647, %v6115
    %vm6129 = vcmp.eq.f32.partialorder %v6128, 8.507059e+37
    %v6130 = vand.u32 %v6115, 2147483648
    %v6131 = vor.u32 1.1754944e-38, %v6130
    %v6132 = vsel %vm6129, %v6131, %v6127
    %v6133 = vmul.f32 1.0, %v6132
    %v6134 = vrcp.pop %v6116
    %v6135 = vmul.f32 %v6116, %v6134
    %v6136 = vsub.f32 1.0, %v6135
    %v6137 = vmul.f32 %v6134, %v6136
    %v6138 = vadd.f32 %v6134, %v6137
    %vm6139 = vweird.f32 %v6116
    %vm6140 = vweird.f32 %v6134
    %vm6141 = vmor %vm6139, %vm6140
    %v6142 = vsel %vm6141, %v6134, %v6138
    %v6143 = vand.u32 2147483647, %v6116
    %vm6144 = vcmp.eq.f32.partialorder %v6143, 8.507059e+37
    %v6145 = vand.u32 %v6116, 2147483648
    %v6146 = vor.u32 1.1754944e-38, %v6145
    %v6147 = vsel %vm6144, %v6146, %v6142
    %v6148 = vmul.f32 1.0, %v6147
    %v6149 = vrcp.pop %v6117
    %v6150 = vmul.f32 %v6117, %v6149
    %v6151 = vsub.f32 1.0, %v6150
    %v6152 = vmul.f32 %v6149, %v6151
    %v6153 = vadd.f32 %v6149, %v6152
    %vm6154 = vweird.f32 %v6117
    %vm6155 = vweird.f32 %v6149
    %vm6156 = vmor %vm6154, %vm6155
    %v6157 = vsel %vm6156, %v6149, %v6153
    %v6158 = vand.u32 2147483647, %v6117
    %vm6159 = vcmp.eq.f32.partialorder %v6158, 8.507059e+37
    %v6160 = vand.u32 %v6117, 2147483648
    %v6161 = vor.u32 1.1754944e-38, %v6160
    %v6162 = vsel %vm6159, %v6161, %v6157
    %v6163 = vmul.f32 1.0, %v6162
    %v6164 = vrcp.pop %v6118
    %v6165 = vmul.f32 %v6118, %v6164
    %v6166 = vsub.f32 1.0, %v6165
    %v6167 = vmul.f32 %v6164, %v6166
    %v6168 = vadd.f32 %v6164, %v6167
    %vm6169 = vweird.f32 %v6118
    %vm6170 = vweird.f32 %v6164
    %vm6171 = vmor %vm6169, %vm6170
    %v6172 = vsel %vm6171, %v6164, %v6168
    %v6173 = vand.u32 2147483647, %v6118
    %vm6174 = vcmp.eq.f32.partialorder %v6173, 8.507059e+37
    %v6175 = vand.u32 %v6118, 2147483648
    %v6176 = vor.u32 1.1754944e-38, %v6175
    %v6177 = vsel %vm6174, %v6176, %v6172
    %v6178 = vmul.f32 1.0, %v6177
    %v6179 = vadd.f32 %v6088, %v4382
    %v6180 = vadd.f32 %v6091, %v4382
    %v6181 = vadd.f32 %v6094, %v4382
    %v6182 = vadd.f32 %v6097, %v4382
    %6187 = vrot.lane.b32.xlu0 %v6179, 64
    %v6188 = vpop.permute.xlu0 %6187
    %6189 = vrot.lane.b32.xlu0 %v6180, 64
    %v6190 = vpop.permute.xlu0 %6189
    %6191 = vrot.lane.b32.xlu0 %v6181, 64
    %v6192 = vpop.permute.xlu0 %6191
    %6193 = vrot.lane.b32.xlu0 %v6182, 64
    %v6194 = vpop.permute.xlu0 %6193
    %v6199 = vmul.f32 %v6133, %v6188
    %v6200 = vmul.f32 %v6148, %v6190
    %v6201 = vmul.f32 %v6163, %v6192
    %v6202 = vmul.f32 %v6178, %v6194
    %6207 = vrot.lane.b32.xlu0 %v6199, 64
    %v6208 = vpop.permute.xlu0 %6207
    %6209 = vrot.lane.b32.xlu0 %v6200, 64
    %v6210 = vpop.permute.xlu0 %6209
    %6211 = vrot.lane.b32.xlu0 %v6201, 64
    %v6212 = vpop.permute.xlu0 %6211
    %6213 = vrot.lane.b32.xlu0 %v6202, 64
    %v6214 = vpop.permute.xlu0 %6213
    %v6219 = vadd.f32 %v6050, %v6208
    %v6220 = vadd.f32 %v6051, %v6210
    %v6221 = vadd.f32 %v6052, %v6212
    %v6222 = vadd.f32 %v6053, %v6214
    %v6223 = vtanh.pop %v6219
    %v6224 = vtanh.pop %v6220
    %v6225 = vtanh.pop %v6221
    %v6226 = vtanh.pop %v6222
    %v6227 = vsub.f32 1.0, %v6133
    %v6228 = vsub.f32 1.0, %v6148
    %v6229 = vsub.f32 1.0, %v6163
    %v6230 = vsub.f32 1.0, %v6178
    %6235 = vrot.lane.b32.xlu0 %v6223, 96
    %v6236 = vpop.permute.xlu0 %6235
    %6237 = vrot.lane.b32.xlu0 %v6224, 96
    %v6238 = vpop.permute.xlu0 %6237
    %6239 = vrot.lane.b32.xlu0 %v6225, 96
    %v6240 = vpop.permute.xlu0 %6239
    %6241 = vrot.lane.b32.xlu0 %v6226, 96
    %v6242 = vpop.permute.xlu0 %6241
    %v6247 = vmul.f32 %v6227, %v6236
    %v6248 = vmul.f32 %v6228, %v6238
    %v6249 = vmul.f32 %v6229, %v6240
    %v6250 = vmul.f32 %v6230, %v6242
    %v6251 = vmul.f32 %v6133, %v6026
    %v6252 = vmul.f32 %v6148, %v6027
    %v6253 = vmul.f32 %v6163, %v6028
    %v6254 = vmul.f32 %v6178, %v6029
    %v6255 = vadd.f32 %v6247, %v6251
    %v6256 = vadd.f32 %v6248, %v6252
    %v6257 = vadd.f32 %v6249, %v6253
    %v6258 = vadd.f32 %v6250, %v6254
    %6263 = vrot.lane.b32.xlu0 %v6255, 96
    %v6264 = vpop.permute.xlu0 %6263
    %6265 = vrot.lane.b32.xlu0 %v6256, 96
    %v6266 = vpop.permute.xlu0 %6265
    %6267 = vrot.lane.b32.xlu0 %v6257, 96
    %v6268 = vpop.permute.xlu0 %6267
    %6269 = vrot.lane.b32.xlu0 %v6258, 96
    %v6270 = vpop.permute.xlu0 %6269
    %6275 = vst.msk [vmem:[%s9 + $0x10] sm:$0xff] %vm103, %v6264
    %6276 = vst.msk [vmem:[%s9 + $0x30] sm:$0xff] %vm103, %v6266
    %6277 = vst.msk [vmem:[%s9 + $0x50] sm:$0xff] %vm103, %v6268
    %6278 = vst.msk [vmem:[%s9 + $0x70] sm:$0xff] %vm103, %v6270
    %v6279 = vld [vmem:[#allocation2 + $0x120] sm:$0xff]
    %v6280 = vld [vmem:[#allocation2 + $0x128] sm:$0xff]
    %v6281 = vld [vmem:[#allocation2 + $0x130] sm:$0xff]
    %v6282 = vld [vmem:[#allocation2 + $0x138] sm:$0xff]
    %v6283 = vsel %vm103, %v6264, 0
    %v6285 = vsel %vm103, %v6266, 0
    %v6287 = vsel %vm103, %v6268, 0
    %v6289 = vsel %vm103, %v6270, 0
    %6291 = vmatpush.msra.mxu0 0.0
    %6292 = vmatpush.msra.mxu0 0.0
    %6293 = vmatpush.msra.mxu0 0.0
    %6294 = vmatpush.msra.mxu0 0.0
    %6295 = vmatpush.msra.mxu0 0.0
    %6296 = vmatpush.msra.mxu0 0.0
    %6297 = vmatpush.msra.mxu0 0.0
    %6298 = vmatpush.msra.mxu0 0.0
    %6299 = vmatpush.msra.mxu0 0.0
    %6300 = vmatpush.msra.mxu0 0.0
    %6301 = vmatpush.msra.mxu0 0.0
    %6302 = vmatpush.msra.mxu0 0.0
    %6303 = vmatpush.msra.mxu0 %v4264
    %6304 = vmatpush.msra.mxu0 %v4263
    %6305 = vmatpush.msra.mxu0 %v4262
    %6306 = vmatpush.msra.mxu0 %v4261
    %6307 = vmatmul.f32.gmra.mxu0 %v6283
    %v6308 = vpop.f32.mrf.mxu0
    %v6309 = vadd.f32 0.0, %v6308
    %6310 = vmatmul.f32.gmra.mxu0 %v6285
    %v6311 = vpop.f32.mrf.mxu0
    %v6312 = vadd.f32 0.0, %v6311
    %6313 = vmatmul.f32.gmra.mxu0 %v6287
    %v6314 = vpop.f32.mrf.mxu0
    %v6315 = vadd.f32 0.0, %v6314
    %6316 = vmatmul.f32.gmra.mxu0 %v6289
    %v6317 = vpop.f32.mrf.mxu0
    %v6318 = vadd.f32 0.0, %v6317
    %6319 = vdwg.mxu0
    %v6320 = vadd.f32 %v6279, %v6309
    %v6321 = vadd.f32 %v6280, %v6312
    %v6322 = vadd.f32 %v6281, %v6315
    %v6323 = vadd.f32 %v6282, %v6318
    %v6324 = vxor.u32 %v6320, 2147483648
    %v6325 = vxor.u32 %v6321, 2147483648
    %v6326 = vxor.u32 %v6322, 2147483648
    %v6327 = vxor.u32 %v6323, 2147483648
    %v6328 = vmul.f32 %v6324, 1.442695
    %v6329 = vpow.pop %v6328
    %v6330 = vmul.f32 %v6325, 1.442695
    %v6331 = vpow.pop %v6330
    %v6332 = vmul.f32 %v6326, 1.442695
    %v6333 = vpow.pop %v6332
    %v6334 = vmul.f32 %v6327, 1.442695
    %v6335 = vpow.pop %v6334
    %v6336 = vadd.f32 %v6329, 1.0
    %v6337 = vadd.f32 %v6331, 1.0
    %v6338 = vadd.f32 %v6333, 1.0
    %v6339 = vadd.f32 %v6335, 1.0
    %v6340 = vrcp.pop %v6336
    %v6341 = vmul.f32 %v6336, %v6340
    %v6342 = vsub.f32 1.0, %v6341
    %v6343 = vmul.f32 %v6340, %v6342
    %v6344 = vadd.f32 %v6340, %v6343
    %vm6345 = vweird.f32 %v6336
    %vm6346 = vweird.f32 %v6340
    %vm6347 = vmor %vm6345, %vm6346
    %v6348 = vsel %vm6347, %v6340, %v6344
    %v6349 = vand.u32 2147483647, %v6336
    %vm6350 = vcmp.eq.f32.partialorder %v6349, 8.507059e+37
    %v6351 = vand.u32 %v6336, 2147483648
    %v6352 = vor.u32 1.1754944e-38, %v6351
    %v6353 = vsel %vm6350, %v6352, %v6348
    %v6354 = vmul.f32 1.0, %v6353
    %v6355 = vrcp.pop %v6337
    %v6356 = vmul.f32 %v6337, %v6355
    %v6357 = vsub.f32 1.0, %v6356
    %v6358 = vmul.f32 %v6355, %v6357
    %v6359 = vadd.f32 %v6355, %v6358
    %vm6360 = vweird.f32 %v6337
    %vm6361 = vweird.f32 %v6355
    %vm6362 = vmor %vm6360, %vm6361
    %v6363 = vsel %vm6362, %v6355, %v6359
    %v6364 = vand.u32 2147483647, %v6337
    %vm6365 = vcmp.eq.f32.partialorder %v6364, 8.507059e+37
    %v6366 = vand.u32 %v6337, 2147483648
    %v6367 = vor.u32 1.1754944e-38, %v6366
    %v6368 = vsel %vm6365, %v6367, %v6363
    %v6369 = vmul.f32 1.0, %v6368
    %v6370 = vrcp.pop %v6338
    %v6371 = vmul.f32 %v6338, %v6370
    %v6372 = vsub.f32 1.0, %v6371
    %v6373 = vmul.f32 %v6370, %v6372
    %v6374 = vadd.f32 %v6370, %v6373
    %vm6375 = vweird.f32 %v6338
    %vm6376 = vweird.f32 %v6370
    %vm6377 = vmor %vm6375, %vm6376
    %v6378 = vsel %vm6377, %v6370, %v6374
    %v6379 = vand.u32 2147483647, %v6338
    %vm6380 = vcmp.eq.f32.partialorder %v6379, 8.507059e+37
    %v6381 = vand.u32 %v6338, 2147483648
    %v6382 = vor.u32 1.1754944e-38, %v6381
    %v6383 = vsel %vm6380, %v6382, %v6378
    %v6384 = vmul.f32 1.0, %v6383
    %v6385 = vrcp.pop %v6339
    %v6386 = vmul.f32 %v6339, %v6385
    %v6387 = vsub.f32 1.0, %v6386
    %v6388 = vmul.f32 %v6385, %v6387
    %v6389 = vadd.f32 %v6385, %v6388
    %vm6390 = vweird.f32 %v6339
    %vm6391 = vweird.f32 %v6385
    %vm6392 = vmor %vm6390, %vm6391
    %v6393 = vsel %vm6392, %v6385, %v6389
    %v6394 = vand.u32 2147483647, %v6339
    %vm6395 = vcmp.eq.f32.partialorder %v6394, 8.507059e+37
    %v6396 = vand.u32 %v6339, 2147483648
    %v6397 = vor.u32 1.1754944e-38, %v6396
    %v6398 = vsel %vm6395, %v6397, %v6393
    %v6399 = vmul.f32 1.0, %v6398
    %v6400 = vadd.f32 %v6309, %v4382
    %v6401 = vadd.f32 %v6312, %v4382
    %v6402 = vadd.f32 %v6315, %v4382
    %v6403 = vadd.f32 %v6318, %v4382
    %6408 = vrot.lane.b32.xlu0 %v6400, 64
    %v6409 = vpop.permute.xlu0 %6408
    %6410 = vrot.lane.b32.xlu0 %v6401, 64
    %v6411 = vpop.permute.xlu0 %6410
    %6412 = vrot.lane.b32.xlu0 %v6402, 64
    %v6413 = vpop.permute.xlu0 %6412
    %6414 = vrot.lane.b32.xlu0 %v6403, 64
    %v6415 = vpop.permute.xlu0 %6414
    %v6420 = vmul.f32 %v6354, %v6409
    %v6421 = vmul.f32 %v6369, %v6411
    %v6422 = vmul.f32 %v6384, %v6413
    %v6423 = vmul.f32 %v6399, %v6415
    %6428 = vrot.lane.b32.xlu0 %v6420, 64
    %v6429 = vpop.permute.xlu0 %6428
    %6430 = vrot.lane.b32.xlu0 %v6421, 64
    %v6431 = vpop.permute.xlu0 %6430
    %6432 = vrot.lane.b32.xlu0 %v6422, 64
    %v6433 = vpop.permute.xlu0 %6432
    %6434 = vrot.lane.b32.xlu0 %v6423, 64
    %v6435 = vpop.permute.xlu0 %6434
    %v6440 = vadd.f32 %v6279, %v6429
    %v6441 = vadd.f32 %v6280, %v6431
    %v6442 = vadd.f32 %v6281, %v6433
    %v6443 = vadd.f32 %v6282, %v6435
    %v6444 = vtanh.pop %v6440
    %v6445 = vtanh.pop %v6441
    %v6446 = vtanh.pop %v6442
    %v6447 = vtanh.pop %v6443
    %v6448 = vsub.f32 1.0, %v6354
    %v6449 = vsub.f32 1.0, %v6369
    %v6450 = vsub.f32 1.0, %v6384
    %v6451 = vsub.f32 1.0, %v6399
    %6456 = vrot.lane.b32.xlu0 %v6444, 96
    %v6457 = vpop.permute.xlu0 %6456
    %6458 = vrot.lane.b32.xlu0 %v6445, 96
    %v6459 = vpop.permute.xlu0 %6458
    %6460 = vrot.lane.b32.xlu0 %v6446, 96
    %v6461 = vpop.permute.xlu0 %6460
    %6462 = vrot.lane.b32.xlu0 %v6447, 96
    %v6463 = vpop.permute.xlu0 %6462
    %v6468 = vmul.f32 %v6448, %v6457
    %v6469 = vmul.f32 %v6449, %v6459
    %v6470 = vmul.f32 %v6450, %v6461
    %v6471 = vmul.f32 %v6451, %v6463
    %v6472 = vmul.f32 %v6354, %v6255
    %v6473 = vmul.f32 %v6369, %v6256
    %v6474 = vmul.f32 %v6384, %v6257
    %v6475 = vmul.f32 %v6399, %v6258
    %v6476 = vadd.f32 %v6468, %v6472
    %v6477 = vadd.f32 %v6469, %v6473
    %v6478 = vadd.f32 %v6470, %v6474
    %v6479 = vadd.f32 %v6471, %v6475
    %6480 = vst.msk [vmem:[%s9 + $0x10] sm:$0xff] %vm4685, %v6476
    %6481 = vst.msk [vmem:[%s9 + $0x30] sm:$0xff] %vm4685, %v6477
    %6482 = vst.msk [vmem:[%s9 + $0x50] sm:$0xff] %vm4685, %v6478
    %6483 = vst.msk [vmem:[%s9 + $0x70] sm:$0xff] %vm4685, %v6479
    %v6484 = vld [vmem:[#allocation2 + $0x140] sm:$0xff]
    %v6485 = vld [vmem:[#allocation2 + $0x148] sm:$0xff]
    %v6486 = vld [vmem:[#allocation2 + $0x150] sm:$0xff]
    %v6487 = vld [vmem:[#allocation2 + $0x158] sm:$0xff]
    %6492 = vrot.lane.b32.xlu0 %v6476, 96
    %v6493 = vpop.permute.xlu0 %6492
    %6494 = vrot.lane.b32.xlu0 %v6477, 96
    %v6495 = vpop.permute.xlu0 %6494
    %6496 = vrot.lane.b32.xlu0 %v6478, 96
    %v6497 = vpop.permute.xlu0 %6496
    %6498 = vrot.lane.b32.xlu0 %v6479, 96
    %v6499 = vpop.permute.xlu0 %6498
    %v6500 = vsel %vm103, %v6493, 0
    %v6502 = vsel %vm103, %v6495, 0
    %v6504 = vsel %vm103, %v6497, 0
    %v6506 = vsel %vm103, %v6499, 0
    %6508 = vmatpush.msra.mxu0 0.0
    %6509 = vmatpush.msra.mxu0 0.0
    %6510 = vmatpush.msra.mxu0 0.0
    %6511 = vmatpush.msra.mxu0 0.0
    %6512 = vmatpush.msra.mxu0 0.0
    %6513 = vmatpush.msra.mxu0 0.0
    %6514 = vmatpush.msra.mxu0 0.0
    %6515 = vmatpush.msra.mxu0 0.0
    %6516 = vmatpush.msra.mxu0 0.0
    %6517 = vmatpush.msra.mxu0 0.0
    %6518 = vmatpush.msra.mxu0 0.0
    %6519 = vmatpush.msra.mxu0 0.0
    %6520 = vmatpush.msra.mxu0 %v4264
    %6521 = vmatpush.msra.mxu0 %v4263
    %6522 = vmatpush.msra.mxu0 %v4262
    %6523 = vmatpush.msra.mxu0 %v4261
    %6524 = vmatmul.f32.gmra.mxu0 %v6500
    %v6525 = vpop.f32.mrf.mxu0
    %v6526 = vadd.f32 0.0, %v6525
    %6527 = vmatmul.f32.gmra.mxu0 %v6502
    %v6528 = vpop.f32.mrf.mxu0
    %v6529 = vadd.f32 0.0, %v6528
    %6530 = vmatmul.f32.gmra.mxu0 %v6504
    %v6531 = vpop.f32.mrf.mxu0
    %v6532 = vadd.f32 0.0, %v6531
    %6533 = vmatmul.f32.gmra.mxu0 %v6506
    %v6534 = vpop.f32.mrf.mxu0
    %v6535 = vadd.f32 0.0, %v6534
    %6536 = vdwg.mxu0
    %v6537 = vadd.f32 %v6484, %v6526
    %v6538 = vadd.f32 %v6485, %v6529
    %v6539 = vadd.f32 %v6486, %v6532
    %v6540 = vadd.f32 %v6487, %v6535
    %v6541 = vxor.u32 %v6537, 2147483648
    %v6542 = vxor.u32 %v6538, 2147483648
    %v6543 = vxor.u32 %v6539, 2147483648
    %v6544 = vxor.u32 %v6540, 2147483648
    %v6545 = vmul.f32 %v6541, 1.442695
    %v6546 = vpow.pop %v6545
    %v6547 = vmul.f32 %v6542, 1.442695
    %v6548 = vpow.pop %v6547
    %v6549 = vmul.f32 %v6543, 1.442695
    %v6550 = vpow.pop %v6549
    %v6551 = vmul.f32 %v6544, 1.442695
    %v6552 = vpow.pop %v6551
    %v6553 = vadd.f32 %v6546, 1.0
    %v6554 = vadd.f32 %v6548, 1.0
    %v6555 = vadd.f32 %v6550, 1.0
    %v6556 = vadd.f32 %v6552, 1.0
    %v6557 = vrcp.pop %v6553
    %v6558 = vmul.f32 %v6553, %v6557
    %v6559 = vsub.f32 1.0, %v6558
    %v6560 = vmul.f32 %v6557, %v6559
    %v6561 = vadd.f32 %v6557, %v6560
    %vm6562 = vweird.f32 %v6553
    %vm6563 = vweird.f32 %v6557
    %vm6564 = vmor %vm6562, %vm6563
    %v6565 = vsel %vm6564, %v6557, %v6561
    %v6566 = vand.u32 2147483647, %v6553
    %vm6567 = vcmp.eq.f32.partialorder %v6566, 8.507059e+37
    %v6568 = vand.u32 %v6553, 2147483648
    %v6569 = vor.u32 1.1754944e-38, %v6568
    %v6570 = vsel %vm6567, %v6569, %v6565
    %v6571 = vmul.f32 1.0, %v6570
    %v6572 = vrcp.pop %v6554
    %v6573 = vmul.f32 %v6554, %v6572
    %v6574 = vsub.f32 1.0, %v6573
    %v6575 = vmul.f32 %v6572, %v6574
    %v6576 = vadd.f32 %v6572, %v6575
    %vm6577 = vweird.f32 %v6554
    %vm6578 = vweird.f32 %v6572
    %vm6579 = vmor %vm6577, %vm6578
    %v6580 = vsel %vm6579, %v6572, %v6576
    %v6581 = vand.u32 2147483647, %v6554
    %vm6582 = vcmp.eq.f32.partialorder %v6581, 8.507059e+37
    %v6583 = vand.u32 %v6554, 2147483648
    %v6584 = vor.u32 1.1754944e-38, %v6583
    %v6585 = vsel %vm6582, %v6584, %v6580
    %v6586 = vmul.f32 1.0, %v6585
    %v6587 = vrcp.pop %v6555
    %v6588 = vmul.f32 %v6555, %v6587
    %v6589 = vsub.f32 1.0, %v6588
    %v6590 = vmul.f32 %v6587, %v6589
    %v6591 = vadd.f32 %v6587, %v6590
    %vm6592 = vweird.f32 %v6555
    %vm6593 = vweird.f32 %v6587
    %vm6594 = vmor %vm6592, %vm6593
    %v6595 = vsel %vm6594, %v6587, %v6591
    %v6596 = vand.u32 2147483647, %v6555
    %vm6597 = vcmp.eq.f32.partialorder %v6596, 8.507059e+37
    %v6598 = vand.u32 %v6555, 2147483648
    %v6599 = vor.u32 1.1754944e-38, %v6598
    %v6600 = vsel %vm6597, %v6599, %v6595
    %v6601 = vmul.f32 1.0, %v6600
    %v6602 = vrcp.pop %v6556
    %v6603 = vmul.f32 %v6556, %v6602
    %v6604 = vsub.f32 1.0, %v6603
    %v6605 = vmul.f32 %v6602, %v6604
    %v6606 = vadd.f32 %v6602, %v6605
    %vm6607 = vweird.f32 %v6556
    %vm6608 = vweird.f32 %v6602
    %vm6609 = vmor %vm6607, %vm6608
    %v6610 = vsel %vm6609, %v6602, %v6606
    %v6611 = vand.u32 2147483647, %v6556
    %vm6612 = vcmp.eq.f32.partialorder %v6611, 8.507059e+37
    %v6613 = vand.u32 %v6556, 2147483648
    %v6614 = vor.u32 1.1754944e-38, %v6613
    %v6615 = vsel %vm6612, %v6614, %v6610
    %v6616 = vmul.f32 1.0, %v6615
    %v6617 = vadd.f32 %v6526, %v4382
    %v6618 = vadd.f32 %v6529, %v4382
    %v6619 = vadd.f32 %v6532, %v4382
    %v6620 = vadd.f32 %v6535, %v4382
    %6625 = vrot.lane.b32.xlu0 %v6617, 64
    %v6626 = vpop.permute.xlu0 %6625
    %6627 = vrot.lane.b32.xlu0 %v6618, 64
    %v6628 = vpop.permute.xlu0 %6627
    %6629 = vrot.lane.b32.xlu0 %v6619, 64
    %v6630 = vpop.permute.xlu0 %6629
    %6631 = vrot.lane.b32.xlu0 %v6620, 64
    %v6632 = vpop.permute.xlu0 %6631
    %v6637 = vmul.f32 %v6571, %v6626
    %v6638 = vmul.f32 %v6586, %v6628
    %v6639 = vmul.f32 %v6601, %v6630
    %v6640 = vmul.f32 %v6616, %v6632
    %6645 = vrot.lane.b32.xlu0 %v6637, 64
    %v6646 = vpop.permute.xlu0 %6645
    %6647 = vrot.lane.b32.xlu0 %v6638, 64
    %v6648 = vpop.permute.xlu0 %6647
    %6649 = vrot.lane.b32.xlu0 %v6639, 64
    %v6650 = vpop.permute.xlu0 %6649
    %6651 = vrot.lane.b32.xlu0 %v6640, 64
    %v6652 = vpop.permute.xlu0 %6651
    %v6657 = vadd.f32 %v6484, %v6646
    %v6658 = vadd.f32 %v6485, %v6648
    %v6659 = vadd.f32 %v6486, %v6650
    %v6660 = vadd.f32 %v6487, %v6652
    %v6661 = vtanh.pop %v6657
    %v6662 = vtanh.pop %v6658
    %v6663 = vtanh.pop %v6659
    %v6664 = vtanh.pop %v6660
    %v6665 = vsub.f32 1.0, %v6571
    %v6666 = vsub.f32 1.0, %v6586
    %v6667 = vsub.f32 1.0, %v6601
    %v6668 = vsub.f32 1.0, %v6616
    %6673 = vrot.lane.b32.xlu0 %v6661, 96
    %v6674 = vpop.permute.xlu0 %6673
    %6675 = vrot.lane.b32.xlu0 %v6662, 96
    %v6676 = vpop.permute.xlu0 %6675
    %6677 = vrot.lane.b32.xlu0 %v6663, 96
    %v6678 = vpop.permute.xlu0 %6677
    %6679 = vrot.lane.b32.xlu0 %v6664, 96
    %v6680 = vpop.permute.xlu0 %6679
    %v6685 = vmul.f32 %v6665, %v6674
    %v6686 = vmul.f32 %v6666, %v6676
    %v6687 = vmul.f32 %v6667, %v6678
    %v6688 = vmul.f32 %v6668, %v6680
    %v6689 = vmul.f32 %v6571, %v6476
    %v6690 = vmul.f32 %v6586, %v6477
    %v6691 = vmul.f32 %v6601, %v6478
    %v6692 = vmul.f32 %v6616, %v6479
    %v6693 = vadd.f32 %v6685, %v6689
    %v6694 = vadd.f32 %v6686, %v6690
    %v6695 = vadd.f32 %v6687, %v6691
    %v6696 = vadd.f32 %v6688, %v6692
    %6701 = vrot.lane.b32.xlu0 %v6693, 32
    %v6702 = vpop.permute.xlu0 %6701
    %6703 = vrot.lane.b32.xlu0 %v6694, 32
    %v6704 = vpop.permute.xlu0 %6703
    %6705 = vrot.lane.b32.xlu0 %v6695, 32
    %v6706 = vpop.permute.xlu0 %6705
    %6707 = vrot.lane.b32.xlu0 %v6696, 32
    %v6708 = vpop.permute.xlu0 %6707
    %6713 = vst.msk [vmem:[%s9 + $0x10] sm:$0xff] %vm4919, %v6702
    %6714 = vst.msk [vmem:[%s9 + $0x30] sm:$0xff] %vm4919, %v6704
    %6715 = vst.msk [vmem:[%s9 + $0x50] sm:$0xff] %vm4919, %v6706
    %6716 = vst.msk [vmem:[%s9 + $0x70] sm:$0xff] %vm4919, %v6708
    %v6717 = vld [vmem:[#allocation2 + $0x160] sm:$0xff]
    %v6718 = vld [vmem:[#allocation2 + $0x168] sm:$0xff]
    %v6719 = vld [vmem:[#allocation2 + $0x170] sm:$0xff]
    %v6720 = vld [vmem:[#allocation2 + $0x178] sm:$0xff]
    %6721 = vrot.lane.b32.xlu0 %v6693, 96
    %v6722 = vpop.permute.xlu0 %6721
    %6723 = vrot.lane.b32.xlu0 %v6694, 96
    %v6724 = vpop.permute.xlu0 %6723
    %6725 = vrot.lane.b32.xlu0 %v6695, 96
    %v6726 = vpop.permute.xlu0 %6725
    %6727 = vrot.lane.b32.xlu0 %v6696, 96
    %v6728 = vpop.permute.xlu0 %6727
    %v6729 = vsel %vm103, %v6722, 0
    %v6731 = vsel %vm103, %v6724, 0
    %v6733 = vsel %vm103, %v6726, 0
    %v6735 = vsel %vm103, %v6728, 0
    %6737 = vmatpush.msra.mxu0 0.0
    %6738 = vmatpush.msra.mxu0 0.0
    %6739 = vmatpush.msra.mxu0 0.0
    %6740 = vmatpush.msra.mxu0 0.0
    %6741 = vmatpush.msra.mxu0 0.0
    %6742 = vmatpush.msra.mxu0 0.0
    %6743 = vmatpush.msra.mxu0 0.0
    %6744 = vmatpush.msra.mxu0 0.0
    %6745 = vmatpush.msra.mxu0 0.0
    %6746 = vmatpush.msra.mxu0 0.0
    %6747 = vmatpush.msra.mxu0 0.0
    %6748 = vmatpush.msra.mxu0 0.0
    %6749 = vmatpush.msra.mxu0 %v4264
    %6750 = vmatpush.msra.mxu0 %v4263
    %6751 = vmatpush.msra.mxu0 %v4262
    %6752 = vmatpush.msra.mxu0 %v4261
    %6753 = vmatmul.f32.gmra.mxu0 %v6729
    %v6754 = vpop.f32.mrf.mxu0
    %v6755 = vadd.f32 0.0, %v6754
    %6756 = vmatmul.f32.gmra.mxu0 %v6731
    %v6757 = vpop.f32.mrf.mxu0
    %v6758 = vadd.f32 0.0, %v6757
    %6759 = vmatmul.f32.gmra.mxu0 %v6733
    %v6760 = vpop.f32.mrf.mxu0
    %v6761 = vadd.f32 0.0, %v6760
    %6762 = vmatmul.f32.gmra.mxu0 %v6735
    %v6763 = vpop.f32.mrf.mxu0
    %v6764 = vadd.f32 0.0, %v6763
    %6765 = vdwg.mxu0
    %v6766 = vadd.f32 %v6717, %v6755
    %v6767 = vadd.f32 %v6718, %v6758
    %v6768 = vadd.f32 %v6719, %v6761
    %v6769 = vadd.f32 %v6720, %v6764
    %v6770 = vxor.u32 %v6766, 2147483648
    %v6771 = vxor.u32 %v6767, 2147483648
    %v6772 = vxor.u32 %v6768, 2147483648
    %v6773 = vxor.u32 %v6769, 2147483648
    %v6774 = vmul.f32 %v6770, 1.442695
    %v6775 = vpow.pop %v6774
    %v6776 = vmul.f32 %v6771, 1.442695
    %v6777 = vpow.pop %v6776
    %v6778 = vmul.f32 %v6772, 1.442695
    %v6779 = vpow.pop %v6778
    %v6780 = vmul.f32 %v6773, 1.442695
    %v6781 = vpow.pop %v6780
    %v6782 = vadd.f32 %v6775, 1.0
    %v6783 = vadd.f32 %v6777, 1.0
    %v6784 = vadd.f32 %v6779, 1.0
    %v6785 = vadd.f32 %v6781, 1.0
    %v6786 = vrcp.pop %v6782
    %v6787 = vmul.f32 %v6782, %v6786
    %v6788 = vsub.f32 1.0, %v6787
    %v6789 = vmul.f32 %v6786, %v6788
    %v6790 = vadd.f32 %v6786, %v6789
    %vm6791 = vweird.f32 %v6782
    %vm6792 = vweird.f32 %v6786
    %vm6793 = vmor %vm6791, %vm6792
    %v6794 = vsel %vm6793, %v6786, %v6790
    %v6795 = vand.u32 2147483647, %v6782
    %vm6796 = vcmp.eq.f32.partialorder %v6795, 8.507059e+37
    %v6797 = vand.u32 %v6782, 2147483648
    %v6798 = vor.u32 1.1754944e-38, %v6797
    %v6799 = vsel %vm6796, %v6798, %v6794
    %v6800 = vmul.f32 1.0, %v6799
    %v6801 = vrcp.pop %v6783
    %v6802 = vmul.f32 %v6783, %v6801
    %v6803 = vsub.f32 1.0, %v6802
    %v6804 = vmul.f32 %v6801, %v6803
    %v6805 = vadd.f32 %v6801, %v6804
    %vm6806 = vweird.f32 %v6783
    %vm6807 = vweird.f32 %v6801
    %vm6808 = vmor %vm6806, %vm6807
    %v6809 = vsel %vm6808, %v6801, %v6805
    %v6810 = vand.u32 2147483647, %v6783
    %vm6811 = vcmp.eq.f32.partialorder %v6810, 8.507059e+37
    %v6812 = vand.u32 %v6783, 2147483648
    %v6813 = vor.u32 1.1754944e-38, %v6812
    %v6814 = vsel %vm6811, %v6813, %v6809
    %v6815 = vmul.f32 1.0, %v6814
    %v6816 = vrcp.pop %v6784
    %v6817 = vmul.f32 %v6784, %v6816
    %v6818 = vsub.f32 1.0, %v6817
    %v6819 = vmul.f32 %v6816, %v6818
    %v6820 = vadd.f32 %v6816, %v6819
    %vm6821 = vweird.f32 %v6784
    %vm6822 = vweird.f32 %v6816
    %vm6823 = vmor %vm6821, %vm6822
    %v6824 = vsel %vm6823, %v6816, %v6820
    %v6825 = vand.u32 2147483647, %v6784
    %vm6826 = vcmp.eq.f32.partialorder %v6825, 8.507059e+37
    %v6827 = vand.u32 %v6784, 2147483648
    %v6828 = vor.u32 1.1754944e-38, %v6827
    %v6829 = vsel %vm6826, %v6828, %v6824
    %v6830 = vmul.f32 1.0, %v6829
    %v6831 = vrcp.pop %v6785
    %v6832 = vmul.f32 %v6785, %v6831
    %v6833 = vsub.f32 1.0, %v6832
    %v6834 = vmul.f32 %v6831, %v6833
    %v6835 = vadd.f32 %v6831, %v6834
    %vm6836 = vweird.f32 %v6785
    %vm6837 = vweird.f32 %v6831
    %vm6838 = vmor %vm6836, %vm6837
    %v6839 = vsel %vm6838, %v6831, %v6835
    %v6840 = vand.u32 2147483647, %v6785
    %vm6841 = vcmp.eq.f32.partialorder %v6840, 8.507059e+37
    %v6842 = vand.u32 %v6785, 2147483648
    %v6843 = vor.u32 1.1754944e-38, %v6842
    %v6844 = vsel %vm6841, %v6843, %v6839
    %v6845 = vmul.f32 1.0, %v6844
    %v6846 = vadd.f32 %v6755, %v4382
    %v6847 = vadd.f32 %v6758, %v4382
    %v6848 = vadd.f32 %v6761, %v4382
    %v6849 = vadd.f32 %v6764, %v4382
    %6854 = vrot.lane.b32.xlu0 %v6846, 64
    %v6855 = vpop.permute.xlu0 %6854
    %6856 = vrot.lane.b32.xlu0 %v6847, 64
    %v6857 = vpop.permute.xlu0 %6856
    %6858 = vrot.lane.b32.xlu0 %v6848, 64
    %v6859 = vpop.permute.xlu0 %6858
    %6860 = vrot.lane.b32.xlu0 %v6849, 64
    %v6861 = vpop.permute.xlu0 %6860
    %v6866 = vmul.f32 %v6800, %v6855
    %v6867 = vmul.f32 %v6815, %v6857
    %v6868 = vmul.f32 %v6830, %v6859
    %v6869 = vmul.f32 %v6845, %v6861
    %6874 = vrot.lane.b32.xlu0 %v6866, 64
    %v6875 = vpop.permute.xlu0 %6874
    %6876 = vrot.lane.b32.xlu0 %v6867, 64
    %v6877 = vpop.permute.xlu0 %6876
    %6878 = vrot.lane.b32.xlu0 %v6868, 64
    %v6879 = vpop.permute.xlu0 %6878
    %6880 = vrot.lane.b32.xlu0 %v6869, 64
    %v6881 = vpop.permute.xlu0 %6880
    %v6886 = vadd.f32 %v6717, %v6875
    %v6887 = vadd.f32 %v6718, %v6877
    %v6888 = vadd.f32 %v6719, %v6879
    %v6889 = vadd.f32 %v6720, %v6881
    %v6890 = vtanh.pop %v6886
    %v6891 = vtanh.pop %v6887
    %v6892 = vtanh.pop %v6888
    %v6893 = vtanh.pop %v6889
    %v6894 = vsub.f32 1.0, %v6800
    %v6895 = vsub.f32 1.0, %v6815
    %v6896 = vsub.f32 1.0, %v6830
    %v6897 = vsub.f32 1.0, %v6845
    %6902 = vrot.lane.b32.xlu0 %v6890, 96
    %v6903 = vpop.permute.xlu0 %6902
    %6904 = vrot.lane.b32.xlu0 %v6891, 96
    %v6905 = vpop.permute.xlu0 %6904
    %6906 = vrot.lane.b32.xlu0 %v6892, 96
    %v6907 = vpop.permute.xlu0 %6906
    %6908 = vrot.lane.b32.xlu0 %v6893, 96
    %v6909 = vpop.permute.xlu0 %6908
    %v6914 = vmul.f32 %v6894, %v6903
    %v6915 = vmul.f32 %v6895, %v6905
    %v6916 = vmul.f32 %v6896, %v6907
    %v6917 = vmul.f32 %v6897, %v6909
    %v6918 = vmul.f32 %v6800, %v6693
    %v6919 = vmul.f32 %v6815, %v6694
    %v6920 = vmul.f32 %v6830, %v6695
    %v6921 = vmul.f32 %v6845, %v6696
    %v6922 = vadd.f32 %v6914, %v6918
    %v6923 = vadd.f32 %v6915, %v6919
    %v6924 = vadd.f32 %v6916, %v6920
    %v6925 = vadd.f32 %v6917, %v6921
    %6930 = vrot.lane.b32.xlu0 %v6922, 64
    %v6931 = vpop.permute.xlu0 %6930
    %6932 = vrot.lane.b32.xlu0 %v6923, 64
    %v6933 = vpop.permute.xlu0 %6932
    %6934 = vrot.lane.b32.xlu0 %v6924, 64
    %v6935 = vpop.permute.xlu0 %6934
    %6936 = vrot.lane.b32.xlu0 %v6925, 64
    %v6937 = vpop.permute.xlu0 %6936
    %6942 = vst.msk [vmem:[%s9 + $0x10] sm:$0xff] %vm5149, %v6931
    %6943 = vst.msk [vmem:[%s9 + $0x30] sm:$0xff] %vm5149, %v6933
    %6944 = vst.msk [vmem:[%s9 + $0x50] sm:$0xff] %vm5149, %v6935
    %6945 = vst.msk [vmem:[%s9 + $0x70] sm:$0xff] %vm5149, %v6937
    %v6946 = vld [vmem:[#allocation2 + $0x180] sm:$0xff]
    %v6947 = vld [vmem:[#allocation2 + $0x188] sm:$0xff]
    %v6948 = vld [vmem:[#allocation2 + $0x190] sm:$0xff]
    %v6949 = vld [vmem:[#allocation2 + $0x198] sm:$0xff]
    %6950 = vrot.lane.b32.xlu0 %v6922, 96
    %v6951 = vpop.permute.xlu0 %6950
    %6952 = vrot.lane.b32.xlu0 %v6923, 96
    %v6953 = vpop.permute.xlu0 %6952
    %6954 = vrot.lane.b32.xlu0 %v6924, 96
    %v6955 = vpop.permute.xlu0 %6954
    %6956 = vrot.lane.b32.xlu0 %v6925, 96
    %v6957 = vpop.permute.xlu0 %6956
    %v6958 = vsel %vm103, %v6951, 0
    %v6960 = vsel %vm103, %v6953, 0
    %v6962 = vsel %vm103, %v6955, 0
    %v6964 = vsel %vm103, %v6957, 0
    %6966 = vmatpush.msra.mxu0 0.0
    %6967 = vmatpush.msra.mxu0 0.0
    %6968 = vmatpush.msra.mxu0 0.0
    %6969 = vmatpush.msra.mxu0 0.0
    %6970 = vmatpush.msra.mxu0 0.0
    %6971 = vmatpush.msra.mxu0 0.0
    %6972 = vmatpush.msra.mxu0 0.0
    %6973 = vmatpush.msra.mxu0 0.0
    %6974 = vmatpush.msra.mxu0 0.0
    %6975 = vmatpush.msra.mxu0 0.0
    %6976 = vmatpush.msra.mxu0 0.0
    %6977 = vmatpush.msra.mxu0 0.0
    %6978 = vmatpush.msra.mxu0 %v4264
    %6979 = vmatpush.msra.mxu0 %v4263
    %6980 = vmatpush.msra.mxu0 %v4262
    %6981 = vmatpush.msra.mxu0 %v4261
    %6982 = vmatmul.f32.gmra.mxu0 %v6958
    %v6983 = vpop.f32.mrf.mxu0
    %v6984 = vadd.f32 0.0, %v6983
    %6985 = vmatmul.f32.gmra.mxu0 %v6960
    %v6986 = vpop.f32.mrf.mxu0
    %v6987 = vadd.f32 0.0, %v6986
    %6988 = vmatmul.f32.gmra.mxu0 %v6962
    %v6989 = vpop.f32.mrf.mxu0
    %v6990 = vadd.f32 0.0, %v6989
    %6991 = vmatmul.f32.gmra.mxu0 %v6964
    %v6992 = vpop.f32.mrf.mxu0
    %v6993 = vadd.f32 0.0, %v6992
    %6994 = vdwg.mxu0
    %v6995 = vadd.f32 %v6946, %v6984
    %v6996 = vadd.f32 %v6947, %v6987
    %v6997 = vadd.f32 %v6948, %v6990
    %v6998 = vadd.f32 %v6949, %v6993
    %v6999 = vxor.u32 %v6995, 2147483648
    %v7000 = vxor.u32 %v6996, 2147483648
    %v7001 = vxor.u32 %v6997, 2147483648
    %v7002 = vxor.u32 %v6998, 2147483648
    %v7003 = vmul.f32 %v6999, 1.442695
    %v7004 = vpow.pop %v7003
    %v7005 = vmul.f32 %v7000, 1.442695
    %v7006 = vpow.pop %v7005
    %v7007 = vmul.f32 %v7001, 1.442695
    %v7008 = vpow.pop %v7007
    %v7009 = vmul.f32 %v7002, 1.442695
    %v7010 = vpow.pop %v7009
    %v7011 = vadd.f32 %v7004, 1.0
    %v7012 = vadd.f32 %v7006, 1.0
    %v7013 = vadd.f32 %v7008, 1.0
    %v7014 = vadd.f32 %v7010, 1.0
    %v7015 = vrcp.pop %v7011
    %v7016 = vmul.f32 %v7011, %v7015
    %v7017 = vsub.f32 1.0, %v7016
    %v7018 = vmul.f32 %v7015, %v7017
    %v7019 = vadd.f32 %v7015, %v7018
    %vm7020 = vweird.f32 %v7011
    %vm7021 = vweird.f32 %v7015
    %vm7022 = vmor %vm7020, %vm7021
    %v7023 = vsel %vm7022, %v7015, %v7019
    %v7024 = vand.u32 2147483647, %v7011
    %vm7025 = vcmp.eq.f32.partialorder %v7024, 8.507059e+37
    %v7026 = vand.u32 %v7011, 2147483648
    %v7027 = vor.u32 1.1754944e-38, %v7026
    %v7028 = vsel %vm7025, %v7027, %v7023
    %v7029 = vmul.f32 1.0, %v7028
    %v7030 = vrcp.pop %v7012
    %v7031 = vmul.f32 %v7012, %v7030
    %v7032 = vsub.f32 1.0, %v7031
    %v7033 = vmul.f32 %v7030, %v7032
    %v7034 = vadd.f32 %v7030, %v7033
    %vm7035 = vweird.f32 %v7012
    %vm7036 = vweird.f32 %v7030
    %vm7037 = vmor %vm7035, %vm7036
    %v7038 = vsel %vm7037, %v7030, %v7034
    %v7039 = vand.u32 2147483647, %v7012
    %vm7040 = vcmp.eq.f32.partialorder %v7039, 8.507059e+37
    %v7041 = vand.u32 %v7012, 2147483648
    %v7042 = vor.u32 1.1754944e-38, %v7041
    %v7043 = vsel %vm7040, %v7042, %v7038
    %v7044 = vmul.f32 1.0, %v7043
    %v7045 = vrcp.pop %v7013
    %v7046 = vmul.f32 %v7013, %v7045
    %v7047 = vsub.f32 1.0, %v7046
    %v7048 = vmul.f32 %v7045, %v7047
    %v7049 = vadd.f32 %v7045, %v7048
    %vm7050 = vweird.f32 %v7013
    %vm7051 = vweird.f32 %v7045
    %vm7052 = vmor %vm7050, %vm7051
    %v7053 = vsel %vm7052, %v7045, %v7049
    %v7054 = vand.u32 2147483647, %v7013
    %vm7055 = vcmp.eq.f32.partialorder %v7054, 8.507059e+37
    %v7056 = vand.u32 %v7013, 2147483648
    %v7057 = vor.u32 1.1754944e-38, %v7056
    %v7058 = vsel %vm7055, %v7057, %v7053
    %v7059 = vmul.f32 1.0, %v7058
    %v7060 = vrcp.pop %v7014
    %v7061 = vmul.f32 %v7014, %v7060
    %v7062 = vsub.f32 1.0, %v7061
    %v7063 = vmul.f32 %v7060, %v7062
    %v7064 = vadd.f32 %v7060, %v7063
    %vm7065 = vweird.f32 %v7014
    %vm7066 = vweird.f32 %v7060
    %vm7067 = vmor %vm7065, %vm7066
    %v7068 = vsel %vm7067, %v7060, %v7064
    %v7069 = vand.u32 2147483647, %v7014
    %vm7070 = vcmp.eq.f32.partialorder %v7069, 8.507059e+37
    %v7071 = vand.u32 %v7014, 2147483648
    %v7072 = vor.u32 1.1754944e-38, %v7071
    %v7073 = vsel %vm7070, %v7072, %v7068
    %v7074 = vmul.f32 1.0, %v7073
    %v7075 = vadd.f32 %v6984, %v4382
    %v7076 = vadd.f32 %v6987, %v4382
    %v7077 = vadd.f32 %v6990, %v4382
    %v7078 = vadd.f32 %v6993, %v4382
    %7083 = vrot.lane.b32.xlu0 %v7075, 64
    %v7084 = vpop.permute.xlu0 %7083
    %7085 = vrot.lane.b32.xlu0 %v7076, 64
    %v7086 = vpop.permute.xlu0 %7085
    %7087 = vrot.lane.b32.xlu0 %v7077, 64
    %v7088 = vpop.permute.xlu0 %7087
    %7089 = vrot.lane.b32.xlu0 %v7078, 64
    %v7090 = vpop.permute.xlu0 %7089
    %v7095 = vmul.f32 %v7029, %v7084
    %v7096 = vmul.f32 %v7044, %v7086
    %v7097 = vmul.f32 %v7059, %v7088
    %v7098 = vmul.f32 %v7074, %v7090
    %7103 = vrot.lane.b32.xlu0 %v7095, 64
    %v7104 = vpop.permute.xlu0 %7103
    %7105 = vrot.lane.b32.xlu0 %v7096, 64
    %v7106 = vpop.permute.xlu0 %7105
    %7107 = vrot.lane.b32.xlu0 %v7097, 64
    %v7108 = vpop.permute.xlu0 %7107
    %7109 = vrot.lane.b32.xlu0 %v7098, 64
    %v7110 = vpop.permute.xlu0 %7109
    %v7115 = vadd.f32 %v6946, %v7104
    %v7116 = vadd.f32 %v6947, %v7106
    %v7117 = vadd.f32 %v6948, %v7108
    %v7118 = vadd.f32 %v6949, %v7110
    %v7119 = vtanh.pop %v7115
    %v7120 = vtanh.pop %v7116
    %v7121 = vtanh.pop %v7117
    %v7122 = vtanh.pop %v7118
    %v7123 = vsub.f32 1.0, %v7029
    %v7124 = vsub.f32 1.0, %v7044
    %v7125 = vsub.f32 1.0, %v7059
    %v7126 = vsub.f32 1.0, %v7074
    %7131 = vrot.lane.b32.xlu0 %v7119, 96
    %v7132 = vpop.permute.xlu0 %7131
    %7133 = vrot.lane.b32.xlu0 %v7120, 96
    %v7134 = vpop.permute.xlu0 %7133
    %7135 = vrot.lane.b32.xlu0 %v7121, 96
    %v7136 = vpop.permute.xlu0 %7135
    %7137 = vrot.lane.b32.xlu0 %v7122, 96
    %v7138 = vpop.permute.xlu0 %7137
    %v7143 = vmul.f32 %v7123, %v7132
    %v7144 = vmul.f32 %v7124, %v7134
    %v7145 = vmul.f32 %v7125, %v7136
    %v7146 = vmul.f32 %v7126, %v7138
    %v7147 = vmul.f32 %v7029, %v6922
    %v7148 = vmul.f32 %v7044, %v6923
    %v7149 = vmul.f32 %v7059, %v6924
    %v7150 = vmul.f32 %v7074, %v6925
    %v7151 = vadd.f32 %v7143, %v7147
    %v7152 = vadd.f32 %v7144, %v7148
    %v7153 = vadd.f32 %v7145, %v7149
    %v7154 = vadd.f32 %v7146, %v7150
    %7159 = vrot.lane.b32.xlu0 %v7151, 96
    %v7160 = vpop.permute.xlu0 %7159
    %7161 = vrot.lane.b32.xlu0 %v7152, 96
    %v7162 = vpop.permute.xlu0 %7161
    %7163 = vrot.lane.b32.xlu0 %v7153, 96
    %v7164 = vpop.permute.xlu0 %7163
    %7165 = vrot.lane.b32.xlu0 %v7154, 96
    %v7166 = vpop.permute.xlu0 %7165
    %7171 = vst.msk [vmem:[%s9 + $0x18] sm:$0xff] %vm103, %v7160
    %7172 = vst.msk [vmem:[%s9 + $0x38] sm:$0xff] %vm103, %v7162
    %7173 = vst.msk [vmem:[%s9 + $0x58] sm:$0xff] %vm103, %v7164
    %7174 = vst.msk [vmem:[%s9 + $0x78] sm:$0xff] %vm103, %v7166
    %v7175 = vld [vmem:[#allocation2 + $0x1a0] sm:$0xff]
    %v7176 = vld [vmem:[#allocation2 + $0x1a8] sm:$0xff]
    %v7177 = vld [vmem:[#allocation2 + $0x1b0] sm:$0xff]
    %v7178 = vld [vmem:[#allocation2 + $0x1b8] sm:$0xff]
    %v7179 = vsel %vm103, %v7160, 0
    %v7181 = vsel %vm103, %v7162, 0
    %v7183 = vsel %vm103, %v7164, 0
    %v7185 = vsel %vm103, %v7166, 0
    %7187 = vmatpush.msra.mxu0 0.0
    %7188 = vmatpush.msra.mxu0 0.0
    %7189 = vmatpush.msra.mxu0 0.0
    %7190 = vmatpush.msra.mxu0 0.0
    %7191 = vmatpush.msra.mxu0 0.0
    %7192 = vmatpush.msra.mxu0 0.0
    %7193 = vmatpush.msra.mxu0 0.0
    %7194 = vmatpush.msra.mxu0 0.0
    %7195 = vmatpush.msra.mxu0 0.0
    %7196 = vmatpush.msra.mxu0 0.0
    %7197 = vmatpush.msra.mxu0 0.0
    %7198 = vmatpush.msra.mxu0 0.0
    %7199 = vmatpush.msra.mxu0 %v4264
    %7200 = vmatpush.msra.mxu0 %v4263
    %7201 = vmatpush.msra.mxu0 %v4262
    %7202 = vmatpush.msra.mxu0 %v4261
    %7203 = vmatmul.f32.gmra.mxu0 %v7179
    %v7204 = vpop.f32.mrf.mxu0
    %v7205 = vadd.f32 0.0, %v7204
    %7206 = vmatmul.f32.gmra.mxu0 %v7181
    %v7207 = vpop.f32.mrf.mxu0
    %v7208 = vadd.f32 0.0, %v7207
    %7209 = vmatmul.f32.gmra.mxu0 %v7183
    %v7210 = vpop.f32.mrf.mxu0
    %v7211 = vadd.f32 0.0, %v7210
    %7212 = vmatmul.f32.gmra.mxu0 %v7185
    %v7213 = vpop.f32.mrf.mxu0
    %v7214 = vadd.f32 0.0, %v7213
    %7215 = vdwg.mxu0
    %v7216 = vadd.f32 %v7175, %v7205
    %v7217 = vadd.f32 %v7176, %v7208
    %v7218 = vadd.f32 %v7177, %v7211
    %v7219 = vadd.f32 %v7178, %v7214
    %v7220 = vxor.u32 %v7216, 2147483648
    %v7221 = vxor.u32 %v7217, 2147483648
    %v7222 = vxor.u32 %v7218, 2147483648
    %v7223 = vxor.u32 %v7219, 2147483648
    %v7224 = vmul.f32 %v7220, 1.442695
    %v7225 = vpow.pop %v7224
    %v7226 = vmul.f32 %v7221, 1.442695
    %v7227 = vpow.pop %v7226
    %v7228 = vmul.f32 %v7222, 1.442695
    %v7229 = vpow.pop %v7228
    %v7230 = vmul.f32 %v7223, 1.442695
    %v7231 = vpow.pop %v7230
    %v7232 = vadd.f32 %v7225, 1.0
    %v7233 = vadd.f32 %v7227, 1.0
    %v7234 = vadd.f32 %v7229, 1.0
    %v7235 = vadd.f32 %v7231, 1.0
    %v7236 = vrcp.pop %v7232
    %v7237 = vmul.f32 %v7232, %v7236
    %v7238 = vsub.f32 1.0, %v7237
    %v7239 = vmul.f32 %v7236, %v7238
    %v7240 = vadd.f32 %v7236, %v7239
    %vm7241 = vweird.f32 %v7232
    %vm7242 = vweird.f32 %v7236
    %vm7243 = vmor %vm7241, %vm7242
    %v7244 = vsel %vm7243, %v7236, %v7240
    %v7245 = vand.u32 2147483647, %v7232
    %vm7246 = vcmp.eq.f32.partialorder %v7245, 8.507059e+37
    %v7247 = vand.u32 %v7232, 2147483648
    %v7248 = vor.u32 1.1754944e-38, %v7247
    %v7249 = vsel %vm7246, %v7248, %v7244
    %v7250 = vmul.f32 1.0, %v7249
    %v7251 = vrcp.pop %v7233
    %v7252 = vmul.f32 %v7233, %v7251
    %v7253 = vsub.f32 1.0, %v7252
    %v7254 = vmul.f32 %v7251, %v7253
    %v7255 = vadd.f32 %v7251, %v7254
    %vm7256 = vweird.f32 %v7233
    %vm7257 = vweird.f32 %v7251
    %vm7258 = vmor %vm7256, %vm7257
    %v7259 = vsel %vm7258, %v7251, %v7255
    %v7260 = vand.u32 2147483647, %v7233
    %vm7261 = vcmp.eq.f32.partialorder %v7260, 8.507059e+37
    %v7262 = vand.u32 %v7233, 2147483648
    %v7263 = vor.u32 1.1754944e-38, %v7262
    %v7264 = vsel %vm7261, %v7263, %v7259
    %v7265 = vmul.f32 1.0, %v7264
    %v7266 = vrcp.pop %v7234
    %v7267 = vmul.f32 %v7234, %v7266
    %v7268 = vsub.f32 1.0, %v7267
    %v7269 = vmul.f32 %v7266, %v7268
    %v7270 = vadd.f32 %v7266, %v7269
    %vm7271 = vweird.f32 %v7234
    %vm7272 = vweird.f32 %v7266
    %vm7273 = vmor %vm7271, %vm7272
    %v7274 = vsel %vm7273, %v7266, %v7270
    %v7275 = vand.u32 2147483647, %v7234
    %vm7276 = vcmp.eq.f32.partialorder %v7275, 8.507059e+37
    %v7277 = vand.u32 %v7234, 2147483648
    %v7278 = vor.u32 1.1754944e-38, %v7277
    %v7279 = vsel %vm7276, %v7278, %v7274
    %v7280 = vmul.f32 1.0, %v7279
    %v7281 = vrcp.pop %v7235
    %v7282 = vmul.f32 %v7235, %v7281
    %v7283 = vsub.f32 1.0, %v7282
    %v7284 = vmul.f32 %v7281, %v7283
    %v7285 = vadd.f32 %v7281, %v7284
    %vm7286 = vweird.f32 %v7235
    %vm7287 = vweird.f32 %v7281
    %vm7288 = vmor %vm7286, %vm7287
    %v7289 = vsel %vm7288, %v7281, %v7285
    %v7290 = vand.u32 2147483647, %v7235
    %vm7291 = vcmp.eq.f32.partialorder %v7290, 8.507059e+37
    %v7292 = vand.u32 %v7235, 2147483648
    %v7293 = vor.u32 1.1754944e-38, %v7292
    %v7294 = vsel %vm7291, %v7293, %v7289
    %v7295 = vmul.f32 1.0, %v7294
    %v7296 = vadd.f32 %v7205, %v4382
    %v7297 = vadd.f32 %v7208, %v4382
    %v7298 = vadd.f32 %v7211, %v4382
    %v7299 = vadd.f32 %v7214, %v4382
    %7304 = vrot.lane.b32.xlu0 %v7296, 64
    %v7305 = vpop.permute.xlu0 %7304
    %7306 = vrot.lane.b32.xlu0 %v7297, 64
    %v7307 = vpop.permute.xlu0 %7306
    %7308 = vrot.lane.b32.xlu0 %v7298, 64
    %v7309 = vpop.permute.xlu0 %7308
    %7310 = vrot.lane.b32.xlu0 %v7299, 64
    %v7311 = vpop.permute.xlu0 %7310
    %v7316 = vmul.f32 %v7250, %v7305
    %v7317 = vmul.f32 %v7265, %v7307
    %v7318 = vmul.f32 %v7280, %v7309
    %v7319 = vmul.f32 %v7295, %v7311
    %7324 = vrot.lane.b32.xlu0 %v7316, 64
    %v7325 = vpop.permute.xlu0 %7324
    %7326 = vrot.lane.b32.xlu0 %v7317, 64
    %v7327 = vpop.permute.xlu0 %7326
    %7328 = vrot.lane.b32.xlu0 %v7318, 64
    %v7329 = vpop.permute.xlu0 %7328
    %7330 = vrot.lane.b32.xlu0 %v7319, 64
    %v7331 = vpop.permute.xlu0 %7330
    %v7336 = vadd.f32 %v7175, %v7325
    %v7337 = vadd.f32 %v7176, %v7327
    %v7338 = vadd.f32 %v7177, %v7329
    %v7339 = vadd.f32 %v7178, %v7331
    %v7340 = vtanh.pop %v7336
    %v7341 = vtanh.pop %v7337
    %v7342 = vtanh.pop %v7338
    %v7343 = vtanh.pop %v7339
    %v7344 = vsub.f32 1.0, %v7250
    %v7345 = vsub.f32 1.0, %v7265
    %v7346 = vsub.f32 1.0, %v7280
    %v7347 = vsub.f32 1.0, %v7295
    %7352 = vrot.lane.b32.xlu0 %v7340, 96
    %v7353 = vpop.permute.xlu0 %7352
    %7354 = vrot.lane.b32.xlu0 %v7341, 96
    %v7355 = vpop.permute.xlu0 %7354
    %7356 = vrot.lane.b32.xlu0 %v7342, 96
    %v7357 = vpop.permute.xlu0 %7356
    %7358 = vrot.lane.b32.xlu0 %v7343, 96
    %v7359 = vpop.permute.xlu0 %7358
    %v7364 = vmul.f32 %v7344, %v7353
    %v7365 = vmul.f32 %v7345, %v7355
    %v7366 = vmul.f32 %v7346, %v7357
    %v7367 = vmul.f32 %v7347, %v7359
    %v7368 = vmul.f32 %v7250, %v7151
    %v7369 = vmul.f32 %v7265, %v7152
    %v7370 = vmul.f32 %v7280, %v7153
    %v7371 = vmul.f32 %v7295, %v7154
    %v7372 = vadd.f32 %v7364, %v7368
    %v7373 = vadd.f32 %v7365, %v7369
    %v7374 = vadd.f32 %v7366, %v7370
    %v7375 = vadd.f32 %v7367, %v7371
    %7376 = vst.msk [vmem:[%s9 + $0x18] sm:$0xff] %vm4685, %v7372
    %7377 = vst.msk [vmem:[%s9 + $0x38] sm:$0xff] %vm4685, %v7373
    %7378 = vst.msk [vmem:[%s9 + $0x58] sm:$0xff] %vm4685, %v7374
    %7379 = vst.msk [vmem:[%s9 + $0x78] sm:$0xff] %vm4685, %v7375
    %v7380 = vld [vmem:[#allocation2 + $0x1c0] sm:$0xff]
    %v7381 = vld [vmem:[#allocation2 + $0x1c8] sm:$0xff]
    %v7382 = vld [vmem:[#allocation2 + $0x1d0] sm:$0xff]
    %v7383 = vld [vmem:[#allocation2 + $0x1d8] sm:$0xff]
    %7388 = vrot.lane.b32.xlu0 %v7372, 96
    %v7389 = vpop.permute.xlu0 %7388
    %7390 = vrot.lane.b32.xlu0 %v7373, 96
    %v7391 = vpop.permute.xlu0 %7390
    %7392 = vrot.lane.b32.xlu0 %v7374, 96
    %v7393 = vpop.permute.xlu0 %7392
    %7394 = vrot.lane.b32.xlu0 %v7375, 96
    %v7395 = vpop.permute.xlu0 %7394
    %v7396 = vsel %vm103, %v7389, 0
    %v7398 = vsel %vm103, %v7391, 0
    %v7400 = vsel %vm103, %v7393, 0
    %v7402 = vsel %vm103, %v7395, 0
    %7404 = vmatpush.msra.mxu0 0.0
    %7405 = vmatpush.msra.mxu0 0.0
    %7406 = vmatpush.msra.mxu0 0.0
    %7407 = vmatpush.msra.mxu0 0.0
    %7408 = vmatpush.msra.mxu0 0.0
    %7409 = vmatpush.msra.mxu0 0.0
    %7410 = vmatpush.msra.mxu0 0.0
    %7411 = vmatpush.msra.mxu0 0.0
    %7412 = vmatpush.msra.mxu0 0.0
    %7413 = vmatpush.msra.mxu0 0.0
    %7414 = vmatpush.msra.mxu0 0.0
    %7415 = vmatpush.msra.mxu0 0.0
    %7416 = vmatpush.msra.mxu0 %v4264
    %7417 = vmatpush.msra.mxu0 %v4263
    %7418 = vmatpush.msra.mxu0 %v4262
    %7419 = vmatpush.msra.mxu0 %v4261
    %7420 = vmatmul.f32.gmra.mxu0 %v7396
    %v7421 = vpop.f32.mrf.mxu0
    %v7422 = vadd.f32 0.0, %v7421
    %7423 = vmatmul.f32.gmra.mxu0 %v7398
    %v7424 = vpop.f32.mrf.mxu0
    %v7425 = vadd.f32 0.0, %v7424
    %7426 = vmatmul.f32.gmra.mxu0 %v7400
    %v7427 = vpop.f32.mrf.mxu0
    %v7428 = vadd.f32 0.0, %v7427
    %7429 = vmatmul.f32.gmra.mxu0 %v7402
    %v7430 = vpop.f32.mrf.mxu0
    %v7431 = vadd.f32 0.0, %v7430
    %7432 = vdwg.mxu0
    %v7433 = vadd.f32 %v7380, %v7422
    %v7434 = vadd.f32 %v7381, %v7425
    %v7435 = vadd.f32 %v7382, %v7428
    %v7436 = vadd.f32 %v7383, %v7431
    %v7437 = vxor.u32 %v7433, 2147483648
    %v7438 = vxor.u32 %v7434, 2147483648
    %v7439 = vxor.u32 %v7435, 2147483648
    %v7440 = vxor.u32 %v7436, 2147483648
    %v7441 = vmul.f32 %v7437, 1.442695
    %v7442 = vpow.pop %v7441
    %v7443 = vmul.f32 %v7438, 1.442695
    %v7444 = vpow.pop %v7443
    %v7445 = vmul.f32 %v7439, 1.442695
    %v7446 = vpow.pop %v7445
    %v7447 = vmul.f32 %v7440, 1.442695
    %v7448 = vpow.pop %v7447
    %v7449 = vadd.f32 %v7442, 1.0
    %v7450 = vadd.f32 %v7444, 1.0
    %v7451 = vadd.f32 %v7446, 1.0
    %v7452 = vadd.f32 %v7448, 1.0
    %v7453 = vrcp.pop %v7449
    %v7454 = vmul.f32 %v7449, %v7453
    %v7455 = vsub.f32 1.0, %v7454
    %v7456 = vmul.f32 %v7453, %v7455
    %v7457 = vadd.f32 %v7453, %v7456
    %vm7458 = vweird.f32 %v7449
    %vm7459 = vweird.f32 %v7453
    %vm7460 = vmor %vm7458, %vm7459
    %v7461 = vsel %vm7460, %v7453, %v7457
    %v7462 = vand.u32 2147483647, %v7449
    %vm7463 = vcmp.eq.f32.partialorder %v7462, 8.507059e+37
    %v7464 = vand.u32 %v7449, 2147483648
    %v7465 = vor.u32 1.1754944e-38, %v7464
    %v7466 = vsel %vm7463, %v7465, %v7461
    %v7467 = vmul.f32 1.0, %v7466
    %v7468 = vrcp.pop %v7450
    %v7469 = vmul.f32 %v7450, %v7468
    %v7470 = vsub.f32 1.0, %v7469
    %v7471 = vmul.f32 %v7468, %v7470
    %v7472 = vadd.f32 %v7468, %v7471
    %vm7473 = vweird.f32 %v7450
    %vm7474 = vweird.f32 %v7468
    %vm7475 = vmor %vm7473, %vm7474
    %v7476 = vsel %vm7475, %v7468, %v7472
    %v7477 = vand.u32 2147483647, %v7450
    %vm7478 = vcmp.eq.f32.partialorder %v7477, 8.507059e+37
    %v7479 = vand.u32 %v7450, 2147483648
    %v7480 = vor.u32 1.1754944e-38, %v7479
    %v7481 = vsel %vm7478, %v7480, %v7476
    %v7482 = vmul.f32 1.0, %v7481
    %v7483 = vrcp.pop %v7451
    %v7484 = vmul.f32 %v7451, %v7483
    %v7485 = vsub.f32 1.0, %v7484
    %v7486 = vmul.f32 %v7483, %v7485
    %v7487 = vadd.f32 %v7483, %v7486
    %vm7488 = vweird.f32 %v7451
    %vm7489 = vweird.f32 %v7483
    %vm7490 = vmor %vm7488, %vm7489
    %v7491 = vsel %vm7490, %v7483, %v7487
    %v7492 = vand.u32 2147483647, %v7451
    %vm7493 = vcmp.eq.f32.partialorder %v7492, 8.507059e+37
    %v7494 = vand.u32 %v7451, 2147483648
    %v7495 = vor.u32 1.1754944e-38, %v7494
    %v7496 = vsel %vm7493, %v7495, %v7491
    %v7497 = vmul.f32 1.0, %v7496
    %v7498 = vrcp.pop %v7452
    %v7499 = vmul.f32 %v7452, %v7498
    %v7500 = vsub.f32 1.0, %v7499
    %v7501 = vmul.f32 %v7498, %v7500
    %v7502 = vadd.f32 %v7498, %v7501
    %vm7503 = vweird.f32 %v7452
    %vm7504 = vweird.f32 %v7498
    %vm7505 = vmor %vm7503, %vm7504
    %v7506 = vsel %vm7505, %v7498, %v7502
    %v7507 = vand.u32 2147483647, %v7452
    %vm7508 = vcmp.eq.f32.partialorder %v7507, 8.507059e+37
    %v7509 = vand.u32 %v7452, 2147483648
    %v7510 = vor.u32 1.1754944e-38, %v7509
    %v7511 = vsel %vm7508, %v7510, %v7506
    %v7512 = vmul.f32 1.0, %v7511
    %v7513 = vadd.f32 %v7422, %v4382
    %v7514 = vadd.f32 %v7425, %v4382
    %v7515 = vadd.f32 %v7428, %v4382
    %v7516 = vadd.f32 %v7431, %v4382
    %7521 = vrot.lane.b32.xlu0 %v7513, 64
    %v7522 = vpop.permute.xlu0 %7521
    %7523 = vrot.lane.b32.xlu0 %v7514, 64
    %v7524 = vpop.permute.xlu0 %7523
    %7525 = vrot.lane.b32.xlu0 %v7515, 64
    %v7526 = vpop.permute.xlu0 %7525
    %7527 = vrot.lane.b32.xlu0 %v7516, 64
    %v7528 = vpop.permute.xlu0 %7527
    %v7533 = vmul.f32 %v7467, %v7522
    %v7534 = vmul.f32 %v7482, %v7524
    %v7535 = vmul.f32 %v7497, %v7526
    %v7536 = vmul.f32 %v7512, %v7528
    %7541 = vrot.lane.b32.xlu0 %v7533, 64
    %v7542 = vpop.permute.xlu0 %7541
    %7543 = vrot.lane.b32.xlu0 %v7534, 64
    %v7544 = vpop.permute.xlu0 %7543
    %7545 = vrot.lane.b32.xlu0 %v7535, 64
    %v7546 = vpop.permute.xlu0 %7545
    %7547 = vrot.lane.b32.xlu0 %v7536, 64
    %v7548 = vpop.permute.xlu0 %7547
    %v7553 = vadd.f32 %v7380, %v7542
    %v7554 = vadd.f32 %v7381, %v7544
    %v7555 = vadd.f32 %v7382, %v7546
    %v7556 = vadd.f32 %v7383, %v7548
    %v7557 = vtanh.pop %v7553
    %v7558 = vtanh.pop %v7554
    %v7559 = vtanh.pop %v7555
    %v7560 = vtanh.pop %v7556
    %v7561 = vsub.f32 1.0, %v7467
    %v7562 = vsub.f32 1.0, %v7482
    %v7563 = vsub.f32 1.0, %v7497
    %v7564 = vsub.f32 1.0, %v7512
    %7569 = vrot.lane.b32.xlu0 %v7557, 96
    %v7570 = vpop.permute.xlu0 %7569
    %7571 = vrot.lane.b32.xlu0 %v7558, 96
    %v7572 = vpop.permute.xlu0 %7571
    %7573 = vrot.lane.b32.xlu0 %v7559, 96
    %v7574 = vpop.permute.xlu0 %7573
    %7575 = vrot.lane.b32.xlu0 %v7560, 96
    %v7576 = vpop.permute.xlu0 %7575
    %v7581 = vmul.f32 %v7561, %v7570
    %v7582 = vmul.f32 %v7562, %v7572
    %v7583 = vmul.f32 %v7563, %v7574
    %v7584 = vmul.f32 %v7564, %v7576
    %v7585 = vmul.f32 %v7467, %v7372
    %v7586 = vmul.f32 %v7482, %v7373
    %v7587 = vmul.f32 %v7497, %v7374
    %v7588 = vmul.f32 %v7512, %v7375
    %v7589 = vadd.f32 %v7581, %v7585
    %v7590 = vadd.f32 %v7582, %v7586
    %v7591 = vadd.f32 %v7583, %v7587
    %v7592 = vadd.f32 %v7584, %v7588
    %7597 = vrot.lane.b32.xlu0 %v7589, 32
    %v7598 = vpop.permute.xlu0 %7597
    %7599 = vrot.lane.b32.xlu0 %v7590, 32
    %v7600 = vpop.permute.xlu0 %7599
    %7601 = vrot.lane.b32.xlu0 %v7591, 32
    %v7602 = vpop.permute.xlu0 %7601
    %7603 = vrot.lane.b32.xlu0 %v7592, 32
    %v7604 = vpop.permute.xlu0 %7603
    %7609 = vst.msk [vmem:[%s9 + $0x18] sm:$0xff] %vm4919, %v7598
    %7610 = vst.msk [vmem:[%s9 + $0x38] sm:$0xff] %vm4919, %v7600
    %7611 = vst.msk [vmem:[%s9 + $0x58] sm:$0xff] %vm4919, %v7602
    %7612 = vst.msk [vmem:[%s9 + $0x78] sm:$0xff] %vm4919, %v7604
    %7613 = vrot.lane.b32.xlu0 %v7589, 96
    %v7614 = vpop.permute.xlu0 %7613
    %7615 = vrot.lane.b32.xlu0 %v7590, 96
    %v7616 = vpop.permute.xlu0 %7615
    %7617 = vrot.lane.b32.xlu0 %v7591, 96
    %v7618 = vpop.permute.xlu0 %7617
    %7619 = vrot.lane.b32.xlu0 %v7592, 96
    %v7620 = vpop.permute.xlu0 %7619
    %s7625 = scalar_lea.vmem [#allocation3], 32
    %7626 = vst.msk [vmem:[%s7625] sm:$0xff] %vm103, %v7614
    %7627 = vst.msk [vmem:[%s7625 + $0x8] sm:$0xff] %vm103, %v7616
    %7628 = vst.msk [vmem:[%s7625 + $0x10] sm:$0xff] %vm103, %v7618
    %7629 = vst.msk [vmem:[%s7625 + $0x18] sm:$0xff] %vm103, %v7620
    // Predicated region
    $region38: #{seq2seq_encoder_forward.1} parent=1 // pred_check
      _
    $region39: #{seq2seq_encoder_forward.1} parent=1 // pred_check_branch
      %7631 = sbr.rel (0) target = $region41
    $region40: #{seq2seq_encoder_forward.1} parent=1 // pred_region
      _
    $region41: #{seq2seq_encoder_forward.1} parent=1 // pred_fallthru
      _
    // Predicated region
    $region42: #{seq2seq_encoder_forward.1} parent=1 // pred_check
      _
    $region43: #{seq2seq_encoder_forward.1} parent=1 // pred_check_branch
      %7633 = sbr.rel (0) target = $region45
    $region44: #{seq2seq_encoder_forward.1} parent=1 // pred_region
      %7635 = vsyncadd [#allocation4], 0
      %s7636 = sshll.u32 [#allocation3], 4
      %s7637 = int_to_ptr.vmem [resolvable:$true] %s7636
      %s7638 = sshll.u32 %s10, 4
      %s7639 = int_to_ptr.hbm [resolvable:$true] %s7638
      %7644 = dma.vmem_to_hbm [thread:$0]  %s7637, 1024, %s7639, [#allocation4], 128, 128, 8
    $region45: #{seq2seq_encoder_forward.1} parent=1 // pred_fallthru
      _
    // Predicated region
    $region46: #{seq2seq_encoder_forward.1} parent=1 // pred_check
      _
    $region47: #{seq2seq_encoder_forward.1} parent=1 // pred_check_branch
      %7646 = sbr.rel (0) target = $region49
    $region48: #{seq2seq_encoder_forward.1} parent=1 // pred_region
      _
    $region49: #{seq2seq_encoder_forward.1} parent=1 // pred_fallthru
      _
    // Predicated region
    $region50: #{seq2seq_encoder_forward.1} parent=1 // pred_check
      _
    $region51: #{seq2seq_encoder_forward.1} parent=1 // pred_check_branch
      %7648 = sbr.rel (0) target = $region53
    $region52: #{seq2seq_encoder_forward.1} parent=1 // pred_region
      %7650 = dma.done [#allocation4], 1024
    $region53: #{seq2seq_encoder_forward.1} parent=1 // pred_fallthru
      _
    %7651 = vsyncpa [#allocation4], 1

</llo_original>
